<compile_context>
chip_gen: v6e
topology: v6e:2x2x1
jax: 0.10.0
libtpu: 0.0.40
codegen_flags: <defaults>
</compile_context>

<pallas_src>
import jax
import jax.numpy as jnp
from jax.experimental import pallas as pl
from jax.experimental.pallas import tpu as pltpu

PROT_DIM = 256              # NHGNN protein embedding dim
LIG_DIM = 96                # GraphDenseNet out_dim = filter_num * 3 = 96
H1 = 1024
H2 = 1024
H3 = 256
H4 = 256
TB = 128                    # batch tile (MXU M dim; 128 works well on v5e/v6e/v7x)


def _mlp_head_kernel(prot_ref, lig_ref,
                     w1a_ref, w1b_ref, b1_ref,
                     w2_ref, b2_ref,
                     w3_ref, b3_ref,
                     w4_ref, b4_ref,
                     vec_ref):
    # bf16 operands into the MXU, f32 accumulation.
    prot = prot_ref[...].astype(jnp.bfloat16)                  # [TB, 256]
    lig = lig_ref[...].astype(jnp.bfloat16)                    # [TB, 96]

    # classifier: Linear(352,1024) -> ReLU -> (Dropout=id) -> Linear(1024,1024)
    #             -> ReLU -> (Dropout=id) -> Linear(1024,256)
    # cat([prot, lig]) @ W1 == prot @ W1[:256] + lig @ W1[256:]
    h1 = (jnp.dot(prot, w1a_ref[...], preferred_element_type=jnp.float32)
          + jnp.dot(lig, w1b_ref[...], preferred_element_type=jnp.float32)
          + b1_ref[...])                                       # [TB, 1024] f32
    h1 = jnp.maximum(h1, 0.0).astype(jnp.bfloat16)

    h2 = jnp.dot(h1, w2_ref[...], preferred_element_type=jnp.float32) + b2_ref[...]
    h2 = jnp.maximum(h2, 0.0).astype(jnp.bfloat16)

    h3 = jnp.dot(h2, w3_ref[...], preferred_element_type=jnp.float32) + b3_ref[...]

    # classifier2: ReLU -> (Dropout=id) -> Linear(256,256)
    h4 = jnp.maximum(h3, 0.0).astype(jnp.bfloat16)
    out = jnp.dot(h4, w4_ref[...], preferred_element_type=jnp.float32) + b4_ref[...]

    vec_ref[...] = out                                         # [TB, 256] lane-dense store


def mgraphdta_head(protein_x, ligand_x, params, tb=TB):
    """protein_x: [B, 256] f32, ligand_x: [B, 96] f32.

    Returns (norm [B] f32, vector [B, 256] f32), matching
    torch.norm(classifier2(classifier(cat([protein_x, ligand_x], -1))), dim=-1)
    and the output_vector=True branch.
    """
    w1a, w1b, b1, w2, b2, w3, b3, w4, b4 = params
    B = protein_x.shape[0]

    # Pad batch to a multiple of the tile (rows are independent; padding is discarded).
    Bp = pl.cdiv(B, tb) * tb
    if Bp != B:
        pad = Bp - B
        protein_x = jnp.pad(protein_x, ((0, pad), (0, 0)))
        ligand_x = jnp.pad(ligand_x, ((0, pad), (0, 0)))

    grid = (Bp // tb,)

    def const2d(shape):
        # Grid-invariant weight/bias tile (whole array every step).
        return pl.BlockSpec(shape, lambda i: (0, 0))

    vec = pl.pallas_call(
        _mlp_head_kernel,
        out_shape=jax.ShapeDtypeStruct((Bp, H4), jnp.float32),
        grid_spec=pltpu.PrefetchScalarGridSpec(
            num_scalar_prefetch=0,
            grid=grid,
            in_specs=[
                pl.BlockSpec((tb, PROT_DIM), lambda i: (i, 0)),   # protein tile over batch
                pl.BlockSpec((tb, LIG_DIM), lambda i: (i, 0)),    # ligand tile over batch
                const2d((PROT_DIM, H1)), const2d((LIG_DIM, H1)), const2d((1, H1)),
                const2d((H1, H2)), const2d((1, H2)),
                const2d((H2, H3)), const2d((1, H3)),
                const2d((H3, H4)), const2d((1, H4)),
            ],
            out_specs=pl.BlockSpec((tb, H4), lambda i: (i, 0)),
        ),
        compiler_params=pltpu.CompilerParams(
            dimension_semantics=("parallel",),
            vmem_limit_bytes=32 << 20,
        ),
    )(protein_x, ligand_x, w1a, w1b, b1, w2, b2, w3, b3, w4, b4)

    vec = vec[:B]
    # torch.norm(out, dim=-1): cheap lane reduction, fused by XLA on the returned vector.
    norm = jnp.sqrt(jnp.sum(vec * vec, axis=-1))
    return norm, vec


def init_params(key):
    """PyTorch-Linear-style init: U(-1/sqrt(fan_in), 1/sqrt(fan_in)).

    Weights are cast to bf16 (MXU operand dtype); biases stay f32 (added post-accumulation).
    W1 is split into its protein (first 256 rows) and ligand (last 96 rows) parts.
    """
    def linear(k, fan_in, fan_out):
        kw, kb = jax.random.split(k)
        bound = 1.0 / jnp.sqrt(float(fan_in))
        w = jax.random.uniform(kw, (fan_in, fan_out), jnp.float32, -bound, bound)
        b = jax.random.uniform(kb, (1, fan_out), jnp.float32, -bound, bound)
        return w.astype(jnp.bfloat16), b

    k1, k2, k3, k4 = jax.random.split(key, 4)
    w1, b1 = linear(k1, PROT_DIM + LIG_DIM, H1)
    w2, b2 = linear(k2, H1, H2)
    w3, b3 = linear(k3, H2, H3)
    w4, b4 = linear(k4, H3, H4)
    w1a, w1b = w1[:PROT_DIM], w1[PROT_DIM:]
    return (w1a, w1b, b1, w2, b2, w3, b3, w4, b4)


def _reference(protein_x, ligand_x, params):
    """Pure-JAX reference with identical dtype handling (bf16 operands, f32 accum)."""
    w1a, w1b, b1, w2, b2, w3, b3, w4, b4 = params
    pb = protein_x.astype(jnp.bfloat16)
    lb = ligand_x.astype(jnp.bfloat16)
    h = (jnp.dot(pb, w1a, preferred_element_type=jnp.float32)
         + jnp.dot(lb, w1b, preferred_element_type=jnp.float32) + b1)
    h = jnp.maximum(h, 0.0).astype(jnp.bfloat16)
    h = jnp.dot(h, w2, preferred_element_type=jnp.float32) + b2
    h = jnp.maximum(h, 0.0).astype(jnp.bfloat16)
    h = jnp.dot(h, w3, preferred_element_type=jnp.float32) + b3
    h = jnp.maximum(h, 0.0).astype(jnp.bfloat16)
    vec = jnp.dot(h, w4, preferred_element_type=jnp.float32) + b4
    return jnp.sqrt(jnp.sum(vec * vec, axis=-1)), vec


if __name__ == "__main__":
    key = jax.random.PRNGKey(0)
    kp, kprot, klig = jax.random.split(key, 3)

    params = init_params(kp)

    # Batch of 256 = the module's training batch size; 2 grid steps of TB=128
    # (keeps both TensorCores busy on v7x).
    B = 256
    # Synthetic encoder outputs (stand-ins for NHGNN_DTA / GraphDenseNet embeddings).
    protein_x = jax.random.normal(kprot, (B, PROT_DIM), jnp.float32)
    ligand_x = jax.random.normal(klig, (B, LIG_DIM), jnp.float32)

    norm_out, vec_out = mgraphdta_head(protein_x, ligand_x, params)
    jax.block_until_ready((norm_out, vec_out))

    # Sanity check against a pure-JAX reference of the same math.
    ref_norm, ref_vec = _reference(protein_x, ligand_x, params)
    assert vec_out.shape == (B, H4)
    assert norm_out.shape == (B,)
    assert jnp.allclose(vec_out, ref_vec, atol=2e-2, rtol=2e-2)
    assert jnp.allclose(norm_out, ref_norm, atol=2e-2, rtol=2e-2)

    print("KERNEL_OK")
</pallas_src>

<mosaic_0001>
module attributes {stable_mosaic.version = 11 : i64} {
  func.func @_mlp_head_kernel(%arg0: i32, %arg1: memref<128x256xf32, #tpu.memory_space<vmem>>, %arg2: memref<128x96xf32, #tpu.memory_space<vmem>>, %arg3: memref<256x1024xbf16, #tpu.memory_space<vmem>>, %arg4: memref<96x1024xbf16, #tpu.memory_space<vmem>>, %arg5: memref<1x1024xf32, #tpu.memory_space<vmem>>, %arg6: memref<1024x1024xbf16, #tpu.memory_space<vmem>>, %arg7: memref<1x1024xf32, #tpu.memory_space<vmem>>, %arg8: memref<1024x256xbf16, #tpu.memory_space<vmem>>, %arg9: memref<1x256xf32, #tpu.memory_space<vmem>>, %arg10: memref<256x256xbf16, #tpu.memory_space<vmem>>, %arg11: memref<1x256xf32, #tpu.memory_space<vmem>>, %arg12: memref<128x256xf32, #tpu.memory_space<vmem>>) attributes {dimension_semantics = [#tpu.dimension_semantics<parallel>], iteration_bounds = array<i64: 2>, scalar_prefetch = 0 : i64, scratch_operands = 0 : i64, tpu.core_type = #tpu.core_type<tc>, window_params = [{transform_indices = @transform_0, window_bounds = array<i64: 128, 256>}, {transform_indices = @transform_1, window_bounds = array<i64: 128, 96>}, {pipeline_mode = #tpu.pipeline_mode<synchronous>, transform_indices = @transform_2, window_bounds = array<i64: 256, 1024>}, {pipeline_mode = #tpu.pipeline_mode<synchronous>, transform_indices = @transform_3, window_bounds = array<i64: 96, 1024>}, {pipeline_mode = #tpu.pipeline_mode<synchronous>, transform_indices = @transform_4, window_bounds = array<i64: 1, 1024>}, {pipeline_mode = #tpu.pipeline_mode<synchronous>, transform_indices = @transform_5, window_bounds = array<i64: 1024, 1024>}, {pipeline_mode = #tpu.pipeline_mode<synchronous>, transform_indices = @transform_6, window_bounds = array<i64: 1, 1024>}, {pipeline_mode = #tpu.pipeline_mode<synchronous>, transform_indices = @transform_7, window_bounds = array<i64: 1024, 256>}, {pipeline_mode = #tpu.pipeline_mode<synchronous>, transform_indices = @transform_8, window_bounds = array<i64: 1, 256>}, {pipeline_mode = #tpu.pipeline_mode<synchronous>, transform_indices = @transform_9, window_bounds = array<i64: 256, 256>}, {pipeline_mode = #tpu.pipeline_mode<synchronous>, transform_indices = @transform_10, window_bounds = array<i64: 1, 256>}, {transform_indices = @transform_11, window_bounds = array<i64: 128, 256>}]} {
    %c0 = arith.constant 0 : index
    %c0_0 = arith.constant 0 : index
    %0 = vector.load %arg1[%c0, %c0_0] : memref<128x256xf32, #tpu.memory_space<vmem>>, vector<128x256xf32>
    %1 = arith.truncf %0 : vector<128x256xf32> to vector<128x256xbf16>
    %c0_1 = arith.constant 0 : index
    %c0_2 = arith.constant 0 : index
    %2 = vector.load %arg2[%c0_1, %c0_2] : memref<128x96xf32, #tpu.memory_space<vmem>>, vector<128x96xf32>
    %3 = arith.truncf %2 : vector<128x96xf32> to vector<128x96xbf16>
    %c0_3 = arith.constant 0 : index
    %c0_4 = arith.constant 0 : index
    %4 = vector.load %arg3[%c0_3, %c0_4] : memref<256x1024xbf16, #tpu.memory_space<vmem>>, vector<256x1024xbf16>
    %cst = arith.constant dense<0.000000e+00> : vector<128x1024xf32>
    %5 = tpu.matmul %1, %4, %cst {dimension_numbers = #tpu.dot_dimension_numbers<[1], [0], [0], [1], [0, 0, 1, 1], [], []>} : vector<128x256xbf16>, vector<256x1024xbf16>, vector<128x1024xf32> -> vector<128x1024xf32>
    %c0_5 = arith.constant 0 : index
    %c0_6 = arith.constant 0 : index
    %6 = vector.load %arg4[%c0_5, %c0_6] : memref<96x1024xbf16, #tpu.memory_space<vmem>>, vector<96x1024xbf16>
    %cst_7 = arith.constant dense<0.000000e+00> : vector<128x1024xf32>
    %7 = tpu.matmul %3, %6, %cst_7 {dimension_numbers = #tpu.dot_dimension_numbers<[1], [0], [0], [1], [0, 0, 1, 1], [], []>} : vector<128x96xbf16>, vector<96x1024xbf16>, vector<128x1024xf32> -> vector<128x1024xf32>
    %8 = arith.addf %5, %7 : vector<128x1024xf32>
    %c0_8 = arith.constant 0 : index
    %c0_9 = arith.constant 0 : index
    %9 = vector.load %arg5[%c0_8, %c0_9] : memref<1x1024xf32, #tpu.memory_space<vmem>>, vector<1x1024xf32>
    %10 = vector.broadcast %9 : vector<1x1024xf32> to vector<128x1024xf32>
    %11 = arith.addf %8, %10 : vector<128x1024xf32>
    %cst_10 = arith.constant 0.000000e+00 : f32
    %12 = vector.broadcast %cst_10 : f32 to vector<128x1024xf32>
    %13 = arith.maximumf %11, %12 : vector<128x1024xf32>
    %14 = arith.truncf %13 : vector<128x1024xf32> to vector<128x1024xbf16>
    %c0_11 = arith.constant 0 : index
    %c0_12 = arith.constant 0 : index
    %15 = vector.load %arg6[%c0_11, %c0_12] : memref<1024x1024xbf16, #tpu.memory_space<vmem>>, vector<1024x1024xbf16>
    %cst_13 = arith.constant dense<0.000000e+00> : vector<128x1024xf32>
    %16 = tpu.matmul %14, %15, %cst_13 {dimension_numbers = #tpu.dot_dimension_numbers<[1], [0], [0], [1], [0, 0, 1, 1], [], []>} : vector<128x1024xbf16>, vector<1024x1024xbf16>, vector<128x1024xf32> -> vector<128x1024xf32>
    %c0_14 = arith.constant 0 : index
    %c0_15 = arith.constant 0 : index
    %17 = vector.load %arg7[%c0_14, %c0_15] : memref<1x1024xf32, #tpu.memory_space<vmem>>, vector<1x1024xf32>
    %18 = vector.broadcast %17 : vector<1x1024xf32> to vector<128x1024xf32>
    %19 = arith.addf %16, %18 : vector<128x1024xf32>
    %cst_16 = arith.constant 0.000000e+00 : f32
    %20 = vector.broadcast %cst_16 : f32 to vector<128x1024xf32>
    %21 = arith.maximumf %19, %20 : vector<128x1024xf32>
    %22 = arith.truncf %21 : vector<128x1024xf32> to vector<128x1024xbf16>
    %c0_17 = arith.constant 0 : index
    %c0_18 = arith.constant 0 : index
    %23 = vector.load %arg8[%c0_17, %c0_18] : memref<1024x256xbf16, #tpu.memory_space<vmem>>, vector<1024x256xbf16>
    %cst_19 = arith.constant dense<0.000000e+00> : vector<128x256xf32>
    %24 = tpu.matmul %22, %23, %cst_19 {dimension_numbers = #tpu.dot_dimension_numbers<[1], [0], [0], [1], [0, 0, 1, 1], [], []>} : vector<128x1024xbf16>, vector<1024x256xbf16>, vector<128x256xf32> -> vector<128x256xf32>
    %c0_20 = arith.constant 0 : index
    %c0_21 = arith.constant 0 : index
    %25 = vector.load %arg9[%c0_20, %c0_21] : memref<1x256xf32, #tpu.memory_space<vmem>>, vector<1x256xf32>
    %26 = vector.broadcast %25 : vector<1x256xf32> to vector<128x256xf32>
    %27 = arith.addf %24, %26 : vector<128x256xf32>
    %cst_22 = arith.constant 0.000000e+00 : f32
    %28 = vector.broadcast %cst_22 : f32 to vector<128x256xf32>
    %29 = arith.maximumf %27, %28 : vector<128x256xf32>
    %30 = arith.truncf %29 : vector<128x256xf32> to vector<128x256xbf16>
    %c0_23 = arith.constant 0 : index
    %c0_24 = arith.constant 0 : index
    %31 = vector.load %arg10[%c0_23, %c0_24] : memref<256x256xbf16, #tpu.memory_space<vmem>>, vector<256x256xbf16>
    %cst_25 = arith.constant dense<0.000000e+00> : vector<128x256xf32>
    %32 = tpu.matmul %30, %31, %cst_25 {dimension_numbers = #tpu.dot_dimension_numbers<[1], [0], [0], [1], [0, 0, 1, 1], [], []>} : vector<128x256xbf16>, vector<256x256xbf16>, vector<128x256xf32> -> vector<128x256xf32>
    %c0_26 = arith.constant 0 : index
    %c0_27 = arith.constant 0 : index
    %33 = vector.load %arg11[%c0_26, %c0_27] : memref<1x256xf32, #tpu.memory_space<vmem>>, vector<1x256xf32>
    %34 = vector.broadcast %33 : vector<1x256xf32> to vector<128x256xf32>
    %35 = arith.addf %32, %34 : vector<128x256xf32>
    %c0_28 = arith.constant 0 : index
    %c0_29 = arith.constant 0 : index
    %36 = vector.load %arg12[%c0_28, %c0_29] : memref<128x256xf32, #tpu.memory_space<vmem>>, vector<128x256xf32>
    tpu.vector_store %arg12[%c0_28, %c0_29], %35 {strides = array<i32>} : memref<128x256xf32, #tpu.memory_space<vmem>>, vector<128x256xf32>,
    return
  }
  func.func @transform_0(%arg0: i32) -> (i32, i32) {
    %c0_i32 = arith.constant 0 : i32
    %c0_i32_0 = arith.constant 0 : i32
    return %arg0, %c0_i32 : i32, i32
  }
  func.func @transform_1(%arg0: i32) -> (i32, i32) {
    %c0_i32 = arith.constant 0 : i32
    %c0_i32_0 = arith.constant 0 : i32
    return %arg0, %c0_i32 : i32, i32
  }
  func.func @transform_2(%arg0: i32) -> (i32, i32) {
    %c0_i32 = arith.constant 0 : i32
    %c0_i32_0 = arith.constant 0 : i32
    %c0_i32_1 = arith.constant 0 : i32
    return %c0_i32, %c0_i32_0 : i32, i32
  }
  func.func @transform_3(%arg0: i32) -> (i32, i32) {
    %c0_i32 = arith.constant 0 : i32
    %c0_i32_0 = arith.constant 0 : i32
    %c0_i32_1 = arith.constant 0 : i32
    return %c0_i32, %c0_i32_0 : i32, i32
  }
  func.func @transform_4(%arg0: i32) -> (i32, i32) {
    %c0_i32 = arith.constant 0 : i32
    %c0_i32_0 = arith.constant 0 : i32
    %c0_i32_1 = arith.constant 0 : i32
    return %c0_i32, %c0_i32_0 : i32, i32
  }
  func.func @transform_5(%arg0: i32) -> (i32, i32) {
    %c0_i32 = arith.constant 0 : i32
    %c0_i32_0 = arith.constant 0 : i32
    %c0_i32_1 = arith.constant 0 : i32
    return %c0_i32, %c0_i32_0 : i32, i32
  }
  func.func @transform_6(%arg0: i32) -> (i32, i32) {
    %c0_i32 = arith.constant 0 : i32
    %c0_i32_0 = arith.constant 0 : i32
    %c0_i32_1 = arith.constant 0 : i32
    return %c0_i32, %c0_i32_0 : i32, i32
  }
  func.func @transform_7(%arg0: i32) -> (i32, i32) {
    %c0_i32 = arith.constant 0 : i32
    %c0_i32_0 = arith.constant 0 : i32
    %c0_i32_1 = arith.constant 0 : i32
    return %c0_i32, %c0_i32_0 : i32, i32
  }
  func.func @transform_8(%arg0: i32) -> (i32, i32) {
    %c0_i32 = arith.constant 0 : i32
    %c0_i32_0 = arith.constant 0 : i32
    %c0_i32_1 = arith.constant 0 : i32
    return %c0_i32, %c0_i32_0 : i32, i32
  }
  func.func @transform_9(%arg0: i32) -> (i32, i32) {
    %c0_i32 = arith.constant 0 : i32
    %c0_i32_0 = arith.constant 0 : i32
    %c0_i32_1 = arith.constant 0 : i32
    return %c0_i32, %c0_i32_0 : i32, i32
  }
  func.func @transform_10(%arg0: i32) -> (i32, i32) {
    %c0_i32 = arith.constant 0 : i32
    %c0_i32_0 = arith.constant 0 : i32
    %c0_i32_1 = arith.constant 0 : i32
    return %c0_i32, %c0_i32_0 : i32, i32
  }
  func.func @transform_11(%arg0: i32) -> (i32, i32) {
    %c0_i32 = arith.constant 0 : i32
    %c0_i32_0 = arith.constant 0 : i32
    return %arg0, %c0_i32 : i32, i32
  }
}

</mosaic_0001>

<llo_original>
// kernel: tpu_custom_call.1
$region0: #{tpu_custom_call.1}
  #allocation0 [shape = 'u32[]', space=smem, size = 0x4, offset = 0x4, fixed_abs, tag = 'smem constant byte address 0x4 - core index']
  #allocation1 [shape = 'u32[144,128]{1,0:T(1,128)}', space=vmem, size = 0x12000, scoped, tag = 'internal scratch']
  %s0 = inlined_call_operand.hbm [shape: f32[256,256], index: 0, kind: input, shape index: {}]
  %s1 = inlined_call_operand.vmem [shape: f32[256,96], index: 1, kind: input, shape index: {}]
  %s2 = inlined_call_operand.hbm [shape: bf16[256,1024], index: 2, kind: input, shape index: {}]
  %s3 = inlined_call_operand.hbm [shape: bf16[96,1024], index: 3, kind: input, shape index: {}]
  %s4 = inlined_call_operand.hbm [shape: f32[1,1024], index: 4, kind: input, shape index: {}]
  %s5 = inlined_call_operand.hbm [shape: bf16[1024,1024], index: 5, kind: input, shape index: {}]
  %s6 = inlined_call_operand.hbm [shape: f32[1,1024], index: 6, kind: input, shape index: {}]
  %s7 = inlined_call_operand.hbm [shape: bf16[1024,256], index: 7, kind: input, shape index: {}]
  %s8 = inlined_call_operand.hbm [shape: f32[1,256], index: 8, kind: input, shape index: {}]
  %s9 = inlined_call_operand.hbm [shape: bf16[256,256], index: 9, kind: input, shape index: {}]
  %s10 = inlined_call_operand.hbm [shape: f32[1,256], index: 10, kind: input, shape index: {}]
  %s11 = inlined_call_operand.hbm [shape: f32[256,256], index: 11, kind: output, shape index: {}]
  %s12 = sld [smem:[#allocation0]]
  $region117: #{tpu_custom_call.1} parent=0
    _
  %s14 = ssub.s32 1, %s12
  %s15 = scalar_select 0, %s14, %s12
  $region1: #{tpu_custom_call.1} parent=0
    #allocation2 [shape = 'u8[262144]{0}', space=vmem, size = 0x40000, scoped, tag = 'input window, operand 0']
    #allocation3 [shape = 's32[2]{0}', space=sflag, size = 0x8, scoped, tag = 'scoped memory for tpu_custom_call.1']
    #allocation4 [shape = 's32[2]{0}', space=sflag, size = 0x8, scoped, tag = 'scoped memory for tpu_custom_call.1']
    #allocation5 [shape = 'u8[524288]{0}', space=vmem, size = 0x80000, scoped, tag = 'input window, operand 2, single buffered']
    #allocation6 [shape = 's32[1]{0}', space=sflag, size = 0x4, scoped, tag = 'scoped memory for tpu_custom_call.1']
    #allocation7 [shape = 'u8[196608]{0}', space=vmem, size = 0x30000, scoped, tag = 'input window, operand 3, single buffered']
    #allocation8 [shape = 'u8[4096]{0}', space=vmem, size = 0x1000, scoped, tag = 'input window, operand 4, single buffered']
    #allocation9 [shape = 's32[1]{0}', space=sflag, size = 0x4, scoped, tag = 'scoped memory for tpu_custom_call.1']
    #allocation10 [shape = 'u8[2097152]{0}', space=vmem, size = 0x200000, scoped, tag = 'input window, operand 5, single buffered']
    #allocation11 [shape = 'u8[4096]{0}', space=vmem, size = 0x1000, scoped, tag = 'input window, operand 6, single buffered']
    #allocation12 [shape = 's32[1]{0}', space=sflag, size = 0x4, scoped, tag = 'scoped memory for tpu_custom_call.1']
    #allocation13 [shape = 'u8[524288]{0}', space=vmem, size = 0x80000, scoped, tag = 'input window, operand 7, single buffered']
    #allocation14 [shape = 'u8[1024]{0}', space=vmem, size = 0x400, scoped, tag = 'input window, operand 8, single buffered']
    #allocation15 [shape = 's32[1]{0}', space=sflag, size = 0x4, scoped, tag = 'scoped memory for tpu_custom_call.1']
    #allocation16 [shape = 'u8[131072]{0}', space=vmem, size = 0x20000, scoped, tag = 'input window, operand 9, single buffered']
    #allocation17 [shape = 'u8[1024]{0}', space=vmem, size = 0x400, scoped, tag = 'input window, operand 10, single buffered']
    #allocation18 [shape = 's32[1]{0}', space=sflag, size = 0x4, scoped, tag = 'scoped memory for tpu_custom_call.1']
    #allocation19 [shape = 'u8[262144]{0}', space=vmem, size = 0x40000, scoped, tag = 'output window, operand 0']
    %16 = vsyncpa [#allocation3], 0
    %s17 = scalar_lea.sflag [#allocation3], 1
    %18 = vsyncpa %s17, 0
    %19 = vsyncpa [#allocation6], 0
    %20 = vsyncpa [#allocation9], 0
    %21 = vsyncpa [#allocation12], 0
    %22 = vsyncpa [#allocation15], 0
    %23 = vsyncpa [#allocation18], 0
    %24 = vsyncpa [#allocation4], 0
    %s25 = scalar_lea.sflag [#allocation4], 1
    %26 = vsyncpa %s25, 0
    loop: start=0, step=1, limit=4
    $region2: #{tpu_custom_call.1} parent=1 // loop_pre_header
      _
    $region3: #{tpu_custom_call.1} parent=1 // loop_header
      %s28 = sphi 0, %s32
      %p29 = scmp.ge.s32.totalorder %s28, 4
      %s38 = sphi 0, %s40
      %s41 = sphi 0, %s38
      %s42 = sphi 0, %s41
      %s58 = sphi 0, %s42
      %s64 = sphi 0, %s66
      %s67 = sphi 0, %s64
      %s68 = sphi 0, %s67
      %s84 = sphi 0, %s68
      %s88 = sphi 0, %s88
      %s90 = sphi 0, %s88
      %s91 = sphi 0, %s90
      %s105 = sphi 0, %s91
      %s109 = sphi 0, %s109
      %s111 = sphi 0, %s109
      %s112 = sphi 0, %s111
      %s126 = sphi 0, %s112
      %s130 = sphi 0, %s130
      %s132 = sphi 0, %s130
      %s133 = sphi 0, %s132
      %s147 = sphi 0, %s133
      %s151 = sphi 0, %s151
      %s153 = sphi 0, %s151
      %s154 = sphi 0, %s153
      %s168 = sphi 0, %s154
      %s172 = sphi 0, %s172
      %s174 = sphi 0, %s172
      %s175 = sphi 0, %s174
      %s189 = sphi 0, %s175
      %s193 = sphi 0, %s193
      %s195 = sphi 0, %s193
      %s196 = sphi 0, %s195
      %s210 = sphi 0, %s196
      %s214 = sphi 0, %s214
      %s216 = sphi 0, %s214
      %s217 = sphi 0, %s216
      %s231 = sphi 0, %s217
      %s235 = sphi 0, %s235
      %s237 = sphi 0, %s235
      %s238 = sphi 0, %s237
      %s252 = sphi 0, %s238
      %s256 = sphi 0, %s256
      %s258 = sphi 0, %s256
      %s259 = sphi 0, %s258
      %s273 = sphi 0, %s259
      %s279 = sphi 0, %s281
      %s282 = sphi 0, %s279
      %s283 = sphi 0, %s282
      %s299 = sphi 0, %s283
    $region4: #{tpu_custom_call.1} parent=1 // loop_header_branch
      %31 = sbr.rel (%p29) target = $region8
    $region5: #{tpu_custom_call.1} parent=1 // loop_body
      %s33 = ssub.s32 %s28, 1
      %s34 = ssub.s32 %s28, 2
      %s35 = sadd.s32 %s28, 1
      %s36 = ssub.s32 %s28, %s35
      %p37 = scmp.eq.s32.totalorder %s36, 0
      %s39 = sadd.s32 %s38, 1
      %s40 = scalar_select %p37, %s38, %s39
      %p43 = pneg %p37
      %p44 = scmp.eq.s32.totalorder %s28, 1
      %p45 = por %p43, %p44
      %p46 = scmp.ne.s32.totalorder %s38, %s41
      %p47 = scmp.eq.s32.totalorder %s28, 0
      %p48 = por %p46, %p47
      %p49 = scmp.ne.s32.totalorder %s38, %s41
      %p50 = scmp.eq.s32.totalorder %s33, 1
      %p51 = por %p49, %p50
      %p52 = scmp.ne.s32.totalorder %s41, %s42
      %p53 = scmp.eq.s32.totalorder %s33, 0
      %p54 = por %p52, %p53
      %p55 = scmp.ne.s32.totalorder %s41, %s42
      %p56 = scmp.eq.s32.totalorder %s34, 1
      %p57 = por %p55, %p56
      %p59 = scmp.ne.s32.totalorder %s42, %s58
      %p60 = scmp.eq.s32.totalorder %s34, 0
      %p61 = por %p59, %p60
      %s62 = ssub.s32 %s28, %s35
      %p63 = scmp.eq.s32.totalorder %s62, 0
      %s65 = sadd.s32 %s64, 1
      %s66 = scalar_select %p63, %s64, %s65
      %p69 = pneg %p63
      %p70 = scmp.eq.s32.totalorder %s28, 1
      %p71 = por %p69, %p70
      %p72 = scmp.ne.s32.totalorder %s64, %s67
      %p73 = scmp.eq.s32.totalorder %s28, 0
      %p74 = por %p72, %p73
      %p75 = scmp.ne.s32.totalorder %s64, %s67
      %p76 = scmp.eq.s32.totalorder %s33, 1
      %p77 = por %p75, %p76
      %p78 = scmp.ne.s32.totalorder %s67, %s68
      %p79 = scmp.eq.s32.totalorder %s33, 0
      %p80 = por %p78, %p79
      %p81 = scmp.ne.s32.totalorder %s67, %s68
      %p82 = scmp.eq.s32.totalorder %s34, 1
      %p83 = por %p81, %p82
      %p85 = scmp.ne.s32.totalorder %s68, %s84
      %p86 = scmp.eq.s32.totalorder %s34, 0
      %p87 = por %p85, %p86
      %s89 = sadd.s32 %s88, 1
      %p92 = scmp.eq.s32.totalorder %s28, 1
      %p93 = scmp.ne.s32.totalorder %s88, %s90
      %p94 = scmp.eq.s32.totalorder %s28, 0
      %p95 = por %p93, %p94
      %p96 = scmp.ne.s32.totalorder %s88, %s90
      %p97 = scmp.eq.s32.totalorder %s33, 1
      %p98 = por %p96, %p97
      %p99 = scmp.ne.s32.totalorder %s90, %s91
      %p100 = scmp.eq.s32.totalorder %s33, 0
      %p101 = por %p99, %p100
      %p102 = scmp.ne.s32.totalorder %s90, %s91
      %p103 = scmp.eq.s32.totalorder %s34, 1
      %p104 = por %p102, %p103
      %p106 = scmp.ne.s32.totalorder %s91, %s105
      %p107 = scmp.eq.s32.totalorder %s34, 0
      %p108 = por %p106, %p107
      %s110 = sadd.s32 %s109, 1
      %p113 = scmp.eq.s32.totalorder %s28, 1
      %p114 = scmp.ne.s32.totalorder %s109, %s111
      %p115 = scmp.eq.s32.totalorder %s28, 0
      %p116 = por %p114, %p115
      %p117 = scmp.ne.s32.totalorder %s109, %s111
      %p118 = scmp.eq.s32.totalorder %s33, 1
      %p119 = por %p117, %p118
      %p120 = scmp.ne.s32.totalorder %s111, %s112
      %p121 = scmp.eq.s32.totalorder %s33, 0
      %p122 = por %p120, %p121
      %p123 = scmp.ne.s32.totalorder %s111, %s112
      %p124 = scmp.eq.s32.totalorder %s34, 1
      %p125 = por %p123, %p124
      %p127 = scmp.ne.s32.totalorder %s112, %s126
      %p128 = scmp.eq.s32.totalorder %s34, 0
      %p129 = por %p127, %p128
      %s131 = sadd.s32 %s130, 1
      %p134 = scmp.eq.s32.totalorder %s28, 1
      %p135 = scmp.ne.s32.totalorder %s130, %s132
      %p136 = scmp.eq.s32.totalorder %s28, 0
      %p137 = por %p135, %p136
      %p138 = scmp.ne.s32.totalorder %s130, %s132
      %p139 = scmp.eq.s32.totalorder %s33, 1
      %p140 = por %p138, %p139
      %p141 = scmp.ne.s32.totalorder %s132, %s133
      %p142 = scmp.eq.s32.totalorder %s33, 0
      %p143 = por %p141, %p142
      %p144 = scmp.ne.s32.totalorder %s132, %s133
      %p145 = scmp.eq.s32.totalorder %s34, 1
      %p146 = por %p144, %p145
      %p148 = scmp.ne.s32.totalorder %s133, %s147
      %p149 = scmp.eq.s32.totalorder %s34, 0
      %p150 = por %p148, %p149
      %s152 = sadd.s32 %s151, 1
      %p155 = scmp.eq.s32.totalorder %s28, 1
      %p156 = scmp.ne.s32.totalorder %s151, %s153
      %p157 = scmp.eq.s32.totalorder %s28, 0
      %p158 = por %p156, %p157
      %p159 = scmp.ne.s32.totalorder %s151, %s153
      %p160 = scmp.eq.s32.totalorder %s33, 1
      %p161 = por %p159, %p160
      %p162 = scmp.ne.s32.totalorder %s153, %s154
      %p163 = scmp.eq.s32.totalorder %s33, 0
      %p164 = por %p162, %p163
      %p165 = scmp.ne.s32.totalorder %s153, %s154
      %p166 = scmp.eq.s32.totalorder %s34, 1
      %p167 = por %p165, %p166
      %p169 = scmp.ne.s32.totalorder %s154, %s168
      %p170 = scmp.eq.s32.totalorder %s34, 0
      %p171 = por %p169, %p170
      %s173 = sadd.s32 %s172, 1
      %p176 = scmp.eq.s32.totalorder %s28, 1
      %p177 = scmp.ne.s32.totalorder %s172, %s174
      %p178 = scmp.eq.s32.totalorder %s28, 0
      %p179 = por %p177, %p178
      %p180 = scmp.ne.s32.totalorder %s172, %s174
      %p181 = scmp.eq.s32.totalorder %s33, 1
      %p182 = por %p180, %p181
      %p183 = scmp.ne.s32.totalorder %s174, %s175
      %p184 = scmp.eq.s32.totalorder %s33, 0
      %p185 = por %p183, %p184
      %p186 = scmp.ne.s32.totalorder %s174, %s175
      %p187 = scmp.eq.s32.totalorder %s34, 1
      %p188 = por %p186, %p187
      %p190 = scmp.ne.s32.totalorder %s175, %s189
      %p191 = scmp.eq.s32.totalorder %s34, 0
      %p192 = por %p190, %p191
      %s194 = sadd.s32 %s193, 1
      %p197 = scmp.eq.s32.totalorder %s28, 1
      %p198 = scmp.ne.s32.totalorder %s193, %s195
      %p199 = scmp.eq.s32.totalorder %s28, 0
      %p200 = por %p198, %p199
      %p201 = scmp.ne.s32.totalorder %s193, %s195
      %p202 = scmp.eq.s32.totalorder %s33, 1
      %p203 = por %p201, %p202
      %p204 = scmp.ne.s32.totalorder %s195, %s196
      %p205 = scmp.eq.s32.totalorder %s33, 0
      %p206 = por %p204, %p205
      %p207 = scmp.ne.s32.totalorder %s195, %s196
      %p208 = scmp.eq.s32.totalorder %s34, 1
      %p209 = por %p207, %p208
      %p211 = scmp.ne.s32.totalorder %s196, %s210
      %p212 = scmp.eq.s32.totalorder %s34, 0
      %p213 = por %p211, %p212
      %s215 = sadd.s32 %s214, 1
      %p218 = scmp.eq.s32.totalorder %s28, 1
      %p219 = scmp.ne.s32.totalorder %s214, %s216
      %p220 = scmp.eq.s32.totalorder %s28, 0
      %p221 = por %p219, %p220
      %p222 = scmp.ne.s32.totalorder %s214, %s216
      %p223 = scmp.eq.s32.totalorder %s33, 1
      %p224 = por %p222, %p223
      %p225 = scmp.ne.s32.totalorder %s216, %s217
      %p226 = scmp.eq.s32.totalorder %s33, 0
      %p227 = por %p225, %p226
      %p228 = scmp.ne.s32.totalorder %s216, %s217
      %p229 = scmp.eq.s32.totalorder %s34, 1
      %p230 = por %p228, %p229
      %p232 = scmp.ne.s32.totalorder %s217, %s231
      %p233 = scmp.eq.s32.totalorder %s34, 0
      %p234 = por %p232, %p233
      %s236 = sadd.s32 %s235, 1
      %p239 = scmp.eq.s32.totalorder %s28, 1
      %p240 = scmp.ne.s32.totalorder %s235, %s237
      %p241 = scmp.eq.s32.totalorder %s28, 0
      %p242 = por %p240, %p241
      %p243 = scmp.ne.s32.totalorder %s235, %s237
      %p244 = scmp.eq.s32.totalorder %s33, 1
      %p245 = por %p243, %p244
      %p246 = scmp.ne.s32.totalorder %s237, %s238
      %p247 = scmp.eq.s32.totalorder %s33, 0
      %p248 = por %p246, %p247
      %p249 = scmp.ne.s32.totalorder %s237, %s238
      %p250 = scmp.eq.s32.totalorder %s34, 1
      %p251 = por %p249, %p250
      %p253 = scmp.ne.s32.totalorder %s238, %s252
      %p254 = scmp.eq.s32.totalorder %s34, 0
      %p255 = por %p253, %p254
      %s257 = sadd.s32 %s256, 1
      %p260 = scmp.eq.s32.totalorder %s28, 1
      %p261 = scmp.ne.s32.totalorder %s256, %s258
      %p262 = scmp.eq.s32.totalorder %s28, 0
      %p263 = por %p261, %p262
      %p264 = scmp.ne.s32.totalorder %s256, %s258
      %p265 = scmp.eq.s32.totalorder %s33, 1
      %p266 = por %p264, %p265
      %p267 = scmp.ne.s32.totalorder %s258, %s259
      %p268 = scmp.eq.s32.totalorder %s33, 0
      %p269 = por %p267, %p268
      %p270 = scmp.ne.s32.totalorder %s258, %s259
      %p271 = scmp.eq.s32.totalorder %s34, 1
      %p272 = por %p270, %p271
      %p274 = scmp.ne.s32.totalorder %s259, %s273
      %p275 = scmp.eq.s32.totalorder %s34, 0
      %p276 = por %p274, %p275
      %s277 = ssub.s32 %s28, %s35
      %p278 = scmp.eq.s32.totalorder %s277, 0
      %s280 = sadd.s32 %s279, 1
      %s281 = scalar_select %p278, %s279, %s280
      %p284 = pneg %p278
      %p285 = scmp.eq.s32.totalorder %s28, 1
      %p286 = por %p284, %p285
      %p287 = scmp.ne.s32.totalorder %s279, %s282
      %p288 = scmp.eq.s32.totalorder %s28, 0
      %p289 = por %p287, %p288
      %p290 = scmp.ne.s32.totalorder %s279, %s282
      %p291 = scmp.eq.s32.totalorder %s33, 1
      %p292 = por %p290, %p291
      %p293 = scmp.ne.s32.totalorder %s282, %s283
      %p294 = scmp.eq.s32.totalorder %s33, 0
      %p295 = por %p293, %p294
      %p296 = scmp.ne.s32.totalorder %s282, %s283
      %p297 = scmp.eq.s32.totalorder %s34, 1
      %p298 = por %p296, %p297
      %p300 = scmp.ne.s32.totalorder %s283, %s299
      %p301 = scmp.eq.s32.totalorder %s34, 0
      %p302 = por %p300, %p301
      %p303 = scmp.le.s32.totalorder 1, %s28
      %p304 = scmp.lt.s32.totalorder %s28, 3
      %p305 = pnand %p303, %p304
      %p306 = pneg %p305
      // Predicated region
      $region9: #{tpu_custom_call.1} parent=5 // pred_check
        _
      $region10: #{tpu_custom_call.1} parent=5 // pred_check_branch
        %308 = sbr.rel (%p305) target = $region12
      $region11: #{tpu_custom_call.1} parent=5 // pred_region
        %s309 = ssub.s32 %s28, 1
        // Predicated region
        $region13: #{tpu_custom_call.1} parent=11 // pred_check
          %p310 = pneg %p101
        $region14: #{tpu_custom_call.1} parent=11 // pred_check_branch
          %312 = sbr.rel (%p310) target = $region16
        $region15: #{tpu_custom_call.1} parent=11 // pred_region
          %s314 = ssub.s32 16384, 16384
          %315 = vsyncadd [#allocation6], %s314
          %s316 = sshll.u32 [#allocation5], 4
          %s317 = int_to_ptr.vmem [resolvable:$true] %s316
          %322 = dma.hbm_to_vmem [thread:$0]  %s2, 16384, %s317, [#allocation6], 512, 512, 32
        $region16: #{tpu_custom_call.1} parent=11 // pred_fallthru
          _
        // Predicated region
        $region17: #{tpu_custom_call.1} parent=11 // pred_check
          %p323 = pneg %p122
        $region18: #{tpu_custom_call.1} parent=11 // pred_check_branch
          %325 = sbr.rel (%p323) target = $region20
        $region19: #{tpu_custom_call.1} parent=11 // pred_region
          %s327 = ssub.s32 6144, 6144
          %328 = vsyncadd [#allocation6], %s327
          %s329 = sshll.u32 [#allocation7], 4
          %s330 = int_to_ptr.vmem [resolvable:$true] %s329
          %335 = dma.hbm_to_vmem [thread:$0]  %s3, 6144, %s330, [#allocation6], 512, 512, 32
        $region20: #{tpu_custom_call.1} parent=11 // pred_fallthru
          _
        // Predicated region
        $region21: #{tpu_custom_call.1} parent=11 // pred_check
          %p336 = pneg %p143
        $region22: #{tpu_custom_call.1} parent=11 // pred_check_branch
          %338 = sbr.rel (%p336) target = $region24
        $region23: #{tpu_custom_call.1} parent=11 // pred_region
          %s340 = ssub.s32 128, 128
          %341 = vsyncadd [#allocation9], %s340
          %s343 = sshll.u32 [#allocation8], 4
          %s344 = int_to_ptr.vmem [resolvable:$true] %s343
          %346 = dma.hbm_to_vmem [thread:$0]  %s4, 128, %s344, [#allocation9]
        $region24: #{tpu_custom_call.1} parent=11 // pred_fallthru
          _
        // Predicated region
        $region25: #{tpu_custom_call.1} parent=11 // pred_check
          %p347 = pneg %p164
        $region26: #{tpu_custom_call.1} parent=11 // pred_check_branch
          %349 = sbr.rel (%p347) target = $region28
        $region27: #{tpu_custom_call.1} parent=11 // pred_region
          %s351 = ssub.s32 65536, 65536
          %352 = vsyncadd [#allocation9], %s351
          %s353 = sshll.u32 [#allocation10], 4
          %s354 = int_to_ptr.vmem [resolvable:$true] %s353
          %359 = dma.hbm_to_vmem [thread:$0]  %s5, 65536, %s354, [#allocation9], 512, 512, 32
        $region28: #{tpu_custom_call.1} parent=11 // pred_fallthru
          _
        // Predicated region
        $region29: #{tpu_custom_call.1} parent=11 // pred_check
          %p360 = pneg %p185
        $region30: #{tpu_custom_call.1} parent=11 // pred_check_branch
          %362 = sbr.rel (%p360) target = $region32
        $region31: #{tpu_custom_call.1} parent=11 // pred_region
          %s364 = ssub.s32 128, 128
          %365 = vsyncadd [#allocation12], %s364
          %s367 = sshll.u32 [#allocation11], 4
          %s368 = int_to_ptr.vmem [resolvable:$true] %s367
          %370 = dma.hbm_to_vmem [thread:$0]  %s6, 128, %s368, [#allocation12]
        $region32: #{tpu_custom_call.1} parent=11 // pred_fallthru
          _
        // Predicated region
        $region33: #{tpu_custom_call.1} parent=11 // pred_check
          %p371 = pneg %p206
        $region34: #{tpu_custom_call.1} parent=11 // pred_check_branch
          %373 = sbr.rel (%p371) target = $region36
        $region35: #{tpu_custom_call.1} parent=11 // pred_region
          %s375 = ssub.s32 16384, 16384
          %376 = vsyncadd [#allocation12], %s375
          %s377 = sshll.u32 [#allocation13], 4
          %s378 = int_to_ptr.vmem [resolvable:$true] %s377
          %383 = dma.hbm_to_vmem [thread:$0]  %s7, 16384, %s378, [#allocation12], 128, 128, 8
        $region36: #{tpu_custom_call.1} parent=11 // pred_fallthru
          _
        // Predicated region
        $region37: #{tpu_custom_call.1} parent=11 // pred_check
          %p384 = pneg %p227
        $region38: #{tpu_custom_call.1} parent=11 // pred_check_branch
          %386 = sbr.rel (%p384) target = $region40
        $region39: #{tpu_custom_call.1} parent=11 // pred_region
          %s388 = ssub.s32 32, 32
          %389 = vsyncadd [#allocation15], %s388
          %s391 = sshll.u32 [#allocation14], 4
          %s392 = int_to_ptr.vmem [resolvable:$true] %s391
          %394 = dma.hbm_to_vmem [thread:$0]  %s8, 32, %s392, [#allocation15]
        $region40: #{tpu_custom_call.1} parent=11 // pred_fallthru
          _
        // Predicated region
        $region41: #{tpu_custom_call.1} parent=11 // pred_check
          %p395 = pneg %p248
        $region42: #{tpu_custom_call.1} parent=11 // pred_check_branch
          %397 = sbr.rel (%p395) target = $region44
        $region43: #{tpu_custom_call.1} parent=11 // pred_region
          %s399 = ssub.s32 4096, 4096
          %400 = vsyncadd [#allocation15], %s399
          %s401 = sshll.u32 [#allocation16], 4
          %s402 = int_to_ptr.vmem [resolvable:$true] %s401
          %407 = dma.hbm_to_vmem [thread:$0]  %s9, 4096, %s402, [#allocation15], 128, 128, 8
        $region44: #{tpu_custom_call.1} parent=11 // pred_fallthru
          _
        // Predicated region
        $region45: #{tpu_custom_call.1} parent=11 // pred_check
          %p408 = pneg %p269
        $region46: #{tpu_custom_call.1} parent=11 // pred_check_branch
          %410 = sbr.rel (%p408) target = $region48
        $region47: #{tpu_custom_call.1} parent=11 // pred_region
          %s412 = ssub.s32 32, 32
          %413 = vsyncadd [#allocation18], %s412
          %s415 = sshll.u32 [#allocation17], 4
          %s416 = int_to_ptr.vmem [resolvable:$true] %s415
          %418 = dma.hbm_to_vmem [thread:$0]  %s10, 32, %s416, [#allocation18]
        $region48: #{tpu_custom_call.1} parent=11 // pred_fallthru
          _
      $region12: #{tpu_custom_call.1} parent=5 // pred_fallthru
        _
      %p419 = scmp.lt.s32.totalorder %s28, 2
      // Predicated region
      $region49: #{tpu_custom_call.1} parent=5 // pred_check
        %p420 = pneg %p419
      $region50: #{tpu_custom_call.1} parent=5 // pred_check_branch
        %422 = sbr.rel (%p420) target = $region52
      $region51: #{tpu_custom_call.1} parent=5 // pred_region
        // Predicated region
        $region53: #{tpu_custom_call.1} parent=51 // pred_check
          %p423 = pneg %p48
        $region54: #{tpu_custom_call.1} parent=51 // pred_check_branch
          %425 = sbr.rel (%p423) target = $region56
        $region55: #{tpu_custom_call.1} parent=51 // pred_region
          %s426 = sand.u32 %s38, 1
          %s427 = scalar_lea.sflag [#allocation3], %s426
          %s428 = sand.u32 %s38, 1
          %s429 = smul.addr %s428, 256
          %s430 = scalar_lea.vmem [#allocation2], %s429
          %s431 = smul.u32 16, %s28
          %s433 = ssub.s32 4096, 4096
          %434 = vsyncadd %s427, %s433
          %s435 = smul.addr %s431, 2
          %s436 = smul.addr %s435, 128
          %s437 = scalar_lea.hbm %s0, %s436
          %s438 = sshll.u32 %s430, 4
          %s439 = int_to_ptr.vmem [resolvable:$true] %s438
          %444 = dma.hbm_to_vmem [thread:$0]  %s437, 4096, %s439, %s427, 256, 256, 16
        $region56: #{tpu_custom_call.1} parent=51 // pred_fallthru
          _
        // Predicated region
        $region57: #{tpu_custom_call.1} parent=51 // pred_check
          %p445 = pneg %p74
        $region58: #{tpu_custom_call.1} parent=51 // pred_check_branch
          %447 = sbr.rel (%p445) target = $region60
        $region59: #{tpu_custom_call.1} parent=51 // pred_region
          %s448 = smul.u32 16, %s28
          %p449 = scmp.lt.s32.totalorder %s448, 31
          %s450 = scalar_select %p449, %s448, 31
          %s451 = smul.addr %s450, 8
          %s452 = scalar_lea.vmem %s1, %s451
          %s453 = smul.u32 16, %s28
        $region60: #{tpu_custom_call.1} parent=51 // pred_fallthru
          _
      $region52: #{tpu_custom_call.1} parent=5 // pred_fallthru
        _
      %p454 = scmp.le.s32.totalorder 1, %s28
      %p455 = scmp.lt.s32.totalorder %s28, 3
      %p456 = pnand %p454, %p455
      %p457 = pneg %p456
      // Predicated region
      $region61: #{tpu_custom_call.1} parent=5 // pred_check
        _
      $region62: #{tpu_custom_call.1} parent=5 // pred_check_branch
        %459 = sbr.rel (%p456) target = $region64
      $region63: #{tpu_custom_call.1} parent=5 // pred_region
        %s460 = ssub.s32 %s28, 1
        %s461 = sand.u32 %s41, 1
        %s462 = scalar_lea.sflag [#allocation3], %s461
        %s463 = sand.u32 %s41, 1
        %s464 = smul.addr %s463, 256
        %s465 = scalar_lea.vmem [#allocation2], %s464
        // Predicated region
        $region65: #{tpu_custom_call.1} parent=63 // pred_check
          %p466 = pneg %p54
        $region66: #{tpu_custom_call.1} parent=63 // pred_check_branch
          %468 = sbr.rel (%p466) target = $region68
        $region67: #{tpu_custom_call.1} parent=63 // pred_region
          %469 = dma.done %s462, 4096
        $region68: #{tpu_custom_call.1} parent=63 // pred_fallthru
          _
        // Predicated region
        $region69: #{tpu_custom_call.1} parent=63 // pred_check
          %p470 = pneg %p101
        $region70: #{tpu_custom_call.1} parent=63 // pred_check_branch
          %472 = sbr.rel (%p470) target = $region72
        $region71: #{tpu_custom_call.1} parent=63 // pred_region
          %473 = dma.done [#allocation6], 16384
        $region72: #{tpu_custom_call.1} parent=63 // pred_fallthru
          _
        // Predicated region
        $region73: #{tpu_custom_call.1} parent=63 // pred_check
          %p474 = pneg %p122
        $region74: #{tpu_custom_call.1} parent=63 // pred_check_branch
          %476 = sbr.rel (%p474) target = $region76
        $region75: #{tpu_custom_call.1} parent=63 // pred_region
          %477 = dma.done [#allocation6], 6144
        $region76: #{tpu_custom_call.1} parent=63 // pred_fallthru
          _
        // Predicated region
        $region77: #{tpu_custom_call.1} parent=63 // pred_check
          %p478 = pneg %p143
        $region78: #{tpu_custom_call.1} parent=63 // pred_check_branch
          %480 = sbr.rel (%p478) target = $region80
        $region79: #{tpu_custom_call.1} parent=63 // pred_region
          %481 = dma.done [#allocation9], 128
        $region80: #{tpu_custom_call.1} parent=63 // pred_fallthru
          _
        // Predicated region
        $region81: #{tpu_custom_call.1} parent=63 // pred_check
          %p482 = pneg %p164
        $region82: #{tpu_custom_call.1} parent=63 // pred_check_branch
          %484 = sbr.rel (%p482) target = $region84
        $region83: #{tpu_custom_call.1} parent=63 // pred_region
          %485 = dma.done [#allocation9], 65536
        $region84: #{tpu_custom_call.1} parent=63 // pred_fallthru
          _
        // Predicated region
        $region85: #{tpu_custom_call.1} parent=63 // pred_check
          %p486 = pneg %p185
        $region86: #{tpu_custom_call.1} parent=63 // pred_check_branch
          %488 = sbr.rel (%p486) target = $region88
        $region87: #{tpu_custom_call.1} parent=63 // pred_region
          %489 = dma.done [#allocation12], 128
        $region88: #{tpu_custom_call.1} parent=63 // pred_fallthru
          _
        // Predicated region
        $region89: #{tpu_custom_call.1} parent=63 // pred_check
          %p490 = pneg %p206
        $region90: #{tpu_custom_call.1} parent=63 // pred_check_branch
          %492 = sbr.rel (%p490) target = $region92
        $region91: #{tpu_custom_call.1} parent=63 // pred_region
          %493 = dma.done [#allocation12], 16384
        $region92: #{tpu_custom_call.1} parent=63 // pred_fallthru
          _
        // Predicated region
        $region93: #{tpu_custom_call.1} parent=63 // pred_check
          %p494 = pneg %p227
        $region94: #{tpu_custom_call.1} parent=63 // pred_check_branch
          %496 = sbr.rel (%p494) target = $region96
        $region95: #{tpu_custom_call.1} parent=63 // pred_region
          %497 = dma.done [#allocation15], 32
        $region96: #{tpu_custom_call.1} parent=63 // pred_fallthru
          _
        // Predicated region
        $region97: #{tpu_custom_call.1} parent=63 // pred_check
          %p498 = pneg %p248
        $region98: #{tpu_custom_call.1} parent=63 // pred_check_branch
          %500 = sbr.rel (%p498) target = $region100
        $region99: #{tpu_custom_call.1} parent=63 // pred_region
          %501 = dma.done [#allocation15], 4096
        $region100: #{tpu_custom_call.1} parent=63 // pred_fallthru
          _
        // Predicated region
        $region101: #{tpu_custom_call.1} parent=63 // pred_check
          %p502 = pneg %p269
        $region102: #{tpu_custom_call.1} parent=63 // pred_check_branch
          %504 = sbr.rel (%p502) target = $region104
        $region103: #{tpu_custom_call.1} parent=63 // pred_region
          %505 = dma.done [#allocation18], 32
        $region104: #{tpu_custom_call.1} parent=63 // pred_fallthru
          _
        %s506 = sand.u32 %s41, 1
        %s507 = scalar_lea.sflag [#allocation3], %s506
        %s508 = sand.u32 %s41, 1
        %s509 = smul.addr %s508, 256
        %s510 = scalar_lea.vmem [#allocation2], %s509
        %p511 = pneg %p54
        %p512 = pneg %p51
        %s513 = smul.u32 16, %s33
        %p514 = scmp.lt.s32.totalorder %s513, 31
        %s515 = scalar_select %p514, %s513, 31
        %s516 = smul.addr %s515, 8
        %s517 = scalar_lea.vmem %s1, %s516
        %p518 = pneg %p80
        %p519 = pneg %p77
        %p520 = pneg %p101
        %p521 = pneg %p98
        %p522 = pneg %p122
        %p523 = pneg %p119
        %p524 = pneg %p143
        %p525 = pneg %p140
        %p526 = pneg %p164
        %p527 = pneg %p161
        %p528 = pneg %p185
        %p529 = pneg %p182
        %p530 = pneg %p206
        %p531 = pneg %p203
        %p532 = pneg %p227
        %p533 = pneg %p224
        %p534 = pneg %p248
        %p535 = pneg %p245
        %p536 = pneg %p269
        %p537 = pneg %p266
        %p538 = pneg %p295
        %p539 = pneg %p292
        %s540 = sand.u32 %s282, 1
        %s541 = scalar_lea.sflag [#allocation4], %s540
        %s542 = sand.u32 %s282, 1
        %s543 = smul.addr %s542, 256
        %s544 = scalar_lea.vmem [#allocation19], %s543
        %s545 = smul.u32 16, %s33
        %s546 = smul.u32 16, %s33
        %p547 = scmp.lt.s32.totalorder %s546, 31
        %s548 = scalar_select %p547, %s546, 31
        %s549 = smul.addr %s548, 8
        %s550 = scalar_lea.vmem %s1, %s549
        %s551 = smul.u32 16, %s33
        %s552 = smul.u32 16, %s33
        %v554 = vld [vmem:[%s465] sm:$0xff]
        %v555 = vld [vmem:[%s465 + $0x8] sm:$0xff]
        %v556 = vld [vmem:[%s465 + $0x10] sm:$0xff]
        %v557 = vld [vmem:[%s465 + $0x18] sm:$0xff]
        %v558 = vld [vmem:[%s465 + $0x20] sm:$0xff]
        %v559 = vld [vmem:[%s465 + $0x28] sm:$0xff]
        %v560 = vld [vmem:[%s465 + $0x30] sm:$0xff]
        %v561 = vld [vmem:[%s465 + $0x38] sm:$0xff]
        %v562 = vld [vmem:[%s465 + $0x40] sm:$0xff]
        %v563 = vld [vmem:[%s465 + $0x48] sm:$0xff]
        %v564 = vld [vmem:[%s465 + $0x50] sm:$0xff]
        %v565 = vld [vmem:[%s465 + $0x58] sm:$0xff]
        %v566 = vld [vmem:[%s465 + $0x60] sm:$0xff]
        %v567 = vld [vmem:[%s465 + $0x68] sm:$0xff]
        %v568 = vld [vmem:[%s465 + $0x70] sm:$0xff]
        %v569 = vld [vmem:[%s465 + $0x78] sm:$0xff]
        %v570 = vld [vmem:[%s465 + $0x80] sm:$0xff]
        %v571 = vld [vmem:[%s465 + $0x88] sm:$0xff]
        %v572 = vld [vmem:[%s465 + $0x90] sm:$0xff]
        %v573 = vld [vmem:[%s465 + $0x98] sm:$0xff]
        %v574 = vld [vmem:[%s465 + $0xa0] sm:$0xff]
        %v575 = vld [vmem:[%s465 + $0xa8] sm:$0xff]
        %v576 = vld [vmem:[%s465 + $0xb0] sm:$0xff]
        %v577 = vld [vmem:[%s465 + $0xb8] sm:$0xff]
        %v578 = vld [vmem:[%s465 + $0xc0] sm:$0xff]
        %v579 = vld [vmem:[%s465 + $0xc8] sm:$0xff]
        %v580 = vld [vmem:[%s465 + $0xd0] sm:$0xff]
        %v581 = vld [vmem:[%s465 + $0xd8] sm:$0xff]
        %v582 = vld [vmem:[%s465 + $0xe0] sm:$0xff]
        %v583 = vld [vmem:[%s465 + $0xe8] sm:$0xff]
        %v584 = vld [vmem:[%s465 + $0xf0] sm:$0xff]
        %v585 = vld [vmem:[%s465 + $0xf8] sm:$0xff]
        %v586 = vpack.c.bf16 %v556, %v554
        %v587 = vpack.c.bf16 %v557, %v555
        %v588 = vpack.c.bf16 %v560, %v558
        %v589 = vpack.c.bf16 %v561, %v559
        %v590 = vpack.c.bf16 %v564, %v562
        %v591 = vpack.c.bf16 %v565, %v563
        %v592 = vpack.c.bf16 %v568, %v566
        %v593 = vpack.c.bf16 %v569, %v567
        %v594 = vpack.c.bf16 %v572, %v570
        %v595 = vpack.c.bf16 %v573, %v571
        %v596 = vpack.c.bf16 %v576, %v574
        %v597 = vpack.c.bf16 %v577, %v575
        %v598 = vpack.c.bf16 %v580, %v578
        %v599 = vpack.c.bf16 %v581, %v579
        %v600 = vpack.c.bf16 %v584, %v582
        %v601 = vpack.c.bf16 %v585, %v583
        %v602 = vld [vmem:[%s550] sm:$0xff]
        %v603 = vld [vmem:[%s550 + $0x8] sm:$0xff]
        %v604 = vld [vmem:[%s550 + $0x10] sm:$0xff]
        %v605 = vld [vmem:[%s550 + $0x18] sm:$0xff]
        %v606 = vld [vmem:[%s550 + $0x20] sm:$0xff]
        %v607 = vld [vmem:[%s550 + $0x28] sm:$0xff]
        %v608 = vld [vmem:[%s550 + $0x30] sm:$0xff]
        %v609 = vld [vmem:[%s550 + $0x38] sm:$0xff]
        %v610 = vld [vmem:[%s550 + $0x40] sm:$0xff]
        %v611 = vld [vmem:[%s550 + $0x48] sm:$0xff]
        %v612 = vld [vmem:[%s550 + $0x50] sm:$0xff]
        %v613 = vld [vmem:[%s550 + $0x58] sm:$0xff]
        %v614 = vld [vmem:[%s550 + $0x60] sm:$0xff]
        %v615 = vld [vmem:[%s550 + $0x68] sm:$0xff]
        %v616 = vld [vmem:[%s550 + $0x70] sm:$0xff]
        %v617 = vld [vmem:[%s550 + $0x78] sm:$0xff]
        %v618 = vpack.c.bf16 %v603, %v602
        %v619 = vpack.c.bf16 %v605, %v604
        %v620 = vpack.c.bf16 %v607, %v606
        %v621 = vpack.c.bf16 %v609, %v608
        %v622 = vpack.c.bf16 %v611, %v610
        %v623 = vpack.c.bf16 %v613, %v612
        %v624 = vpack.c.bf16 %v615, %v614
        %v625 = vpack.c.bf16 %v617, %v616
        %v626 = vld [vmem:[#allocation5] sm:$0xff]
        %v627 = vld [vmem:[#allocation5 + $0x8] sm:$0xff]
        %v628 = vld [vmem:[#allocation5 + $0x10] sm:$0xff]
        %v629 = vld [vmem:[#allocation5 + $0x18] sm:$0xff]
        %v630 = vld [vmem:[#allocation5 + $0x20] sm:$0xff]
        %v631 = vld [vmem:[#allocation5 + $0x28] sm:$0xff]
        %v632 = vld [vmem:[#allocation5 + $0x30] sm:$0xff]
        %v633 = vld [vmem:[#allocation5 + $0x38] sm:$0xff]
        %v634 = vld [vmem:[#allocation5 + $0x40] sm:$0xff]
        %v635 = vld [vmem:[#allocation5 + $0x48] sm:$0xff]
        %v636 = vld [vmem:[#allocation5 + $0x50] sm:$0xff]
        %v637 = vld [vmem:[#allocation5 + $0x58] sm:$0xff]
        %v638 = vld [vmem:[#allocation5 + $0x60] sm:$0xff]
        %v639 = vld [vmem:[#allocation5 + $0x68] sm:$0xff]
        %v640 = vld [vmem:[#allocation5 + $0x70] sm:$0xff]
        %v641 = vld [vmem:[#allocation5 + $0x78] sm:$0xff]
        %v642 = vld [vmem:[#allocation5 + $0x80] sm:$0xff]
        %v643 = vld [vmem:[#allocation5 + $0x88] sm:$0xff]
        %v644 = vld [vmem:[#allocation5 + $0x90] sm:$0xff]
        %v645 = vld [vmem:[#allocation5 + $0x98] sm:$0xff]
        %v646 = vld [vmem:[#allocation5 + $0xa0] sm:$0xff]
        %v647 = vld [vmem:[#allocation5 + $0xa8] sm:$0xff]
        %v648 = vld [vmem:[#allocation5 + $0xb0] sm:$0xff]
        %v649 = vld [vmem:[#allocation5 + $0xb8] sm:$0xff]
        %v650 = vld [vmem:[#allocation5 + $0xc0] sm:$0xff]
        %v651 = vld [vmem:[#allocation5 + $0xc8] sm:$0xff]
        %v652 = vld [vmem:[#allocation5 + $0xd0] sm:$0xff]
        %v653 = vld [vmem:[#allocation5 + $0xd8] sm:$0xff]
        %v654 = vld [vmem:[#allocation5 + $0xe0] sm:$0xff]
        %v655 = vld [vmem:[#allocation5 + $0xe8] sm:$0xff]
        %v656 = vld [vmem:[#allocation5 + $0xf0] sm:$0xff]
        %v657 = vld [vmem:[#allocation5 + $0xf8] sm:$0xff]
        %v658 = vld [vmem:[#allocation5 + $0x100] sm:$0xff]
        %v659 = vld [vmem:[#allocation5 + $0x108] sm:$0xff]
        %v660 = vld [vmem:[#allocation5 + $0x110] sm:$0xff]
        %v661 = vld [vmem:[#allocation5 + $0x118] sm:$0xff]
        %v662 = vld [vmem:[#allocation5 + $0x120] sm:$0xff]
        %v663 = vld [vmem:[#allocation5 + $0x128] sm:$0xff]
        %v664 = vld [vmem:[#allocation5 + $0x130] sm:$0xff]
        %v665 = vld [vmem:[#allocation5 + $0x138] sm:$0xff]
        %v666 = vld [vmem:[#allocation5 + $0x140] sm:$0xff]
        %v667 = vld [vmem:[#allocation5 + $0x148] sm:$0xff]
        %v668 = vld [vmem:[#allocation5 + $0x150] sm:$0xff]
        %v669 = vld [vmem:[#allocation5 + $0x158] sm:$0xff]
        %v670 = vld [vmem:[#allocation5 + $0x160] sm:$0xff]
        %v671 = vld [vmem:[#allocation5 + $0x168] sm:$0xff]
        %v672 = vld [vmem:[#allocation5 + $0x170] sm:$0xff]
        %v673 = vld [vmem:[#allocation5 + $0x178] sm:$0xff]
        %v674 = vld [vmem:[#allocation5 + $0x180] sm:$0xff]
        %v675 = vld [vmem:[#allocation5 + $0x188] sm:$0xff]
        %v676 = vld [vmem:[#allocation5 + $0x190] sm:$0xff]
        %v677 = vld [vmem:[#allocation5 + $0x198] sm:$0xff]
        %v678 = vld [vmem:[#allocation5 + $0x1a0] sm:$0xff]
        %v679 = vld [vmem:[#allocation5 + $0x1a8] sm:$0xff]
        %v680 = vld [vmem:[#allocation5 + $0x1b0] sm:$0xff]
        %v681 = vld [vmem:[#allocation5 + $0x1b8] sm:$0xff]
        %v682 = vld [vmem:[#allocation5 + $0x1c0] sm:$0xff]
        %v683 = vld [vmem:[#allocation5 + $0x1c8] sm:$0xff]
        %v684 = vld [vmem:[#allocation5 + $0x1d0] sm:$0xff]
        %v685 = vld [vmem:[#allocation5 + $0x1d8] sm:$0xff]
        %v686 = vld [vmem:[#allocation5 + $0x1e0] sm:$0xff]
        %v687 = vld [vmem:[#allocation5 + $0x1e8] sm:$0xff]
        %v688 = vld [vmem:[#allocation5 + $0x1f0] sm:$0xff]
        %v689 = vld [vmem:[#allocation5 + $0x1f8] sm:$0xff]
        %v690 = vld [vmem:[#allocation5 + $0x200] sm:$0xff]
        %v691 = vld [vmem:[#allocation5 + $0x208] sm:$0xff]
        %v692 = vld [vmem:[#allocation5 + $0x210] sm:$0xff]
        %v693 = vld [vmem:[#allocation5 + $0x218] sm:$0xff]
        %v694 = vld [vmem:[#allocation5 + $0x220] sm:$0xff]
        %v695 = vld [vmem:[#allocation5 + $0x228] sm:$0xff]
        %v696 = vld [vmem:[#allocation5 + $0x230] sm:$0xff]
        %v697 = vld [vmem:[#allocation5 + $0x238] sm:$0xff]
        %v698 = vld [vmem:[#allocation5 + $0x240] sm:$0xff]
        %v699 = vld [vmem:[#allocation5 + $0x248] sm:$0xff]
        %v700 = vld [vmem:[#allocation5 + $0x250] sm:$0xff]
        %v701 = vld [vmem:[#allocation5 + $0x258] sm:$0xff]
        %v702 = vld [vmem:[#allocation5 + $0x260] sm:$0xff]
        %v703 = vld [vmem:[#allocation5 + $0x268] sm:$0xff]
        %v704 = vld [vmem:[#allocation5 + $0x270] sm:$0xff]
        %v705 = vld [vmem:[#allocation5 + $0x278] sm:$0xff]
        %v706 = vld [vmem:[#allocation5 + $0x280] sm:$0xff]
        %v707 = vld [vmem:[#allocation5 + $0x288] sm:$0xff]
        %v708 = vld [vmem:[#allocation5 + $0x290] sm:$0xff]
        %v709 = vld [vmem:[#allocation5 + $0x298] sm:$0xff]
        %v710 = vld [vmem:[#allocation5 + $0x2a0] sm:$0xff]
        %v711 = vld [vmem:[#allocation5 + $0x2a8] sm:$0xff]
        %v712 = vld [vmem:[#allocation5 + $0x2b0] sm:$0xff]
        %v713 = vld [vmem:[#allocation5 + $0x2b8] sm:$0xff]
        %v714 = vld [vmem:[#allocation5 + $0x2c0] sm:$0xff]
        %v715 = vld [vmem:[#allocation5 + $0x2c8] sm:$0xff]
        %v716 = vld [vmem:[#allocation5 + $0x2d0] sm:$0xff]
        %v717 = vld [vmem:[#allocation5 + $0x2d8] sm:$0xff]
        %v718 = vld [vmem:[#allocation5 + $0x2e0] sm:$0xff]
        %v719 = vld [vmem:[#allocation5 + $0x2e8] sm:$0xff]
        %v720 = vld [vmem:[#allocation5 + $0x2f0] sm:$0xff]
        %v721 = vld [vmem:[#allocation5 + $0x2f8] sm:$0xff]
        %v722 = vld [vmem:[#allocation5 + $0x300] sm:$0xff]
        %v723 = vld [vmem:[#allocation5 + $0x308] sm:$0xff]
        %v724 = vld [vmem:[#allocation5 + $0x310] sm:$0xff]
        %v725 = vld [vmem:[#allocation5 + $0x318] sm:$0xff]
        %v726 = vld [vmem:[#allocation5 + $0x320] sm:$0xff]
        %v727 = vld [vmem:[#allocation5 + $0x328] sm:$0xff]
        %v728 = vld [vmem:[#allocation5 + $0x330] sm:$0xff]
        %v729 = vld [vmem:[#allocation5 + $0x338] sm:$0xff]
        %v730 = vld [vmem:[#allocation5 + $0x340] sm:$0xff]
        %v731 = vld [vmem:[#allocation5 + $0x348] sm:$0xff]
        %v732 = vld [vmem:[#allocation5 + $0x350] sm:$0xff]
        %v733 = vld [vmem:[#allocation5 + $0x358] sm:$0xff]
        %v734 = vld [vmem:[#allocation5 + $0x360] sm:$0xff]
        %v735 = vld [vmem:[#allocation5 + $0x368] sm:$0xff]
        %v736 = vld [vmem:[#allocation5 + $0x370] sm:$0xff]
        %v737 = vld [vmem:[#allocation5 + $0x378] sm:$0xff]
        %v738 = vld [vmem:[#allocation5 + $0x380] sm:$0xff]
        %v739 = vld [vmem:[#allocation5 + $0x388] sm:$0xff]
        %v740 = vld [vmem:[#allocation5 + $0x390] sm:$0xff]
        %v741 = vld [vmem:[#allocation5 + $0x398] sm:$0xff]
        %v742 = vld [vmem:[#allocation5 + $0x3a0] sm:$0xff]
        %v743 = vld [vmem:[#allocation5 + $0x3a8] sm:$0xff]
        %v744 = vld [vmem:[#allocation5 + $0x3b0] sm:$0xff]
        %v745 = vld [vmem:[#allocation5 + $0x3b8] sm:$0xff]
        %v746 = vld [vmem:[#allocation5 + $0x3c0] sm:$0xff]
        %v747 = vld [vmem:[#allocation5 + $0x3c8] sm:$0xff]
        %v748 = vld [vmem:[#allocation5 + $0x3d0] sm:$0xff]
        %v749 = vld [vmem:[#allocation5 + $0x3d8] sm:$0xff]
        %v750 = vld [vmem:[#allocation5 + $0x3e0] sm:$0xff]
        %v751 = vld [vmem:[#allocation5 + $0x3e8] sm:$0xff]
        %v752 = vld [vmem:[#allocation5 + $0x3f0] sm:$0xff]
        %v753 = vld [vmem:[#allocation5 + $0x3f8] sm:$0xff]
        %v754 = vld [vmem:[#allocation7] sm:$0xff]
        %v755 = vld [vmem:[#allocation7 + $0x8] sm:$0xff]
        %v756 = vld [vmem:[#allocation7 + $0x10] sm:$0xff]
        %v757 = vld [vmem:[#allocation7 + $0x18] sm:$0xff]
        %v758 = vld [vmem:[#allocation7 + $0x20] sm:$0xff]
        %v759 = vld [vmem:[#allocation7 + $0x28] sm:$0xff]
        %v760 = vld [vmem:[#allocation7 + $0x30] sm:$0xff]
        %v761 = vld [vmem:[#allocation7 + $0x38] sm:$0xff]
        %v762 = vld [vmem:[#allocation7 + $0x40] sm:$0xff]
        %v763 = vld [vmem:[#allocation7 + $0x48] sm:$0xff]
        %v764 = vld [vmem:[#allocation7 + $0x50] sm:$0xff]
        %v765 = vld [vmem:[#allocation7 + $0x58] sm:$0xff]
        %v766 = vld [vmem:[#allocation7 + $0x60] sm:$0xff]
        %v767 = vld [vmem:[#allocation7 + $0x68] sm:$0xff]
        %v768 = vld [vmem:[#allocation7 + $0x70] sm:$0xff]
        %v769 = vld [vmem:[#allocation7 + $0x78] sm:$0xff]
        %v770 = vld [vmem:[#allocation7 + $0x80] sm:$0xff]
        %v771 = vld [vmem:[#allocation7 + $0x88] sm:$0xff]
        %v772 = vld [vmem:[#allocation7 + $0x90] sm:$0xff]
        %v773 = vld [vmem:[#allocation7 + $0x98] sm:$0xff]
        %v774 = vld [vmem:[#allocation7 + $0xa0] sm:$0xff]
        %v775 = vld [vmem:[#allocation7 + $0xa8] sm:$0xff]
        %v776 = vld [vmem:[#allocation7 + $0xb0] sm:$0xff]
        %v777 = vld [vmem:[#allocation7 + $0xb8] sm:$0xff]
        %v778 = vld [vmem:[#allocation7 + $0xc0] sm:$0xff]
        %v779 = vld [vmem:[#allocation7 + $0xc8] sm:$0xff]
        %v780 = vld [vmem:[#allocation7 + $0xd0] sm:$0xff]
        %v781 = vld [vmem:[#allocation7 + $0xd8] sm:$0xff]
        %v782 = vld [vmem:[#allocation7 + $0xe0] sm:$0xff]
        %v783 = vld [vmem:[#allocation7 + $0xe8] sm:$0xff]
        %v784 = vld [vmem:[#allocation7 + $0xf0] sm:$0xff]
        %v785 = vld [vmem:[#allocation7 + $0xf8] sm:$0xff]
        %v786 = vld [vmem:[#allocation7 + $0x100] sm:$0xff]
        %v787 = vld [vmem:[#allocation7 + $0x108] sm:$0xff]
        %v788 = vld [vmem:[#allocation7 + $0x110] sm:$0xff]
        %v789 = vld [vmem:[#allocation7 + $0x118] sm:$0xff]
        %v790 = vld [vmem:[#allocation7 + $0x120] sm:$0xff]
        %v791 = vld [vmem:[#allocation7 + $0x128] sm:$0xff]
        %v792 = vld [vmem:[#allocation7 + $0x130] sm:$0xff]
        %v793 = vld [vmem:[#allocation7 + $0x138] sm:$0xff]
        %v794 = vld [vmem:[#allocation7 + $0x140] sm:$0xff]
        %v795 = vld [vmem:[#allocation7 + $0x148] sm:$0xff]
        %v796 = vld [vmem:[#allocation7 + $0x150] sm:$0xff]
        %v797 = vld [vmem:[#allocation7 + $0x158] sm:$0xff]
        %v798 = vld [vmem:[#allocation7 + $0x160] sm:$0xff]
        %v799 = vld [vmem:[#allocation7 + $0x168] sm:$0xff]
        %v800 = vld [vmem:[#allocation7 + $0x170] sm:$0xff]
        %v801 = vld [vmem:[#allocation7 + $0x178] sm:$0xff]
        %v850 = vunpack.c.l.b16 %v754
        %v851 = vunpack.c.h.b16 %v754
        %v852 = vunpack.c.l.b16 %v755
        %v853 = vunpack.c.h.b16 %v755
        %v854 = vunpack.c.l.b16 %v756
        %v855 = vunpack.c.h.b16 %v756
        %v856 = vunpack.c.l.b16 %v757
        %v857 = vunpack.c.h.b16 %v757
        %v858 = vunpack.c.l.b16 %v758
        %v859 = vunpack.c.h.b16 %v758
        %v860 = vunpack.c.l.b16 %v759
        %v861 = vunpack.c.h.b16 %v759
        %v862 = vunpack.c.l.b16 %v760
        %v863 = vunpack.c.h.b16 %v760
        %v864 = vunpack.c.l.b16 %v761
        %v865 = vunpack.c.h.b16 %v761
        %v866 = vunpack.c.l.b16 %v762
        %v867 = vunpack.c.h.b16 %v762
        %v868 = vunpack.c.l.b16 %v763
        %v869 = vunpack.c.h.b16 %v763
        %v870 = vunpack.c.l.b16 %v764
        %v871 = vunpack.c.h.b16 %v764
        %v872 = vunpack.c.l.b16 %v765
        %v873 = vunpack.c.h.b16 %v765
        %v874 = vunpack.c.l.b16 %v766
        %v875 = vunpack.c.h.b16 %v766
        %v876 = vunpack.c.l.b16 %v767
        %v877 = vunpack.c.h.b16 %v767
        %v878 = vunpack.c.l.b16 %v768
        %v879 = vunpack.c.h.b16 %v768
        %v880 = vunpack.c.l.b16 %v769
        %v881 = vunpack.c.h.b16 %v769
        %v882 = vunpack.c.l.b16 %v770
        %v883 = vunpack.c.h.b16 %v770
        %v884 = vunpack.c.l.b16 %v771
        %v885 = vunpack.c.h.b16 %v771
        %v886 = vunpack.c.l.b16 %v772
        %v887 = vunpack.c.h.b16 %v772
        %v888 = vunpack.c.l.b16 %v773
        %v889 = vunpack.c.h.b16 %v773
        %v890 = vunpack.c.l.b16 %v774
        %v891 = vunpack.c.h.b16 %v774
        %v892 = vunpack.c.l.b16 %v775
        %v893 = vunpack.c.h.b16 %v775
        %v894 = vunpack.c.l.b16 %v776
        %v895 = vunpack.c.h.b16 %v776
        %v896 = vunpack.c.l.b16 %v777
        %v897 = vunpack.c.h.b16 %v777
        %v898 = vunpack.c.l.b16 %v778
        %v899 = vunpack.c.h.b16 %v778
        %v900 = vunpack.c.l.b16 %v779
        %v901 = vunpack.c.h.b16 %v779
        %v902 = vunpack.c.l.b16 %v780
        %v903 = vunpack.c.h.b16 %v780
        %v904 = vunpack.c.l.b16 %v781
        %v905 = vunpack.c.h.b16 %v781
        %v906 = vunpack.c.l.b16 %v782
        %v907 = vunpack.c.h.b16 %v782
        %v908 = vunpack.c.l.b16 %v783
        %v909 = vunpack.c.h.b16 %v783
        %v910 = vunpack.c.l.b16 %v784
        %v911 = vunpack.c.h.b16 %v784
        %v912 = vunpack.c.l.b16 %v785
        %v913 = vunpack.c.h.b16 %v785
        %v914 = vunpack.c.l.b16 %v786
        %v915 = vunpack.c.h.b16 %v786
        %v916 = vunpack.c.l.b16 %v787
        %v917 = vunpack.c.h.b16 %v787
        %v918 = vunpack.c.l.b16 %v788
        %v919 = vunpack.c.h.b16 %v788
        %v920 = vunpack.c.l.b16 %v789
        %v921 = vunpack.c.h.b16 %v789
        %v922 = vunpack.c.l.b16 %v790
        %v923 = vunpack.c.h.b16 %v790
        %v924 = vunpack.c.l.b16 %v791
        %v925 = vunpack.c.h.b16 %v791
        %v926 = vunpack.c.l.b16 %v792
        %v927 = vunpack.c.h.b16 %v792
        %v928 = vunpack.c.l.b16 %v793
        %v929 = vunpack.c.h.b16 %v793
        %v930 = vunpack.c.l.b16 %v794
        %v931 = vunpack.c.h.b16 %v794
        %v932 = vunpack.c.l.b16 %v795
        %v933 = vunpack.c.h.b16 %v795
        %v934 = vunpack.c.l.b16 %v796
        %v935 = vunpack.c.h.b16 %v796
        %v936 = vunpack.c.l.b16 %v797
        %v937 = vunpack.c.h.b16 %v797
        %v938 = vunpack.c.l.b16 %v798
        %v939 = vunpack.c.h.b16 %v798
        %v940 = vunpack.c.l.b16 %v799
        %v941 = vunpack.c.h.b16 %v799
        %v942 = vunpack.c.l.b16 %v800
        %v943 = vunpack.c.h.b16 %v800
        %v944 = vunpack.c.l.b16 %v801
        %v945 = vunpack.c.h.b16 %v801
        %v946 = vpack.c.b16 %v858, %v850
        %v947 = vpack.c.b16 %v859, %v851
        %v948 = vpack.c.b16 %v860, %v852
        %v949 = vpack.c.b16 %v861, %v853
        %v950 = vpack.c.b16 %v862, %v854
        %v951 = vpack.c.b16 %v863, %v855
        %v952 = vpack.c.b16 %v864, %v856
        %v953 = vpack.c.b16 %v865, %v857
        %v954 = vpack.c.b16 %v874, %v866
        %v955 = vpack.c.b16 %v875, %v867
        %v956 = vpack.c.b16 %v876, %v868
        %v957 = vpack.c.b16 %v877, %v869
        %v958 = vpack.c.b16 %v878, %v870
        %v959 = vpack.c.b16 %v879, %v871
        %v960 = vpack.c.b16 %v880, %v872
        %v961 = vpack.c.b16 %v881, %v873
        %v962 = vpack.c.b16 %v890, %v882
        %v963 = vpack.c.b16 %v891, %v883
        %v964 = vpack.c.b16 %v892, %v884
        %v965 = vpack.c.b16 %v893, %v885
        %v966 = vpack.c.b16 %v894, %v886
        %v967 = vpack.c.b16 %v895, %v887
        %v968 = vpack.c.b16 %v896, %v888
        %v969 = vpack.c.b16 %v897, %v889
        %v970 = vpack.c.b16 %v906, %v898
        %v971 = vpack.c.b16 %v907, %v899
        %v972 = vpack.c.b16 %v908, %v900
        %v973 = vpack.c.b16 %v909, %v901
        %v974 = vpack.c.b16 %v910, %v902
        %v975 = vpack.c.b16 %v911, %v903
        %v976 = vpack.c.b16 %v912, %v904
        %v977 = vpack.c.b16 %v913, %v905
        %v978 = vpack.c.b16 %v922, %v914
        %v979 = vpack.c.b16 %v923, %v915
        %v980 = vpack.c.b16 %v924, %v916
        %v981 = vpack.c.b16 %v925, %v917
        %v982 = vpack.c.b16 %v926, %v918
        %v983 = vpack.c.b16 %v927, %v919
        %v984 = vpack.c.b16 %v928, %v920
        %v985 = vpack.c.b16 %v929, %v921
        %v986 = vpack.c.b16 %v938, %v930
        %v987 = vpack.c.b16 %v939, %v931
        %v988 = vpack.c.b16 %v940, %v932
        %v989 = vpack.c.b16 %v941, %v933
        %v990 = vpack.c.b16 %v942, %v934
        %v991 = vpack.c.b16 %v943, %v935
        %v992 = vpack.c.b16 %v944, %v936
        %v993 = vpack.c.b16 %v945, %v937
        %vm1042 = vcmask 785408
        %v1044 = vsel %vm1042, %v618, 0
        %v1047 = vsel %vm1042, %v619, 0
        %v1050 = vsel %vm1042, %v620, 0
        %v1053 = vsel %vm1042, %v621, 0
        %v1056 = vsel %vm1042, %v622, 0
        %v1059 = vsel %vm1042, %v623, 0
        %v1062 = vsel %vm1042, %v624, 0
        %v1065 = vsel %vm1042, %v625, 0
        %1067 = vmatprep.subr.bf16.mxu0 0
        %1068 = vmatpush1.bf16.msra.mxu0 0
        %1069 = vmatprep.subr.bf16.mxu0 0
        %1070 = vmatpush1.bf16.msra.mxu0 0
        %1071 = vmatprep.subr.bf16.mxu0 %v987
        %1072 = vmatpush1.bf16.msra.mxu0 %v986
        %1073 = vmatprep.subr.bf16.mxu0 %v979
        %1074 = vmatpush1.bf16.msra.mxu0 %v978
        %1075 = vmatprep.subr.bf16.mxu0 %v971
        %1076 = vmatpush1.bf16.msra.mxu0 %v970
        %1077 = vmatprep.subr.bf16.mxu0 %v963
        %1078 = vmatpush1.bf16.msra.mxu0 %v962
        %1079 = vmatprep.subr.bf16.mxu0 %v955
        %1080 = vmatpush1.bf16.msra.mxu0 %v954
        %1081 = vmatprep.subr.bf16.mxu0 %v947
        %1082 = vmatpush1.bf16.msra.mxu0 %v946
        %1083 = vmatprep.subr.bf16.mxu0 0
        %1084 = vmatpush2.bf16.msra.mxu0 0
        %1085 = vmatprep.subr.bf16.mxu0 0
        %1086 = vmatpush2.bf16.msra.mxu0 0
        %1087 = vmatprep.subr.bf16.mxu0 0
        %1088 = vmatpush2.bf16.msra.mxu0 0
        %1089 = vmatprep.subr.bf16.mxu0 0
        %1090 = vmatpush2.bf16.msra.mxu0 0
        %1091 = vmatprep.subr.bf16.mxu0 0
        %1092 = vmatpush2.bf16.msra.mxu0 0
        %1093 = vmatprep.subr.bf16.mxu0 0
        %1094 = vmatpush2.bf16.msra.mxu0 0
        %1095 = vmatprep.subr.bf16.mxu0 0
        %1096 = vmatpush2.bf16.msra.mxu0 0
        %1097 = vmatprep.subr.bf16.mxu0 0
        %1098 = vmatpush2.bf16.msra.mxu0 0
        %1099 = vmatprep.mubr.bf16.mxu0 0
        %1100 = vmatmul.mubr.bf16.gmra.mxu0 %v1044
        %v1101 = vpop.f32.mrf.mxu0
        %v1102 = vadd.f32 0.0, %v1101
        %v1103 = vpop.f32.mrf.mxu0
        %v1104 = vadd.f32 0.0, %v1103
        %v1105 = vpop.f32.mrf.mxu0
        %v1106 = vadd.f32 0.0, %v1105
        %v1107 = vpop.f32.mrf.mxu0
        %v1108 = vadd.f32 0.0, %v1107
        %1109 = vmatprep.mubr.bf16.mxu0 0
        %1110 = vmatmul.mubr.bf16.gmra.mxu0 %v1047
        %v1111 = vpop.f32.mrf.mxu0
        %v1112 = vadd.f32 0.0, %v1111
        %v1113 = vpop.f32.mrf.mxu0
        %v1114 = vadd.f32 0.0, %v1113
        %v1115 = vpop.f32.mrf.mxu0
        %v1116 = vadd.f32 0.0, %v1115
        %v1117 = vpop.f32.mrf.mxu0
        %v1118 = vadd.f32 0.0, %v1117
        %1119 = vmatprep.mubr.bf16.mxu0 0
        %1120 = vmatmul.mubr.bf16.gmra.mxu0 %v1050
        %v1121 = vpop.f32.mrf.mxu0
        %v1122 = vadd.f32 0.0, %v1121
        %v1123 = vpop.f32.mrf.mxu0
        %v1124 = vadd.f32 0.0, %v1123
        %v1125 = vpop.f32.mrf.mxu0
        %v1126 = vadd.f32 0.0, %v1125
        %v1127 = vpop.f32.mrf.mxu0
        %v1128 = vadd.f32 0.0, %v1127
        %1129 = vmatprep.mubr.bf16.mxu0 0
        %1130 = vmatmul.mubr.bf16.gmra.mxu0 %v1053
        %v1131 = vpop.f32.mrf.mxu0
        %v1132 = vadd.f32 0.0, %v1131
        %v1133 = vpop.f32.mrf.mxu0
        %v1134 = vadd.f32 0.0, %v1133
        %v1135 = vpop.f32.mrf.mxu0
        %v1136 = vadd.f32 0.0, %v1135
        %v1137 = vpop.f32.mrf.mxu0
        %v1138 = vadd.f32 0.0, %v1137
        %1139 = vmatprep.mubr.bf16.mxu0 0
        %1140 = vmatmul.mubr.bf16.gmra.mxu0 %v1056
        %v1141 = vpop.f32.mrf.mxu0
        %v1142 = vadd.f32 0.0, %v1141
        %v1143 = vpop.f32.mrf.mxu0
        %v1144 = vadd.f32 0.0, %v1143
        %v1145 = vpop.f32.mrf.mxu0
        %v1146 = vadd.f32 0.0, %v1145
        %v1147 = vpop.f32.mrf.mxu0
        %v1148 = vadd.f32 0.0, %v1147
        %1149 = vmatprep.mubr.bf16.mxu0 0
        %1150 = vmatmul.mubr.bf16.gmra.mxu0 %v1059
        %v1151 = vpop.f32.mrf.mxu0
        %v1152 = vadd.f32 0.0, %v1151
        %v1153 = vpop.f32.mrf.mxu0
        %v1154 = vadd.f32 0.0, %v1153
        %v1155 = vpop.f32.mrf.mxu0
        %v1156 = vadd.f32 0.0, %v1155
        %v1157 = vpop.f32.mrf.mxu0
        %v1158 = vadd.f32 0.0, %v1157
        %1159 = vmatprep.mubr.bf16.mxu0 0
        %1160 = vmatmul.mubr.bf16.gmra.mxu0 %v1062
        %v1161 = vpop.f32.mrf.mxu0
        %v1162 = vadd.f32 0.0, %v1161
        %v1163 = vpop.f32.mrf.mxu0
        %v1164 = vadd.f32 0.0, %v1163
        %v1165 = vpop.f32.mrf.mxu0
        %v1166 = vadd.f32 0.0, %v1165
        %v1167 = vpop.f32.mrf.mxu0
        %v1168 = vadd.f32 0.0, %v1167
        %1169 = vmatprep.mubr.bf16.mxu0 0
        %1170 = vmatmul.mubr.bf16.gmra.mxu0 %v1065
        %v1171 = vpop.f32.mrf.mxu0
        %v1172 = vadd.f32 0.0, %v1171
        %v1173 = vpop.f32.mrf.mxu0
        %v1174 = vadd.f32 0.0, %v1173
        %v1175 = vpop.f32.mrf.mxu0
        %v1176 = vadd.f32 0.0, %v1175
        %v1177 = vpop.f32.mrf.mxu0
        %v1178 = vadd.f32 0.0, %v1177
        %1179 = vdwg.mxu0
        %1180 = vmatprep.subr.bf16.mxu0 0
        %1181 = vmatpush1.bf16.msra.mxu0 0
        %1182 = vmatprep.subr.bf16.mxu0 0
        %1183 = vmatpush1.bf16.msra.mxu0 0
        %1184 = vmatprep.subr.bf16.mxu0 %v989
        %1185 = vmatpush1.bf16.msra.mxu0 %v988
        %1186 = vmatprep.subr.bf16.mxu0 %v981
        %1187 = vmatpush1.bf16.msra.mxu0 %v980
        %1188 = vmatprep.subr.bf16.mxu0 %v973
        %1189 = vmatpush1.bf16.msra.mxu0 %v972
        %1190 = vmatprep.subr.bf16.mxu0 %v965
        %1191 = vmatpush1.bf16.msra.mxu0 %v964
        %1192 = vmatprep.subr.bf16.mxu0 %v957
        %1193 = vmatpush1.bf16.msra.mxu0 %v956
        %1194 = vmatprep.subr.bf16.mxu0 %v949
        %1195 = vmatpush1.bf16.msra.mxu0 %v948
        %1196 = vmatprep.subr.bf16.mxu0 0
        %1197 = vmatpush2.bf16.msra.mxu0 0
        %1198 = vmatprep.subr.bf16.mxu0 0
        %1199 = vmatpush2.bf16.msra.mxu0 0
        %1200 = vmatprep.subr.bf16.mxu0 0
        %1201 = vmatpush2.bf16.msra.mxu0 0
        %1202 = vmatprep.subr.bf16.mxu0 0
        %1203 = vmatpush2.bf16.msra.mxu0 0
        %1204 = vmatprep.subr.bf16.mxu0 0
        %1205 = vmatpush2.bf16.msra.mxu0 0
        %1206 = vmatprep.subr.bf16.mxu0 0
        %1207 = vmatpush2.bf16.msra.mxu0 0
        %1208 = vmatprep.subr.bf16.mxu0 0
        %1209 = vmatpush2.bf16.msra.mxu0 0
        %1210 = vmatprep.subr.bf16.mxu0 0
        %1211 = vmatpush2.bf16.msra.mxu0 0
        %1212 = vmatprep.mubr.bf16.mxu0 0
        %1213 = vmatmul.mubr.bf16.gmra.mxu0 %v1044
        %v1214 = vpop.f32.mrf.mxu0
        %v1215 = vadd.f32 0.0, %v1214
        %v1216 = vpop.f32.mrf.mxu0
        %v1217 = vadd.f32 0.0, %v1216
        %v1218 = vpop.f32.mrf.mxu0
        %v1219 = vadd.f32 0.0, %v1218
        %v1220 = vpop.f32.mrf.mxu0
        %v1221 = vadd.f32 0.0, %v1220
        %1222 = vmatprep.mubr.bf16.mxu0 0
        %1223 = vmatmul.mubr.bf16.gmra.mxu0 %v1047
        %v1224 = vpop.f32.mrf.mxu0
        %v1225 = vadd.f32 0.0, %v1224
        %v1226 = vpop.f32.mrf.mxu0
        %v1227 = vadd.f32 0.0, %v1226
        %v1228 = vpop.f32.mrf.mxu0
        %v1229 = vadd.f32 0.0, %v1228
        %v1230 = vpop.f32.mrf.mxu0
        %v1231 = vadd.f32 0.0, %v1230
        %1232 = vmatprep.mubr.bf16.mxu0 0
        %1233 = vmatmul.mubr.bf16.gmra.mxu0 %v1050
        %v1234 = vpop.f32.mrf.mxu0
        %v1235 = vadd.f32 0.0, %v1234
        %v1236 = vpop.f32.mrf.mxu0
        %v1237 = vadd.f32 0.0, %v1236
        %v1238 = vpop.f32.mrf.mxu0
        %v1239 = vadd.f32 0.0, %v1238
        %v1240 = vpop.f32.mrf.mxu0
        %v1241 = vadd.f32 0.0, %v1240
        %1242 = vmatprep.mubr.bf16.mxu0 0
        %1243 = vmatmul.mubr.bf16.gmra.mxu0 %v1053
        %v1244 = vpop.f32.mrf.mxu0
        %v1245 = vadd.f32 0.0, %v1244
        %v1246 = vpop.f32.mrf.mxu0
        %v1247 = vadd.f32 0.0, %v1246
        %v1248 = vpop.f32.mrf.mxu0
        %v1249 = vadd.f32 0.0, %v1248
        %v1250 = vpop.f32.mrf.mxu0
        %v1251 = vadd.f32 0.0, %v1250
        %1252 = vmatprep.mubr.bf16.mxu0 0
        %1253 = vmatmul.mubr.bf16.gmra.mxu0 %v1056
        %v1254 = vpop.f32.mrf.mxu0
        %v1255 = vadd.f32 0.0, %v1254
        %v1256 = vpop.f32.mrf.mxu0
        %v1257 = vadd.f32 0.0, %v1256
        %v1258 = vpop.f32.mrf.mxu0
        %v1259 = vadd.f32 0.0, %v1258
        %v1260 = vpop.f32.mrf.mxu0
        %v1261 = vadd.f32 0.0, %v1260
        %1262 = vmatprep.mubr.bf16.mxu0 0
        %1263 = vmatmul.mubr.bf16.gmra.mxu0 %v1059
        %v1264 = vpop.f32.mrf.mxu0
        %v1265 = vadd.f32 0.0, %v1264
        %v1266 = vpop.f32.mrf.mxu0
        %v1267 = vadd.f32 0.0, %v1266
        %v1268 = vpop.f32.mrf.mxu0
        %v1269 = vadd.f32 0.0, %v1268
        %v1270 = vpop.f32.mrf.mxu0
        %v1271 = vadd.f32 0.0, %v1270
        %1272 = vmatprep.mubr.bf16.mxu0 0
        %1273 = vmatmul.mubr.bf16.gmra.mxu0 %v1062
        %v1274 = vpop.f32.mrf.mxu0
        %v1275 = vadd.f32 0.0, %v1274
        %v1276 = vpop.f32.mrf.mxu0
        %v1277 = vadd.f32 0.0, %v1276
        %v1278 = vpop.f32.mrf.mxu0
        %v1279 = vadd.f32 0.0, %v1278
        %v1280 = vpop.f32.mrf.mxu0
        %v1281 = vadd.f32 0.0, %v1280
        %1282 = vmatprep.mubr.bf16.mxu0 0
        %1283 = vmatmul.mubr.bf16.gmra.mxu0 %v1065
        %v1284 = vpop.f32.mrf.mxu0
        %v1285 = vadd.f32 0.0, %v1284
        %v1286 = vpop.f32.mrf.mxu0
        %v1287 = vadd.f32 0.0, %v1286
        %v1288 = vpop.f32.mrf.mxu0
        %v1289 = vadd.f32 0.0, %v1288
        %v1290 = vpop.f32.mrf.mxu0
        %v1291 = vadd.f32 0.0, %v1290
        %1292 = vdwg.mxu0
        %1293 = vmatprep.subr.bf16.mxu0 0
        %1294 = vmatpush1.bf16.msra.mxu0 0
        %1295 = vmatprep.subr.bf16.mxu0 0
        %1296 = vmatpush1.bf16.msra.mxu0 0
        %1297 = vmatprep.subr.bf16.mxu0 %v991
        %1298 = vmatpush1.bf16.msra.mxu0 %v990
        %1299 = vmatprep.subr.bf16.mxu0 %v983
        %1300 = vmatpush1.bf16.msra.mxu0 %v982
        %1301 = vmatprep.subr.bf16.mxu0 %v975
        %1302 = vmatpush1.bf16.msra.mxu0 %v974
        %1303 = vmatprep.subr.bf16.mxu0 %v967
        %1304 = vmatpush1.bf16.msra.mxu0 %v966
        %1305 = vmatprep.subr.bf16.mxu0 %v959
        %1306 = vmatpush1.bf16.msra.mxu0 %v958
        %1307 = vmatprep.subr.bf16.mxu0 %v951
        %1308 = vmatpush1.bf16.msra.mxu0 %v950
        %1309 = vmatprep.subr.bf16.mxu0 0
        %1310 = vmatpush2.bf16.msra.mxu0 0
        %1311 = vmatprep.subr.bf16.mxu0 0
        %1312 = vmatpush2.bf16.msra.mxu0 0
        %1313 = vmatprep.subr.bf16.mxu0 0
        %1314 = vmatpush2.bf16.msra.mxu0 0
        %1315 = vmatprep.subr.bf16.mxu0 0
        %1316 = vmatpush2.bf16.msra.mxu0 0
        %1317 = vmatprep.subr.bf16.mxu0 0
        %1318 = vmatpush2.bf16.msra.mxu0 0
        %1319 = vmatprep.subr.bf16.mxu0 0
        %1320 = vmatpush2.bf16.msra.mxu0 0
        %1321 = vmatprep.subr.bf16.mxu0 0
        %1322 = vmatpush2.bf16.msra.mxu0 0
        %1323 = vmatprep.subr.bf16.mxu0 0
        %1324 = vmatpush2.bf16.msra.mxu0 0
        %1325 = vmatprep.mubr.bf16.mxu0 0
        %1326 = vmatmul.mubr.bf16.gmra.mxu0 %v1044
        %v1327 = vpop.f32.mrf.mxu0
        %v1328 = vadd.f32 0.0, %v1327
        %v1329 = vpop.f32.mrf.mxu0
        %v1330 = vadd.f32 0.0, %v1329
        %v1331 = vpop.f32.mrf.mxu0
        %v1332 = vadd.f32 0.0, %v1331
        %v1333 = vpop.f32.mrf.mxu0
        %v1334 = vadd.f32 0.0, %v1333
        %1335 = vmatprep.mubr.bf16.mxu0 0
        %1336 = vmatmul.mubr.bf16.gmra.mxu0 %v1047
        %v1337 = vpop.f32.mrf.mxu0
        %v1338 = vadd.f32 0.0, %v1337
        %v1339 = vpop.f32.mrf.mxu0
        %v1340 = vadd.f32 0.0, %v1339
        %v1341 = vpop.f32.mrf.mxu0
        %v1342 = vadd.f32 0.0, %v1341
        %v1343 = vpop.f32.mrf.mxu0
        %v1344 = vadd.f32 0.0, %v1343
        %1345 = vmatprep.mubr.bf16.mxu0 0
        %1346 = vmatmul.mubr.bf16.gmra.mxu0 %v1050
        %v1347 = vpop.f32.mrf.mxu0
        %v1348 = vadd.f32 0.0, %v1347
        %v1349 = vpop.f32.mrf.mxu0
        %v1350 = vadd.f32 0.0, %v1349
        %v1351 = vpop.f32.mrf.mxu0
        %v1352 = vadd.f32 0.0, %v1351
        %v1353 = vpop.f32.mrf.mxu0
        %v1354 = vadd.f32 0.0, %v1353
        %1355 = vmatprep.mubr.bf16.mxu0 0
        %1356 = vmatmul.mubr.bf16.gmra.mxu0 %v1053
        %v1357 = vpop.f32.mrf.mxu0
        %v1358 = vadd.f32 0.0, %v1357
        %v1359 = vpop.f32.mrf.mxu0
        %v1360 = vadd.f32 0.0, %v1359
        %v1361 = vpop.f32.mrf.mxu0
        %v1362 = vadd.f32 0.0, %v1361
        %v1363 = vpop.f32.mrf.mxu0
        %v1364 = vadd.f32 0.0, %v1363
        %1365 = vmatprep.mubr.bf16.mxu0 0
        %1366 = vmatmul.mubr.bf16.gmra.mxu0 %v1056
        %v1367 = vpop.f32.mrf.mxu0
        %v1368 = vadd.f32 0.0, %v1367
        %v1369 = vpop.f32.mrf.mxu0
        %v1370 = vadd.f32 0.0, %v1369
        %v1371 = vpop.f32.mrf.mxu0
        %v1372 = vadd.f32 0.0, %v1371
        %v1373 = vpop.f32.mrf.mxu0
        %v1374 = vadd.f32 0.0, %v1373
        %1375 = vmatprep.mubr.bf16.mxu0 0
        %1376 = vmatmul.mubr.bf16.gmra.mxu0 %v1059
        %v1377 = vpop.f32.mrf.mxu0
        %v1378 = vadd.f32 0.0, %v1377
        %v1379 = vpop.f32.mrf.mxu0
        %v1380 = vadd.f32 0.0, %v1379
        %v1381 = vpop.f32.mrf.mxu0
        %v1382 = vadd.f32 0.0, %v1381
        %v1383 = vpop.f32.mrf.mxu0
        %v1384 = vadd.f32 0.0, %v1383
        %1385 = vmatprep.mubr.bf16.mxu0 0
        %1386 = vmatmul.mubr.bf16.gmra.mxu0 %v1062
        %v1387 = vpop.f32.mrf.mxu0
        %v1388 = vadd.f32 0.0, %v1387
        %v1389 = vpop.f32.mrf.mxu0
        %v1390 = vadd.f32 0.0, %v1389
        %v1391 = vpop.f32.mrf.mxu0
        %v1392 = vadd.f32 0.0, %v1391
        %v1393 = vpop.f32.mrf.mxu0
        %v1394 = vadd.f32 0.0, %v1393
        %1395 = vmatprep.mubr.bf16.mxu0 0
        %1396 = vmatmul.mubr.bf16.gmra.mxu0 %v1065
        %v1397 = vpop.f32.mrf.mxu0
        %v1398 = vadd.f32 0.0, %v1397
        %v1399 = vpop.f32.mrf.mxu0
        %v1400 = vadd.f32 0.0, %v1399
        %v1401 = vpop.f32.mrf.mxu0
        %v1402 = vadd.f32 0.0, %v1401
        %v1403 = vpop.f32.mrf.mxu0
        %v1404 = vadd.f32 0.0, %v1403
        %1405 = vdwg.mxu0
        %1406 = vmatprep.subr.bf16.mxu0 0
        %1407 = vmatpush1.bf16.msra.mxu0 0
        %1408 = vmatprep.subr.bf16.mxu0 0
        %1409 = vmatpush1.bf16.msra.mxu0 0
        %1410 = vmatprep.subr.bf16.mxu0 %v993
        %1411 = vmatpush1.bf16.msra.mxu0 %v992
        %1412 = vmatprep.subr.bf16.mxu0 %v985
        %1413 = vmatpush1.bf16.msra.mxu0 %v984
        %1414 = vmatprep.subr.bf16.mxu0 %v977
        %1415 = vmatpush1.bf16.msra.mxu0 %v976
        %1416 = vmatprep.subr.bf16.mxu0 %v969
        %1417 = vmatpush1.bf16.msra.mxu0 %v968
        %1418 = vmatprep.subr.bf16.mxu0 %v961
        %1419 = vmatpush1.bf16.msra.mxu0 %v960
        %1420 = vmatprep.subr.bf16.mxu0 %v953
        %1421 = vmatpush1.bf16.msra.mxu0 %v952
        %1422 = vmatprep.subr.bf16.mxu0 0
        %1423 = vmatpush2.bf16.msra.mxu0 0
        %1424 = vmatprep.subr.bf16.mxu0 0
        %1425 = vmatpush2.bf16.msra.mxu0 0
        %1426 = vmatprep.subr.bf16.mxu0 0
        %1427 = vmatpush2.bf16.msra.mxu0 0
        %1428 = vmatprep.subr.bf16.mxu0 0
        %1429 = vmatpush2.bf16.msra.mxu0 0
        %1430 = vmatprep.subr.bf16.mxu0 0
        %1431 = vmatpush2.bf16.msra.mxu0 0
        %1432 = vmatprep.subr.bf16.mxu0 0
        %1433 = vmatpush2.bf16.msra.mxu0 0
        %1434 = vmatprep.subr.bf16.mxu0 0
        %1435 = vmatpush2.bf16.msra.mxu0 0
        %1436 = vmatprep.subr.bf16.mxu0 0
        %1437 = vmatpush2.bf16.msra.mxu0 0
        %1438 = vmatprep.mubr.bf16.mxu0 0
        %1439 = vmatmul.mubr.bf16.gmra.mxu0 %v1044
        %v1440 = vpop.f32.mrf.mxu0
        %v1441 = vadd.f32 0.0, %v1440
        %v1442 = vpop.f32.mrf.mxu0
        %v1443 = vadd.f32 0.0, %v1442
        %v1444 = vpop.f32.mrf.mxu0
        %v1445 = vadd.f32 0.0, %v1444
        %v1446 = vpop.f32.mrf.mxu0
        %v1447 = vadd.f32 0.0, %v1446
        %1448 = vmatprep.mubr.bf16.mxu0 0
        %1449 = vmatmul.mubr.bf16.gmra.mxu0 %v1047
        %v1450 = vpop.f32.mrf.mxu0
        %v1451 = vadd.f32 0.0, %v1450
        %v1452 = vpop.f32.mrf.mxu0
        %v1453 = vadd.f32 0.0, %v1452
        %v1454 = vpop.f32.mrf.mxu0
        %v1455 = vadd.f32 0.0, %v1454
        %v1456 = vpop.f32.mrf.mxu0
        %v1457 = vadd.f32 0.0, %v1456
        %1458 = vmatprep.mubr.bf16.mxu0 0
        %1459 = vmatmul.mubr.bf16.gmra.mxu0 %v1050
        %v1460 = vpop.f32.mrf.mxu0
        %v1461 = vadd.f32 0.0, %v1460
        %v1462 = vpop.f32.mrf.mxu0
        %v1463 = vadd.f32 0.0, %v1462
        %v1464 = vpop.f32.mrf.mxu0
        %v1465 = vadd.f32 0.0, %v1464
        %v1466 = vpop.f32.mrf.mxu0
        %v1467 = vadd.f32 0.0, %v1466
        %1468 = vmatprep.mubr.bf16.mxu0 0
        %1469 = vmatmul.mubr.bf16.gmra.mxu0 %v1053
        %v1470 = vpop.f32.mrf.mxu0
        %v1471 = vadd.f32 0.0, %v1470
        %v1472 = vpop.f32.mrf.mxu0
        %v1473 = vadd.f32 0.0, %v1472
        %v1474 = vpop.f32.mrf.mxu0
        %v1475 = vadd.f32 0.0, %v1474
        %v1476 = vpop.f32.mrf.mxu0
        %v1477 = vadd.f32 0.0, %v1476
        %1478 = vmatprep.mubr.bf16.mxu0 0
        %1479 = vmatmul.mubr.bf16.gmra.mxu0 %v1056
        %v1480 = vpop.f32.mrf.mxu0
        %v1481 = vadd.f32 0.0, %v1480
        %v1482 = vpop.f32.mrf.mxu0
        %v1483 = vadd.f32 0.0, %v1482
        %v1484 = vpop.f32.mrf.mxu0
        %v1485 = vadd.f32 0.0, %v1484
        %v1486 = vpop.f32.mrf.mxu0
        %v1487 = vadd.f32 0.0, %v1486
        %1488 = vmatprep.mubr.bf16.mxu0 0
        %1489 = vmatmul.mubr.bf16.gmra.mxu0 %v1059
        %v1490 = vpop.f32.mrf.mxu0
        %v1491 = vadd.f32 0.0, %v1490
        %v1492 = vpop.f32.mrf.mxu0
        %v1493 = vadd.f32 0.0, %v1492
        %v1494 = vpop.f32.mrf.mxu0
        %v1495 = vadd.f32 0.0, %v1494
        %v1496 = vpop.f32.mrf.mxu0
        %v1497 = vadd.f32 0.0, %v1496
        %1498 = vmatprep.mubr.bf16.mxu0 0
        %1499 = vmatmul.mubr.bf16.gmra.mxu0 %v1062
        %v1500 = vpop.f32.mrf.mxu0
        %v1501 = vadd.f32 0.0, %v1500
        %v1502 = vpop.f32.mrf.mxu0
        %v1503 = vadd.f32 0.0, %v1502
        %v1504 = vpop.f32.mrf.mxu0
        %v1505 = vadd.f32 0.0, %v1504
        %v1506 = vpop.f32.mrf.mxu0
        %v1507 = vadd.f32 0.0, %v1506
        %1508 = vmatprep.mubr.bf16.mxu0 0
        %1509 = vmatmul.mubr.bf16.gmra.mxu0 %v1065
        %v1510 = vpop.f32.mrf.mxu0
        %v1511 = vadd.f32 0.0, %v1510
        %v1512 = vpop.f32.mrf.mxu0
        %v1513 = vadd.f32 0.0, %v1512
        %v1514 = vpop.f32.mrf.mxu0
        %v1515 = vadd.f32 0.0, %v1514
        %v1516 = vpop.f32.mrf.mxu0
        %v1517 = vadd.f32 0.0, %v1516
        %1518 = vdwg.mxu0
        %v1647 = vunpack.c.l.b16 %v626
        %v1648 = vunpack.c.h.b16 %v626
        %v1649 = vunpack.c.l.b16 %v627
        %v1650 = vunpack.c.h.b16 %v627
        %v1651 = vunpack.c.l.b16 %v628
        %v1652 = vunpack.c.h.b16 %v628
        %v1653 = vunpack.c.l.b16 %v629
        %v1654 = vunpack.c.h.b16 %v629
        %v1655 = vunpack.c.l.b16 %v630
        %v1656 = vunpack.c.h.b16 %v630
        %v1657 = vunpack.c.l.b16 %v631
        %v1658 = vunpack.c.h.b16 %v631
        %v1659 = vunpack.c.l.b16 %v632
        %v1660 = vunpack.c.h.b16 %v632
        %v1661 = vunpack.c.l.b16 %v633
        %v1662 = vunpack.c.h.b16 %v633
        %v1663 = vunpack.c.l.b16 %v634
        %v1664 = vunpack.c.h.b16 %v634
        %v1665 = vunpack.c.l.b16 %v635
        %v1666 = vunpack.c.h.b16 %v635
        %v1667 = vunpack.c.l.b16 %v636
        %v1668 = vunpack.c.h.b16 %v636
        %v1669 = vunpack.c.l.b16 %v637
        %v1670 = vunpack.c.h.b16 %v637
        %v1671 = vunpack.c.l.b16 %v638
        %v1672 = vunpack.c.h.b16 %v638
        %v1673 = vunpack.c.l.b16 %v639
        %v1674 = vunpack.c.h.b16 %v639
        %v1675 = vunpack.c.l.b16 %v640
        %v1676 = vunpack.c.h.b16 %v640
        %v1677 = vunpack.c.l.b16 %v641
        %v1678 = vunpack.c.h.b16 %v641
        %v1679 = vunpack.c.l.b16 %v642
        %v1680 = vunpack.c.h.b16 %v642
        %v1681 = vunpack.c.l.b16 %v643
        %v1682 = vunpack.c.h.b16 %v643
        %v1683 = vunpack.c.l.b16 %v644
        %v1684 = vunpack.c.h.b16 %v644
        %v1685 = vunpack.c.l.b16 %v645
        %v1686 = vunpack.c.h.b16 %v645
        %v1687 = vunpack.c.l.b16 %v646
        %v1688 = vunpack.c.h.b16 %v646
        %v1689 = vunpack.c.l.b16 %v647
        %v1690 = vunpack.c.h.b16 %v647
        %v1691 = vunpack.c.l.b16 %v648
        %v1692 = vunpack.c.h.b16 %v648
        %v1693 = vunpack.c.l.b16 %v649
        %v1694 = vunpack.c.h.b16 %v649
        %v1695 = vunpack.c.l.b16 %v650
        %v1696 = vunpack.c.h.b16 %v650
        %v1697 = vunpack.c.l.b16 %v651
        %v1698 = vunpack.c.h.b16 %v651
        %v1699 = vunpack.c.l.b16 %v652
        %v1700 = vunpack.c.h.b16 %v652
        %v1701 = vunpack.c.l.b16 %v653
        %v1702 = vunpack.c.h.b16 %v653
        %v1703 = vunpack.c.l.b16 %v654
        %v1704 = vunpack.c.h.b16 %v654
        %v1705 = vunpack.c.l.b16 %v655
        %v1706 = vunpack.c.h.b16 %v655
        %v1707 = vunpack.c.l.b16 %v656
        %v1708 = vunpack.c.h.b16 %v656
        %v1709 = vunpack.c.l.b16 %v657
        %v1710 = vunpack.c.h.b16 %v657
        %v1711 = vunpack.c.l.b16 %v658
        %v1712 = vunpack.c.h.b16 %v658
        %v1713 = vunpack.c.l.b16 %v659
        %v1714 = vunpack.c.h.b16 %v659
        %v1715 = vunpack.c.l.b16 %v660
        %v1716 = vunpack.c.h.b16 %v660
        %v1717 = vunpack.c.l.b16 %v661
        %v1718 = vunpack.c.h.b16 %v661
        %v1719 = vunpack.c.l.b16 %v662
        %v1720 = vunpack.c.h.b16 %v662
        %v1721 = vunpack.c.l.b16 %v663
        %v1722 = vunpack.c.h.b16 %v663
        %v1723 = vunpack.c.l.b16 %v664
        %v1724 = vunpack.c.h.b16 %v664
        %v1725 = vunpack.c.l.b16 %v665
        %v1726 = vunpack.c.h.b16 %v665
        %v1727 = vunpack.c.l.b16 %v666
        %v1728 = vunpack.c.h.b16 %v666
        %v1729 = vunpack.c.l.b16 %v667
        %v1730 = vunpack.c.h.b16 %v667
        %v1731 = vunpack.c.l.b16 %v668
        %v1732 = vunpack.c.h.b16 %v668
        %v1733 = vunpack.c.l.b16 %v669
        %v1734 = vunpack.c.h.b16 %v669
        %v1735 = vunpack.c.l.b16 %v670
        %v1736 = vunpack.c.h.b16 %v670
        %v1737 = vunpack.c.l.b16 %v671
        %v1738 = vunpack.c.h.b16 %v671
        %v1739 = vunpack.c.l.b16 %v672
        %v1740 = vunpack.c.h.b16 %v672
        %v1741 = vunpack.c.l.b16 %v673
        %v1742 = vunpack.c.h.b16 %v673
        %v1743 = vunpack.c.l.b16 %v674
        %v1744 = vunpack.c.h.b16 %v674
        %v1745 = vunpack.c.l.b16 %v675
        %v1746 = vunpack.c.h.b16 %v675
        %v1747 = vunpack.c.l.b16 %v676
        %v1748 = vunpack.c.h.b16 %v676
        %v1749 = vunpack.c.l.b16 %v677
        %v1750 = vunpack.c.h.b16 %v677
        %v1751 = vunpack.c.l.b16 %v678
        %v1752 = vunpack.c.h.b16 %v678
        %v1753 = vunpack.c.l.b16 %v679
        %v1754 = vunpack.c.h.b16 %v679
        %v1755 = vunpack.c.l.b16 %v680
        %v1756 = vunpack.c.h.b16 %v680
        %v1757 = vunpack.c.l.b16 %v681
        %v1758 = vunpack.c.h.b16 %v681
        %v1759 = vunpack.c.l.b16 %v682
        %v1760 = vunpack.c.h.b16 %v682
        %v1761 = vunpack.c.l.b16 %v683
        %v1762 = vunpack.c.h.b16 %v683
        %v1763 = vunpack.c.l.b16 %v684
        %v1764 = vunpack.c.h.b16 %v684
        %v1765 = vunpack.c.l.b16 %v685
        %v1766 = vunpack.c.h.b16 %v685
        %v1767 = vunpack.c.l.b16 %v686
        %v1768 = vunpack.c.h.b16 %v686
        %v1769 = vunpack.c.l.b16 %v687
        %v1770 = vunpack.c.h.b16 %v687
        %v1771 = vunpack.c.l.b16 %v688
        %v1772 = vunpack.c.h.b16 %v688
        %v1773 = vunpack.c.l.b16 %v689
        %v1774 = vunpack.c.h.b16 %v689
        %v1775 = vunpack.c.l.b16 %v690
        %v1776 = vunpack.c.h.b16 %v690
        %v1777 = vunpack.c.l.b16 %v691
        %v1778 = vunpack.c.h.b16 %v691
        %v1779 = vunpack.c.l.b16 %v692
        %v1780 = vunpack.c.h.b16 %v692
        %v1781 = vunpack.c.l.b16 %v693
        %v1782 = vunpack.c.h.b16 %v693
        %v1783 = vunpack.c.l.b16 %v694
        %v1784 = vunpack.c.h.b16 %v694
        %v1785 = vunpack.c.l.b16 %v695
        %v1786 = vunpack.c.h.b16 %v695
        %v1787 = vunpack.c.l.b16 %v696
        %v1788 = vunpack.c.h.b16 %v696
        %v1789 = vunpack.c.l.b16 %v697
        %v1790 = vunpack.c.h.b16 %v697
        %v1791 = vunpack.c.l.b16 %v698
        %v1792 = vunpack.c.h.b16 %v698
        %v1793 = vunpack.c.l.b16 %v699
        %v1794 = vunpack.c.h.b16 %v699
        %v1795 = vunpack.c.l.b16 %v700
        %v1796 = vunpack.c.h.b16 %v700
        %v1797 = vunpack.c.l.b16 %v701
        %v1798 = vunpack.c.h.b16 %v701
        %v1799 = vunpack.c.l.b16 %v702
        %v1800 = vunpack.c.h.b16 %v702
        %v1801 = vunpack.c.l.b16 %v703
        %v1802 = vunpack.c.h.b16 %v703
        %v1803 = vunpack.c.l.b16 %v704
        %v1804 = vunpack.c.h.b16 %v704
        %v1805 = vunpack.c.l.b16 %v705
        %v1806 = vunpack.c.h.b16 %v705
        %v1807 = vunpack.c.l.b16 %v706
        %v1808 = vunpack.c.h.b16 %v706
        %v1809 = vunpack.c.l.b16 %v707
        %v1810 = vunpack.c.h.b16 %v707
        %v1811 = vunpack.c.l.b16 %v708
        %v1812 = vunpack.c.h.b16 %v708
        %v1813 = vunpack.c.l.b16 %v709
        %v1814 = vunpack.c.h.b16 %v709
        %v1815 = vunpack.c.l.b16 %v710
        %v1816 = vunpack.c.h.b16 %v710
        %v1817 = vunpack.c.l.b16 %v711
        %v1818 = vunpack.c.h.b16 %v711
        %v1819 = vunpack.c.l.b16 %v712
        %v1820 = vunpack.c.h.b16 %v712
        %v1821 = vunpack.c.l.b16 %v713
        %v1822 = vunpack.c.h.b16 %v713
        %v1823 = vunpack.c.l.b16 %v714
        %v1824 = vunpack.c.h.b16 %v714
        %v1825 = vunpack.c.l.b16 %v715
        %v1826 = vunpack.c.h.b16 %v715
        %v1827 = vunpack.c.l.b16 %v716
        %v1828 = vunpack.c.h.b16 %v716
        %v1829 = vunpack.c.l.b16 %v717
        %v1830 = vunpack.c.h.b16 %v717
        %v1831 = vunpack.c.l.b16 %v718
        %v1832 = vunpack.c.h.b16 %v718
        %v1833 = vunpack.c.l.b16 %v719
        %v1834 = vunpack.c.h.b16 %v719
        %v1835 = vunpack.c.l.b16 %v720
        %v1836 = vunpack.c.h.b16 %v720
        %v1837 = vunpack.c.l.b16 %v721
        %v1838 = vunpack.c.h.b16 %v721
        %v1839 = vunpack.c.l.b16 %v722
        %v1840 = vunpack.c.h.b16 %v722
        %v1841 = vunpack.c.l.b16 %v723
        %v1842 = vunpack.c.h.b16 %v723
        %v1843 = vunpack.c.l.b16 %v724
        %v1844 = vunpack.c.h.b16 %v724
        %v1845 = vunpack.c.l.b16 %v725
        %v1846 = vunpack.c.h.b16 %v725
        %v1847 = vunpack.c.l.b16 %v726
        %v1848 = vunpack.c.h.b16 %v726
        %v1849 = vunpack.c.l.b16 %v727
        %v1850 = vunpack.c.h.b16 %v727
        %v1851 = vunpack.c.l.b16 %v728
        %v1852 = vunpack.c.h.b16 %v728
        %v1853 = vunpack.c.l.b16 %v729
        %v1854 = vunpack.c.h.b16 %v729
        %v1855 = vunpack.c.l.b16 %v730
        %v1856 = vunpack.c.h.b16 %v730
        %v1857 = vunpack.c.l.b16 %v731
        %v1858 = vunpack.c.h.b16 %v731
        %v1859 = vunpack.c.l.b16 %v732
        %v1860 = vunpack.c.h.b16 %v732
        %v1861 = vunpack.c.l.b16 %v733
        %v1862 = vunpack.c.h.b16 %v733
        %v1863 = vunpack.c.l.b16 %v734
        %v1864 = vunpack.c.h.b16 %v734
        %v1865 = vunpack.c.l.b16 %v735
        %v1866 = vunpack.c.h.b16 %v735
        %v1867 = vunpack.c.l.b16 %v736
        %v1868 = vunpack.c.h.b16 %v736
        %v1869 = vunpack.c.l.b16 %v737
        %v1870 = vunpack.c.h.b16 %v737
        %v1871 = vunpack.c.l.b16 %v738
        %v1872 = vunpack.c.h.b16 %v738
        %v1873 = vunpack.c.l.b16 %v739
        %v1874 = vunpack.c.h.b16 %v739
        %v1875 = vunpack.c.l.b16 %v740
        %v1876 = vunpack.c.h.b16 %v740
        %v1877 = vunpack.c.l.b16 %v741
        %v1878 = vunpack.c.h.b16 %v741
        %v1879 = vunpack.c.l.b16 %v742
        %v1880 = vunpack.c.h.b16 %v742
        %v1881 = vunpack.c.l.b16 %v743
        %v1882 = vunpack.c.h.b16 %v743
        %v1883 = vunpack.c.l.b16 %v744
        %v1884 = vunpack.c.h.b16 %v744
        %v1885 = vunpack.c.l.b16 %v745
        %v1886 = vunpack.c.h.b16 %v745
        %v1887 = vunpack.c.l.b16 %v746
        %v1888 = vunpack.c.h.b16 %v746
        %v1889 = vunpack.c.l.b16 %v747
        %v1890 = vunpack.c.h.b16 %v747
        %v1891 = vunpack.c.l.b16 %v748
        %v1892 = vunpack.c.h.b16 %v748
        %v1893 = vunpack.c.l.b16 %v749
        %v1894 = vunpack.c.h.b16 %v749
        %v1895 = vunpack.c.l.b16 %v750
        %v1896 = vunpack.c.h.b16 %v750
        %v1897 = vunpack.c.l.b16 %v751
        %v1898 = vunpack.c.h.b16 %v751
        %v1899 = vunpack.c.l.b16 %v752
        %v1900 = vunpack.c.h.b16 %v752
        %v1901 = vunpack.c.l.b16 %v753
        %v1902 = vunpack.c.h.b16 %v753
        %v1903 = vpack.c.b16 %v1655, %v1647
        %v1904 = vpack.c.b16 %v1656, %v1648
        %v1905 = vpack.c.b16 %v1657, %v1649
        %v1906 = vpack.c.b16 %v1658, %v1650
        %v1907 = vpack.c.b16 %v1659, %v1651
        %v1908 = vpack.c.b16 %v1660, %v1652
        %v1909 = vpack.c.b16 %v1661, %v1653
        %v1910 = vpack.c.b16 %v1662, %v1654
        %v1911 = vpack.c.b16 %v1671, %v1663
        %v1912 = vpack.c.b16 %v1672, %v1664
        %v1913 = vpack.c.b16 %v1673, %v1665
        %v1914 = vpack.c.b16 %v1674, %v1666
        %v1915 = vpack.c.b16 %v1675, %v1667
        %v1916 = vpack.c.b16 %v1676, %v1668
        %v1917 = vpack.c.b16 %v1677, %v1669
        %v1918 = vpack.c.b16 %v1678, %v1670
        %v1919 = vpack.c.b16 %v1687, %v1679
        %v1920 = vpack.c.b16 %v1688, %v1680
        %v1921 = vpack.c.b16 %v1689, %v1681
        %v1922 = vpack.c.b16 %v1690, %v1682
        %v1923 = vpack.c.b16 %v1691, %v1683
        %v1924 = vpack.c.b16 %v1692, %v1684
        %v1925 = vpack.c.b16 %v1693, %v1685
        %v1926 = vpack.c.b16 %v1694, %v1686
        %v1927 = vpack.c.b16 %v1703, %v1695
        %v1928 = vpack.c.b16 %v1704, %v1696
        %v1929 = vpack.c.b16 %v1705, %v1697
        %v1930 = vpack.c.b16 %v1706, %v1698
        %v1931 = vpack.c.b16 %v1707, %v1699
        %v1932 = vpack.c.b16 %v1708, %v1700
        %v1933 = vpack.c.b16 %v1709, %v1701
        %v1934 = vpack.c.b16 %v1710, %v1702
        %v1935 = vpack.c.b16 %v1719, %v1711
        %v1936 = vpack.c.b16 %v1720, %v1712
        %v1937 = vpack.c.b16 %v1721, %v1713
        %v1938 = vpack.c.b16 %v1722, %v1714
        %v1939 = vpack.c.b16 %v1723, %v1715
        %v1940 = vpack.c.b16 %v1724, %v1716
        %v1941 = vpack.c.b16 %v1725, %v1717
        %v1942 = vpack.c.b16 %v1726, %v1718
        %v1943 = vpack.c.b16 %v1735, %v1727
        %v1944 = vpack.c.b16 %v1736, %v1728
        %v1945 = vpack.c.b16 %v1737, %v1729
        %v1946 = vpack.c.b16 %v1738, %v1730
        %v1947 = vpack.c.b16 %v1739, %v1731
        %v1948 = vpack.c.b16 %v1740, %v1732
        %v1949 = vpack.c.b16 %v1741, %v1733
        %v1950 = vpack.c.b16 %v1742, %v1734
        %v1951 = vpack.c.b16 %v1751, %v1743
        %v1952 = vpack.c.b16 %v1752, %v1744
        %v1953 = vpack.c.b16 %v1753, %v1745
        %v1954 = vpack.c.b16 %v1754, %v1746
        %v1955 = vpack.c.b16 %v1755, %v1747
        %v1956 = vpack.c.b16 %v1756, %v1748
        %v1957 = vpack.c.b16 %v1757, %v1749
        %v1958 = vpack.c.b16 %v1758, %v1750
        %v1959 = vpack.c.b16 %v1767, %v1759
        %v1960 = vpack.c.b16 %v1768, %v1760
        %v1961 = vpack.c.b16 %v1769, %v1761
        %v1962 = vpack.c.b16 %v1770, %v1762
        %v1963 = vpack.c.b16 %v1771, %v1763
        %v1964 = vpack.c.b16 %v1772, %v1764
        %v1965 = vpack.c.b16 %v1773, %v1765
        %v1966 = vpack.c.b16 %v1774, %v1766
        %v1967 = vpack.c.b16 %v1783, %v1775
        %v1968 = vpack.c.b16 %v1784, %v1776
        %v1969 = vpack.c.b16 %v1785, %v1777
        %v1970 = vpack.c.b16 %v1786, %v1778
        %v1971 = vpack.c.b16 %v1787, %v1779
        %v1972 = vpack.c.b16 %v1788, %v1780
        %v1973 = vpack.c.b16 %v1789, %v1781
        %v1974 = vpack.c.b16 %v1790, %v1782
        %v1975 = vpack.c.b16 %v1799, %v1791
        %v1976 = vpack.c.b16 %v1800, %v1792
        %v1977 = vpack.c.b16 %v1801, %v1793
        %v1978 = vpack.c.b16 %v1802, %v1794
        %v1979 = vpack.c.b16 %v1803, %v1795
        %v1980 = vpack.c.b16 %v1804, %v1796
        %v1981 = vpack.c.b16 %v1805, %v1797
        %v1982 = vpack.c.b16 %v1806, %v1798
        %v1983 = vpack.c.b16 %v1815, %v1807
        %v1984 = vpack.c.b16 %v1816, %v1808
        %v1985 = vpack.c.b16 %v1817, %v1809
        %v1986 = vpack.c.b16 %v1818, %v1810
        %v1987 = vpack.c.b16 %v1819, %v1811
        %v1988 = vpack.c.b16 %v1820, %v1812
        %v1989 = vpack.c.b16 %v1821, %v1813
        %v1990 = vpack.c.b16 %v1822, %v1814
        %v1991 = vpack.c.b16 %v1831, %v1823
        %v1992 = vpack.c.b16 %v1832, %v1824
        %v1993 = vpack.c.b16 %v1833, %v1825
        %v1994 = vpack.c.b16 %v1834, %v1826
        %v1995 = vpack.c.b16 %v1835, %v1827
        %v1996 = vpack.c.b16 %v1836, %v1828
        %v1997 = vpack.c.b16 %v1837, %v1829
        %v1998 = vpack.c.b16 %v1838, %v1830
        %v1999 = vpack.c.b16 %v1847, %v1839
        %v2000 = vpack.c.b16 %v1848, %v1840
        %v2001 = vpack.c.b16 %v1849, %v1841
        %v2002 = vpack.c.b16 %v1850, %v1842
        %v2003 = vpack.c.b16 %v1851, %v1843
        %v2004 = vpack.c.b16 %v1852, %v1844
        %v2005 = vpack.c.b16 %v1853, %v1845
        %v2006 = vpack.c.b16 %v1854, %v1846
        %v2007 = vpack.c.b16 %v1863, %v1855
        %v2008 = vpack.c.b16 %v1864, %v1856
        %v2009 = vpack.c.b16 %v1865, %v1857
        %v2010 = vpack.c.b16 %v1866, %v1858
        %v2011 = vpack.c.b16 %v1867, %v1859
        %v2012 = vpack.c.b16 %v1868, %v1860
        %v2013 = vpack.c.b16 %v1869, %v1861
        %v2014 = vpack.c.b16 %v1870, %v1862
        %v2015 = vpack.c.b16 %v1879, %v1871
        %v2016 = vpack.c.b16 %v1880, %v1872
        %v2017 = vpack.c.b16 %v1881, %v1873
        %v2018 = vpack.c.b16 %v1882, %v1874
        %v2019 = vpack.c.b16 %v1883, %v1875
        %v2020 = vpack.c.b16 %v1884, %v1876
        %v2021 = vpack.c.b16 %v1885, %v1877
        %v2022 = vpack.c.b16 %v1886, %v1878
        %v2023 = vpack.c.b16 %v1895, %v1887
        %v2024 = vpack.c.b16 %v1896, %v1888
        %v2025 = vpack.c.b16 %v1897, %v1889
        %v2026 = vpack.c.b16 %v1898, %v1890
        %v2027 = vpack.c.b16 %v1899, %v1891
        %v2028 = vpack.c.b16 %v1900, %v1892
        %v2029 = vpack.c.b16 %v1901, %v1893
        %v2030 = vpack.c.b16 %v1902, %v1894
        %2159 = vmatprep.subr.bf16.mxu0 %v1960
        %2160 = vmatpush1.bf16.msra.mxu0 %v1959
        %2161 = vmatprep.subr.bf16.mxu0 %v1952
        %2162 = vmatpush1.bf16.msra.mxu0 %v1951
        %2163 = vmatprep.subr.bf16.mxu0 %v1944
        %2164 = vmatpush1.bf16.msra.mxu0 %v1943
        %2165 = vmatprep.subr.bf16.mxu0 %v1936
        %2166 = vmatpush1.bf16.msra.mxu0 %v1935
        %2167 = vmatprep.subr.bf16.mxu0 %v1928
        %2168 = vmatpush1.bf16.msra.mxu0 %v1927
        %2169 = vmatprep.subr.bf16.mxu0 %v1920
        %2170 = vmatpush1.bf16.msra.mxu0 %v1919
        %2171 = vmatprep.subr.bf16.mxu0 %v1912
        %2172 = vmatpush1.bf16.msra.mxu0 %v1911
        %2173 = vmatprep.subr.bf16.mxu0 %v1904
        %2174 = vmatpush1.bf16.msra.mxu0 %v1903
        %2175 = vmatprep.subr.bf16.mxu0 %v2024
        %2176 = vmatpush2.bf16.msra.mxu0 %v2023
        %2177 = vmatprep.subr.bf16.mxu0 %v2016
        %2178 = vmatpush2.bf16.msra.mxu0 %v2015
        %2179 = vmatprep.subr.bf16.mxu0 %v2008
        %2180 = vmatpush2.bf16.msra.mxu0 %v2007
        %2181 = vmatprep.subr.bf16.mxu0 %v2000
        %2182 = vmatpush2.bf16.msra.mxu0 %v1999
        %2183 = vmatprep.subr.bf16.mxu0 %v1992
        %2184 = vmatpush2.bf16.msra.mxu0 %v1991
        %2185 = vmatprep.subr.bf16.mxu0 %v1984
        %2186 = vmatpush2.bf16.msra.mxu0 %v1983
        %2187 = vmatprep.subr.bf16.mxu0 %v1976
        %2188 = vmatpush2.bf16.msra.mxu0 %v1975
        %2189 = vmatprep.subr.bf16.mxu0 %v1968
        %2190 = vmatpush2.bf16.msra.mxu0 %v1967
        %2191 = vmatprep.mubr.bf16.mxu0 %v587
        %2192 = vmatmul.mubr.bf16.gmra.mxu0 %v586
        %v2193 = vpop.f32.mrf.mxu0
        %v2194 = vadd.f32 %v1102, %v2193
        %v2195 = vpop.f32.mrf.mxu0
        %v2196 = vadd.f32 %v1104, %v2195
        %v2197 = vpop.f32.mrf.mxu0
        %v2198 = vadd.f32 %v1106, %v2197
        %v2199 = vpop.f32.mrf.mxu0
        %v2200 = vadd.f32 %v1108, %v2199
        %2201 = vmatprep.mubr.bf16.mxu0 %v589
        %2202 = vmatmul.mubr.bf16.gmra.mxu0 %v588
        %v2203 = vpop.f32.mrf.mxu0
        %v2204 = vadd.f32 %v1112, %v2203
        %v2205 = vpop.f32.mrf.mxu0
        %v2206 = vadd.f32 %v1114, %v2205
        %v2207 = vpop.f32.mrf.mxu0
        %v2208 = vadd.f32 %v1116, %v2207
        %v2209 = vpop.f32.mrf.mxu0
        %v2210 = vadd.f32 %v1118, %v2209
        %2211 = vmatprep.mubr.bf16.mxu0 %v591
        %2212 = vmatmul.mubr.bf16.gmra.mxu0 %v590
        %v2213 = vpop.f32.mrf.mxu0
        %v2214 = vadd.f32 %v1122, %v2213
        %v2215 = vpop.f32.mrf.mxu0
        %v2216 = vadd.f32 %v1124, %v2215
        %v2217 = vpop.f32.mrf.mxu0
        %v2218 = vadd.f32 %v1126, %v2217
        %v2219 = vpop.f32.mrf.mxu0
        %v2220 = vadd.f32 %v1128, %v2219
        %2221 = vmatprep.mubr.bf16.mxu0 %v593
        %2222 = vmatmul.mubr.bf16.gmra.mxu0 %v592
        %v2223 = vpop.f32.mrf.mxu0
        %v2224 = vadd.f32 %v1132, %v2223
        %v2225 = vpop.f32.mrf.mxu0
        %v2226 = vadd.f32 %v1134, %v2225
        %v2227 = vpop.f32.mrf.mxu0
        %v2228 = vadd.f32 %v1136, %v2227
        %v2229 = vpop.f32.mrf.mxu0
        %v2230 = vadd.f32 %v1138, %v2229
        %2231 = vmatprep.mubr.bf16.mxu0 %v595
        %2232 = vmatmul.mubr.bf16.gmra.mxu0 %v594
        %v2233 = vpop.f32.mrf.mxu0
        %v2234 = vadd.f32 %v1142, %v2233
        %v2235 = vpop.f32.mrf.mxu0
        %v2236 = vadd.f32 %v1144, %v2235
        %v2237 = vpop.f32.mrf.mxu0
        %v2238 = vadd.f32 %v1146, %v2237
        %v2239 = vpop.f32.mrf.mxu0
        %v2240 = vadd.f32 %v1148, %v2239
        %2241 = vmatprep.mubr.bf16.mxu0 %v597
        %2242 = vmatmul.mubr.bf16.gmra.mxu0 %v596
        %v2243 = vpop.f32.mrf.mxu0
        %v2244 = vadd.f32 %v1152, %v2243
        %v2245 = vpop.f32.mrf.mxu0
        %v2246 = vadd.f32 %v1154, %v2245
        %v2247 = vpop.f32.mrf.mxu0
        %v2248 = vadd.f32 %v1156, %v2247
        %v2249 = vpop.f32.mrf.mxu0
        %v2250 = vadd.f32 %v1158, %v2249
        %2251 = vmatprep.mubr.bf16.mxu0 %v599
        %2252 = vmatmul.mubr.bf16.gmra.mxu0 %v598
        %v2253 = vpop.f32.mrf.mxu0
        %v2254 = vadd.f32 %v1162, %v2253
        %v2255 = vpop.f32.mrf.mxu0
        %v2256 = vadd.f32 %v1164, %v2255
        %v2257 = vpop.f32.mrf.mxu0
        %v2258 = vadd.f32 %v1166, %v2257
        %v2259 = vpop.f32.mrf.mxu0
        %v2260 = vadd.f32 %v1168, %v2259
        %2261 = vmatprep.mubr.bf16.mxu0 %v601
        %2262 = vmatmul.mubr.bf16.gmra.mxu0 %v600
        %v2263 = vpop.f32.mrf.mxu0
        %v2264 = vadd.f32 %v1172, %v2263
        %v2265 = vpop.f32.mrf.mxu0
        %v2266 = vadd.f32 %v1174, %v2265
        %v2267 = vpop.f32.mrf.mxu0
        %v2268 = vadd.f32 %v1176, %v2267
        %v2269 = vpop.f32.mrf.mxu0
        %v2270 = vadd.f32 %v1178, %v2269
        %2271 = vdwg.mxu0
        %2272 = vmatprep.subr.bf16.mxu0 %v1962
        %2273 = vmatpush1.bf16.msra.mxu0 %v1961
        %2274 = vmatprep.subr.bf16.mxu0 %v1954
        %2275 = vmatpush1.bf16.msra.mxu0 %v1953
        %2276 = vmatprep.subr.bf16.mxu0 %v1946
        %2277 = vmatpush1.bf16.msra.mxu0 %v1945
        %2278 = vmatprep.subr.bf16.mxu0 %v1938
        %2279 = vmatpush1.bf16.msra.mxu0 %v1937
        %2280 = vmatprep.subr.bf16.mxu0 %v1930
        %2281 = vmatpush1.bf16.msra.mxu0 %v1929
        %2282 = vmatprep.subr.bf16.mxu0 %v1922
        %2283 = vmatpush1.bf16.msra.mxu0 %v1921
        %2284 = vmatprep.subr.bf16.mxu0 %v1914
        %2285 = vmatpush1.bf16.msra.mxu0 %v1913
        %2286 = vmatprep.subr.bf16.mxu0 %v1906
        %2287 = vmatpush1.bf16.msra.mxu0 %v1905
        %2288 = vmatprep.subr.bf16.mxu0 %v2026
        %2289 = vmatpush2.bf16.msra.mxu0 %v2025
        %2290 = vmatprep.subr.bf16.mxu0 %v2018
        %2291 = vmatpush2.bf16.msra.mxu0 %v2017
        %2292 = vmatprep.subr.bf16.mxu0 %v2010
        %2293 = vmatpush2.bf16.msra.mxu0 %v2009
        %2294 = vmatprep.subr.bf16.mxu0 %v2002
        %2295 = vmatpush2.bf16.msra.mxu0 %v2001
        %2296 = vmatprep.subr.bf16.mxu0 %v1994
        %2297 = vmatpush2.bf16.msra.mxu0 %v1993
        %2298 = vmatprep.subr.bf16.mxu0 %v1986
        %2299 = vmatpush2.bf16.msra.mxu0 %v1985
        %2300 = vmatprep.subr.bf16.mxu0 %v1978
        %2301 = vmatpush2.bf16.msra.mxu0 %v1977
        %2302 = vmatprep.subr.bf16.mxu0 %v1970
        %2303 = vmatpush2.bf16.msra.mxu0 %v1969
        %2304 = vmatprep.mubr.bf16.mxu0 %v587
        %2305 = vmatmul.mubr.bf16.gmra.mxu0 %v586
        %v2306 = vpop.f32.mrf.mxu0
        %v2307 = vadd.f32 %v1215, %v2306
        %v2308 = vpop.f32.mrf.mxu0
        %v2309 = vadd.f32 %v1217, %v2308
        %v2310 = vpop.f32.mrf.mxu0
        %v2311 = vadd.f32 %v1219, %v2310
        %v2312 = vpop.f32.mrf.mxu0
        %v2313 = vadd.f32 %v1221, %v2312
        %2314 = vmatprep.mubr.bf16.mxu0 %v589
        %2315 = vmatmul.mubr.bf16.gmra.mxu0 %v588
        %v2316 = vpop.f32.mrf.mxu0
        %v2317 = vadd.f32 %v1225, %v2316
        %v2318 = vpop.f32.mrf.mxu0
        %v2319 = vadd.f32 %v1227, %v2318
        %v2320 = vpop.f32.mrf.mxu0
        %v2321 = vadd.f32 %v1229, %v2320
        %v2322 = vpop.f32.mrf.mxu0
        %v2323 = vadd.f32 %v1231, %v2322
        %2324 = vmatprep.mubr.bf16.mxu0 %v591
        %2325 = vmatmul.mubr.bf16.gmra.mxu0 %v590
        %v2326 = vpop.f32.mrf.mxu0
        %v2327 = vadd.f32 %v1235, %v2326
        %v2328 = vpop.f32.mrf.mxu0
        %v2329 = vadd.f32 %v1237, %v2328
        %v2330 = vpop.f32.mrf.mxu0
        %v2331 = vadd.f32 %v1239, %v2330
        %v2332 = vpop.f32.mrf.mxu0
        %v2333 = vadd.f32 %v1241, %v2332
        %2334 = vmatprep.mubr.bf16.mxu0 %v593
        %2335 = vmatmul.mubr.bf16.gmra.mxu0 %v592
        %v2336 = vpop.f32.mrf.mxu0
        %v2337 = vadd.f32 %v1245, %v2336
        %v2338 = vpop.f32.mrf.mxu0
        %v2339 = vadd.f32 %v1247, %v2338
        %v2340 = vpop.f32.mrf.mxu0
        %v2341 = vadd.f32 %v1249, %v2340
        %v2342 = vpop.f32.mrf.mxu0
        %v2343 = vadd.f32 %v1251, %v2342
        %2344 = vmatprep.mubr.bf16.mxu0 %v595
        %2345 = vmatmul.mubr.bf16.gmra.mxu0 %v594
        %v2346 = vpop.f32.mrf.mxu0
        %v2347 = vadd.f32 %v1255, %v2346
        %v2348 = vpop.f32.mrf.mxu0
        %v2349 = vadd.f32 %v1257, %v2348
        %v2350 = vpop.f32.mrf.mxu0
        %v2351 = vadd.f32 %v1259, %v2350
        %v2352 = vpop.f32.mrf.mxu0
        %v2353 = vadd.f32 %v1261, %v2352
        %2354 = vmatprep.mubr.bf16.mxu0 %v597
        %2355 = vmatmul.mubr.bf16.gmra.mxu0 %v596
        %v2356 = vpop.f32.mrf.mxu0
        %v2357 = vadd.f32 %v1265, %v2356
        %v2358 = vpop.f32.mrf.mxu0
        %v2359 = vadd.f32 %v1267, %v2358
        %v2360 = vpop.f32.mrf.mxu0
        %v2361 = vadd.f32 %v1269, %v2360
        %v2362 = vpop.f32.mrf.mxu0
        %v2363 = vadd.f32 %v1271, %v2362
        %2364 = vmatprep.mubr.bf16.mxu0 %v599
        %2365 = vmatmul.mubr.bf16.gmra.mxu0 %v598
        %v2366 = vpop.f32.mrf.mxu0
        %v2367 = vadd.f32 %v1275, %v2366
        %v2368 = vpop.f32.mrf.mxu0
        %v2369 = vadd.f32 %v1277, %v2368
        %v2370 = vpop.f32.mrf.mxu0
        %v2371 = vadd.f32 %v1279, %v2370
        %v2372 = vpop.f32.mrf.mxu0
        %v2373 = vadd.f32 %v1281, %v2372
        %2374 = vmatprep.mubr.bf16.mxu0 %v601
        %2375 = vmatmul.mubr.bf16.gmra.mxu0 %v600
        %v2376 = vpop.f32.mrf.mxu0
        %v2377 = vadd.f32 %v1285, %v2376
        %v2378 = vpop.f32.mrf.mxu0
        %v2379 = vadd.f32 %v1287, %v2378
        %v2380 = vpop.f32.mrf.mxu0
        %v2381 = vadd.f32 %v1289, %v2380
        %v2382 = vpop.f32.mrf.mxu0
        %v2383 = vadd.f32 %v1291, %v2382
        %2384 = vdwg.mxu0
        %2385 = vmatprep.subr.bf16.mxu0 %v1964
        %2386 = vmatpush1.bf16.msra.mxu0 %v1963
        %2387 = vmatprep.subr.bf16.mxu0 %v1956
        %2388 = vmatpush1.bf16.msra.mxu0 %v1955
        %2389 = vmatprep.subr.bf16.mxu0 %v1948
        %2390 = vmatpush1.bf16.msra.mxu0 %v1947
        %2391 = vmatprep.subr.bf16.mxu0 %v1940
        %2392 = vmatpush1.bf16.msra.mxu0 %v1939
        %2393 = vmatprep.subr.bf16.mxu0 %v1932
        %2394 = vmatpush1.bf16.msra.mxu0 %v1931
        %2395 = vmatprep.subr.bf16.mxu0 %v1924
        %2396 = vmatpush1.bf16.msra.mxu0 %v1923
        %2397 = vmatprep.subr.bf16.mxu0 %v1916
        %2398 = vmatpush1.bf16.msra.mxu0 %v1915
        %2399 = vmatprep.subr.bf16.mxu0 %v1908
        %2400 = vmatpush1.bf16.msra.mxu0 %v1907
        %2401 = vmatprep.subr.bf16.mxu0 %v2028
        %2402 = vmatpush2.bf16.msra.mxu0 %v2027
        %2403 = vmatprep.subr.bf16.mxu0 %v2020
        %2404 = vmatpush2.bf16.msra.mxu0 %v2019
        %2405 = vmatprep.subr.bf16.mxu0 %v2012
        %2406 = vmatpush2.bf16.msra.mxu0 %v2011
        %2407 = vmatprep.subr.bf16.mxu0 %v2004
        %2408 = vmatpush2.bf16.msra.mxu0 %v2003
        %2409 = vmatprep.subr.bf16.mxu0 %v1996
        %2410 = vmatpush2.bf16.msra.mxu0 %v1995
        %2411 = vmatprep.subr.bf16.mxu0 %v1988
        %2412 = vmatpush2.bf16.msra.mxu0 %v1987
        %2413 = vmatprep.subr.bf16.mxu0 %v1980
        %2414 = vmatpush2.bf16.msra.mxu0 %v1979
        %2415 = vmatprep.subr.bf16.mxu0 %v1972
        %2416 = vmatpush2.bf16.msra.mxu0 %v1971
        %2417 = vmatprep.mubr.bf16.mxu0 %v587
        %2418 = vmatmul.mubr.bf16.gmra.mxu0 %v586
        %v2419 = vpop.f32.mrf.mxu0
        %v2420 = vadd.f32 %v1328, %v2419
        %v2421 = vpop.f32.mrf.mxu0
        %v2422 = vadd.f32 %v1330, %v2421
        %v2423 = vpop.f32.mrf.mxu0
        %v2424 = vadd.f32 %v1332, %v2423
        %v2425 = vpop.f32.mrf.mxu0
        %v2426 = vadd.f32 %v1334, %v2425
        %2427 = vmatprep.mubr.bf16.mxu0 %v589
        %2428 = vmatmul.mubr.bf16.gmra.mxu0 %v588
        %v2429 = vpop.f32.mrf.mxu0
        %v2430 = vadd.f32 %v1338, %v2429
        %v2431 = vpop.f32.mrf.mxu0
        %v2432 = vadd.f32 %v1340, %v2431
        %v2433 = vpop.f32.mrf.mxu0
        %v2434 = vadd.f32 %v1342, %v2433
        %v2435 = vpop.f32.mrf.mxu0
        %v2436 = vadd.f32 %v1344, %v2435
        %2437 = vmatprep.mubr.bf16.mxu0 %v591
        %2438 = vmatmul.mubr.bf16.gmra.mxu0 %v590
        %v2439 = vpop.f32.mrf.mxu0
        %v2440 = vadd.f32 %v1348, %v2439
        %v2441 = vpop.f32.mrf.mxu0
        %v2442 = vadd.f32 %v1350, %v2441
        %v2443 = vpop.f32.mrf.mxu0
        %v2444 = vadd.f32 %v1352, %v2443
        %v2445 = vpop.f32.mrf.mxu0
        %v2446 = vadd.f32 %v1354, %v2445
        %2447 = vmatprep.mubr.bf16.mxu0 %v593
        %2448 = vmatmul.mubr.bf16.gmra.mxu0 %v592
        %v2449 = vpop.f32.mrf.mxu0
        %v2450 = vadd.f32 %v1358, %v2449
        %v2451 = vpop.f32.mrf.mxu0
        %v2452 = vadd.f32 %v1360, %v2451
        %v2453 = vpop.f32.mrf.mxu0
        %v2454 = vadd.f32 %v1362, %v2453
        %v2455 = vpop.f32.mrf.mxu0
        %v2456 = vadd.f32 %v1364, %v2455
        %2457 = vmatprep.mubr.bf16.mxu0 %v595
        %2458 = vmatmul.mubr.bf16.gmra.mxu0 %v594
        %v2459 = vpop.f32.mrf.mxu0
        %v2460 = vadd.f32 %v1368, %v2459
        %v2461 = vpop.f32.mrf.mxu0
        %v2462 = vadd.f32 %v1370, %v2461
        %v2463 = vpop.f32.mrf.mxu0
        %v2464 = vadd.f32 %v1372, %v2463
        %v2465 = vpop.f32.mrf.mxu0
        %v2466 = vadd.f32 %v1374, %v2465
        %2467 = vmatprep.mubr.bf16.mxu0 %v597
        %2468 = vmatmul.mubr.bf16.gmra.mxu0 %v596
        %v2469 = vpop.f32.mrf.mxu0
        %v2470 = vadd.f32 %v1378, %v2469
        %v2471 = vpop.f32.mrf.mxu0
        %v2472 = vadd.f32 %v1380, %v2471
        %v2473 = vpop.f32.mrf.mxu0
        %v2474 = vadd.f32 %v1382, %v2473
        %v2475 = vpop.f32.mrf.mxu0
        %v2476 = vadd.f32 %v1384, %v2475
        %2477 = vmatprep.mubr.bf16.mxu0 %v599
        %2478 = vmatmul.mubr.bf16.gmra.mxu0 %v598
        %v2479 = vpop.f32.mrf.mxu0
        %v2480 = vadd.f32 %v1388, %v2479
        %v2481 = vpop.f32.mrf.mxu0
        %v2482 = vadd.f32 %v1390, %v2481
        %v2483 = vpop.f32.mrf.mxu0
        %v2484 = vadd.f32 %v1392, %v2483
        %v2485 = vpop.f32.mrf.mxu0
        %v2486 = vadd.f32 %v1394, %v2485
        %2487 = vmatprep.mubr.bf16.mxu0 %v601
        %2488 = vmatmul.mubr.bf16.gmra.mxu0 %v600
        %v2489 = vpop.f32.mrf.mxu0
        %v2490 = vadd.f32 %v1398, %v2489
        %v2491 = vpop.f32.mrf.mxu0
        %v2492 = vadd.f32 %v1400, %v2491
        %v2493 = vpop.f32.mrf.mxu0
        %v2494 = vadd.f32 %v1402, %v2493
        %v2495 = vpop.f32.mrf.mxu0
        %v2496 = vadd.f32 %v1404, %v2495
        %2497 = vdwg.mxu0
        %2498 = vmatprep.subr.bf16.mxu0 %v1966
        %2499 = vmatpush1.bf16.msra.mxu0 %v1965
        %2500 = vmatprep.subr.bf16.mxu0 %v1958
        %2501 = vmatpush1.bf16.msra.mxu0 %v1957
        %2502 = vmatprep.subr.bf16.mxu0 %v1950
        %2503 = vmatpush1.bf16.msra.mxu0 %v1949
        %2504 = vmatprep.subr.bf16.mxu0 %v1942
        %2505 = vmatpush1.bf16.msra.mxu0 %v1941
        %2506 = vmatprep.subr.bf16.mxu0 %v1934
        %2507 = vmatpush1.bf16.msra.mxu0 %v1933
        %2508 = vmatprep.subr.bf16.mxu0 %v1926
        %2509 = vmatpush1.bf16.msra.mxu0 %v1925
        %2510 = vmatprep.subr.bf16.mxu0 %v1918
        %2511 = vmatpush1.bf16.msra.mxu0 %v1917
        %2512 = vmatprep.subr.bf16.mxu0 %v1910
        %2513 = vmatpush1.bf16.msra.mxu0 %v1909
        %2514 = vmatprep.subr.bf16.mxu0 %v2030
        %2515 = vmatpush2.bf16.msra.mxu0 %v2029
        %2516 = vmatprep.subr.bf16.mxu0 %v2022
        %2517 = vmatpush2.bf16.msra.mxu0 %v2021
        %2518 = vmatprep.subr.bf16.mxu0 %v2014
        %2519 = vmatpush2.bf16.msra.mxu0 %v2013
        %2520 = vmatprep.subr.bf16.mxu0 %v2006
        %2521 = vmatpush2.bf16.msra.mxu0 %v2005
        %2522 = vmatprep.subr.bf16.mxu0 %v1998
        %2523 = vmatpush2.bf16.msra.mxu0 %v1997
        %2524 = vmatprep.subr.bf16.mxu0 %v1990
        %2525 = vmatpush2.bf16.msra.mxu0 %v1989
        %2526 = vmatprep.subr.bf16.mxu0 %v1982
        %2527 = vmatpush2.bf16.msra.mxu0 %v1981
        %2528 = vmatprep.subr.bf16.mxu0 %v1974
        %2529 = vmatpush2.bf16.msra.mxu0 %v1973
        %2530 = vmatprep.mubr.bf16.mxu0 %v587
        %2531 = vmatmul.mubr.bf16.gmra.mxu0 %v586
        %v2532 = vpop.f32.mrf.mxu0
        %v2533 = vadd.f32 %v1441, %v2532
        %v2534 = vpop.f32.mrf.mxu0
        %v2535 = vadd.f32 %v1443, %v2534
        %v2536 = vpop.f32.mrf.mxu0
        %v2537 = vadd.f32 %v1445, %v2536
        %v2538 = vpop.f32.mrf.mxu0
        %v2539 = vadd.f32 %v1447, %v2538
        %2540 = vmatprep.mubr.bf16.mxu0 %v589
        %2541 = vmatmul.mubr.bf16.gmra.mxu0 %v588
        %v2542 = vpop.f32.mrf.mxu0
        %v2543 = vadd.f32 %v1451, %v2542
        %v2544 = vpop.f32.mrf.mxu0
        %v2545 = vadd.f32 %v1453, %v2544
        %v2546 = vpop.f32.mrf.mxu0
        %v2547 = vadd.f32 %v1455, %v2546
        %v2548 = vpop.f32.mrf.mxu0
        %v2549 = vadd.f32 %v1457, %v2548
        %2550 = vmatprep.mubr.bf16.mxu0 %v591
        %2551 = vmatmul.mubr.bf16.gmra.mxu0 %v590
        %v2552 = vpop.f32.mrf.mxu0
        %v2553 = vadd.f32 %v1461, %v2552
        %v2554 = vpop.f32.mrf.mxu0
        %v2555 = vadd.f32 %v1463, %v2554
        %v2556 = vpop.f32.mrf.mxu0
        %v2557 = vadd.f32 %v1465, %v2556
        %v2558 = vpop.f32.mrf.mxu0
        %v2559 = vadd.f32 %v1467, %v2558
        %2560 = vmatprep.mubr.bf16.mxu0 %v593
        %2561 = vmatmul.mubr.bf16.gmra.mxu0 %v592
        %v2562 = vpop.f32.mrf.mxu0
        %v2563 = vadd.f32 %v1471, %v2562
        %v2564 = vpop.f32.mrf.mxu0
        %v2565 = vadd.f32 %v1473, %v2564
        %v2566 = vpop.f32.mrf.mxu0
        %v2567 = vadd.f32 %v1475, %v2566
        %v2568 = vpop.f32.mrf.mxu0
        %v2569 = vadd.f32 %v1477, %v2568
        %2570 = vmatprep.mubr.bf16.mxu0 %v595
        %2571 = vmatmul.mubr.bf16.gmra.mxu0 %v594
        %v2572 = vpop.f32.mrf.mxu0
        %v2573 = vadd.f32 %v1481, %v2572
        %v2574 = vpop.f32.mrf.mxu0
        %v2575 = vadd.f32 %v1483, %v2574
        %v2576 = vpop.f32.mrf.mxu0
        %v2577 = vadd.f32 %v1485, %v2576
        %v2578 = vpop.f32.mrf.mxu0
        %v2579 = vadd.f32 %v1487, %v2578
        %2580 = vmatprep.mubr.bf16.mxu0 %v597
        %2581 = vmatmul.mubr.bf16.gmra.mxu0 %v596
        %v2582 = vpop.f32.mrf.mxu0
        %v2583 = vadd.f32 %v1491, %v2582
        %v2584 = vpop.f32.mrf.mxu0
        %v2585 = vadd.f32 %v1493, %v2584
        %v2586 = vpop.f32.mrf.mxu0
        %v2587 = vadd.f32 %v1495, %v2586
        %v2588 = vpop.f32.mrf.mxu0
        %v2589 = vadd.f32 %v1497, %v2588
        %2590 = vmatprep.mubr.bf16.mxu0 %v599
        %2591 = vmatmul.mubr.bf16.gmra.mxu0 %v598
        %v2592 = vpop.f32.mrf.mxu0
        %v2593 = vadd.f32 %v1501, %v2592
        %v2594 = vpop.f32.mrf.mxu0
        %v2595 = vadd.f32 %v1503, %v2594
        %v2596 = vpop.f32.mrf.mxu0
        %v2597 = vadd.f32 %v1505, %v2596
        %v2598 = vpop.f32.mrf.mxu0
        %v2599 = vadd.f32 %v1507, %v2598
        %2600 = vmatprep.mubr.bf16.mxu0 %v601
        %2601 = vmatmul.mubr.bf16.gmra.mxu0 %v600
        %v2602 = vpop.f32.mrf.mxu0
        %v2603 = vadd.f32 %v1511, %v2602
        %v2604 = vpop.f32.mrf.mxu0
        %v2605 = vadd.f32 %v1513, %v2604
        %v2606 = vpop.f32.mrf.mxu0
        %v2607 = vadd.f32 %v1515, %v2606
        %v2608 = vpop.f32.mrf.mxu0
        %v2609 = vadd.f32 %v1517, %v2608
        %2610 = vdwg.mxu0
        %v2611 = vld [vmem:[#allocation8] sm:$0xff]
        %v2613 = vlaneseq
        %v2614 = vshrl.u32 %v2613, 7
        %v2615 = vsub.s32 0, %v2614
        %v2616 = vrot.slane %v2611, %v2615
        %v2617 = vlaneseq
        %v2618 = vshrl.u32 %v2617, 7
        %v2619 = vsub.s32 1, %v2618
        %v2620 = vrot.slane %v2611, %v2619
        %v2621 = vlaneseq
        %v2622 = vshrl.u32 %v2621, 7
        %v2623 = vsub.s32 2, %v2622
        %v2624 = vrot.slane %v2611, %v2623
        %v2625 = vlaneseq
        %v2626 = vshrl.u32 %v2625, 7
        %v2627 = vsub.s32 3, %v2626
        %v2628 = vrot.slane %v2611, %v2627
        %v2629 = vlaneseq
        %v2630 = vshrl.u32 %v2629, 7
        %v2631 = vsub.s32 4, %v2630
        %v2632 = vrot.slane %v2611, %v2631
        %v2633 = vlaneseq
        %v2634 = vshrl.u32 %v2633, 7
        %v2635 = vsub.s32 5, %v2634
        %v2636 = vrot.slane %v2611, %v2635
        %v2637 = vlaneseq
        %v2638 = vshrl.u32 %v2637, 7
        %v2639 = vsub.s32 6, %v2638
        %v2640 = vrot.slane %v2611, %v2639
        %v2641 = vlaneseq
        %v2642 = vshrl.u32 %v2641, 7
        %v2643 = vsub.s32 7, %v2642
        %v2644 = vrot.slane %v2611, %v2643
        %v2653 = vadd.f32 %v2194, %v2616
        %v2654 = vadd.f32 %v2196, %v2620
        %v2655 = vadd.f32 %v2307, %v2624
        %v2656 = vadd.f32 %v2309, %v2628
        %v2657 = vadd.f32 %v2420, %v2632
        %v2658 = vadd.f32 %v2422, %v2636
        %v2659 = vadd.f32 %v2533, %v2640
        %v2660 = vadd.f32 %v2535, %v2644
        %v2661 = vadd.f32 %v2198, %v2616
        %v2662 = vadd.f32 %v2200, %v2620
        %v2663 = vadd.f32 %v2311, %v2624
        %v2664 = vadd.f32 %v2313, %v2628
        %v2665 = vadd.f32 %v2424, %v2632
        %v2666 = vadd.f32 %v2426, %v2636
        %v2667 = vadd.f32 %v2537, %v2640
        %v2668 = vadd.f32 %v2539, %v2644
        %v2669 = vadd.f32 %v2204, %v2616
        %v2670 = vadd.f32 %v2206, %v2620
        %v2671 = vadd.f32 %v2317, %v2624
        %v2672 = vadd.f32 %v2319, %v2628
        %v2673 = vadd.f32 %v2430, %v2632
        %v2674 = vadd.f32 %v2432, %v2636
        %v2675 = vadd.f32 %v2543, %v2640
        %v2676 = vadd.f32 %v2545, %v2644
        %v2677 = vadd.f32 %v2208, %v2616
        %v2678 = vadd.f32 %v2210, %v2620
        %v2679 = vadd.f32 %v2321, %v2624
        %v2680 = vadd.f32 %v2323, %v2628
        %v2681 = vadd.f32 %v2434, %v2632
        %v2682 = vadd.f32 %v2436, %v2636
        %v2683 = vadd.f32 %v2547, %v2640
        %v2684 = vadd.f32 %v2549, %v2644
        %v2685 = vadd.f32 %v2214, %v2616
        %v2686 = vadd.f32 %v2216, %v2620
        %v2687 = vadd.f32 %v2327, %v2624
        %v2688 = vadd.f32 %v2329, %v2628
        %v2689 = vadd.f32 %v2440, %v2632
        %v2690 = vadd.f32 %v2442, %v2636
        %v2691 = vadd.f32 %v2553, %v2640
        %v2692 = vadd.f32 %v2555, %v2644
        %v2693 = vadd.f32 %v2218, %v2616
        %v2694 = vadd.f32 %v2220, %v2620
        %v2695 = vadd.f32 %v2331, %v2624
        %v2696 = vadd.f32 %v2333, %v2628
        %v2697 = vadd.f32 %v2444, %v2632
        %v2698 = vadd.f32 %v2446, %v2636
        %v2699 = vadd.f32 %v2557, %v2640
        %v2700 = vadd.f32 %v2559, %v2644
        %v2701 = vadd.f32 %v2224, %v2616
        %v2702 = vadd.f32 %v2226, %v2620
        %v2703 = vadd.f32 %v2337, %v2624
        %v2704 = vadd.f32 %v2339, %v2628
        %v2705 = vadd.f32 %v2450, %v2632
        %v2706 = vadd.f32 %v2452, %v2636
        %v2707 = vadd.f32 %v2563, %v2640
        %v2708 = vadd.f32 %v2565, %v2644
        %v2709 = vadd.f32 %v2228, %v2616
        %v2710 = vadd.f32 %v2230, %v2620
        %v2711 = vadd.f32 %v2341, %v2624
        %v2712 = vadd.f32 %v2343, %v2628
        %v2713 = vadd.f32 %v2454, %v2632
        %v2714 = vadd.f32 %v2456, %v2636
        %v2715 = vadd.f32 %v2567, %v2640
        %v2716 = vadd.f32 %v2569, %v2644
        %v2717 = vadd.f32 %v2234, %v2616
        %v2718 = vadd.f32 %v2236, %v2620
        %v2719 = vadd.f32 %v2347, %v2624
        %v2720 = vadd.f32 %v2349, %v2628
        %v2721 = vadd.f32 %v2460, %v2632
        %v2722 = vadd.f32 %v2462, %v2636
        %v2723 = vadd.f32 %v2573, %v2640
        %v2724 = vadd.f32 %v2575, %v2644
        %v2725 = vadd.f32 %v2238, %v2616
        %v2726 = vadd.f32 %v2240, %v2620
        %v2727 = vadd.f32 %v2351, %v2624
        %v2728 = vadd.f32 %v2353, %v2628
        %v2729 = vadd.f32 %v2464, %v2632
        %v2730 = vadd.f32 %v2466, %v2636
        %v2731 = vadd.f32 %v2577, %v2640
        %v2732 = vadd.f32 %v2579, %v2644
        %v2733 = vadd.f32 %v2244, %v2616
        %v2734 = vadd.f32 %v2246, %v2620
        %v2735 = vadd.f32 %v2357, %v2624
        %v2736 = vadd.f32 %v2359, %v2628
        %v2737 = vadd.f32 %v2470, %v2632
        %v2738 = vadd.f32 %v2472, %v2636
        %v2739 = vadd.f32 %v2583, %v2640
        %v2740 = vadd.f32 %v2585, %v2644
        %v2741 = vadd.f32 %v2248, %v2616
        %v2742 = vadd.f32 %v2250, %v2620
        %v2743 = vadd.f32 %v2361, %v2624
        %v2744 = vadd.f32 %v2363, %v2628
        %v2745 = vadd.f32 %v2474, %v2632
        %v2746 = vadd.f32 %v2476, %v2636
        %v2747 = vadd.f32 %v2587, %v2640
        %v2748 = vadd.f32 %v2589, %v2644
        %v2749 = vadd.f32 %v2254, %v2616
        %v2750 = vadd.f32 %v2256, %v2620
        %v2751 = vadd.f32 %v2367, %v2624
        %v2752 = vadd.f32 %v2369, %v2628
        %v2753 = vadd.f32 %v2480, %v2632
        %v2754 = vadd.f32 %v2482, %v2636
        %v2755 = vadd.f32 %v2593, %v2640
        %v2756 = vadd.f32 %v2595, %v2644
        %v2757 = vadd.f32 %v2258, %v2616
        %v2758 = vadd.f32 %v2260, %v2620
        %v2759 = vadd.f32 %v2371, %v2624
        %v2760 = vadd.f32 %v2373, %v2628
        %v2761 = vadd.f32 %v2484, %v2632
        %v2762 = vadd.f32 %v2486, %v2636
        %v2763 = vadd.f32 %v2597, %v2640
        %v2764 = vadd.f32 %v2599, %v2644
        %v2765 = vadd.f32 %v2264, %v2616
        %v2766 = vadd.f32 %v2266, %v2620
        %v2767 = vadd.f32 %v2377, %v2624
        %v2768 = vadd.f32 %v2379, %v2628
        %v2769 = vadd.f32 %v2490, %v2632
        %v2770 = vadd.f32 %v2492, %v2636
        %v2771 = vadd.f32 %v2603, %v2640
        %v2772 = vadd.f32 %v2605, %v2644
        %v2773 = vadd.f32 %v2268, %v2616
        %v2774 = vadd.f32 %v2270, %v2620
        %v2775 = vadd.f32 %v2381, %v2624
        %v2776 = vadd.f32 %v2383, %v2628
        %v2777 = vadd.f32 %v2494, %v2632
        %v2778 = vadd.f32 %v2496, %v2636
        %v2779 = vadd.f32 %v2607, %v2640
        %v2780 = vadd.f32 %v2609, %v2644
        %v2781 = vmax.f32 %v2653, 0.0
        %v2782 = vmax.f32 %v2654, 0.0
        %v2783 = vmax.f32 %v2655, 0.0
        %v2784 = vmax.f32 %v2656, 0.0
        %v2785 = vmax.f32 %v2657, 0.0
        %v2786 = vmax.f32 %v2658, 0.0
        %v2787 = vmax.f32 %v2659, 0.0
        %v2788 = vmax.f32 %v2660, 0.0
        %v2789 = vmax.f32 %v2661, 0.0
        %v2790 = vmax.f32 %v2662, 0.0
        %v2791 = vmax.f32 %v2663, 0.0
        %v2792 = vmax.f32 %v2664, 0.0
        %v2793 = vmax.f32 %v2665, 0.0
        %v2794 = vmax.f32 %v2666, 0.0
        %v2795 = vmax.f32 %v2667, 0.0
        %v2796 = vmax.f32 %v2668, 0.0
        %v2797 = vmax.f32 %v2669, 0.0
        %v2798 = vmax.f32 %v2670, 0.0
        %v2799 = vmax.f32 %v2671, 0.0
        %v2800 = vmax.f32 %v2672, 0.0
        %v2801 = vmax.f32 %v2673, 0.0
        %v2802 = vmax.f32 %v2674, 0.0
        %v2803 = vmax.f32 %v2675, 0.0
        %v2804 = vmax.f32 %v2676, 0.0
        %v2805 = vmax.f32 %v2677, 0.0
        %v2806 = vmax.f32 %v2678, 0.0
        %v2807 = vmax.f32 %v2679, 0.0
        %v2808 = vmax.f32 %v2680, 0.0
        %v2809 = vmax.f32 %v2681, 0.0
        %v2810 = vmax.f32 %v2682, 0.0
        %v2811 = vmax.f32 %v2683, 0.0
        %v2812 = vmax.f32 %v2684, 0.0
        %v2813 = vmax.f32 %v2685, 0.0
        %v2814 = vmax.f32 %v2686, 0.0
        %v2815 = vmax.f32 %v2687, 0.0
        %v2816 = vmax.f32 %v2688, 0.0
        %v2817 = vmax.f32 %v2689, 0.0
        %v2818 = vmax.f32 %v2690, 0.0
        %v2819 = vmax.f32 %v2691, 0.0
        %v2820 = vmax.f32 %v2692, 0.0
        %v2821 = vmax.f32 %v2693, 0.0
        %v2822 = vmax.f32 %v2694, 0.0
        %v2823 = vmax.f32 %v2695, 0.0
        %v2824 = vmax.f32 %v2696, 0.0
        %v2825 = vmax.f32 %v2697, 0.0
        %v2826 = vmax.f32 %v2698, 0.0
        %v2827 = vmax.f32 %v2699, 0.0
        %v2828 = vmax.f32 %v2700, 0.0
        %v2829 = vmax.f32 %v2701, 0.0
        %v2830 = vmax.f32 %v2702, 0.0
        %v2831 = vmax.f32 %v2703, 0.0
        %v2832 = vmax.f32 %v2704, 0.0
        %v2833 = vmax.f32 %v2705, 0.0
        %v2834 = vmax.f32 %v2706, 0.0
        %v2835 = vmax.f32 %v2707, 0.0
        %v2836 = vmax.f32 %v2708, 0.0
        %v2837 = vmax.f32 %v2709, 0.0
        %v2838 = vmax.f32 %v2710, 0.0
        %v2839 = vmax.f32 %v2711, 0.0
        %v2840 = vmax.f32 %v2712, 0.0
        %v2841 = vmax.f32 %v2713, 0.0
        %v2842 = vmax.f32 %v2714, 0.0
        %v2843 = vmax.f32 %v2715, 0.0
        %v2844 = vmax.f32 %v2716, 0.0
        %v2845 = vmax.f32 %v2717, 0.0
        %v2846 = vmax.f32 %v2718, 0.0
        %v2847 = vmax.f32 %v2719, 0.0
        %v2848 = vmax.f32 %v2720, 0.0
        %v2849 = vmax.f32 %v2721, 0.0
        %v2850 = vmax.f32 %v2722, 0.0
        %v2851 = vmax.f32 %v2723, 0.0
        %v2852 = vmax.f32 %v2724, 0.0
        %v2853 = vmax.f32 %v2725, 0.0
        %v2854 = vmax.f32 %v2726, 0.0
        %v2855 = vmax.f32 %v2727, 0.0
        %v2856 = vmax.f32 %v2728, 0.0
        %v2857 = vmax.f32 %v2729, 0.0
        %v2858 = vmax.f32 %v2730, 0.0
        %v2859 = vmax.f32 %v2731, 0.0
        %v2860 = vmax.f32 %v2732, 0.0
        %v2861 = vmax.f32 %v2733, 0.0
        %v2862 = vmax.f32 %v2734, 0.0
        %v2863 = vmax.f32 %v2735, 0.0
        %v2864 = vmax.f32 %v2736, 0.0
        %v2865 = vmax.f32 %v2737, 0.0
        %v2866 = vmax.f32 %v2738, 0.0
        %v2867 = vmax.f32 %v2739, 0.0
        %v2868 = vmax.f32 %v2740, 0.0
        %v2869 = vmax.f32 %v2741, 0.0
        %v2870 = vmax.f32 %v2742, 0.0
        %v2871 = vmax.f32 %v2743, 0.0
        %v2872 = vmax.f32 %v2744, 0.0
        %v2873 = vmax.f32 %v2745, 0.0
        %v2874 = vmax.f32 %v2746, 0.0
        %v2875 = vmax.f32 %v2747, 0.0
        %v2876 = vmax.f32 %v2748, 0.0
        %v2877 = vmax.f32 %v2749, 0.0
        %v2878 = vmax.f32 %v2750, 0.0
        %v2879 = vmax.f32 %v2751, 0.0
        %v2880 = vmax.f32 %v2752, 0.0
        %v2881 = vmax.f32 %v2753, 0.0
        %v2882 = vmax.f32 %v2754, 0.0
        %v2883 = vmax.f32 %v2755, 0.0
        %v2884 = vmax.f32 %v2756, 0.0
        %v2885 = vmax.f32 %v2757, 0.0
        %v2886 = vmax.f32 %v2758, 0.0
        %v2887 = vmax.f32 %v2759, 0.0
        %v2888 = vmax.f32 %v2760, 0.0
        %v2889 = vmax.f32 %v2761, 0.0
        %v2890 = vmax.f32 %v2762, 0.0
        %v2891 = vmax.f32 %v2763, 0.0
        %v2892 = vmax.f32 %v2764, 0.0
        %v2893 = vmax.f32 %v2765, 0.0
        %v2894 = vmax.f32 %v2766, 0.0
        %v2895 = vmax.f32 %v2767, 0.0
        %v2896 = vmax.f32 %v2768, 0.0
        %v2897 = vmax.f32 %v2769, 0.0
        %v2898 = vmax.f32 %v2770, 0.0
        %v2899 = vmax.f32 %v2771, 0.0
        %v2900 = vmax.f32 %v2772, 0.0
        %v2901 = vmax.f32 %v2773, 0.0
        %v2902 = vmax.f32 %v2774, 0.0
        %v2903 = vmax.f32 %v2775, 0.0
        %v2904 = vmax.f32 %v2776, 0.0
        %v2905 = vmax.f32 %v2777, 0.0
        %v2906 = vmax.f32 %v2778, 0.0
        %v2907 = vmax.f32 %v2779, 0.0
        %v2908 = vmax.f32 %v2780, 0.0
        %v2909 = vpack.c.bf16 %v2789, %v2781
        %v2910 = vpack.c.bf16 %v2790, %v2782
        %v2911 = vpack.c.bf16 %v2791, %v2783
        %v2912 = vpack.c.bf16 %v2792, %v2784
        %v2913 = vpack.c.bf16 %v2793, %v2785
        %v2914 = vpack.c.bf16 %v2794, %v2786
        %v2915 = vpack.c.bf16 %v2795, %v2787
        %v2916 = vpack.c.bf16 %v2796, %v2788
        %v2917 = vpack.c.bf16 %v2805, %v2797
        %v2918 = vpack.c.bf16 %v2806, %v2798
        %v2919 = vpack.c.bf16 %v2807, %v2799
        %v2920 = vpack.c.bf16 %v2808, %v2800
        %v2921 = vpack.c.bf16 %v2809, %v2801
        %v2922 = vpack.c.bf16 %v2810, %v2802
        %v2923 = vpack.c.bf16 %v2811, %v2803
        %v2924 = vpack.c.bf16 %v2812, %v2804
        %v2925 = vpack.c.bf16 %v2821, %v2813
        %v2926 = vpack.c.bf16 %v2822, %v2814
        %v2927 = vpack.c.bf16 %v2823, %v2815
        %v2928 = vpack.c.bf16 %v2824, %v2816
        %v2929 = vpack.c.bf16 %v2825, %v2817
        %v2930 = vpack.c.bf16 %v2826, %v2818
        %v2931 = vpack.c.bf16 %v2827, %v2819
        %v2932 = vpack.c.bf16 %v2828, %v2820
        %v2933 = vpack.c.bf16 %v2837, %v2829
        %v2934 = vpack.c.bf16 %v2838, %v2830
        %v2935 = vpack.c.bf16 %v2839, %v2831
        %v2936 = vpack.c.bf16 %v2840, %v2832
        %v2937 = vpack.c.bf16 %v2841, %v2833
        %v2938 = vpack.c.bf16 %v2842, %v2834
        %v2939 = vpack.c.bf16 %v2843, %v2835
        %v2940 = vpack.c.bf16 %v2844, %v2836
        %v2941 = vpack.c.bf16 %v2853, %v2845
        %v2942 = vpack.c.bf16 %v2854, %v2846
        %v2943 = vpack.c.bf16 %v2855, %v2847
        %v2944 = vpack.c.bf16 %v2856, %v2848
        %v2945 = vpack.c.bf16 %v2857, %v2849
        %v2946 = vpack.c.bf16 %v2858, %v2850
        %v2947 = vpack.c.bf16 %v2859, %v2851
        %v2948 = vpack.c.bf16 %v2860, %v2852
        %v2949 = vpack.c.bf16 %v2869, %v2861
        %v2950 = vpack.c.bf16 %v2870, %v2862
        %v2951 = vpack.c.bf16 %v2871, %v2863
        %v2952 = vpack.c.bf16 %v2872, %v2864
        %v2953 = vpack.c.bf16 %v2873, %v2865
        %v2954 = vpack.c.bf16 %v2874, %v2866
        %v2955 = vpack.c.bf16 %v2875, %v2867
        %v2956 = vpack.c.bf16 %v2876, %v2868
        %v2957 = vpack.c.bf16 %v2885, %v2877
        %v2958 = vpack.c.bf16 %v2886, %v2878
        %v2959 = vpack.c.bf16 %v2887, %v2879
        %v2960 = vpack.c.bf16 %v2888, %v2880
        %v2961 = vpack.c.bf16 %v2889, %v2881
        %v2962 = vpack.c.bf16 %v2890, %v2882
        %v2963 = vpack.c.bf16 %v2891, %v2883
        %v2964 = vpack.c.bf16 %v2892, %v2884
        %v2965 = vpack.c.bf16 %v2901, %v2893
        %v2966 = vpack.c.bf16 %v2902, %v2894
        %v2967 = vpack.c.bf16 %v2903, %v2895
        %v2968 = vpack.c.bf16 %v2904, %v2896
        %v2969 = vpack.c.bf16 %v2905, %v2897
        %v2970 = vpack.c.bf16 %v2906, %v2898
        %v2971 = vpack.c.bf16 %v2907, %v2899
        %v2972 = vpack.c.bf16 %v2908, %v2900
        %v2973 = vld [vmem:[#allocation10] sm:$0xff]
        %v2974 = vld [vmem:[#allocation10 + $0x8] sm:$0xff]
        %v2975 = vld [vmem:[#allocation10 + $0x10] sm:$0xff]
        %v2976 = vld [vmem:[#allocation10 + $0x18] sm:$0xff]
        %v2977 = vld [vmem:[#allocation10 + $0x20] sm:$0xff]
        %v2978 = vld [vmem:[#allocation10 + $0x28] sm:$0xff]
        %v2979 = vld [vmem:[#allocation10 + $0x30] sm:$0xff]
        %v2980 = vld [vmem:[#allocation10 + $0x38] sm:$0xff]
        %v2981 = vld [vmem:[#allocation10 + $0x40] sm:$0xff]
        %v2982 = vld [vmem:[#allocation10 + $0x48] sm:$0xff]
        %v2983 = vld [vmem:[#allocation10 + $0x50] sm:$0xff]
        %v2984 = vld [vmem:[#allocation10 + $0x58] sm:$0xff]
        %v2985 = vld [vmem:[#allocation10 + $0x60] sm:$0xff]
        %v2986 = vld [vmem:[#allocation10 + $0x68] sm:$0xff]
        %v2987 = vld [vmem:[#allocation10 + $0x70] sm:$0xff]
        %v2988 = vld [vmem:[#allocation10 + $0x78] sm:$0xff]
        %v2989 = vld [vmem:[#allocation10 + $0x80] sm:$0xff]
        %v2990 = vld [vmem:[#allocation10 + $0x88] sm:$0xff]
        %v2991 = vld [vmem:[#allocation10 + $0x90] sm:$0xff]
        %v2992 = vld [vmem:[#allocation10 + $0x98] sm:$0xff]
        %v2993 = vld [vmem:[#allocation10 + $0xa0] sm:$0xff]
        %v2994 = vld [vmem:[#allocation10 + $0xa8] sm:$0xff]
        %v2995 = vld [vmem:[#allocation10 + $0xb0] sm:$0xff]
        %v2996 = vld [vmem:[#allocation10 + $0xb8] sm:$0xff]
        %v2997 = vld [vmem:[#allocation10 + $0xc0] sm:$0xff]
        %v2998 = vld [vmem:[#allocation10 + $0xc8] sm:$0xff]
        %v2999 = vld [vmem:[#allocation10 + $0xd0] sm:$0xff]
        %v3000 = vld [vmem:[#allocation10 + $0xd8] sm:$0xff]
        %v3001 = vld [vmem:[#allocation10 + $0xe0] sm:$0xff]
        %v3002 = vld [vmem:[#allocation10 + $0xe8] sm:$0xff]
        %v3003 = vld [vmem:[#allocation10 + $0xf0] sm:$0xff]
        %v3004 = vld [vmem:[#allocation10 + $0xf8] sm:$0xff]
        %v3005 = vld [vmem:[#allocation10 + $0x100] sm:$0xff]
        %v3006 = vld [vmem:[#allocation10 + $0x108] sm:$0xff]
        %v3007 = vld [vmem:[#allocation10 + $0x110] sm:$0xff]
        %v3008 = vld [vmem:[#allocation10 + $0x118] sm:$0xff]
        %v3009 = vld [vmem:[#allocation10 + $0x120] sm:$0xff]
        %v3010 = vld [vmem:[#allocation10 + $0x128] sm:$0xff]
        %v3011 = vld [vmem:[#allocation10 + $0x130] sm:$0xff]
        %v3012 = vld [vmem:[#allocation10 + $0x138] sm:$0xff]
        %v3013 = vld [vmem:[#allocation10 + $0x140] sm:$0xff]
        %v3014 = vld [vmem:[#allocation10 + $0x148] sm:$0xff]
        %v3015 = vld [vmem:[#allocation10 + $0x150] sm:$0xff]
        %v3016 = vld [vmem:[#allocation10 + $0x158] sm:$0xff]
        %v3017 = vld [vmem:[#allocation10 + $0x160] sm:$0xff]
        %v3018 = vld [vmem:[#allocation10 + $0x168] sm:$0xff]
        %v3019 = vld [vmem:[#allocation10 + $0x170] sm:$0xff]
        %v3020 = vld [vmem:[#allocation10 + $0x178] sm:$0xff]
        %v3021 = vld [vmem:[#allocation10 + $0x180] sm:$0xff]
        %v3022 = vld [vmem:[#allocation10 + $0x188] sm:$0xff]
        %v3023 = vld [vmem:[#allocation10 + $0x190] sm:$0xff]
        %v3024 = vld [vmem:[#allocation10 + $0x198] sm:$0xff]
        %v3025 = vld [vmem:[#allocation10 + $0x1a0] sm:$0xff]
        %v3026 = vld [vmem:[#allocation10 + $0x1a8] sm:$0xff]
        %v3027 = vld [vmem:[#allocation10 + $0x1b0] sm:$0xff]
        %v3028 = vld [vmem:[#allocation10 + $0x1b8] sm:$0xff]
        %v3029 = vld [vmem:[#allocation10 + $0x1c0] sm:$0xff]
        %v3030 = vld [vmem:[#allocation10 + $0x1c8] sm:$0xff]
        %v3031 = vld [vmem:[#allocation10 + $0x1d0] sm:$0xff]
        %v3032 = vld [vmem:[#allocation10 + $0x1d8] sm:$0xff]
        %v3033 = vld [vmem:[#allocation10 + $0x1e0] sm:$0xff]
        %v3034 = vld [vmem:[#allocation10 + $0x1e8] sm:$0xff]
        %v3035 = vld [vmem:[#allocation10 + $0x1f0] sm:$0xff]
        %v3036 = vld [vmem:[#allocation10 + $0x1f8] sm:$0xff]
        %v3037 = vld [vmem:[#allocation10 + $0x200] sm:$0xff]
        %v3038 = vld [vmem:[#allocation10 + $0x208] sm:$0xff]
        %v3039 = vld [vmem:[#allocation10 + $0x210] sm:$0xff]
        %v3040 = vld [vmem:[#allocation10 + $0x218] sm:$0xff]
        %v3041 = vld [vmem:[#allocation10 + $0x220] sm:$0xff]
        %v3042 = vld [vmem:[#allocation10 + $0x228] sm:$0xff]
        %v3043 = vld [vmem:[#allocation10 + $0x230] sm:$0xff]
        %v3044 = vld [vmem:[#allocation10 + $0x238] sm:$0xff]
        %v3045 = vld [vmem:[#allocation10 + $0x240] sm:$0xff]
        %v3046 = vld [vmem:[#allocation10 + $0x248] sm:$0xff]
        %v3047 = vld [vmem:[#allocation10 + $0x250] sm:$0xff]
        %v3048 = vld [vmem:[#allocation10 + $0x258] sm:$0xff]
        %v3049 = vld [vmem:[#allocation10 + $0x260] sm:$0xff]
        %v3050 = vld [vmem:[#allocation10 + $0x268] sm:$0xff]
        %v3051 = vld [vmem:[#allocation10 + $0x270] sm:$0xff]
        %v3052 = vld [vmem:[#allocation10 + $0x278] sm:$0xff]
        %v3053 = vld [vmem:[#allocation10 + $0x280] sm:$0xff]
        %v3054 = vld [vmem:[#allocation10 + $0x288] sm:$0xff]
        %v3055 = vld [vmem:[#allocation10 + $0x290] sm:$0xff]
        %v3056 = vld [vmem:[#allocation10 + $0x298] sm:$0xff]
        %v3057 = vld [vmem:[#allocation10 + $0x2a0] sm:$0xff]
        %v3058 = vld [vmem:[#allocation10 + $0x2a8] sm:$0xff]
        %v3059 = vld [vmem:[#allocation10 + $0x2b0] sm:$0xff]
        %v3060 = vld [vmem:[#allocation10 + $0x2b8] sm:$0xff]
        %v3061 = vld [vmem:[#allocation10 + $0x2c0] sm:$0xff]
        %v3062 = vld [vmem:[#allocation10 + $0x2c8] sm:$0xff]
        %v3063 = vld [vmem:[#allocation10 + $0x2d0] sm:$0xff]
        %v3064 = vld [vmem:[#allocation10 + $0x2d8] sm:$0xff]
        %v3065 = vld [vmem:[#allocation10 + $0x2e0] sm:$0xff]
        %v3066 = vld [vmem:[#allocation10 + $0x2e8] sm:$0xff]
        %v3067 = vld [vmem:[#allocation10 + $0x2f0] sm:$0xff]
        %v3068 = vld [vmem:[#allocation10 + $0x2f8] sm:$0xff]
        %v3069 = vld [vmem:[#allocation10 + $0x300] sm:$0xff]
        %v3070 = vld [vmem:[#allocation10 + $0x308] sm:$0xff]
        %v3071 = vld [vmem:[#allocation10 + $0x310] sm:$0xff]
        %v3072 = vld [vmem:[#allocation10 + $0x318] sm:$0xff]
        %v3073 = vld [vmem:[#allocation10 + $0x320] sm:$0xff]
        %v3074 = vld [vmem:[#allocation10 + $0x328] sm:$0xff]
        %v3075 = vld [vmem:[#allocation10 + $0x330] sm:$0xff]
        %v3076 = vld [vmem:[#allocation10 + $0x338] sm:$0xff]
        %v3077 = vld [vmem:[#allocation10 + $0x340] sm:$0xff]
        %v3078 = vld [vmem:[#allocation10 + $0x348] sm:$0xff]
        %v3079 = vld [vmem:[#allocation10 + $0x350] sm:$0xff]
        %v3080 = vld [vmem:[#allocation10 + $0x358] sm:$0xff]
        %v3081 = vld [vmem:[#allocation10 + $0x360] sm:$0xff]
        %v3082 = vld [vmem:[#allocation10 + $0x368] sm:$0xff]
        %v3083 = vld [vmem:[#allocation10 + $0x370] sm:$0xff]
        %v3084 = vld [vmem:[#allocation10 + $0x378] sm:$0xff]
        %v3085 = vld [vmem:[#allocation10 + $0x380] sm:$0xff]
        %v3086 = vld [vmem:[#allocation10 + $0x388] sm:$0xff]
        %v3087 = vld [vmem:[#allocation10 + $0x390] sm:$0xff]
        %v3088 = vld [vmem:[#allocation10 + $0x398] sm:$0xff]
        %v3089 = vld [vmem:[#allocation10 + $0x3a0] sm:$0xff]
        %v3090 = vld [vmem:[#allocation10 + $0x3a8] sm:$0xff]
        %v3091 = vld [vmem:[#allocation10 + $0x3b0] sm:$0xff]
        %v3092 = vld [vmem:[#allocation10 + $0x3b8] sm:$0xff]
        %v3093 = vld [vmem:[#allocation10 + $0x3c0] sm:$0xff]
        %v3094 = vld [vmem:[#allocation10 + $0x3c8] sm:$0xff]
        %v3095 = vld [vmem:[#allocation10 + $0x3d0] sm:$0xff]
        %v3096 = vld [vmem:[#allocation10 + $0x3d8] sm:$0xff]
        %v3097 = vld [vmem:[#allocation10 + $0x3e0] sm:$0xff]
        %v3098 = vld [vmem:[#allocation10 + $0x3e8] sm:$0xff]
        %v3099 = vld [vmem:[#allocation10 + $0x3f0] sm:$0xff]
        %v3100 = vld [vmem:[#allocation10 + $0x3f8] sm:$0xff]
        %v3101 = vld [vmem:[#allocation10 + $0x400] sm:$0xff]
        %v3102 = vld [vmem:[#allocation10 + $0x408] sm:$0xff]
        %v3103 = vld [vmem:[#allocation10 + $0x410] sm:$0xff]
        %v3104 = vld [vmem:[#allocation10 + $0x418] sm:$0xff]
        %v3105 = vld [vmem:[#allocation10 + $0x420] sm:$0xff]
        %v3106 = vld [vmem:[#allocation10 + $0x428] sm:$0xff]
        %v3107 = vld [vmem:[#allocation10 + $0x430] sm:$0xff]
        %v3108 = vld [vmem:[#allocation10 + $0x438] sm:$0xff]
        %v3109 = vld [vmem:[#allocation10 + $0x440] sm:$0xff]
        %v3110 = vld [vmem:[#allocation10 + $0x448] sm:$0xff]
        %v3111 = vld [vmem:[#allocation10 + $0x450] sm:$0xff]
        %v3112 = vld [vmem:[#allocation10 + $0x458] sm:$0xff]
        %v3113 = vld [vmem:[#allocation10 + $0x460] sm:$0xff]
        %v3114 = vld [vmem:[#allocation10 + $0x468] sm:$0xff]
        %v3115 = vld [vmem:[#allocation10 + $0x470] sm:$0xff]
        %v3116 = vld [vmem:[#allocation10 + $0x478] sm:$0xff]
        %v3117 = vld [vmem:[#allocation10 + $0x480] sm:$0xff]
        %v3118 = vld [vmem:[#allocation10 + $0x488] sm:$0xff]
        %v3119 = vld [vmem:[#allocation10 + $0x490] sm:$0xff]
        %v3120 = vld [vmem:[#allocation10 + $0x498] sm:$0xff]
        %v3121 = vld [vmem:[#allocation10 + $0x4a0] sm:$0xff]
        %v3122 = vld [vmem:[#allocation10 + $0x4a8] sm:$0xff]
        %v3123 = vld [vmem:[#allocation10 + $0x4b0] sm:$0xff]
        %v3124 = vld [vmem:[#allocation10 + $0x4b8] sm:$0xff]
        %v3125 = vld [vmem:[#allocation10 + $0x4c0] sm:$0xff]
        %v3126 = vld [vmem:[#allocation10 + $0x4c8] sm:$0xff]
        %v3127 = vld [vmem:[#allocation10 + $0x4d0] sm:$0xff]
        %v3128 = vld [vmem:[#allocation10 + $0x4d8] sm:$0xff]
        %v3129 = vld [vmem:[#allocation10 + $0x4e0] sm:$0xff]
        %v3130 = vld [vmem:[#allocation10 + $0x4e8] sm:$0xff]
        %v3131 = vld [vmem:[#allocation10 + $0x4f0] sm:$0xff]
        %v3132 = vld [vmem:[#allocation10 + $0x4f8] sm:$0xff]
        %v3133 = vld [vmem:[#allocation10 + $0x500] sm:$0xff]
        %v3134 = vld [vmem:[#allocation10 + $0x508] sm:$0xff]
        %v3135 = vld [vmem:[#allocation10 + $0x510] sm:$0xff]
        %v3136 = vld [vmem:[#allocation10 + $0x518] sm:$0xff]
        %v3137 = vld [vmem:[#allocation10 + $0x520] sm:$0xff]
        %v3138 = vld [vmem:[#allocation10 + $0x528] sm:$0xff]
        %v3139 = vld [vmem:[#allocation10 + $0x530] sm:$0xff]
        %v3140 = vld [vmem:[#allocation10 + $0x538] sm:$0xff]
        %v3141 = vld [vmem:[#allocation10 + $0x540] sm:$0xff]
        %v3142 = vld [vmem:[#allocation10 + $0x548] sm:$0xff]
        %v3143 = vld [vmem:[#allocation10 + $0x550] sm:$0xff]
        %v3144 = vld [vmem:[#allocation10 + $0x558] sm:$0xff]
        %v3145 = vld [vmem:[#allocation10 + $0x560] sm:$0xff]
        %v3146 = vld [vmem:[#allocation10 + $0x568] sm:$0xff]
        %v3147 = vld [vmem:[#allocation10 + $0x570] sm:$0xff]
        %v3148 = vld [vmem:[#allocation10 + $0x578] sm:$0xff]
        %v3149 = vld [vmem:[#allocation10 + $0x580] sm:$0xff]
        %v3150 = vld [vmem:[#allocation10 + $0x588] sm:$0xff]
        %v3151 = vld [vmem:[#allocation10 + $0x590] sm:$0xff]
        %v3152 = vld [vmem:[#allocation10 + $0x598] sm:$0xff]
        %v3153 = vld [vmem:[#allocation10 + $0x5a0] sm:$0xff]
        %v3154 = vld [vmem:[#allocation10 + $0x5a8] sm:$0xff]
        %v3155 = vld [vmem:[#allocation10 + $0x5b0] sm:$0xff]
        %v3156 = vld [vmem:[#allocation10 + $0x5b8] sm:$0xff]
        %v3157 = vld [vmem:[#allocation10 + $0x5c0] sm:$0xff]
        %v3158 = vld [vmem:[#allocation10 + $0x5c8] sm:$0xff]
        %v3159 = vld [vmem:[#allocation10 + $0x5d0] sm:$0xff]
        %v3160 = vld [vmem:[#allocation10 + $0x5d8] sm:$0xff]
        %v3161 = vld [vmem:[#allocation10 + $0x5e0] sm:$0xff]
        %v3162 = vld [vmem:[#allocation10 + $0x5e8] sm:$0xff]
        %v3163 = vld [vmem:[#allocation10 + $0x5f0] sm:$0xff]
        %v3164 = vld [vmem:[#allocation10 + $0x5f8] sm:$0xff]
        %v3165 = vld [vmem:[#allocation10 + $0x600] sm:$0xff]
        %v3166 = vld [vmem:[#allocation10 + $0x608] sm:$0xff]
        %v3167 = vld [vmem:[#allocation10 + $0x610] sm:$0xff]
        %v3168 = vld [vmem:[#allocation10 + $0x618] sm:$0xff]
        %v3169 = vld [vmem:[#allocation10 + $0x620] sm:$0xff]
        %v3170 = vld [vmem:[#allocation10 + $0x628] sm:$0xff]
        %v3171 = vld [vmem:[#allocation10 + $0x630] sm:$0xff]
        %v3172 = vld [vmem:[#allocation10 + $0x638] sm:$0xff]
        %v3173 = vld [vmem:[#allocation10 + $0x640] sm:$0xff]
        %v3174 = vld [vmem:[#allocation10 + $0x648] sm:$0xff]
        %v3175 = vld [vmem:[#allocation10 + $0x650] sm:$0xff]
        %v3176 = vld [vmem:[#allocation10 + $0x658] sm:$0xff]
        %v3177 = vld [vmem:[#allocation10 + $0x660] sm:$0xff]
        %v3178 = vld [vmem:[#allocation10 + $0x668] sm:$0xff]
        %v3179 = vld [vmem:[#allocation10 + $0x670] sm:$0xff]
        %v3180 = vld [vmem:[#allocation10 + $0x678] sm:$0xff]
        %v3181 = vld [vmem:[#allocation10 + $0x680] sm:$0xff]
        %v3182 = vld [vmem:[#allocation10 + $0x688] sm:$0xff]
        %v3183 = vld [vmem:[#allocation10 + $0x690] sm:$0xff]
        %v3184 = vld [vmem:[#allocation10 + $0x698] sm:$0xff]
        %v3185 = vld [vmem:[#allocation10 + $0x6a0] sm:$0xff]
        %v3186 = vld [vmem:[#allocation10 + $0x6a8] sm:$0xff]
        %v3187 = vld [vmem:[#allocation10 + $0x6b0] sm:$0xff]
        %v3188 = vld [vmem:[#allocation10 + $0x6b8] sm:$0xff]
        %v3189 = vld [vmem:[#allocation10 + $0x6c0] sm:$0xff]
        %v3190 = vld [vmem:[#allocation10 + $0x6c8] sm:$0xff]
        %v3191 = vld [vmem:[#allocation10 + $0x6d0] sm:$0xff]
        %v3192 = vld [vmem:[#allocation10 + $0x6d8] sm:$0xff]
        %v3193 = vld [vmem:[#allocation10 + $0x6e0] sm:$0xff]
        %v3194 = vld [vmem:[#allocation10 + $0x6e8] sm:$0xff]
        %v3195 = vld [vmem:[#allocation10 + $0x6f0] sm:$0xff]
        %v3196 = vld [vmem:[#allocation10 + $0x6f8] sm:$0xff]
        %v3197 = vld [vmem:[#allocation10 + $0x700] sm:$0xff]
        %v3198 = vld [vmem:[#allocation10 + $0x708] sm:$0xff]
        %v3199 = vld [vmem:[#allocation10 + $0x710] sm:$0xff]
        %v3200 = vld [vmem:[#allocation10 + $0x718] sm:$0xff]
        %v3201 = vld [vmem:[#allocation10 + $0x720] sm:$0xff]
        %v3202 = vld [vmem:[#allocation10 + $0x728] sm:$0xff]
        %v3203 = vld [vmem:[#allocation10 + $0x730] sm:$0xff]
        %v3204 = vld [vmem:[#allocation10 + $0x738] sm:$0xff]
        %v3205 = vld [vmem:[#allocation10 + $0x740] sm:$0xff]
        %v3206 = vld [vmem:[#allocation10 + $0x748] sm:$0xff]
        %v3207 = vld [vmem:[#allocation10 + $0x750] sm:$0xff]
        %v3208 = vld [vmem:[#allocation10 + $0x758] sm:$0xff]
        %v3209 = vld [vmem:[#allocation10 + $0x760] sm:$0xff]
        %v3210 = vld [vmem:[#allocation10 + $0x768] sm:$0xff]
        %v3211 = vld [vmem:[#allocation10 + $0x770] sm:$0xff]
        %v3212 = vld [vmem:[#allocation10 + $0x778] sm:$0xff]
        %v3213 = vld [vmem:[#allocation10 + $0x780] sm:$0xff]
        %v3214 = vld [vmem:[#allocation10 + $0x788] sm:$0xff]
        %v3215 = vld [vmem:[#allocation10 + $0x790] sm:$0xff]
        %v3216 = vld [vmem:[#allocation10 + $0x798] sm:$0xff]
        %v3217 = vld [vmem:[#allocation10 + $0x7a0] sm:$0xff]
        %v3218 = vld [vmem:[#allocation10 + $0x7a8] sm:$0xff]
        %v3219 = vld [vmem:[#allocation10 + $0x7b0] sm:$0xff]
        %v3220 = vld [vmem:[#allocation10 + $0x7b8] sm:$0xff]
        %v3221 = vld [vmem:[#allocation10 + $0x7c0] sm:$0xff]
        %v3222 = vld [vmem:[#allocation10 + $0x7c8] sm:$0xff]
        %v3223 = vld [vmem:[#allocation10 + $0x7d0] sm:$0xff]
        %v3224 = vld [vmem:[#allocation10 + $0x7d8] sm:$0xff]
        %v3225 = vld [vmem:[#allocation10 + $0x7e0] sm:$0xff]
        %v3226 = vld [vmem:[#allocation10 + $0x7e8] sm:$0xff]
        %v3227 = vld [vmem:[#allocation10 + $0x7f0] sm:$0xff]
        %v3228 = vld [vmem:[#allocation10 + $0x7f8] sm:$0xff]
        %v3229 = vld [vmem:[#allocation10 + $0x800] sm:$0xff]
        %v3230 = vld [vmem:[#allocation10 + $0x808] sm:$0xff]
        %v3231 = vld [vmem:[#allocation10 + $0x810] sm:$0xff]
        %v3232 = vld [vmem:[#allocation10 + $0x818] sm:$0xff]
        %v3233 = vld [vmem:[#allocation10 + $0x820] sm:$0xff]
        %v3234 = vld [vmem:[#allocation10 + $0x828] sm:$0xff]
        %v3235 = vld [vmem:[#allocation10 + $0x830] sm:$0xff]
        %v3236 = vld [vmem:[#allocation10 + $0x838] sm:$0xff]
        %v3237 = vld [vmem:[#allocation10 + $0x840] sm:$0xff]
        %v3238 = vld [vmem:[#allocation10 + $0x848] sm:$0xff]
        %v3239 = vld [vmem:[#allocation10 + $0x850] sm:$0xff]
        %v3240 = vld [vmem:[#allocation10 + $0x858] sm:$0xff]
        %v3241 = vld [vmem:[#allocation10 + $0x860] sm:$0xff]
        %v3242 = vld [vmem:[#allocation10 + $0x868] sm:$0xff]
        %v3243 = vld [vmem:[#allocation10 + $0x870] sm:$0xff]
        %v3244 = vld [vmem:[#allocation10 + $0x878] sm:$0xff]
        %v3245 = vld [vmem:[#allocation10 + $0x880] sm:$0xff]
        %v3246 = vld [vmem:[#allocation10 + $0x888] sm:$0xff]
        %v3247 = vld [vmem:[#allocation10 + $0x890] sm:$0xff]
        %v3248 = vld [vmem:[#allocation10 + $0x898] sm:$0xff]
        %v3249 = vld [vmem:[#allocation10 + $0x8a0] sm:$0xff]
        %v3250 = vld [vmem:[#allocation10 + $0x8a8] sm:$0xff]
        %v3251 = vld [vmem:[#allocation10 + $0x8b0] sm:$0xff]
        %v3252 = vld [vmem:[#allocation10 + $0x8b8] sm:$0xff]
        %v3253 = vld [vmem:[#allocation10 + $0x8c0] sm:$0xff]
        %v3254 = vld [vmem:[#allocation10 + $0x8c8] sm:$0xff]
        %v3255 = vld [vmem:[#allocation10 + $0x8d0] sm:$0xff]
        %v3256 = vld [vmem:[#allocation10 + $0x8d8] sm:$0xff]
        %v3257 = vld [vmem:[#allocation10 + $0x8e0] sm:$0xff]
        %v3258 = vld [vmem:[#allocation10 + $0x8e8] sm:$0xff]
        %v3259 = vld [vmem:[#allocation10 + $0x8f0] sm:$0xff]
        %v3260 = vld [vmem:[#allocation10 + $0x8f8] sm:$0xff]
        %v3261 = vld [vmem:[#allocation10 + $0x900] sm:$0xff]
        %v3262 = vld [vmem:[#allocation10 + $0x908] sm:$0xff]
        %v3263 = vld [vmem:[#allocation10 + $0x910] sm:$0xff]
        %v3264 = vld [vmem:[#allocation10 + $0x918] sm:$0xff]
        %v3265 = vld [vmem:[#allocation10 + $0x920] sm:$0xff]
        %v3266 = vld [vmem:[#allocation10 + $0x928] sm:$0xff]
        %v3267 = vld [vmem:[#allocation10 + $0x930] sm:$0xff]
        %v3268 = vld [vmem:[#allocation10 + $0x938] sm:$0xff]
        %v3269 = vld [vmem:[#allocation10 + $0x940] sm:$0xff]
        %v3270 = vld [vmem:[#allocation10 + $0x948] sm:$0xff]
        %v3271 = vld [vmem:[#allocation10 + $0x950] sm:$0xff]
        %v3272 = vld [vmem:[#allocation10 + $0x958] sm:$0xff]
        %v3273 = vld [vmem:[#allocation10 + $0x960] sm:$0xff]
        %v3274 = vld [vmem:[#allocation10 + $0x968] sm:$0xff]
        %v3275 = vld [vmem:[#allocation10 + $0x970] sm:$0xff]
        %v3276 = vld [vmem:[#allocation10 + $0x978] sm:$0xff]
        %v3277 = vld [vmem:[#allocation10 + $0x980] sm:$0xff]
        %v3278 = vld [vmem:[#allocation10 + $0x988] sm:$0xff]
        %v3279 = vld [vmem:[#allocation10 + $0x990] sm:$0xff]
        %v3280 = vld [vmem:[#allocation10 + $0x998] sm:$0xff]
        %v3281 = vld [vmem:[#allocation10 + $0x9a0] sm:$0xff]
        %v3282 = vld [vmem:[#allocation10 + $0x9a8] sm:$0xff]
        %v3283 = vld [vmem:[#allocation10 + $0x9b0] sm:$0xff]
        %v3284 = vld [vmem:[#allocation10 + $0x9b8] sm:$0xff]
        %v3285 = vld [vmem:[#allocation10 + $0x9c0] sm:$0xff]
        %v3286 = vld [vmem:[#allocation10 + $0x9c8] sm:$0xff]
        %v3287 = vld [vmem:[#allocation10 + $0x9d0] sm:$0xff]
        %v3288 = vld [vmem:[#allocation10 + $0x9d8] sm:$0xff]
        %v3289 = vld [vmem:[#allocation10 + $0x9e0] sm:$0xff]
        %v3290 = vld [vmem:[#allocation10 + $0x9e8] sm:$0xff]
        %v3291 = vld [vmem:[#allocation10 + $0x9f0] sm:$0xff]
        %v3292 = vld [vmem:[#allocation10 + $0x9f8] sm:$0xff]
        %v3293 = vld [vmem:[#allocation10 + $0xa00] sm:$0xff]
        %v3294 = vld [vmem:[#allocation10 + $0xa08] sm:$0xff]
        %v3295 = vld [vmem:[#allocation10 + $0xa10] sm:$0xff]
        %v3296 = vld [vmem:[#allocation10 + $0xa18] sm:$0xff]
        %v3297 = vld [vmem:[#allocation10 + $0xa20] sm:$0xff]
        %v3298 = vld [vmem:[#allocation10 + $0xa28] sm:$0xff]
        %v3299 = vld [vmem:[#allocation10 + $0xa30] sm:$0xff]
        %v3300 = vld [vmem:[#allocation10 + $0xa38] sm:$0xff]
        %v3301 = vld [vmem:[#allocation10 + $0xa40] sm:$0xff]
        %v3302 = vld [vmem:[#allocation10 + $0xa48] sm:$0xff]
        %v3303 = vld [vmem:[#allocation10 + $0xa50] sm:$0xff]
        %v3304 = vld [vmem:[#allocation10 + $0xa58] sm:$0xff]
        %v3305 = vld [vmem:[#allocation10 + $0xa60] sm:$0xff]
        %v3306 = vld [vmem:[#allocation10 + $0xa68] sm:$0xff]
        %v3307 = vld [vmem:[#allocation10 + $0xa70] sm:$0xff]
        %v3308 = vld [vmem:[#allocation10 + $0xa78] sm:$0xff]
        %v3309 = vld [vmem:[#allocation10 + $0xa80] sm:$0xff]
        %v3310 = vld [vmem:[#allocation10 + $0xa88] sm:$0xff]
        %v3311 = vld [vmem:[#allocation10 + $0xa90] sm:$0xff]
        %v3312 = vld [vmem:[#allocation10 + $0xa98] sm:$0xff]
        %v3313 = vld [vmem:[#allocation10 + $0xaa0] sm:$0xff]
        %v3314 = vld [vmem:[#allocation10 + $0xaa8] sm:$0xff]
        %v3315 = vld [vmem:[#allocation10 + $0xab0] sm:$0xff]
        %v3316 = vld [vmem:[#allocation10 + $0xab8] sm:$0xff]
        %v3317 = vld [vmem:[#allocation10 + $0xac0] sm:$0xff]
        %v3318 = vld [vmem:[#allocation10 + $0xac8] sm:$0xff]
        %v3319 = vld [vmem:[#allocation10 + $0xad0] sm:$0xff]
        %v3320 = vld [vmem:[#allocation10 + $0xad8] sm:$0xff]
        %v3321 = vld [vmem:[#allocation10 + $0xae0] sm:$0xff]
        %v3322 = vld [vmem:[#allocation10 + $0xae8] sm:$0xff]
        %v3323 = vld [vmem:[#allocation10 + $0xaf0] sm:$0xff]
        %v3324 = vld [vmem:[#allocation10 + $0xaf8] sm:$0xff]
        %v3325 = vld [vmem:[#allocation10 + $0xb00] sm:$0xff]
        %v3326 = vld [vmem:[#allocation10 + $0xb08] sm:$0xff]
        %v3327 = vld [vmem:[#allocation10 + $0xb10] sm:$0xff]
        %v3328 = vld [vmem:[#allocation10 + $0xb18] sm:$0xff]
        %v3329 = vld [vmem:[#allocation10 + $0xb20] sm:$0xff]
        %v3330 = vld [vmem:[#allocation10 + $0xb28] sm:$0xff]
        %v3331 = vld [vmem:[#allocation10 + $0xb30] sm:$0xff]
        %v3332 = vld [vmem:[#allocation10 + $0xb38] sm:$0xff]
        %v3333 = vld [vmem:[#allocation10 + $0xb40] sm:$0xff]
        %v3334 = vld [vmem:[#allocation10 + $0xb48] sm:$0xff]
        %v3335 = vld [vmem:[#allocation10 + $0xb50] sm:$0xff]
        %v3336 = vld [vmem:[#allocation10 + $0xb58] sm:$0xff]
        %v3337 = vld [vmem:[#allocation10 + $0xb60] sm:$0xff]
        %v3338 = vld [vmem:[#allocation10 + $0xb68] sm:$0xff]
        %v3339 = vld [vmem:[#allocation10 + $0xb70] sm:$0xff]
        %v3340 = vld [vmem:[#allocation10 + $0xb78] sm:$0xff]
        %v3341 = vld [vmem:[#allocation10 + $0xb80] sm:$0xff]
        %v3342 = vld [vmem:[#allocation10 + $0xb88] sm:$0xff]
        %v3343 = vld [vmem:[#allocation10 + $0xb90] sm:$0xff]
        %v3344 = vld [vmem:[#allocation10 + $0xb98] sm:$0xff]
        %v3345 = vld [vmem:[#allocation10 + $0xba0] sm:$0xff]
        %v3346 = vld [vmem:[#allocation10 + $0xba8] sm:$0xff]
        %v3347 = vld [vmem:[#allocation10 + $0xbb0] sm:$0xff]
        %v3348 = vld [vmem:[#allocation10 + $0xbb8] sm:$0xff]
        %v3349 = vld [vmem:[#allocation10 + $0xbc0] sm:$0xff]
        %v3350 = vld [vmem:[#allocation10 + $0xbc8] sm:$0xff]
        %v3351 = vld [vmem:[#allocation10 + $0xbd0] sm:$0xff]
        %v3352 = vld [vmem:[#allocation10 + $0xbd8] sm:$0xff]
        %v3353 = vld [vmem:[#allocation10 + $0xbe0] sm:$0xff]
        %v3354 = vld [vmem:[#allocation10 + $0xbe8] sm:$0xff]
        %v3355 = vld [vmem:[#allocation10 + $0xbf0] sm:$0xff]
        %v3356 = vld [vmem:[#allocation10 + $0xbf8] sm:$0xff]
        %v3357 = vld [vmem:[#allocation10 + $0xc00] sm:$0xff]
        %v3358 = vld [vmem:[#allocation10 + $0xc08] sm:$0xff]
        %v3359 = vld [vmem:[#allocation10 + $0xc10] sm:$0xff]
        %v3360 = vld [vmem:[#allocation10 + $0xc18] sm:$0xff]
        %v3361 = vld [vmem:[#allocation10 + $0xc20] sm:$0xff]
        %v3362 = vld [vmem:[#allocation10 + $0xc28] sm:$0xff]
        %v3363 = vld [vmem:[#allocation10 + $0xc30] sm:$0xff]
        %v3364 = vld [vmem:[#allocation10 + $0xc38] sm:$0xff]
        %v3365 = vld [vmem:[#allocation10 + $0xc40] sm:$0xff]
        %v3366 = vld [vmem:[#allocation10 + $0xc48] sm:$0xff]
        %v3367 = vld [vmem:[#allocation10 + $0xc50] sm:$0xff]
        %v3368 = vld [vmem:[#allocation10 + $0xc58] sm:$0xff]
        %v3369 = vld [vmem:[#allocation10 + $0xc60] sm:$0xff]
        %v3370 = vld [vmem:[#allocation10 + $0xc68] sm:$0xff]
        %v3371 = vld [vmem:[#allocation10 + $0xc70] sm:$0xff]
        %v3372 = vld [vmem:[#allocation10 + $0xc78] sm:$0xff]
        %v3373 = vld [vmem:[#allocation10 + $0xc80] sm:$0xff]
        %v3374 = vld [vmem:[#allocation10 + $0xc88] sm:$0xff]
        %v3375 = vld [vmem:[#allocation10 + $0xc90] sm:$0xff]
        %v3376 = vld [vmem:[#allocation10 + $0xc98] sm:$0xff]
        %v3377 = vld [vmem:[#allocation10 + $0xca0] sm:$0xff]
        %v3378 = vld [vmem:[#allocation10 + $0xca8] sm:$0xff]
        %v3379 = vld [vmem:[#allocation10 + $0xcb0] sm:$0xff]
        %v3380 = vld [vmem:[#allocation10 + $0xcb8] sm:$0xff]
        %v3381 = vld [vmem:[#allocation10 + $0xcc0] sm:$0xff]
        %v3382 = vld [vmem:[#allocation10 + $0xcc8] sm:$0xff]
        %v3383 = vld [vmem:[#allocation10 + $0xcd0] sm:$0xff]
        %v3384 = vld [vmem:[#allocation10 + $0xcd8] sm:$0xff]
        %v3385 = vld [vmem:[#allocation10 + $0xce0] sm:$0xff]
        %v3386 = vld [vmem:[#allocation10 + $0xce8] sm:$0xff]
        %v3387 = vld [vmem:[#allocation10 + $0xcf0] sm:$0xff]
        %v3388 = vld [vmem:[#allocation10 + $0xcf8] sm:$0xff]
        %v3389 = vld [vmem:[#allocation10 + $0xd00] sm:$0xff]
        %v3390 = vld [vmem:[#allocation10 + $0xd08] sm:$0xff]
        %v3391 = vld [vmem:[#allocation10 + $0xd10] sm:$0xff]
        %v3392 = vld [vmem:[#allocation10 + $0xd18] sm:$0xff]
        %v3393 = vld [vmem:[#allocation10 + $0xd20] sm:$0xff]
        %v3394 = vld [vmem:[#allocation10 + $0xd28] sm:$0xff]
        %v3395 = vld [vmem:[#allocation10 + $0xd30] sm:$0xff]
        %v3396 = vld [vmem:[#allocation10 + $0xd38] sm:$0xff]
        %v3397 = vld [vmem:[#allocation10 + $0xd40] sm:$0xff]
        %v3398 = vld [vmem:[#allocation10 + $0xd48] sm:$0xff]
        %v3399 = vld [vmem:[#allocation10 + $0xd50] sm:$0xff]
        %v3400 = vld [vmem:[#allocation10 + $0xd58] sm:$0xff]
        %v3401 = vld [vmem:[#allocation10 + $0xd60] sm:$0xff]
        %v3402 = vld [vmem:[#allocation10 + $0xd68] sm:$0xff]
        %v3403 = vld [vmem:[#allocation10 + $0xd70] sm:$0xff]
        %v3404 = vld [vmem:[#allocation10 + $0xd78] sm:$0xff]
        %v3405 = vld [vmem:[#allocation10 + $0xd80] sm:$0xff]
        %v3406 = vld [vmem:[#allocation10 + $0xd88] sm:$0xff]
        %v3407 = vld [vmem:[#allocation10 + $0xd90] sm:$0xff]
        %v3408 = vld [vmem:[#allocation10 + $0xd98] sm:$0xff]
        %v3409 = vld [vmem:[#allocation10 + $0xda0] sm:$0xff]
        %v3410 = vld [vmem:[#allocation10 + $0xda8] sm:$0xff]
        %v3411 = vld [vmem:[#allocation10 + $0xdb0] sm:$0xff]
        %v3412 = vld [vmem:[#allocation10 + $0xdb8] sm:$0xff]
        %v3413 = vld [vmem:[#allocation10 + $0xdc0] sm:$0xff]
        %v3414 = vld [vmem:[#allocation10 + $0xdc8] sm:$0xff]
        %v3415 = vld [vmem:[#allocation10 + $0xdd0] sm:$0xff]
        %v3416 = vld [vmem:[#allocation10 + $0xdd8] sm:$0xff]
        %v3417 = vld [vmem:[#allocation10 + $0xde0] sm:$0xff]
        %v3418 = vld [vmem:[#allocation10 + $0xde8] sm:$0xff]
        %v3419 = vld [vmem:[#allocation10 + $0xdf0] sm:$0xff]
        %v3420 = vld [vmem:[#allocation10 + $0xdf8] sm:$0xff]
        %v3421 = vld [vmem:[#allocation10 + $0xe00] sm:$0xff]
        %v3422 = vld [vmem:[#allocation10 + $0xe08] sm:$0xff]
        %v3423 = vld [vmem:[#allocation10 + $0xe10] sm:$0xff]
        %v3424 = vld [vmem:[#allocation10 + $0xe18] sm:$0xff]
        %v3425 = vld [vmem:[#allocation10 + $0xe20] sm:$0xff]
        %v3426 = vld [vmem:[#allocation10 + $0xe28] sm:$0xff]
        %v3427 = vld [vmem:[#allocation10 + $0xe30] sm:$0xff]
        %v3428 = vld [vmem:[#allocation10 + $0xe38] sm:$0xff]
        %v3429 = vld [vmem:[#allocation10 + $0xe40] sm:$0xff]
        %v3430 = vld [vmem:[#allocation10 + $0xe48] sm:$0xff]
        %v3431 = vld [vmem:[#allocation10 + $0xe50] sm:$0xff]
        %v3432 = vld [vmem:[#allocation10 + $0xe58] sm:$0xff]
        %v3433 = vld [vmem:[#allocation10 + $0xe60] sm:$0xff]
        %v3434 = vld [vmem:[#allocation10 + $0xe68] sm:$0xff]
        %v3435 = vld [vmem:[#allocation10 + $0xe70] sm:$0xff]
        %v3436 = vld [vmem:[#allocation10 + $0xe78] sm:$0xff]
        %v3437 = vld [vmem:[#allocation10 + $0xe80] sm:$0xff]
        %v3438 = vld [vmem:[#allocation10 + $0xe88] sm:$0xff]
        %v3439 = vld [vmem:[#allocation10 + $0xe90] sm:$0xff]
        %v3440 = vld [vmem:[#allocation10 + $0xe98] sm:$0xff]
        %v3441 = vld [vmem:[#allocation10 + $0xea0] sm:$0xff]
        %v3442 = vld [vmem:[#allocation10 + $0xea8] sm:$0xff]
        %v3443 = vld [vmem:[#allocation10 + $0xeb0] sm:$0xff]
        %v3444 = vld [vmem:[#allocation10 + $0xeb8] sm:$0xff]
        %v3445 = vld [vmem:[#allocation10 + $0xec0] sm:$0xff]
        %v3446 = vld [vmem:[#allocation10 + $0xec8] sm:$0xff]
        %v3447 = vld [vmem:[#allocation10 + $0xed0] sm:$0xff]
        %v3448 = vld [vmem:[#allocation10 + $0xed8] sm:$0xff]
        %v3449 = vld [vmem:[#allocation10 + $0xee0] sm:$0xff]
        %v3450 = vld [vmem:[#allocation10 + $0xee8] sm:$0xff]
        %v3451 = vld [vmem:[#allocation10 + $0xef0] sm:$0xff]
        %v3452 = vld [vmem:[#allocation10 + $0xef8] sm:$0xff]
        %v3453 = vld [vmem:[#allocation10 + $0xf00] sm:$0xff]
        %v3454 = vld [vmem:[#allocation10 + $0xf08] sm:$0xff]
        %v3455 = vld [vmem:[#allocation10 + $0xf10] sm:$0xff]
        %v3456 = vld [vmem:[#allocation10 + $0xf18] sm:$0xff]
        %v3457 = vld [vmem:[#allocation10 + $0xf20] sm:$0xff]
        %v3458 = vld [vmem:[#allocation10 + $0xf28] sm:$0xff]
        %v3459 = vld [vmem:[#allocation10 + $0xf30] sm:$0xff]
        %v3460 = vld [vmem:[#allocation10 + $0xf38] sm:$0xff]
        %v3461 = vld [vmem:[#allocation10 + $0xf40] sm:$0xff]
        %v3462 = vld [vmem:[#allocation10 + $0xf48] sm:$0xff]
        %v3463 = vld [vmem:[#allocation10 + $0xf50] sm:$0xff]
        %v3464 = vld [vmem:[#allocation10 + $0xf58] sm:$0xff]
        %v3465 = vld [vmem:[#allocation10 + $0xf60] sm:$0xff]
        %v3466 = vld [vmem:[#allocation10 + $0xf68] sm:$0xff]
        %v3467 = vld [vmem:[#allocation10 + $0xf70] sm:$0xff]
        %v3468 = vld [vmem:[#allocation10 + $0xf78] sm:$0xff]
        %v3469 = vld [vmem:[#allocation10 + $0xf80] sm:$0xff]
        %v3470 = vld [vmem:[#allocation10 + $0xf88] sm:$0xff]
        %v3471 = vld [vmem:[#allocation10 + $0xf90] sm:$0xff]
        %v3472 = vld [vmem:[#allocation10 + $0xf98] sm:$0xff]
        %v3473 = vld [vmem:[#allocation10 + $0xfa0] sm:$0xff]
        %v3474 = vld [vmem:[#allocation10 + $0xfa8] sm:$0xff]
        %v3475 = vld [vmem:[#allocation10 + $0xfb0] sm:$0xff]
        %v3476 = vld [vmem:[#allocation10 + $0xfb8] sm:$0xff]
        %v3477 = vld [vmem:[#allocation10 + $0xfc0] sm:$0xff]
        %v3478 = vld [vmem:[#allocation10 + $0xfc8] sm:$0xff]
        %v3479 = vld [vmem:[#allocation10 + $0xfd0] sm:$0xff]
        %v3480 = vld [vmem:[#allocation10 + $0xfd8] sm:$0xff]
        %v3481 = vld [vmem:[#allocation10 + $0xfe0] sm:$0xff]
        %v3482 = vld [vmem:[#allocation10 + $0xfe8] sm:$0xff]
        %v3483 = vld [vmem:[#allocation10 + $0xff0] sm:$0xff]
        %v3484 = vld [vmem:[#allocation10 + $0xff8] sm:$0xff]
        %v3485 = vld [vmem:[#allocation11] sm:$0xff]
        %v3487 = vlaneseq
        %v3488 = vshrl.u32 %v3487, 7
        %v3489 = vsub.s32 0, %v3488
        %v3490 = vrot.slane %v3485, %v3489
        %v3491 = vlaneseq
        %v3492 = vshrl.u32 %v3491, 7
        %v3493 = vsub.s32 1, %v3492
        %v3494 = vrot.slane %v3485, %v3493
        %v3495 = vlaneseq
        %v3496 = vshrl.u32 %v3495, 7
        %v3497 = vsub.s32 2, %v3496
        %v3498 = vrot.slane %v3485, %v3497
        %v3499 = vlaneseq
        %v3500 = vshrl.u32 %v3499, 7
        %v3501 = vsub.s32 3, %v3500
        %v3502 = vrot.slane %v3485, %v3501
        %v3503 = vlaneseq
        %v3504 = vshrl.u32 %v3503, 7
        %v3505 = vsub.s32 4, %v3504
        %v3506 = vrot.slane %v3485, %v3505
        %v3507 = vlaneseq
        %v3508 = vshrl.u32 %v3507, 7
        %v3509 = vsub.s32 5, %v3508
        %v3510 = vrot.slane %v3485, %v3509
        %v3511 = vlaneseq
        %v3512 = vshrl.u32 %v3511, 7
        %v3513 = vsub.s32 6, %v3512
        %v3514 = vrot.slane %v3485, %v3513
        %v3515 = vlaneseq
        %v3516 = vshrl.u32 %v3515, 7
        %v3517 = vsub.s32 7, %v3516
        %v3518 = vrot.slane %v3485, %v3517
        %v4039 = vunpack.c.l.b16 %v2973
        %v4040 = vunpack.c.h.b16 %v2973
        %v4041 = vunpack.c.l.b16 %v2974
        %v4042 = vunpack.c.h.b16 %v2974
        %v4043 = vunpack.c.l.b16 %v2975
        %v4044 = vunpack.c.h.b16 %v2975
        %v4045 = vunpack.c.l.b16 %v2976
        %v4046 = vunpack.c.h.b16 %v2976
        %v4047 = vunpack.c.l.b16 %v2977
        %v4048 = vunpack.c.h.b16 %v2977
        %v4049 = vunpack.c.l.b16 %v2978
        %v4050 = vunpack.c.h.b16 %v2978
        %v4051 = vunpack.c.l.b16 %v2979
        %v4052 = vunpack.c.h.b16 %v2979
        %v4053 = vunpack.c.l.b16 %v2980
        %v4054 = vunpack.c.h.b16 %v2980
        %v4055 = vunpack.c.l.b16 %v2981
        %v4056 = vunpack.c.h.b16 %v2981
        %v4057 = vunpack.c.l.b16 %v2982
        %v4058 = vunpack.c.h.b16 %v2982
        %v4059 = vunpack.c.l.b16 %v2983
        %v4060 = vunpack.c.h.b16 %v2983
        %v4061 = vunpack.c.l.b16 %v2984
        %v4062 = vunpack.c.h.b16 %v2984
        %v4063 = vunpack.c.l.b16 %v2985
        %v4064 = vunpack.c.h.b16 %v2985
        %v4065 = vunpack.c.l.b16 %v2986
        %v4066 = vunpack.c.h.b16 %v2986
        %v4067 = vunpack.c.l.b16 %v2987
        %v4068 = vunpack.c.h.b16 %v2987
        %v4069 = vunpack.c.l.b16 %v2988
        %v4070 = vunpack.c.h.b16 %v2988
        %v4071 = vunpack.c.l.b16 %v2989
        %v4072 = vunpack.c.h.b16 %v2989
        %v4073 = vunpack.c.l.b16 %v2990
        %v4074 = vunpack.c.h.b16 %v2990
        %v4075 = vunpack.c.l.b16 %v2991
        %v4076 = vunpack.c.h.b16 %v2991
        %v4077 = vunpack.c.l.b16 %v2992
        %v4078 = vunpack.c.h.b16 %v2992
        %v4079 = vunpack.c.l.b16 %v2993
        %v4080 = vunpack.c.h.b16 %v2993
        %v4081 = vunpack.c.l.b16 %v2994
        %v4082 = vunpack.c.h.b16 %v2994
        %v4083 = vunpack.c.l.b16 %v2995
        %v4084 = vunpack.c.h.b16 %v2995
        %v4085 = vunpack.c.l.b16 %v2996
        %v4086 = vunpack.c.h.b16 %v2996
        %v4087 = vunpack.c.l.b16 %v2997
        %v4088 = vunpack.c.h.b16 %v2997
        %v4089 = vunpack.c.l.b16 %v2998
        %v4090 = vunpack.c.h.b16 %v2998
        %v4091 = vunpack.c.l.b16 %v2999
        %v4092 = vunpack.c.h.b16 %v2999
        %v4093 = vunpack.c.l.b16 %v3000
        %v4094 = vunpack.c.h.b16 %v3000
        %v4095 = vunpack.c.l.b16 %v3001
        %v4096 = vunpack.c.h.b16 %v3001
        %v4097 = vunpack.c.l.b16 %v3002
        %v4098 = vunpack.c.h.b16 %v3002
        %v4099 = vunpack.c.l.b16 %v3003
        %v4100 = vunpack.c.h.b16 %v3003
        %v4101 = vunpack.c.l.b16 %v3004
        %v4102 = vunpack.c.h.b16 %v3004
        %v4103 = vunpack.c.l.b16 %v3005
        %v4104 = vunpack.c.h.b16 %v3005
        %v4105 = vunpack.c.l.b16 %v3006
        %v4106 = vunpack.c.h.b16 %v3006
        %v4107 = vunpack.c.l.b16 %v3007
        %v4108 = vunpack.c.h.b16 %v3007
        %v4109 = vunpack.c.l.b16 %v3008
        %v4110 = vunpack.c.h.b16 %v3008
        %v4111 = vunpack.c.l.b16 %v3009
        %v4112 = vunpack.c.h.b16 %v3009
        %v4113 = vunpack.c.l.b16 %v3010
        %v4114 = vunpack.c.h.b16 %v3010
        %v4115 = vunpack.c.l.b16 %v3011
        %v4116 = vunpack.c.h.b16 %v3011
        %v4117 = vunpack.c.l.b16 %v3012
        %v4118 = vunpack.c.h.b16 %v3012
        %v4119 = vunpack.c.l.b16 %v3013
        %v4120 = vunpack.c.h.b16 %v3013
        %v4121 = vunpack.c.l.b16 %v3014
        %v4122 = vunpack.c.h.b16 %v3014
        %v4123 = vunpack.c.l.b16 %v3015
        %v4124 = vunpack.c.h.b16 %v3015
        %v4125 = vunpack.c.l.b16 %v3016
        %v4126 = vunpack.c.h.b16 %v3016
        %v4127 = vunpack.c.l.b16 %v3017
        %v4128 = vunpack.c.h.b16 %v3017
        %v4129 = vunpack.c.l.b16 %v3018
        %v4130 = vunpack.c.h.b16 %v3018
        %v4131 = vunpack.c.l.b16 %v3019
        %v4132 = vunpack.c.h.b16 %v3019
        %v4133 = vunpack.c.l.b16 %v3020
        %v4134 = vunpack.c.h.b16 %v3020
        %v4135 = vunpack.c.l.b16 %v3021
        %v4136 = vunpack.c.h.b16 %v3021
        %v4137 = vunpack.c.l.b16 %v3022
        %v4138 = vunpack.c.h.b16 %v3022
        %v4139 = vunpack.c.l.b16 %v3023
        %v4140 = vunpack.c.h.b16 %v3023
        %v4141 = vunpack.c.l.b16 %v3024
        %v4142 = vunpack.c.h.b16 %v3024
        %v4143 = vunpack.c.l.b16 %v3025
        %v4144 = vunpack.c.h.b16 %v3025
        %v4145 = vunpack.c.l.b16 %v3026
        %v4146 = vunpack.c.h.b16 %v3026
        %v4147 = vunpack.c.l.b16 %v3027
        %v4148 = vunpack.c.h.b16 %v3027
        %v4149 = vunpack.c.l.b16 %v3028
        %v4150 = vunpack.c.h.b16 %v3028
        %v4151 = vunpack.c.l.b16 %v3029
        %v4152 = vunpack.c.h.b16 %v3029
        %v4153 = vunpack.c.l.b16 %v3030
        %v4154 = vunpack.c.h.b16 %v3030
        %v4155 = vunpack.c.l.b16 %v3031
        %v4156 = vunpack.c.h.b16 %v3031
        %v4157 = vunpack.c.l.b16 %v3032
        %v4158 = vunpack.c.h.b16 %v3032
        %v4159 = vunpack.c.l.b16 %v3033
        %v4160 = vunpack.c.h.b16 %v3033
        %v4161 = vunpack.c.l.b16 %v3034
        %v4162 = vunpack.c.h.b16 %v3034
        %v4163 = vunpack.c.l.b16 %v3035
        %v4164 = vunpack.c.h.b16 %v3035
        %v4165 = vunpack.c.l.b16 %v3036
        %v4166 = vunpack.c.h.b16 %v3036
        %v4167 = vunpack.c.l.b16 %v3037
        %v4168 = vunpack.c.h.b16 %v3037
        %v4169 = vunpack.c.l.b16 %v3038
        %v4170 = vunpack.c.h.b16 %v3038
        %v4171 = vunpack.c.l.b16 %v3039
        %v4172 = vunpack.c.h.b16 %v3039
        %v4173 = vunpack.c.l.b16 %v3040
        %v4174 = vunpack.c.h.b16 %v3040
        %v4175 = vunpack.c.l.b16 %v3041
        %v4176 = vunpack.c.h.b16 %v3041
        %v4177 = vunpack.c.l.b16 %v3042
        %v4178 = vunpack.c.h.b16 %v3042
        %v4179 = vunpack.c.l.b16 %v3043
        %v4180 = vunpack.c.h.b16 %v3043
        %v4181 = vunpack.c.l.b16 %v3044
        %v4182 = vunpack.c.h.b16 %v3044
        %v4183 = vunpack.c.l.b16 %v3045
        %v4184 = vunpack.c.h.b16 %v3045
        %v4185 = vunpack.c.l.b16 %v3046
        %v4186 = vunpack.c.h.b16 %v3046
        %v4187 = vunpack.c.l.b16 %v3047
        %v4188 = vunpack.c.h.b16 %v3047
        %v4189 = vunpack.c.l.b16 %v3048
        %v4190 = vunpack.c.h.b16 %v3048
        %v4191 = vunpack.c.l.b16 %v3049
        %v4192 = vunpack.c.h.b16 %v3049
        %v4193 = vunpack.c.l.b16 %v3050
        %v4194 = vunpack.c.h.b16 %v3050
        %v4195 = vunpack.c.l.b16 %v3051
        %v4196 = vunpack.c.h.b16 %v3051
        %v4197 = vunpack.c.l.b16 %v3052
        %v4198 = vunpack.c.h.b16 %v3052
        %v4199 = vunpack.c.l.b16 %v3053
        %v4200 = vunpack.c.h.b16 %v3053
        %v4201 = vunpack.c.l.b16 %v3054
        %v4202 = vunpack.c.h.b16 %v3054
        %v4203 = vunpack.c.l.b16 %v3055
        %v4204 = vunpack.c.h.b16 %v3055
        %v4205 = vunpack.c.l.b16 %v3056
        %v4206 = vunpack.c.h.b16 %v3056
        %v4207 = vunpack.c.l.b16 %v3057
        %v4208 = vunpack.c.h.b16 %v3057
        %v4209 = vunpack.c.l.b16 %v3058
        %v4210 = vunpack.c.h.b16 %v3058
        %v4211 = vunpack.c.l.b16 %v3059
        %v4212 = vunpack.c.h.b16 %v3059
        %v4213 = vunpack.c.l.b16 %v3060
        %v4214 = vunpack.c.h.b16 %v3060
        %v4215 = vunpack.c.l.b16 %v3061
        %v4216 = vunpack.c.h.b16 %v3061
        %v4217 = vunpack.c.l.b16 %v3062
        %v4218 = vunpack.c.h.b16 %v3062
        %v4219 = vunpack.c.l.b16 %v3063
        %v4220 = vunpack.c.h.b16 %v3063
        %v4221 = vunpack.c.l.b16 %v3064
        %v4222 = vunpack.c.h.b16 %v3064
        %v4223 = vunpack.c.l.b16 %v3065
        %v4224 = vunpack.c.h.b16 %v3065
        %v4225 = vunpack.c.l.b16 %v3066
        %v4226 = vunpack.c.h.b16 %v3066
        %v4227 = vunpack.c.l.b16 %v3067
        %v4228 = vunpack.c.h.b16 %v3067
        %v4229 = vunpack.c.l.b16 %v3068
        %v4230 = vunpack.c.h.b16 %v3068
        %v4231 = vunpack.c.l.b16 %v3069
        %v4232 = vunpack.c.h.b16 %v3069
        %v4233 = vunpack.c.l.b16 %v3070
        %v4234 = vunpack.c.h.b16 %v3070
        %v4235 = vunpack.c.l.b16 %v3071
        %v4236 = vunpack.c.h.b16 %v3071
        %v4237 = vunpack.c.l.b16 %v3072
        %v4238 = vunpack.c.h.b16 %v3072
        %v4239 = vunpack.c.l.b16 %v3073
        %v4240 = vunpack.c.h.b16 %v3073
        %v4241 = vunpack.c.l.b16 %v3074
        %v4242 = vunpack.c.h.b16 %v3074
        %v4243 = vunpack.c.l.b16 %v3075
        %v4244 = vunpack.c.h.b16 %v3075
        %v4245 = vunpack.c.l.b16 %v3076
        %v4246 = vunpack.c.h.b16 %v3076
        %v4247 = vunpack.c.l.b16 %v3077
        %v4248 = vunpack.c.h.b16 %v3077
        %v4249 = vunpack.c.l.b16 %v3078
        %v4250 = vunpack.c.h.b16 %v3078
        %v4251 = vunpack.c.l.b16 %v3079
        %v4252 = vunpack.c.h.b16 %v3079
        %v4253 = vunpack.c.l.b16 %v3080
        %v4254 = vunpack.c.h.b16 %v3080
        %v4255 = vunpack.c.l.b16 %v3081
        %v4256 = vunpack.c.h.b16 %v3081
        %v4257 = vunpack.c.l.b16 %v3082
        %v4258 = vunpack.c.h.b16 %v3082
        %v4259 = vunpack.c.l.b16 %v3083
        %v4260 = vunpack.c.h.b16 %v3083
        %v4261 = vunpack.c.l.b16 %v3084
        %v4262 = vunpack.c.h.b16 %v3084
        %v4263 = vunpack.c.l.b16 %v3085
        %v4264 = vunpack.c.h.b16 %v3085
        %v4265 = vunpack.c.l.b16 %v3086
        %v4266 = vunpack.c.h.b16 %v3086
        %v4267 = vunpack.c.l.b16 %v3087
        %v4268 = vunpack.c.h.b16 %v3087
        %v4269 = vunpack.c.l.b16 %v3088
        %v4270 = vunpack.c.h.b16 %v3088
        %v4271 = vunpack.c.l.b16 %v3089
        %v4272 = vunpack.c.h.b16 %v3089
        %v4273 = vunpack.c.l.b16 %v3090
        %v4274 = vunpack.c.h.b16 %v3090
        %v4275 = vunpack.c.l.b16 %v3091
        %v4276 = vunpack.c.h.b16 %v3091
        %v4277 = vunpack.c.l.b16 %v3092
        %v4278 = vunpack.c.h.b16 %v3092
        %v4279 = vunpack.c.l.b16 %v3093
        %v4280 = vunpack.c.h.b16 %v3093
        %v4281 = vunpack.c.l.b16 %v3094
        %v4282 = vunpack.c.h.b16 %v3094
        %v4283 = vunpack.c.l.b16 %v3095
        %v4284 = vunpack.c.h.b16 %v3095
        %v4285 = vunpack.c.l.b16 %v3096
        %v4286 = vunpack.c.h.b16 %v3096
        %v4287 = vunpack.c.l.b16 %v3097
        %v4288 = vunpack.c.h.b16 %v3097
        %v4289 = vunpack.c.l.b16 %v3098
        %v4290 = vunpack.c.h.b16 %v3098
        %v4291 = vunpack.c.l.b16 %v3099
        %v4292 = vunpack.c.h.b16 %v3099
        %v4293 = vunpack.c.l.b16 %v3100
        %v4294 = vunpack.c.h.b16 %v3100
        %v4295 = vunpack.c.l.b16 %v3101
        %v4296 = vunpack.c.h.b16 %v3101
        %v4297 = vunpack.c.l.b16 %v3102
        %v4298 = vunpack.c.h.b16 %v3102
        %v4299 = vunpack.c.l.b16 %v3103
        %v4300 = vunpack.c.h.b16 %v3103
        %v4301 = vunpack.c.l.b16 %v3104
        %v4302 = vunpack.c.h.b16 %v3104
        %v4303 = vunpack.c.l.b16 %v3105
        %v4304 = vunpack.c.h.b16 %v3105
        %v4305 = vunpack.c.l.b16 %v3106
        %v4306 = vunpack.c.h.b16 %v3106
        %v4307 = vunpack.c.l.b16 %v3107
        %v4308 = vunpack.c.h.b16 %v3107
        %v4309 = vunpack.c.l.b16 %v3108
        %v4310 = vunpack.c.h.b16 %v3108
        %v4311 = vunpack.c.l.b16 %v3109
        %v4312 = vunpack.c.h.b16 %v3109
        %v4313 = vunpack.c.l.b16 %v3110
        %v4314 = vunpack.c.h.b16 %v3110
        %v4315 = vunpack.c.l.b16 %v3111
        %v4316 = vunpack.c.h.b16 %v3111
        %v4317 = vunpack.c.l.b16 %v3112
        %v4318 = vunpack.c.h.b16 %v3112
        %v4319 = vunpack.c.l.b16 %v3113
        %v4320 = vunpack.c.h.b16 %v3113
        %v4321 = vunpack.c.l.b16 %v3114
        %v4322 = vunpack.c.h.b16 %v3114
        %v4323 = vunpack.c.l.b16 %v3115
        %v4324 = vunpack.c.h.b16 %v3115
        %v4325 = vunpack.c.l.b16 %v3116
        %v4326 = vunpack.c.h.b16 %v3116
        %v4327 = vunpack.c.l.b16 %v3117
        %v4328 = vunpack.c.h.b16 %v3117
        %v4329 = vunpack.c.l.b16 %v3118
        %v4330 = vunpack.c.h.b16 %v3118
        %v4331 = vunpack.c.l.b16 %v3119
        %v4332 = vunpack.c.h.b16 %v3119
        %v4333 = vunpack.c.l.b16 %v3120
        %v4334 = vunpack.c.h.b16 %v3120
        %v4335 = vunpack.c.l.b16 %v3121
        %v4336 = vunpack.c.h.b16 %v3121
        %v4337 = vunpack.c.l.b16 %v3122
        %v4338 = vunpack.c.h.b16 %v3122
        %v4339 = vunpack.c.l.b16 %v3123
        %v4340 = vunpack.c.h.b16 %v3123
        %v4341 = vunpack.c.l.b16 %v3124
        %v4342 = vunpack.c.h.b16 %v3124
        %v4343 = vunpack.c.l.b16 %v3125
        %v4344 = vunpack.c.h.b16 %v3125
        %v4345 = vunpack.c.l.b16 %v3126
        %v4346 = vunpack.c.h.b16 %v3126
        %v4347 = vunpack.c.l.b16 %v3127
        %v4348 = vunpack.c.h.b16 %v3127
        %v4349 = vunpack.c.l.b16 %v3128
        %v4350 = vunpack.c.h.b16 %v3128
        %v4351 = vunpack.c.l.b16 %v3129
        %v4352 = vunpack.c.h.b16 %v3129
        %v4353 = vunpack.c.l.b16 %v3130
        %v4354 = vunpack.c.h.b16 %v3130
        %v4355 = vunpack.c.l.b16 %v3131
        %v4356 = vunpack.c.h.b16 %v3131
        %v4357 = vunpack.c.l.b16 %v3132
        %v4358 = vunpack.c.h.b16 %v3132
        %v4359 = vunpack.c.l.b16 %v3133
        %v4360 = vunpack.c.h.b16 %v3133
        %v4361 = vunpack.c.l.b16 %v3134
        %v4362 = vunpack.c.h.b16 %v3134
        %v4363 = vunpack.c.l.b16 %v3135
        %v4364 = vunpack.c.h.b16 %v3135
        %v4365 = vunpack.c.l.b16 %v3136
        %v4366 = vunpack.c.h.b16 %v3136
        %v4367 = vunpack.c.l.b16 %v3137
        %v4368 = vunpack.c.h.b16 %v3137
        %v4369 = vunpack.c.l.b16 %v3138
        %v4370 = vunpack.c.h.b16 %v3138
        %v4371 = vunpack.c.l.b16 %v3139
        %v4372 = vunpack.c.h.b16 %v3139
        %v4373 = vunpack.c.l.b16 %v3140
        %v4374 = vunpack.c.h.b16 %v3140
        %v4375 = vunpack.c.l.b16 %v3141
        %v4376 = vunpack.c.h.b16 %v3141
        %v4377 = vunpack.c.l.b16 %v3142
        %v4378 = vunpack.c.h.b16 %v3142
        %v4379 = vunpack.c.l.b16 %v3143
        %v4380 = vunpack.c.h.b16 %v3143
        %v4381 = vunpack.c.l.b16 %v3144
        %v4382 = vunpack.c.h.b16 %v3144
        %v4383 = vunpack.c.l.b16 %v3145
        %v4384 = vunpack.c.h.b16 %v3145
        %v4385 = vunpack.c.l.b16 %v3146
        %v4386 = vunpack.c.h.b16 %v3146
        %v4387 = vunpack.c.l.b16 %v3147
        %v4388 = vunpack.c.h.b16 %v3147
        %v4389 = vunpack.c.l.b16 %v3148
        %v4390 = vunpack.c.h.b16 %v3148
        %v4391 = vunpack.c.l.b16 %v3149
        %v4392 = vunpack.c.h.b16 %v3149
        %v4393 = vunpack.c.l.b16 %v3150
        %v4394 = vunpack.c.h.b16 %v3150
        %v4395 = vunpack.c.l.b16 %v3151
        %v4396 = vunpack.c.h.b16 %v3151
        %v4397 = vunpack.c.l.b16 %v3152
        %v4398 = vunpack.c.h.b16 %v3152
        %v4399 = vunpack.c.l.b16 %v3153
        %v4400 = vunpack.c.h.b16 %v3153
        %v4401 = vunpack.c.l.b16 %v3154
        %v4402 = vunpack.c.h.b16 %v3154
        %v4403 = vunpack.c.l.b16 %v3155
        %v4404 = vunpack.c.h.b16 %v3155
        %v4405 = vunpack.c.l.b16 %v3156
        %v4406 = vunpack.c.h.b16 %v3156
        %v4407 = vunpack.c.l.b16 %v3157
        %v4408 = vunpack.c.h.b16 %v3157
        %v4409 = vunpack.c.l.b16 %v3158
        %v4410 = vunpack.c.h.b16 %v3158
        %v4411 = vunpack.c.l.b16 %v3159
        %v4412 = vunpack.c.h.b16 %v3159
        %v4413 = vunpack.c.l.b16 %v3160
        %v4414 = vunpack.c.h.b16 %v3160
        %v4415 = vunpack.c.l.b16 %v3161
        %v4416 = vunpack.c.h.b16 %v3161
        %v4417 = vunpack.c.l.b16 %v3162
        %v4418 = vunpack.c.h.b16 %v3162
        %v4419 = vunpack.c.l.b16 %v3163
        %v4420 = vunpack.c.h.b16 %v3163
        %v4421 = vunpack.c.l.b16 %v3164
        %v4422 = vunpack.c.h.b16 %v3164
        %v4423 = vunpack.c.l.b16 %v3165
        %v4424 = vunpack.c.h.b16 %v3165
        %v4425 = vunpack.c.l.b16 %v3166
        %v4426 = vunpack.c.h.b16 %v3166
        %v4427 = vunpack.c.l.b16 %v3167
        %v4428 = vunpack.c.h.b16 %v3167
        %v4429 = vunpack.c.l.b16 %v3168
        %v4430 = vunpack.c.h.b16 %v3168
        %v4431 = vunpack.c.l.b16 %v3169
        %v4432 = vunpack.c.h.b16 %v3169
        %v4433 = vunpack.c.l.b16 %v3170
        %v4434 = vunpack.c.h.b16 %v3170
        %v4435 = vunpack.c.l.b16 %v3171
        %v4436 = vunpack.c.h.b16 %v3171
        %v4437 = vunpack.c.l.b16 %v3172
        %v4438 = vunpack.c.h.b16 %v3172
        %v4439 = vunpack.c.l.b16 %v3173
        %v4440 = vunpack.c.h.b16 %v3173
        %v4441 = vunpack.c.l.b16 %v3174
        %v4442 = vunpack.c.h.b16 %v3174
        %v4443 = vunpack.c.l.b16 %v3175
        %v4444 = vunpack.c.h.b16 %v3175
        %v4445 = vunpack.c.l.b16 %v3176
        %v4446 = vunpack.c.h.b16 %v3176
        %v4447 = vunpack.c.l.b16 %v3177
        %v4448 = vunpack.c.h.b16 %v3177
        %v4449 = vunpack.c.l.b16 %v3178
        %v4450 = vunpack.c.h.b16 %v3178
        %v4451 = vunpack.c.l.b16 %v3179
        %v4452 = vunpack.c.h.b16 %v3179
        %v4453 = vunpack.c.l.b16 %v3180
        %v4454 = vunpack.c.h.b16 %v3180
        %v4455 = vunpack.c.l.b16 %v3181
        %v4456 = vunpack.c.h.b16 %v3181
        %v4457 = vunpack.c.l.b16 %v3182
        %v4458 = vunpack.c.h.b16 %v3182
        %v4459 = vunpack.c.l.b16 %v3183
        %v4460 = vunpack.c.h.b16 %v3183
        %v4461 = vunpack.c.l.b16 %v3184
        %v4462 = vunpack.c.h.b16 %v3184
        %v4463 = vunpack.c.l.b16 %v3185
        %v4464 = vunpack.c.h.b16 %v3185
        %v4465 = vunpack.c.l.b16 %v3186
        %v4466 = vunpack.c.h.b16 %v3186
        %v4467 = vunpack.c.l.b16 %v3187
        %v4468 = vunpack.c.h.b16 %v3187
        %v4469 = vunpack.c.l.b16 %v3188
        %v4470 = vunpack.c.h.b16 %v3188
        %v4471 = vunpack.c.l.b16 %v3189
        %v4472 = vunpack.c.h.b16 %v3189
        %v4473 = vunpack.c.l.b16 %v3190
        %v4474 = vunpack.c.h.b16 %v3190
        %v4475 = vunpack.c.l.b16 %v3191
        %v4476 = vunpack.c.h.b16 %v3191
        %v4477 = vunpack.c.l.b16 %v3192
        %v4478 = vunpack.c.h.b16 %v3192
        %v4479 = vunpack.c.l.b16 %v3193
        %v4480 = vunpack.c.h.b16 %v3193
        %v4481 = vunpack.c.l.b16 %v3194
        %v4482 = vunpack.c.h.b16 %v3194
        %v4483 = vunpack.c.l.b16 %v3195
        %v4484 = vunpack.c.h.b16 %v3195
        %v4485 = vunpack.c.l.b16 %v3196
        %v4486 = vunpack.c.h.b16 %v3196
        %v4487 = vunpack.c.l.b16 %v3197
        %v4488 = vunpack.c.h.b16 %v3197
        %v4489 = vunpack.c.l.b16 %v3198
        %v4490 = vunpack.c.h.b16 %v3198
        %v4491 = vunpack.c.l.b16 %v3199
        %v4492 = vunpack.c.h.b16 %v3199
        %v4493 = vunpack.c.l.b16 %v3200
        %v4494 = vunpack.c.h.b16 %v3200
        %v4495 = vunpack.c.l.b16 %v3201
        %v4496 = vunpack.c.h.b16 %v3201
        %v4497 = vunpack.c.l.b16 %v3202
        %v4498 = vunpack.c.h.b16 %v3202
        %v4499 = vunpack.c.l.b16 %v3203
        %v4500 = vunpack.c.h.b16 %v3203
        %v4501 = vunpack.c.l.b16 %v3204
        %v4502 = vunpack.c.h.b16 %v3204
        %v4503 = vunpack.c.l.b16 %v3205
        %v4504 = vunpack.c.h.b16 %v3205
        %v4505 = vunpack.c.l.b16 %v3206
        %v4506 = vunpack.c.h.b16 %v3206
        %v4507 = vunpack.c.l.b16 %v3207
        %v4508 = vunpack.c.h.b16 %v3207
        %v4509 = vunpack.c.l.b16 %v3208
        %v4510 = vunpack.c.h.b16 %v3208
        %v4511 = vunpack.c.l.b16 %v3209
        %v4512 = vunpack.c.h.b16 %v3209
        %v4513 = vunpack.c.l.b16 %v3210
        %v4514 = vunpack.c.h.b16 %v3210
        %v4515 = vunpack.c.l.b16 %v3211
        %v4516 = vunpack.c.h.b16 %v3211
        %v4517 = vunpack.c.l.b16 %v3212
        %v4518 = vunpack.c.h.b16 %v3212
        %v4519 = vunpack.c.l.b16 %v3213
        %v4520 = vunpack.c.h.b16 %v3213
        %v4521 = vunpack.c.l.b16 %v3214
        %v4522 = vunpack.c.h.b16 %v3214
        %v4523 = vunpack.c.l.b16 %v3215
        %v4524 = vunpack.c.h.b16 %v3215
        %v4525 = vunpack.c.l.b16 %v3216
        %v4526 = vunpack.c.h.b16 %v3216
        %v4527 = vunpack.c.l.b16 %v3217
        %v4528 = vunpack.c.h.b16 %v3217
        %v4529 = vunpack.c.l.b16 %v3218
        %v4530 = vunpack.c.h.b16 %v3218
        %v4531 = vunpack.c.l.b16 %v3219
        %v4532 = vunpack.c.h.b16 %v3219
        %v4533 = vunpack.c.l.b16 %v3220
        %v4534 = vunpack.c.h.b16 %v3220
        %v4535 = vunpack.c.l.b16 %v3221
        %v4536 = vunpack.c.h.b16 %v3221
        %v4537 = vunpack.c.l.b16 %v3222
        %v4538 = vunpack.c.h.b16 %v3222
        %v4539 = vunpack.c.l.b16 %v3223
        %v4540 = vunpack.c.h.b16 %v3223
        %v4541 = vunpack.c.l.b16 %v3224
        %v4542 = vunpack.c.h.b16 %v3224
        %v4543 = vunpack.c.l.b16 %v3225
        %v4544 = vunpack.c.h.b16 %v3225
        %v4545 = vunpack.c.l.b16 %v3226
        %v4546 = vunpack.c.h.b16 %v3226
        %v4547 = vunpack.c.l.b16 %v3227
        %v4548 = vunpack.c.h.b16 %v3227
        %v4549 = vunpack.c.l.b16 %v3228
        %v4550 = vunpack.c.h.b16 %v3228
        %v4551 = vunpack.c.l.b16 %v3229
        %v4552 = vunpack.c.h.b16 %v3229
        %v4553 = vunpack.c.l.b16 %v3230
        %v4554 = vunpack.c.h.b16 %v3230
        %v4555 = vunpack.c.l.b16 %v3231
        %v4556 = vunpack.c.h.b16 %v3231
        %v4557 = vunpack.c.l.b16 %v3232
        %v4558 = vunpack.c.h.b16 %v3232
        %v4559 = vunpack.c.l.b16 %v3233
        %v4560 = vunpack.c.h.b16 %v3233
        %v4561 = vunpack.c.l.b16 %v3234
        %v4562 = vunpack.c.h.b16 %v3234
        %v4563 = vunpack.c.l.b16 %v3235
        %v4564 = vunpack.c.h.b16 %v3235
        %v4565 = vunpack.c.l.b16 %v3236
        %v4566 = vunpack.c.h.b16 %v3236
        %v4567 = vunpack.c.l.b16 %v3237
        %v4568 = vunpack.c.h.b16 %v3237
        %v4569 = vunpack.c.l.b16 %v3238
        %v4570 = vunpack.c.h.b16 %v3238
        %v4571 = vunpack.c.l.b16 %v3239
        %v4572 = vunpack.c.h.b16 %v3239
        %v4573 = vunpack.c.l.b16 %v3240
        %v4574 = vunpack.c.h.b16 %v3240
        %v4575 = vunpack.c.l.b16 %v3241
        %v4576 = vunpack.c.h.b16 %v3241
        %v4577 = vunpack.c.l.b16 %v3242
        %v4578 = vunpack.c.h.b16 %v3242
        %v4579 = vunpack.c.l.b16 %v3243
        %v4580 = vunpack.c.h.b16 %v3243
        %v4581 = vunpack.c.l.b16 %v3244
        %v4582 = vunpack.c.h.b16 %v3244
        %v4583 = vunpack.c.l.b16 %v3245
        %v4584 = vunpack.c.h.b16 %v3245
        %v4585 = vunpack.c.l.b16 %v3246
        %v4586 = vunpack.c.h.b16 %v3246
        %v4587 = vunpack.c.l.b16 %v3247
        %v4588 = vunpack.c.h.b16 %v3247
        %v4589 = vunpack.c.l.b16 %v3248
        %v4590 = vunpack.c.h.b16 %v3248
        %v4591 = vunpack.c.l.b16 %v3249
        %v4592 = vunpack.c.h.b16 %v3249
        %v4593 = vunpack.c.l.b16 %v3250
        %v4594 = vunpack.c.h.b16 %v3250
        %v4595 = vunpack.c.l.b16 %v3251
        %v4596 = vunpack.c.h.b16 %v3251
        %v4597 = vunpack.c.l.b16 %v3252
        %v4598 = vunpack.c.h.b16 %v3252
        %v4599 = vunpack.c.l.b16 %v3253
        %v4600 = vunpack.c.h.b16 %v3253
        %v4601 = vunpack.c.l.b16 %v3254
        %v4602 = vunpack.c.h.b16 %v3254
        %v4603 = vunpack.c.l.b16 %v3255
        %v4604 = vunpack.c.h.b16 %v3255
        %v4605 = vunpack.c.l.b16 %v3256
        %v4606 = vunpack.c.h.b16 %v3256
        %v4607 = vunpack.c.l.b16 %v3257
        %v4608 = vunpack.c.h.b16 %v3257
        %v4609 = vunpack.c.l.b16 %v3258
        %v4610 = vunpack.c.h.b16 %v3258
        %v4611 = vunpack.c.l.b16 %v3259
        %v4612 = vunpack.c.h.b16 %v3259
        %v4613 = vunpack.c.l.b16 %v3260
        %v4614 = vunpack.c.h.b16 %v3260
        %v4615 = vunpack.c.l.b16 %v3261
        %v4616 = vunpack.c.h.b16 %v3261
        %v4617 = vunpack.c.l.b16 %v3262
        %v4618 = vunpack.c.h.b16 %v3262
        %v4619 = vunpack.c.l.b16 %v3263
        %v4620 = vunpack.c.h.b16 %v3263
        %v4621 = vunpack.c.l.b16 %v3264
        %v4622 = vunpack.c.h.b16 %v3264
        %v4623 = vunpack.c.l.b16 %v3265
        %v4624 = vunpack.c.h.b16 %v3265
        %v4625 = vunpack.c.l.b16 %v3266
        %v4626 = vunpack.c.h.b16 %v3266
        %v4627 = vunpack.c.l.b16 %v3267
        %v4628 = vunpack.c.h.b16 %v3267
        %v4629 = vunpack.c.l.b16 %v3268
        %v4630 = vunpack.c.h.b16 %v3268
        %v4631 = vunpack.c.l.b16 %v3269
        %v4632 = vunpack.c.h.b16 %v3269
        %v4633 = vunpack.c.l.b16 %v3270
        %v4634 = vunpack.c.h.b16 %v3270
        %v4635 = vunpack.c.l.b16 %v3271
        %v4636 = vunpack.c.h.b16 %v3271
        %v4637 = vunpack.c.l.b16 %v3272
        %v4638 = vunpack.c.h.b16 %v3272
        %v4639 = vunpack.c.l.b16 %v3273
        %v4640 = vunpack.c.h.b16 %v3273
        %v4641 = vunpack.c.l.b16 %v3274
        %v4642 = vunpack.c.h.b16 %v3274
        %v4643 = vunpack.c.l.b16 %v3275
        %v4644 = vunpack.c.h.b16 %v3275
        %v4645 = vunpack.c.l.b16 %v3276
        %v4646 = vunpack.c.h.b16 %v3276
        %v4647 = vunpack.c.l.b16 %v3277
        %v4648 = vunpack.c.h.b16 %v3277
        %v4649 = vunpack.c.l.b16 %v3278
        %v4650 = vunpack.c.h.b16 %v3278
        %v4651 = vunpack.c.l.b16 %v3279
        %v4652 = vunpack.c.h.b16 %v3279
        %v4653 = vunpack.c.l.b16 %v3280
        %v4654 = vunpack.c.h.b16 %v3280
        %v4655 = vunpack.c.l.b16 %v3281
        %v4656 = vunpack.c.h.b16 %v3281
        %v4657 = vunpack.c.l.b16 %v3282
        %v4658 = vunpack.c.h.b16 %v3282
        %v4659 = vunpack.c.l.b16 %v3283
        %v4660 = vunpack.c.h.b16 %v3283
        %v4661 = vunpack.c.l.b16 %v3284
        %v4662 = vunpack.c.h.b16 %v3284
        %v4663 = vunpack.c.l.b16 %v3285
        %v4664 = vunpack.c.h.b16 %v3285
        %v4665 = vunpack.c.l.b16 %v3286
        %v4666 = vunpack.c.h.b16 %v3286
        %v4667 = vunpack.c.l.b16 %v3287
        %v4668 = vunpack.c.h.b16 %v3287
        %v4669 = vunpack.c.l.b16 %v3288
        %v4670 = vunpack.c.h.b16 %v3288
        %v4671 = vunpack.c.l.b16 %v3289
        %v4672 = vunpack.c.h.b16 %v3289
        %v4673 = vunpack.c.l.b16 %v3290
        %v4674 = vunpack.c.h.b16 %v3290
        %v4675 = vunpack.c.l.b16 %v3291
        %v4676 = vunpack.c.h.b16 %v3291
        %v4677 = vunpack.c.l.b16 %v3292
        %v4678 = vunpack.c.h.b16 %v3292
        %v4679 = vunpack.c.l.b16 %v3293
        %v4680 = vunpack.c.h.b16 %v3293
        %v4681 = vunpack.c.l.b16 %v3294
        %v4682 = vunpack.c.h.b16 %v3294
        %v4683 = vunpack.c.l.b16 %v3295
        %v4684 = vunpack.c.h.b16 %v3295
        %v4685 = vunpack.c.l.b16 %v3296
        %v4686 = vunpack.c.h.b16 %v3296
        %v4687 = vunpack.c.l.b16 %v3297
        %v4688 = vunpack.c.h.b16 %v3297
        %v4689 = vunpack.c.l.b16 %v3298
        %v4690 = vunpack.c.h.b16 %v3298
        %v4691 = vunpack.c.l.b16 %v3299
        %v4692 = vunpack.c.h.b16 %v3299
        %v4693 = vunpack.c.l.b16 %v3300
        %v4694 = vunpack.c.h.b16 %v3300
        %v4695 = vunpack.c.l.b16 %v3301
        %v4696 = vunpack.c.h.b16 %v3301
        %v4697 = vunpack.c.l.b16 %v3302
        %v4698 = vunpack.c.h.b16 %v3302
        %v4699 = vunpack.c.l.b16 %v3303
        %v4700 = vunpack.c.h.b16 %v3303
        %v4701 = vunpack.c.l.b16 %v3304
        %v4702 = vunpack.c.h.b16 %v3304
        %v4703 = vunpack.c.l.b16 %v3305
        %v4704 = vunpack.c.h.b16 %v3305
        %v4705 = vunpack.c.l.b16 %v3306
        %v4706 = vunpack.c.h.b16 %v3306
        %v4707 = vunpack.c.l.b16 %v3307
        %v4708 = vunpack.c.h.b16 %v3307
        %v4709 = vunpack.c.l.b16 %v3308
        %v4710 = vunpack.c.h.b16 %v3308
        %v4711 = vunpack.c.l.b16 %v3309
        %v4712 = vunpack.c.h.b16 %v3309
        %v4713 = vunpack.c.l.b16 %v3310
        %v4714 = vunpack.c.h.b16 %v3310
        %v4715 = vunpack.c.l.b16 %v3311
        %v4716 = vunpack.c.h.b16 %v3311
        %v4717 = vunpack.c.l.b16 %v3312
        %v4718 = vunpack.c.h.b16 %v3312
        %v4719 = vunpack.c.l.b16 %v3313
        %v4720 = vunpack.c.h.b16 %v3313
        %v4721 = vunpack.c.l.b16 %v3314
        %v4722 = vunpack.c.h.b16 %v3314
        %v4723 = vunpack.c.l.b16 %v3315
        %v4724 = vunpack.c.h.b16 %v3315
        %v4725 = vunpack.c.l.b16 %v3316
        %v4726 = vunpack.c.h.b16 %v3316
        %v4727 = vunpack.c.l.b16 %v3317
        %v4728 = vunpack.c.h.b16 %v3317
        %v4729 = vunpack.c.l.b16 %v3318
        %v4730 = vunpack.c.h.b16 %v3318
        %v4731 = vunpack.c.l.b16 %v3319
        %v4732 = vunpack.c.h.b16 %v3319
        %v4733 = vunpack.c.l.b16 %v3320
        %v4734 = vunpack.c.h.b16 %v3320
        %v4735 = vunpack.c.l.b16 %v3321
        %v4736 = vunpack.c.h.b16 %v3321
        %v4737 = vunpack.c.l.b16 %v3322
        %v4738 = vunpack.c.h.b16 %v3322
        %v4739 = vunpack.c.l.b16 %v3323
        %v4740 = vunpack.c.h.b16 %v3323
        %v4741 = vunpack.c.l.b16 %v3324
        %v4742 = vunpack.c.h.b16 %v3324
        %v4743 = vunpack.c.l.b16 %v3325
        %v4744 = vunpack.c.h.b16 %v3325
        %v4745 = vunpack.c.l.b16 %v3326
        %v4746 = vunpack.c.h.b16 %v3326
        %v4747 = vunpack.c.l.b16 %v3327
        %v4748 = vunpack.c.h.b16 %v3327
        %v4749 = vunpack.c.l.b16 %v3328
        %v4750 = vunpack.c.h.b16 %v3328
        %v4751 = vunpack.c.l.b16 %v3329
        %v4752 = vunpack.c.h.b16 %v3329
        %v4753 = vunpack.c.l.b16 %v3330
        %v4754 = vunpack.c.h.b16 %v3330
        %v4755 = vunpack.c.l.b16 %v3331
        %v4756 = vunpack.c.h.b16 %v3331
        %v4757 = vunpack.c.l.b16 %v3332
        %v4758 = vunpack.c.h.b16 %v3332
        %v4759 = vunpack.c.l.b16 %v3333
        %v4760 = vunpack.c.h.b16 %v3333
        %v4761 = vunpack.c.l.b16 %v3334
        %v4762 = vunpack.c.h.b16 %v3334
        %v4763 = vunpack.c.l.b16 %v3335
        %v4764 = vunpack.c.h.b16 %v3335
        %v4765 = vunpack.c.l.b16 %v3336
        %v4766 = vunpack.c.h.b16 %v3336
        %v4767 = vunpack.c.l.b16 %v3337
        %v4768 = vunpack.c.h.b16 %v3337
        %v4769 = vunpack.c.l.b16 %v3338
        %v4770 = vunpack.c.h.b16 %v3338
        %v4771 = vunpack.c.l.b16 %v3339
        %v4772 = vunpack.c.h.b16 %v3339
        %v4773 = vunpack.c.l.b16 %v3340
        %v4774 = vunpack.c.h.b16 %v3340
        %v4775 = vunpack.c.l.b16 %v3341
        %v4776 = vunpack.c.h.b16 %v3341
        %v4777 = vunpack.c.l.b16 %v3342
        %v4778 = vunpack.c.h.b16 %v3342
        %v4779 = vunpack.c.l.b16 %v3343
        %v4780 = vunpack.c.h.b16 %v3343
        %v4781 = vunpack.c.l.b16 %v3344
        %v4782 = vunpack.c.h.b16 %v3344
        %v4783 = vunpack.c.l.b16 %v3345
        %v4784 = vunpack.c.h.b16 %v3345
        %v4785 = vunpack.c.l.b16 %v3346
        %v4786 = vunpack.c.h.b16 %v3346
        %v4787 = vunpack.c.l.b16 %v3347
        %v4788 = vunpack.c.h.b16 %v3347
        %v4789 = vunpack.c.l.b16 %v3348
        %v4790 = vunpack.c.h.b16 %v3348
        %v4791 = vunpack.c.l.b16 %v3349
        %v4792 = vunpack.c.h.b16 %v3349
        %v4793 = vunpack.c.l.b16 %v3350
        %v4794 = vunpack.c.h.b16 %v3350
        %v4795 = vunpack.c.l.b16 %v3351
        %v4796 = vunpack.c.h.b16 %v3351
        %v4797 = vunpack.c.l.b16 %v3352
        %v4798 = vunpack.c.h.b16 %v3352
        %v4799 = vunpack.c.l.b16 %v3353
        %v4800 = vunpack.c.h.b16 %v3353
        %v4801 = vunpack.c.l.b16 %v3354
        %v4802 = vunpack.c.h.b16 %v3354
        %v4803 = vunpack.c.l.b16 %v3355
        %v4804 = vunpack.c.h.b16 %v3355
        %v4805 = vunpack.c.l.b16 %v3356
        %v4806 = vunpack.c.h.b16 %v3356
        %v4807 = vunpack.c.l.b16 %v3357
        %v4808 = vunpack.c.h.b16 %v3357
        %v4809 = vunpack.c.l.b16 %v3358
        %v4810 = vunpack.c.h.b16 %v3358
        %v4811 = vunpack.c.l.b16 %v3359
        %v4812 = vunpack.c.h.b16 %v3359
        %v4813 = vunpack.c.l.b16 %v3360
        %v4814 = vunpack.c.h.b16 %v3360
        %v4815 = vunpack.c.l.b16 %v3361
        %v4816 = vunpack.c.h.b16 %v3361
        %v4817 = vunpack.c.l.b16 %v3362
        %v4818 = vunpack.c.h.b16 %v3362
        %v4819 = vunpack.c.l.b16 %v3363
        %v4820 = vunpack.c.h.b16 %v3363
        %v4821 = vunpack.c.l.b16 %v3364
        %v4822 = vunpack.c.h.b16 %v3364
        %v4823 = vunpack.c.l.b16 %v3365
        %v4824 = vunpack.c.h.b16 %v3365
        %v4825 = vunpack.c.l.b16 %v3366
        %v4826 = vunpack.c.h.b16 %v3366
        %v4827 = vunpack.c.l.b16 %v3367
        %v4828 = vunpack.c.h.b16 %v3367
        %v4829 = vunpack.c.l.b16 %v3368
        %v4830 = vunpack.c.h.b16 %v3368
        %v4831 = vunpack.c.l.b16 %v3369
        %v4832 = vunpack.c.h.b16 %v3369
        %v4833 = vunpack.c.l.b16 %v3370
        %v4834 = vunpack.c.h.b16 %v3370
        %v4835 = vunpack.c.l.b16 %v3371
        %v4836 = vunpack.c.h.b16 %v3371
        %v4837 = vunpack.c.l.b16 %v3372
        %v4838 = vunpack.c.h.b16 %v3372
        %v4839 = vunpack.c.l.b16 %v3373
        %v4840 = vunpack.c.h.b16 %v3373
        %v4841 = vunpack.c.l.b16 %v3374
        %v4842 = vunpack.c.h.b16 %v3374
        %v4843 = vunpack.c.l.b16 %v3375
        %v4844 = vunpack.c.h.b16 %v3375
        %v4845 = vunpack.c.l.b16 %v3376
        %v4846 = vunpack.c.h.b16 %v3376
        %v4847 = vunpack.c.l.b16 %v3377
        %v4848 = vunpack.c.h.b16 %v3377
        %v4849 = vunpack.c.l.b16 %v3378
        %v4850 = vunpack.c.h.b16 %v3378
        %v4851 = vunpack.c.l.b16 %v3379
        %v4852 = vunpack.c.h.b16 %v3379
        %v4853 = vunpack.c.l.b16 %v3380
        %v4854 = vunpack.c.h.b16 %v3380
        %v4855 = vunpack.c.l.b16 %v3381
        %v4856 = vunpack.c.h.b16 %v3381
        %v4857 = vunpack.c.l.b16 %v3382
        %v4858 = vunpack.c.h.b16 %v3382
        %v4859 = vunpack.c.l.b16 %v3383
        %v4860 = vunpack.c.h.b16 %v3383
        %v4861 = vunpack.c.l.b16 %v3384
        %v4862 = vunpack.c.h.b16 %v3384
        %v4863 = vunpack.c.l.b16 %v3385
        %v4864 = vunpack.c.h.b16 %v3385
        %v4865 = vunpack.c.l.b16 %v3386
        %v4866 = vunpack.c.h.b16 %v3386
        %v4867 = vunpack.c.l.b16 %v3387
        %v4868 = vunpack.c.h.b16 %v3387
        %v4869 = vunpack.c.l.b16 %v3388
        %v4870 = vunpack.c.h.b16 %v3388
        %v4871 = vunpack.c.l.b16 %v3389
        %v4872 = vunpack.c.h.b16 %v3389
        %v4873 = vunpack.c.l.b16 %v3390
        %v4874 = vunpack.c.h.b16 %v3390
        %v4875 = vunpack.c.l.b16 %v3391
        %v4876 = vunpack.c.h.b16 %v3391
        %v4877 = vunpack.c.l.b16 %v3392
        %v4878 = vunpack.c.h.b16 %v3392
        %v4879 = vunpack.c.l.b16 %v3393
        %v4880 = vunpack.c.h.b16 %v3393
        %v4881 = vunpack.c.l.b16 %v3394
        %v4882 = vunpack.c.h.b16 %v3394
        %v4883 = vunpack.c.l.b16 %v3395
        %v4884 = vunpack.c.h.b16 %v3395
        %v4885 = vunpack.c.l.b16 %v3396
        %v4886 = vunpack.c.h.b16 %v3396
        %v4887 = vunpack.c.l.b16 %v3397
        %v4888 = vunpack.c.h.b16 %v3397
        %v4889 = vunpack.c.l.b16 %v3398
        %v4890 = vunpack.c.h.b16 %v3398
        %v4891 = vunpack.c.l.b16 %v3399
        %v4892 = vunpack.c.h.b16 %v3399
        %v4893 = vunpack.c.l.b16 %v3400
        %v4894 = vunpack.c.h.b16 %v3400
        %v4895 = vunpack.c.l.b16 %v3401
        %v4896 = vunpack.c.h.b16 %v3401
        %v4897 = vunpack.c.l.b16 %v3402
        %v4898 = vunpack.c.h.b16 %v3402
        %v4899 = vunpack.c.l.b16 %v3403
        %v4900 = vunpack.c.h.b16 %v3403
        %v4901 = vunpack.c.l.b16 %v3404
        %v4902 = vunpack.c.h.b16 %v3404
        %v4903 = vunpack.c.l.b16 %v3405
        %v4904 = vunpack.c.h.b16 %v3405
        %v4905 = vunpack.c.l.b16 %v3406
        %v4906 = vunpack.c.h.b16 %v3406
        %v4907 = vunpack.c.l.b16 %v3407
        %v4908 = vunpack.c.h.b16 %v3407
        %v4909 = vunpack.c.l.b16 %v3408
        %v4910 = vunpack.c.h.b16 %v3408
        %v4911 = vunpack.c.l.b16 %v3409
        %v4912 = vunpack.c.h.b16 %v3409
        %v4913 = vunpack.c.l.b16 %v3410
        %v4914 = vunpack.c.h.b16 %v3410
        %v4915 = vunpack.c.l.b16 %v3411
        %v4916 = vunpack.c.h.b16 %v3411
        %v4917 = vunpack.c.l.b16 %v3412
        %v4918 = vunpack.c.h.b16 %v3412
        %v4919 = vunpack.c.l.b16 %v3413
        %v4920 = vunpack.c.h.b16 %v3413
        %v4921 = vunpack.c.l.b16 %v3414
        %v4922 = vunpack.c.h.b16 %v3414
        %v4923 = vunpack.c.l.b16 %v3415
        %v4924 = vunpack.c.h.b16 %v3415
        %v4925 = vunpack.c.l.b16 %v3416
        %v4926 = vunpack.c.h.b16 %v3416
        %v4927 = vunpack.c.l.b16 %v3417
        %v4928 = vunpack.c.h.b16 %v3417
        %v4929 = vunpack.c.l.b16 %v3418
        %v4930 = vunpack.c.h.b16 %v3418
        %v4931 = vunpack.c.l.b16 %v3419
        %v4932 = vunpack.c.h.b16 %v3419
        %v4933 = vunpack.c.l.b16 %v3420
        %v4934 = vunpack.c.h.b16 %v3420
        %v4935 = vunpack.c.l.b16 %v3421
        %v4936 = vunpack.c.h.b16 %v3421
        %v4937 = vunpack.c.l.b16 %v3422
        %v4938 = vunpack.c.h.b16 %v3422
        %v4939 = vunpack.c.l.b16 %v3423
        %v4940 = vunpack.c.h.b16 %v3423
        %v4941 = vunpack.c.l.b16 %v3424
        %v4942 = vunpack.c.h.b16 %v3424
        %v4943 = vunpack.c.l.b16 %v3425
        %v4944 = vunpack.c.h.b16 %v3425
        %v4945 = vunpack.c.l.b16 %v3426
        %v4946 = vunpack.c.h.b16 %v3426
        %v4947 = vunpack.c.l.b16 %v3427
        %v4948 = vunpack.c.h.b16 %v3427
        %v4949 = vunpack.c.l.b16 %v3428
        %v4950 = vunpack.c.h.b16 %v3428
        %v4951 = vunpack.c.l.b16 %v3429
        %v4952 = vunpack.c.h.b16 %v3429
        %v4953 = vunpack.c.l.b16 %v3430
        %v4954 = vunpack.c.h.b16 %v3430
        %v4955 = vunpack.c.l.b16 %v3431
        %v4956 = vunpack.c.h.b16 %v3431
        %v4957 = vunpack.c.l.b16 %v3432
        %v4958 = vunpack.c.h.b16 %v3432
        %v4959 = vunpack.c.l.b16 %v3433
        %v4960 = vunpack.c.h.b16 %v3433
        %v4961 = vunpack.c.l.b16 %v3434
        %v4962 = vunpack.c.h.b16 %v3434
        %v4963 = vunpack.c.l.b16 %v3435
        %v4964 = vunpack.c.h.b16 %v3435
        %v4965 = vunpack.c.l.b16 %v3436
        %v4966 = vunpack.c.h.b16 %v3436
        %v4967 = vunpack.c.l.b16 %v3437
        %v4968 = vunpack.c.h.b16 %v3437
        %v4969 = vunpack.c.l.b16 %v3438
        %v4970 = vunpack.c.h.b16 %v3438
        %v4971 = vunpack.c.l.b16 %v3439
        %v4972 = vunpack.c.h.b16 %v3439
        %v4973 = vunpack.c.l.b16 %v3440
        %v4974 = vunpack.c.h.b16 %v3440
        %v4975 = vunpack.c.l.b16 %v3441
        %v4976 = vunpack.c.h.b16 %v3441
        %v4977 = vunpack.c.l.b16 %v3442
        %v4978 = vunpack.c.h.b16 %v3442
        %v4979 = vunpack.c.l.b16 %v3443
        %v4980 = vunpack.c.h.b16 %v3443
        %v4981 = vunpack.c.l.b16 %v3444
        %v4982 = vunpack.c.h.b16 %v3444
        %v4983 = vunpack.c.l.b16 %v3445
        %v4984 = vunpack.c.h.b16 %v3445
        %v4985 = vunpack.c.l.b16 %v3446
        %v4986 = vunpack.c.h.b16 %v3446
        %v4987 = vunpack.c.l.b16 %v3447
        %v4988 = vunpack.c.h.b16 %v3447
        %v4989 = vunpack.c.l.b16 %v3448
        %v4990 = vunpack.c.h.b16 %v3448
        %v4991 = vunpack.c.l.b16 %v3449
        %v4992 = vunpack.c.h.b16 %v3449
        %v4993 = vunpack.c.l.b16 %v3450
        %v4994 = vunpack.c.h.b16 %v3450
        %v4995 = vunpack.c.l.b16 %v3451
        %v4996 = vunpack.c.h.b16 %v3451
        %v4997 = vunpack.c.l.b16 %v3452
        %v4998 = vunpack.c.h.b16 %v3452
        %v4999 = vunpack.c.l.b16 %v3453
        %v5000 = vunpack.c.h.b16 %v3453
        %v5001 = vunpack.c.l.b16 %v3454
        %v5002 = vunpack.c.h.b16 %v3454
        %v5003 = vunpack.c.l.b16 %v3455
        %v5004 = vunpack.c.h.b16 %v3455
        %v5005 = vunpack.c.l.b16 %v3456
        %v5006 = vunpack.c.h.b16 %v3456
        %v5007 = vunpack.c.l.b16 %v3457
        %v5008 = vunpack.c.h.b16 %v3457
        %v5009 = vunpack.c.l.b16 %v3458
        %v5010 = vunpack.c.h.b16 %v3458
        %v5011 = vunpack.c.l.b16 %v3459
        %v5012 = vunpack.c.h.b16 %v3459
        %v5013 = vunpack.c.l.b16 %v3460
        %v5014 = vunpack.c.h.b16 %v3460
        %v5015 = vunpack.c.l.b16 %v3461
        %v5016 = vunpack.c.h.b16 %v3461
        %v5017 = vunpack.c.l.b16 %v3462
        %v5018 = vunpack.c.h.b16 %v3462
        %v5019 = vunpack.c.l.b16 %v3463
        %v5020 = vunpack.c.h.b16 %v3463
        %v5021 = vunpack.c.l.b16 %v3464
        %v5022 = vunpack.c.h.b16 %v3464
        %v5023 = vunpack.c.l.b16 %v3465
        %v5024 = vunpack.c.h.b16 %v3465
        %v5025 = vunpack.c.l.b16 %v3466
        %v5026 = vunpack.c.h.b16 %v3466
        %v5027 = vunpack.c.l.b16 %v3467
        %v5028 = vunpack.c.h.b16 %v3467
        %v5029 = vunpack.c.l.b16 %v3468
        %v5030 = vunpack.c.h.b16 %v3468
        %v5031 = vunpack.c.l.b16 %v3469
        %v5032 = vunpack.c.h.b16 %v3469
        %v5033 = vunpack.c.l.b16 %v3470
        %v5034 = vunpack.c.h.b16 %v3470
        %v5035 = vunpack.c.l.b16 %v3471
        %v5036 = vunpack.c.h.b16 %v3471
        %v5037 = vunpack.c.l.b16 %v3472
        %v5038 = vunpack.c.h.b16 %v3472
        %v5039 = vunpack.c.l.b16 %v3473
        %v5040 = vunpack.c.h.b16 %v3473
        %v5041 = vunpack.c.l.b16 %v3474
        %v5042 = vunpack.c.h.b16 %v3474
        %v5043 = vunpack.c.l.b16 %v3475
        %v5044 = vunpack.c.h.b16 %v3475
        %v5045 = vunpack.c.l.b16 %v3476
        %v5046 = vunpack.c.h.b16 %v3476
        %v5047 = vunpack.c.l.b16 %v3477
        %v5048 = vunpack.c.h.b16 %v3477
        %v5049 = vunpack.c.l.b16 %v3478
        %v5050 = vunpack.c.h.b16 %v3478
        %v5051 = vunpack.c.l.b16 %v3479
        %v5052 = vunpack.c.h.b16 %v3479
        %v5053 = vunpack.c.l.b16 %v3480
        %v5054 = vunpack.c.h.b16 %v3480
        %v5055 = vunpack.c.l.b16 %v3481
        %v5056 = vunpack.c.h.b16 %v3481
        %v5057 = vunpack.c.l.b16 %v3482
        %v5058 = vunpack.c.h.b16 %v3482
        %v5059 = vunpack.c.l.b16 %v3483
        %v5060 = vunpack.c.h.b16 %v3483
        %v5061 = vunpack.c.l.b16 %v3484
        %v5062 = vunpack.c.h.b16 %v3484
        %v5063 = vpack.c.b16 %v4047, %v4039
        %v5064 = vpack.c.b16 %v4048, %v4040
        %v5065 = vpack.c.b16 %v4049, %v4041
        %v5066 = vpack.c.b16 %v4050, %v4042
        %v5067 = vpack.c.b16 %v4051, %v4043
        %v5068 = vpack.c.b16 %v4052, %v4044
        %v5069 = vpack.c.b16 %v4053, %v4045
        %v5070 = vpack.c.b16 %v4054, %v4046
        %v5071 = vpack.c.b16 %v4063, %v4055
        %v5072 = vpack.c.b16 %v4064, %v4056
        %v5073 = vpack.c.b16 %v4065, %v4057
        %v5074 = vpack.c.b16 %v4066, %v4058
        %v5075 = vpack.c.b16 %v4067, %v4059
        %v5076 = vpack.c.b16 %v4068, %v4060
        %v5077 = vpack.c.b16 %v4069, %v4061
        %v5078 = vpack.c.b16 %v4070, %v4062
        %v5079 = vpack.c.b16 %v4079, %v4071
        %v5080 = vpack.c.b16 %v4080, %v4072
        %v5081 = vpack.c.b16 %v4081, %v4073
        %v5082 = vpack.c.b16 %v4082, %v4074
        %v5083 = vpack.c.b16 %v4083, %v4075
        %v5084 = vpack.c.b16 %v4084, %v4076
        %v5085 = vpack.c.b16 %v4085, %v4077
        %v5086 = vpack.c.b16 %v4086, %v4078
        %v5087 = vpack.c.b16 %v4095, %v4087
        %v5088 = vpack.c.b16 %v4096, %v4088
        %v5089 = vpack.c.b16 %v4097, %v4089
        %v5090 = vpack.c.b16 %v4098, %v4090
        %v5091 = vpack.c.b16 %v4099, %v4091
        %v5092 = vpack.c.b16 %v4100, %v4092
        %v5093 = vpack.c.b16 %v4101, %v4093
        %v5094 = vpack.c.b16 %v4102, %v4094
        %v5095 = vpack.c.b16 %v4111, %v4103
        %v5096 = vpack.c.b16 %v4112, %v4104
        %v5097 = vpack.c.b16 %v4113, %v4105
        %v5098 = vpack.c.b16 %v4114, %v4106
        %v5099 = vpack.c.b16 %v4115, %v4107
        %v5100 = vpack.c.b16 %v4116, %v4108
        %v5101 = vpack.c.b16 %v4117, %v4109
        %v5102 = vpack.c.b16 %v4118, %v4110
        %v5103 = vpack.c.b16 %v4127, %v4119
        %v5104 = vpack.c.b16 %v4128, %v4120
        %v5105 = vpack.c.b16 %v4129, %v4121
        %v5106 = vpack.c.b16 %v4130, %v4122
        %v5107 = vpack.c.b16 %v4131, %v4123
        %v5108 = vpack.c.b16 %v4132, %v4124
        %v5109 = vpack.c.b16 %v4133, %v4125
        %v5110 = vpack.c.b16 %v4134, %v4126
        %v5111 = vpack.c.b16 %v4143, %v4135
        %v5112 = vpack.c.b16 %v4144, %v4136
        %v5113 = vpack.c.b16 %v4145, %v4137
        %v5114 = vpack.c.b16 %v4146, %v4138
        %v5115 = vpack.c.b16 %v4147, %v4139
        %v5116 = vpack.c.b16 %v4148, %v4140
        %v5117 = vpack.c.b16 %v4149, %v4141
        %v5118 = vpack.c.b16 %v4150, %v4142
        %v5119 = vpack.c.b16 %v4159, %v4151
        %v5120 = vpack.c.b16 %v4160, %v4152
        %v5121 = vpack.c.b16 %v4161, %v4153
        %v5122 = vpack.c.b16 %v4162, %v4154
        %v5123 = vpack.c.b16 %v4163, %v4155
        %v5124 = vpack.c.b16 %v4164, %v4156
        %v5125 = vpack.c.b16 %v4165, %v4157
        %v5126 = vpack.c.b16 %v4166, %v4158
        %v5127 = vpack.c.b16 %v4175, %v4167
        %v5128 = vpack.c.b16 %v4176, %v4168
        %v5129 = vpack.c.b16 %v4177, %v4169
        %v5130 = vpack.c.b16 %v4178, %v4170
        %v5131 = vpack.c.b16 %v4179, %v4171
        %v5132 = vpack.c.b16 %v4180, %v4172
        %v5133 = vpack.c.b16 %v4181, %v4173
        %v5134 = vpack.c.b16 %v4182, %v4174
        %v5135 = vpack.c.b16 %v4191, %v4183
        %v5136 = vpack.c.b16 %v4192, %v4184
        %v5137 = vpack.c.b16 %v4193, %v4185
        %v5138 = vpack.c.b16 %v4194, %v4186
        %v5139 = vpack.c.b16 %v4195, %v4187
        %v5140 = vpack.c.b16 %v4196, %v4188
        %v5141 = vpack.c.b16 %v4197, %v4189
        %v5142 = vpack.c.b16 %v4198, %v4190
        %v5143 = vpack.c.b16 %v4207, %v4199
        %v5144 = vpack.c.b16 %v4208, %v4200
        %v5145 = vpack.c.b16 %v4209, %v4201
        %v5146 = vpack.c.b16 %v4210, %v4202
        %v5147 = vpack.c.b16 %v4211, %v4203
        %v5148 = vpack.c.b16 %v4212, %v4204
        %v5149 = vpack.c.b16 %v4213, %v4205
        %v5150 = vpack.c.b16 %v4214, %v4206
        %v5151 = vpack.c.b16 %v4223, %v4215
        %v5152 = vpack.c.b16 %v4224, %v4216
        %v5153 = vpack.c.b16 %v4225, %v4217
        %v5154 = vpack.c.b16 %v4226, %v4218
        %v5155 = vpack.c.b16 %v4227, %v4219
        %v5156 = vpack.c.b16 %v4228, %v4220
        %v5157 = vpack.c.b16 %v4229, %v4221
        %v5158 = vpack.c.b16 %v4230, %v4222
        %v5159 = vpack.c.b16 %v4239, %v4231
        %v5160 = vpack.c.b16 %v4240, %v4232
        %v5161 = vpack.c.b16 %v4241, %v4233
        %v5162 = vpack.c.b16 %v4242, %v4234
        %v5163 = vpack.c.b16 %v4243, %v4235
        %v5164 = vpack.c.b16 %v4244, %v4236
        %v5165 = vpack.c.b16 %v4245, %v4237
        %v5166 = vpack.c.b16 %v4246, %v4238
        %v5167 = vpack.c.b16 %v4255, %v4247
        %v5168 = vpack.c.b16 %v4256, %v4248
        %v5169 = vpack.c.b16 %v4257, %v4249
        %v5170 = vpack.c.b16 %v4258, %v4250
        %v5171 = vpack.c.b16 %v4259, %v4251
        %v5172 = vpack.c.b16 %v4260, %v4252
        %v5173 = vpack.c.b16 %v4261, %v4253
        %v5174 = vpack.c.b16 %v4262, %v4254
        %v5175 = vpack.c.b16 %v4271, %v4263
        %v5176 = vpack.c.b16 %v4272, %v4264
        %v5177 = vpack.c.b16 %v4273, %v4265
        %v5178 = vpack.c.b16 %v4274, %v4266
        %v5179 = vpack.c.b16 %v4275, %v4267
        %v5180 = vpack.c.b16 %v4276, %v4268
        %v5181 = vpack.c.b16 %v4277, %v4269
        %v5182 = vpack.c.b16 %v4278, %v4270
        %v5183 = vpack.c.b16 %v4287, %v4279
        %v5184 = vpack.c.b16 %v4288, %v4280
        %v5185 = vpack.c.b16 %v4289, %v4281
        %v5186 = vpack.c.b16 %v4290, %v4282
        %v5187 = vpack.c.b16 %v4291, %v4283
        %v5188 = vpack.c.b16 %v4292, %v4284
        %v5189 = vpack.c.b16 %v4293, %v4285
        %v5190 = vpack.c.b16 %v4294, %v4286
        %v5191 = vpack.c.b16 %v4303, %v4295
        %v5192 = vpack.c.b16 %v4304, %v4296
        %v5193 = vpack.c.b16 %v4305, %v4297
        %v5194 = vpack.c.b16 %v4306, %v4298
        %v5195 = vpack.c.b16 %v4307, %v4299
        %v5196 = vpack.c.b16 %v4308, %v4300
        %v5197 = vpack.c.b16 %v4309, %v4301
        %v5198 = vpack.c.b16 %v4310, %v4302
        %v5199 = vpack.c.b16 %v4319, %v4311
        %v5200 = vpack.c.b16 %v4320, %v4312
        %v5201 = vpack.c.b16 %v4321, %v4313
        %v5202 = vpack.c.b16 %v4322, %v4314
        %v5203 = vpack.c.b16 %v4323, %v4315
        %v5204 = vpack.c.b16 %v4324, %v4316
        %v5205 = vpack.c.b16 %v4325, %v4317
        %v5206 = vpack.c.b16 %v4326, %v4318
        %v5207 = vpack.c.b16 %v4335, %v4327
        %v5208 = vpack.c.b16 %v4336, %v4328
        %v5209 = vpack.c.b16 %v4337, %v4329
        %v5210 = vpack.c.b16 %v4338, %v4330
        %v5211 = vpack.c.b16 %v4339, %v4331
        %v5212 = vpack.c.b16 %v4340, %v4332
        %v5213 = vpack.c.b16 %v4341, %v4333
        %v5214 = vpack.c.b16 %v4342, %v4334
        %v5215 = vpack.c.b16 %v4351, %v4343
        %v5216 = vpack.c.b16 %v4352, %v4344
        %v5217 = vpack.c.b16 %v4353, %v4345
        %v5218 = vpack.c.b16 %v4354, %v4346
        %v5219 = vpack.c.b16 %v4355, %v4347
        %v5220 = vpack.c.b16 %v4356, %v4348
        %v5221 = vpack.c.b16 %v4357, %v4349
        %v5222 = vpack.c.b16 %v4358, %v4350
        %v5223 = vpack.c.b16 %v4367, %v4359
        %v5224 = vpack.c.b16 %v4368, %v4360
        %v5225 = vpack.c.b16 %v4369, %v4361
        %v5226 = vpack.c.b16 %v4370, %v4362
        %v5227 = vpack.c.b16 %v4371, %v4363
        %v5228 = vpack.c.b16 %v4372, %v4364
        %v5229 = vpack.c.b16 %v4373, %v4365
        %v5230 = vpack.c.b16 %v4374, %v4366
        %v5231 = vpack.c.b16 %v4383, %v4375
        %v5232 = vpack.c.b16 %v4384, %v4376
        %v5233 = vpack.c.b16 %v4385, %v4377
        %v5234 = vpack.c.b16 %v4386, %v4378
        %v5235 = vpack.c.b16 %v4387, %v4379
        %v5236 = vpack.c.b16 %v4388, %v4380
        %v5237 = vpack.c.b16 %v4389, %v4381
        %v5238 = vpack.c.b16 %v4390, %v4382
        %v5239 = vpack.c.b16 %v4399, %v4391
        %v5240 = vpack.c.b16 %v4400, %v4392
        %v5241 = vpack.c.b16 %v4401, %v4393
        %v5242 = vpack.c.b16 %v4402, %v4394
        %v5243 = vpack.c.b16 %v4403, %v4395
        %v5244 = vpack.c.b16 %v4404, %v4396
        %v5245 = vpack.c.b16 %v4405, %v4397
        %v5246 = vpack.c.b16 %v4406, %v4398
        %v5247 = vpack.c.b16 %v4415, %v4407
        %v5248 = vpack.c.b16 %v4416, %v4408
        %v5249 = vpack.c.b16 %v4417, %v4409
        %v5250 = vpack.c.b16 %v4418, %v4410
        %v5251 = vpack.c.b16 %v4419, %v4411
        %v5252 = vpack.c.b16 %v4420, %v4412
        %v5253 = vpack.c.b16 %v4421, %v4413
        %v5254 = vpack.c.b16 %v4422, %v4414
        %v5255 = vpack.c.b16 %v4431, %v4423
        %v5256 = vpack.c.b16 %v4432, %v4424
        %v5257 = vpack.c.b16 %v4433, %v4425
        %v5258 = vpack.c.b16 %v4434, %v4426
        %v5259 = vpack.c.b16 %v4435, %v4427
        %v5260 = vpack.c.b16 %v4436, %v4428
        %v5261 = vpack.c.b16 %v4437, %v4429
        %v5262 = vpack.c.b16 %v4438, %v4430
        %v5263 = vpack.c.b16 %v4447, %v4439
        %v5264 = vpack.c.b16 %v4448, %v4440
        %v5265 = vpack.c.b16 %v4449, %v4441
        %v5266 = vpack.c.b16 %v4450, %v4442
        %v5267 = vpack.c.b16 %v4451, %v4443
        %v5268 = vpack.c.b16 %v4452, %v4444
        %v5269 = vpack.c.b16 %v4453, %v4445
        %v5270 = vpack.c.b16 %v4454, %v4446
        %v5271 = vpack.c.b16 %v4463, %v4455
        %v5272 = vpack.c.b16 %v4464, %v4456
        %v5273 = vpack.c.b16 %v4465, %v4457
        %v5274 = vpack.c.b16 %v4466, %v4458
        %v5275 = vpack.c.b16 %v4467, %v4459
        %v5276 = vpack.c.b16 %v4468, %v4460
        %v5277 = vpack.c.b16 %v4469, %v4461
        %v5278 = vpack.c.b16 %v4470, %v4462
        %v5279 = vpack.c.b16 %v4479, %v4471
        %v5280 = vpack.c.b16 %v4480, %v4472
        %v5281 = vpack.c.b16 %v4481, %v4473
        %v5282 = vpack.c.b16 %v4482, %v4474
        %v5283 = vpack.c.b16 %v4483, %v4475
        %v5284 = vpack.c.b16 %v4484, %v4476
        %v5285 = vpack.c.b16 %v4485, %v4477
        %v5286 = vpack.c.b16 %v4486, %v4478
        %v5287 = vpack.c.b16 %v4495, %v4487
        %v5288 = vpack.c.b16 %v4496, %v4488
        %v5289 = vpack.c.b16 %v4497, %v4489
        %v5290 = vpack.c.b16 %v4498, %v4490
        %v5291 = vpack.c.b16 %v4499, %v4491
        %v5292 = vpack.c.b16 %v4500, %v4492
        %v5293 = vpack.c.b16 %v4501, %v4493
        %v5294 = vpack.c.b16 %v4502, %v4494
        %v5295 = vpack.c.b16 %v4511, %v4503
        %v5296 = vpack.c.b16 %v4512, %v4504
        %v5297 = vpack.c.b16 %v4513, %v4505
        %v5298 = vpack.c.b16 %v4514, %v4506
        %v5299 = vpack.c.b16 %v4515, %v4507
        %v5300 = vpack.c.b16 %v4516, %v4508
        %v5301 = vpack.c.b16 %v4517, %v4509
        %v5302 = vpack.c.b16 %v4518, %v4510
        %v5303 = vpack.c.b16 %v4527, %v4519
        %v5304 = vpack.c.b16 %v4528, %v4520
        %v5305 = vpack.c.b16 %v4529, %v4521
        %v5306 = vpack.c.b16 %v4530, %v4522
        %v5307 = vpack.c.b16 %v4531, %v4523
        %v5308 = vpack.c.b16 %v4532, %v4524
        %v5309 = vpack.c.b16 %v4533, %v4525
        %v5310 = vpack.c.b16 %v4534, %v4526
        %v5311 = vpack.c.b16 %v4543, %v4535
        %v5312 = vpack.c.b16 %v4544, %v4536
        %v5313 = vpack.c.b16 %v4545, %v4537
        %v5314 = vpack.c.b16 %v4546, %v4538
        %v5315 = vpack.c.b16 %v4547, %v4539
        %v5316 = vpack.c.b16 %v4548, %v4540
        %v5317 = vpack.c.b16 %v4549, %v4541
        %v5318 = vpack.c.b16 %v4550, %v4542
        %v5319 = vpack.c.b16 %v4559, %v4551
        %v5320 = vpack.c.b16 %v4560, %v4552
        %v5321 = vpack.c.b16 %v4561, %v4553
        %v5322 = vpack.c.b16 %v4562, %v4554
        %v5323 = vpack.c.b16 %v4563, %v4555
        %v5324 = vpack.c.b16 %v4564, %v4556
        %v5325 = vpack.c.b16 %v4565, %v4557
        %v5326 = vpack.c.b16 %v4566, %v4558
        %v5327 = vpack.c.b16 %v4575, %v4567
        %v5328 = vpack.c.b16 %v4576, %v4568
        %v5329 = vpack.c.b16 %v4577, %v4569
        %v5330 = vpack.c.b16 %v4578, %v4570
        %v5331 = vpack.c.b16 %v4579, %v4571
        %v5332 = vpack.c.b16 %v4580, %v4572
        %v5333 = vpack.c.b16 %v4581, %v4573
        %v5334 = vpack.c.b16 %v4582, %v4574
        %v5335 = vpack.c.b16 %v4591, %v4583
        %v5336 = vpack.c.b16 %v4592, %v4584
        %v5337 = vpack.c.b16 %v4593, %v4585
        %v5338 = vpack.c.b16 %v4594, %v4586
        %v5339 = vpack.c.b16 %v4595, %v4587
        %v5340 = vpack.c.b16 %v4596, %v4588
        %v5341 = vpack.c.b16 %v4597, %v4589
        %v5342 = vpack.c.b16 %v4598, %v4590
        %v5343 = vpack.c.b16 %v4607, %v4599
        %v5344 = vpack.c.b16 %v4608, %v4600
        %v5345 = vpack.c.b16 %v4609, %v4601
        %v5346 = vpack.c.b16 %v4610, %v4602
        %v5347 = vpack.c.b16 %v4611, %v4603
        %v5348 = vpack.c.b16 %v4612, %v4604
        %v5349 = vpack.c.b16 %v4613, %v4605
        %v5350 = vpack.c.b16 %v4614, %v4606
        %v5351 = vpack.c.b16 %v4623, %v4615
        %v5352 = vpack.c.b16 %v4624, %v4616
        %v5353 = vpack.c.b16 %v4625, %v4617
        %v5354 = vpack.c.b16 %v4626, %v4618
        %v5355 = vpack.c.b16 %v4627, %v4619
        %v5356 = vpack.c.b16 %v4628, %v4620
        %v5357 = vpack.c.b16 %v4629, %v4621
        %v5358 = vpack.c.b16 %v4630, %v4622
        %v5359 = vpack.c.b16 %v4639, %v4631
        %v5360 = vpack.c.b16 %v4640, %v4632
        %v5361 = vpack.c.b16 %v4641, %v4633
        %v5362 = vpack.c.b16 %v4642, %v4634
        %v5363 = vpack.c.b16 %v4643, %v4635
        %v5364 = vpack.c.b16 %v4644, %v4636
        %v5365 = vpack.c.b16 %v4645, %v4637
        %v5366 = vpack.c.b16 %v4646, %v4638
        %v5367 = vpack.c.b16 %v4655, %v4647
        %v5368 = vpack.c.b16 %v4656, %v4648
        %v5369 = vpack.c.b16 %v4657, %v4649
        %v5370 = vpack.c.b16 %v4658, %v4650
        %v5371 = vpack.c.b16 %v4659, %v4651
        %v5372 = vpack.c.b16 %v4660, %v4652
        %v5373 = vpack.c.b16 %v4661, %v4653
        %v5374 = vpack.c.b16 %v4662, %v4654
        %v5375 = vpack.c.b16 %v4671, %v4663
        %v5376 = vpack.c.b16 %v4672, %v4664
        %v5377 = vpack.c.b16 %v4673, %v4665
        %v5378 = vpack.c.b16 %v4674, %v4666
        %v5379 = vpack.c.b16 %v4675, %v4667
        %v5380 = vpack.c.b16 %v4676, %v4668
        %v5381 = vpack.c.b16 %v4677, %v4669
        %v5382 = vpack.c.b16 %v4678, %v4670
        %v5383 = vpack.c.b16 %v4687, %v4679
        %v5384 = vpack.c.b16 %v4688, %v4680
        %v5385 = vpack.c.b16 %v4689, %v4681
        %v5386 = vpack.c.b16 %v4690, %v4682
        %v5387 = vpack.c.b16 %v4691, %v4683
        %v5388 = vpack.c.b16 %v4692, %v4684
        %v5389 = vpack.c.b16 %v4693, %v4685
        %v5390 = vpack.c.b16 %v4694, %v4686
        %v5391 = vpack.c.b16 %v4703, %v4695
        %v5392 = vpack.c.b16 %v4704, %v4696
        %v5393 = vpack.c.b16 %v4705, %v4697
        %v5394 = vpack.c.b16 %v4706, %v4698
        %v5395 = vpack.c.b16 %v4707, %v4699
        %v5396 = vpack.c.b16 %v4708, %v4700
        %v5397 = vpack.c.b16 %v4709, %v4701
        %v5398 = vpack.c.b16 %v4710, %v4702
        %v5399 = vpack.c.b16 %v4719, %v4711
        %v5400 = vpack.c.b16 %v4720, %v4712
        %v5401 = vpack.c.b16 %v4721, %v4713
        %v5402 = vpack.c.b16 %v4722, %v4714
        %v5403 = vpack.c.b16 %v4723, %v4715
        %v5404 = vpack.c.b16 %v4724, %v4716
        %v5405 = vpack.c.b16 %v4725, %v4717
        %v5406 = vpack.c.b16 %v4726, %v4718
        %v5407 = vpack.c.b16 %v4735, %v4727
        %v5408 = vpack.c.b16 %v4736, %v4728
        %v5409 = vpack.c.b16 %v4737, %v4729
        %v5410 = vpack.c.b16 %v4738, %v4730
        %v5411 = vpack.c.b16 %v4739, %v4731
        %v5412 = vpack.c.b16 %v4740, %v4732
        %v5413 = vpack.c.b16 %v4741, %v4733
        %v5414 = vpack.c.b16 %v4742, %v4734
        %v5415 = vpack.c.b16 %v4751, %v4743
        %v5416 = vpack.c.b16 %v4752, %v4744
        %v5417 = vpack.c.b16 %v4753, %v4745
        %v5418 = vpack.c.b16 %v4754, %v4746
        %v5419 = vpack.c.b16 %v4755, %v4747
        %v5420 = vpack.c.b16 %v4756, %v4748
        %v5421 = vpack.c.b16 %v4757, %v4749
        %v5422 = vpack.c.b16 %v4758, %v4750
        %v5423 = vpack.c.b16 %v4767, %v4759
        %v5424 = vpack.c.b16 %v4768, %v4760
        %v5425 = vpack.c.b16 %v4769, %v4761
        %v5426 = vpack.c.b16 %v4770, %v4762
        %v5427 = vpack.c.b16 %v4771, %v4763
        %v5428 = vpack.c.b16 %v4772, %v4764
        %v5429 = vpack.c.b16 %v4773, %v4765
        %v5430 = vpack.c.b16 %v4774, %v4766
        %v5431 = vpack.c.b16 %v4783, %v4775
        %v5432 = vpack.c.b16 %v4784, %v4776
        %v5433 = vpack.c.b16 %v4785, %v4777
        %v5434 = vpack.c.b16 %v4786, %v4778
        %v5435 = vpack.c.b16 %v4787, %v4779
        %v5436 = vpack.c.b16 %v4788, %v4780
        %v5437 = vpack.c.b16 %v4789, %v4781
        %v5438 = vpack.c.b16 %v4790, %v4782
        %v5439 = vpack.c.b16 %v4799, %v4791
        %v5440 = vpack.c.b16 %v4800, %v4792
        %v5441 = vpack.c.b16 %v4801, %v4793
        %v5442 = vpack.c.b16 %v4802, %v4794
        %v5443 = vpack.c.b16 %v4803, %v4795
        %v5444 = vpack.c.b16 %v4804, %v4796
        %v5445 = vpack.c.b16 %v4805, %v4797
        %v5446 = vpack.c.b16 %v4806, %v4798
        %v5447 = vpack.c.b16 %v4815, %v4807
        %v5448 = vpack.c.b16 %v4816, %v4808
        %v5449 = vpack.c.b16 %v4817, %v4809
        %v5450 = vpack.c.b16 %v4818, %v4810
        %v5451 = vpack.c.b16 %v4819, %v4811
        %v5452 = vpack.c.b16 %v4820, %v4812
        %v5453 = vpack.c.b16 %v4821, %v4813
        %v5454 = vpack.c.b16 %v4822, %v4814
        %v5455 = vpack.c.b16 %v4831, %v4823
        %v5456 = vpack.c.b16 %v4832, %v4824
        %v5457 = vpack.c.b16 %v4833, %v4825
        %v5458 = vpack.c.b16 %v4834, %v4826
        %v5459 = vpack.c.b16 %v4835, %v4827
        %v5460 = vpack.c.b16 %v4836, %v4828
        %v5461 = vpack.c.b16 %v4837, %v4829
        %v5462 = vpack.c.b16 %v4838, %v4830
        %v5463 = vpack.c.b16 %v4847, %v4839
        %v5464 = vpack.c.b16 %v4848, %v4840
        %v5465 = vpack.c.b16 %v4849, %v4841
        %v5466 = vpack.c.b16 %v4850, %v4842
        %v5467 = vpack.c.b16 %v4851, %v4843
        %v5468 = vpack.c.b16 %v4852, %v4844
        %v5469 = vpack.c.b16 %v4853, %v4845
        %v5470 = vpack.c.b16 %v4854, %v4846
        %v5471 = vpack.c.b16 %v4863, %v4855
        %v5472 = vpack.c.b16 %v4864, %v4856
        %v5473 = vpack.c.b16 %v4865, %v4857
        %v5474 = vpack.c.b16 %v4866, %v4858
        %v5475 = vpack.c.b16 %v4867, %v4859
        %v5476 = vpack.c.b16 %v4868, %v4860
        %v5477 = vpack.c.b16 %v4869, %v4861
        %v5478 = vpack.c.b16 %v4870, %v4862
        %v5479 = vpack.c.b16 %v4879, %v4871
        %v5480 = vpack.c.b16 %v4880, %v4872
        %v5481 = vpack.c.b16 %v4881, %v4873
        %v5482 = vpack.c.b16 %v4882, %v4874
        %v5483 = vpack.c.b16 %v4883, %v4875
        %v5484 = vpack.c.b16 %v4884, %v4876
        %v5485 = vpack.c.b16 %v4885, %v4877
        %v5486 = vpack.c.b16 %v4886, %v4878
        %v5487 = vpack.c.b16 %v4895, %v4887
        %v5488 = vpack.c.b16 %v4896, %v4888
        %v5489 = vpack.c.b16 %v4897, %v4889
        %v5490 = vpack.c.b16 %v4898, %v4890
        %v5491 = vpack.c.b16 %v4899, %v4891
        %v5492 = vpack.c.b16 %v4900, %v4892
        %v5493 = vpack.c.b16 %v4901, %v4893
        %v5494 = vpack.c.b16 %v4902, %v4894
        %v5495 = vpack.c.b16 %v4911, %v4903
        %v5496 = vpack.c.b16 %v4912, %v4904
        %v5497 = vpack.c.b16 %v4913, %v4905
        %v5498 = vpack.c.b16 %v4914, %v4906
        %v5499 = vpack.c.b16 %v4915, %v4907
        %v5500 = vpack.c.b16 %v4916, %v4908
        %v5501 = vpack.c.b16 %v4917, %v4909
        %v5502 = vpack.c.b16 %v4918, %v4910
        %v5503 = vpack.c.b16 %v4927, %v4919
        %v5504 = vpack.c.b16 %v4928, %v4920
        %v5505 = vpack.c.b16 %v4929, %v4921
        %v5506 = vpack.c.b16 %v4930, %v4922
        %v5507 = vpack.c.b16 %v4931, %v4923
        %v5508 = vpack.c.b16 %v4932, %v4924
        %v5509 = vpack.c.b16 %v4933, %v4925
        %v5510 = vpack.c.b16 %v4934, %v4926
        %v5511 = vpack.c.b16 %v4943, %v4935
        %v5512 = vpack.c.b16 %v4944, %v4936
        %v5513 = vpack.c.b16 %v4945, %v4937
        %v5514 = vpack.c.b16 %v4946, %v4938
        %v5515 = vpack.c.b16 %v4947, %v4939
        %v5516 = vpack.c.b16 %v4948, %v4940
        %v5517 = vpack.c.b16 %v4949, %v4941
        %v5518 = vpack.c.b16 %v4950, %v4942
        %v5519 = vpack.c.b16 %v4959, %v4951
        %v5520 = vpack.c.b16 %v4960, %v4952
        %v5521 = vpack.c.b16 %v4961, %v4953
        %v5522 = vpack.c.b16 %v4962, %v4954
        %v5523 = vpack.c.b16 %v4963, %v4955
        %v5524 = vpack.c.b16 %v4964, %v4956
        %v5525 = vpack.c.b16 %v4965, %v4957
        %v5526 = vpack.c.b16 %v4966, %v4958
        %v5527 = vpack.c.b16 %v4975, %v4967
        %v5528 = vpack.c.b16 %v4976, %v4968
        %v5529 = vpack.c.b16 %v4977, %v4969
        %v5530 = vpack.c.b16 %v4978, %v4970
        %v5531 = vpack.c.b16 %v4979, %v4971
        %v5532 = vpack.c.b16 %v4980, %v4972
        %v5533 = vpack.c.b16 %v4981, %v4973
        %v5534 = vpack.c.b16 %v4982, %v4974
        %v5535 = vpack.c.b16 %v4991, %v4983
        %v5536 = vpack.c.b16 %v4992, %v4984
        %v5537 = vpack.c.b16 %v4993, %v4985
        %v5538 = vpack.c.b16 %v4994, %v4986
        %v5539 = vpack.c.b16 %v4995, %v4987
        %v5540 = vpack.c.b16 %v4996, %v4988
        %v5541 = vpack.c.b16 %v4997, %v4989
        %v5542 = vpack.c.b16 %v4998, %v4990
        %v5543 = vpack.c.b16 %v5007, %v4999
        %v5544 = vpack.c.b16 %v5008, %v5000
        %v5545 = vpack.c.b16 %v5009, %v5001
        %v5546 = vpack.c.b16 %v5010, %v5002
        %v5547 = vpack.c.b16 %v5011, %v5003
        %v5548 = vpack.c.b16 %v5012, %v5004
        %v5549 = vpack.c.b16 %v5013, %v5005
        %v5550 = vpack.c.b16 %v5014, %v5006
        %v5551 = vpack.c.b16 %v5023, %v5015
        %v5552 = vpack.c.b16 %v5024, %v5016
        %v5553 = vpack.c.b16 %v5025, %v5017
        %v5554 = vpack.c.b16 %v5026, %v5018
        %v5555 = vpack.c.b16 %v5027, %v5019
        %v5556 = vpack.c.b16 %v5028, %v5020
        %v5557 = vpack.c.b16 %v5029, %v5021
        %v5558 = vpack.c.b16 %v5030, %v5022
        %v5559 = vpack.c.b16 %v5039, %v5031
        %v5560 = vpack.c.b16 %v5040, %v5032
        %v5561 = vpack.c.b16 %v5041, %v5033
        %v5562 = vpack.c.b16 %v5042, %v5034
        %v5563 = vpack.c.b16 %v5043, %v5035
        %v5564 = vpack.c.b16 %v5044, %v5036
        %v5565 = vpack.c.b16 %v5045, %v5037
        %v5566 = vpack.c.b16 %v5046, %v5038
        %v5567 = vpack.c.b16 %v5055, %v5047
        %v5568 = vpack.c.b16 %v5056, %v5048
        %v5569 = vpack.c.b16 %v5057, %v5049
        %v5570 = vpack.c.b16 %v5058, %v5050
        %v5571 = vpack.c.b16 %v5059, %v5051
        %v5572 = vpack.c.b16 %v5060, %v5052
        %v5573 = vpack.c.b16 %v5061, %v5053
        %v5574 = vpack.c.b16 %v5062, %v5054
        %6087 = vmatprep.subr.bf16.mxu0 %v5120
        %6088 = vmatpush1.bf16.msra.mxu0 %v5119
        %6089 = vmatprep.subr.bf16.mxu0 %v5112
        %6090 = vmatpush1.bf16.msra.mxu0 %v5111
        %6091 = vmatprep.subr.bf16.mxu0 %v5104
        %6092 = vmatpush1.bf16.msra.mxu0 %v5103
        %6093 = vmatprep.subr.bf16.mxu0 %v5096
        %6094 = vmatpush1.bf16.msra.mxu0 %v5095
        %6095 = vmatprep.subr.bf16.mxu0 %v5088
        %6096 = vmatpush1.bf16.msra.mxu0 %v5087
        %6097 = vmatprep.subr.bf16.mxu0 %v5080
        %6098 = vmatpush1.bf16.msra.mxu0 %v5079
        %6099 = vmatprep.subr.bf16.mxu0 %v5072
        %6100 = vmatpush1.bf16.msra.mxu0 %v5071
        %6101 = vmatprep.subr.bf16.mxu0 %v5064
        %6102 = vmatpush1.bf16.msra.mxu0 %v5063
        %6103 = vmatprep.subr.bf16.mxu0 %v5184
        %6104 = vmatpush2.bf16.msra.mxu0 %v5183
        %6105 = vmatprep.subr.bf16.mxu0 %v5176
        %6106 = vmatpush2.bf16.msra.mxu0 %v5175
        %6107 = vmatprep.subr.bf16.mxu0 %v5168
        %6108 = vmatpush2.bf16.msra.mxu0 %v5167
        %6109 = vmatprep.subr.bf16.mxu0 %v5160
        %6110 = vmatpush2.bf16.msra.mxu0 %v5159
        %6111 = vmatprep.subr.bf16.mxu0 %v5152
        %6112 = vmatpush2.bf16.msra.mxu0 %v5151
        %6113 = vmatprep.subr.bf16.mxu0 %v5144
        %6114 = vmatpush2.bf16.msra.mxu0 %v5143
        %6115 = vmatprep.subr.bf16.mxu0 %v5136
        %6116 = vmatpush2.bf16.msra.mxu0 %v5135
        %6117 = vmatprep.subr.bf16.mxu0 %v5128
        %6118 = vmatpush2.bf16.msra.mxu0 %v5127
        %6119 = vmatprep.mubr.bf16.mxu0 %v2910
        %6120 = vmatmul.mubr.bf16.gmra.mxu0 %v2909
        %v6121 = vpop.f32.mrf.mxu0
        %v6122 = vadd.f32 %v3490, %v6121
        %v6123 = vpop.f32.mrf.mxu0
        %v6124 = vadd.f32 %v3494, %v6123
        %v6125 = vpop.f32.mrf.mxu0
        %v6126 = vadd.f32 %v3490, %v6125
        %v6127 = vpop.f32.mrf.mxu0
        %v6128 = vadd.f32 %v3494, %v6127
        %6129 = vmatprep.mubr.bf16.mxu0 %v2918
        %6130 = vmatmul.mubr.bf16.gmra.mxu0 %v2917
        %v6131 = vpop.f32.mrf.mxu0
        %v6132 = vadd.f32 %v3490, %v6131
        %v6133 = vpop.f32.mrf.mxu0
        %v6134 = vadd.f32 %v3494, %v6133
        %v6135 = vpop.f32.mrf.mxu0
        %v6136 = vadd.f32 %v3490, %v6135
        %v6137 = vpop.f32.mrf.mxu0
        %v6138 = vadd.f32 %v3494, %v6137
        %6139 = vmatprep.mubr.bf16.mxu0 %v2926
        %6140 = vmatmul.mubr.bf16.gmra.mxu0 %v2925
        %v6141 = vpop.f32.mrf.mxu0
        %v6142 = vadd.f32 %v3490, %v6141
        %v6143 = vpop.f32.mrf.mxu0
        %v6144 = vadd.f32 %v3494, %v6143
        %v6145 = vpop.f32.mrf.mxu0
        %v6146 = vadd.f32 %v3490, %v6145
        %v6147 = vpop.f32.mrf.mxu0
        %v6148 = vadd.f32 %v3494, %v6147
        %6149 = vmatprep.mubr.bf16.mxu0 %v2934
        %6150 = vmatmul.mubr.bf16.gmra.mxu0 %v2933
        %v6151 = vpop.f32.mrf.mxu0
        %v6152 = vadd.f32 %v3490, %v6151
        %v6153 = vpop.f32.mrf.mxu0
        %v6154 = vadd.f32 %v3494, %v6153
        %v6155 = vpop.f32.mrf.mxu0
        %v6156 = vadd.f32 %v3490, %v6155
        %v6157 = vpop.f32.mrf.mxu0
        %v6158 = vadd.f32 %v3494, %v6157
        %6159 = vmatprep.mubr.bf16.mxu0 %v2942
        %6160 = vmatmul.mubr.bf16.gmra.mxu0 %v2941
        %v6161 = vpop.f32.mrf.mxu0
        %v6162 = vadd.f32 %v3490, %v6161
        %v6163 = vpop.f32.mrf.mxu0
        %v6164 = vadd.f32 %v3494, %v6163
        %v6165 = vpop.f32.mrf.mxu0
        %v6166 = vadd.f32 %v3490, %v6165
        %v6167 = vpop.f32.mrf.mxu0
        %v6168 = vadd.f32 %v3494, %v6167
        %6169 = vmatprep.mubr.bf16.mxu0 %v2950
        %6170 = vmatmul.mubr.bf16.gmra.mxu0 %v2949
        %v6171 = vpop.f32.mrf.mxu0
        %v6172 = vadd.f32 %v3490, %v6171
        %v6173 = vpop.f32.mrf.mxu0
        %v6174 = vadd.f32 %v3494, %v6173
        %v6175 = vpop.f32.mrf.mxu0
        %v6176 = vadd.f32 %v3490, %v6175
        %v6177 = vpop.f32.mrf.mxu0
        %v6178 = vadd.f32 %v3494, %v6177
        %6179 = vmatprep.mubr.bf16.mxu0 %v2958
        %6180 = vmatmul.mubr.bf16.gmra.mxu0 %v2957
        %v6181 = vpop.f32.mrf.mxu0
        %v6182 = vadd.f32 %v3490, %v6181
        %v6183 = vpop.f32.mrf.mxu0
        %v6184 = vadd.f32 %v3494, %v6183
        %v6185 = vpop.f32.mrf.mxu0
        %v6186 = vadd.f32 %v3490, %v6185
        %v6187 = vpop.f32.mrf.mxu0
        %v6188 = vadd.f32 %v3494, %v6187
        %6189 = vmatprep.mubr.bf16.mxu0 %v2966
        %6190 = vmatmul.mubr.bf16.gmra.mxu0 %v2965
        %v6191 = vpop.f32.mrf.mxu0
        %v6192 = vadd.f32 %v3490, %v6191
        %v6193 = vpop.f32.mrf.mxu0
        %v6194 = vadd.f32 %v3494, %v6193
        %v6195 = vpop.f32.mrf.mxu0
        %v6196 = vadd.f32 %v3490, %v6195
        %v6197 = vpop.f32.mrf.mxu0
        %v6198 = vadd.f32 %v3494, %v6197
        %6199 = vdwg.mxu0
        %6200 = vmatprep.subr.bf16.mxu0 %v5248
        %6201 = vmatpush1.bf16.msra.mxu0 %v5247
        %6202 = vmatprep.subr.bf16.mxu0 %v5240
        %6203 = vmatpush1.bf16.msra.mxu0 %v5239
        %6204 = vmatprep.subr.bf16.mxu0 %v5232
        %6205 = vmatpush1.bf16.msra.mxu0 %v5231
        %6206 = vmatprep.subr.bf16.mxu0 %v5224
        %6207 = vmatpush1.bf16.msra.mxu0 %v5223
        %6208 = vmatprep.subr.bf16.mxu0 %v5216
        %6209 = vmatpush1.bf16.msra.mxu0 %v5215
        %6210 = vmatprep.subr.bf16.mxu0 %v5208
        %6211 = vmatpush1.bf16.msra.mxu0 %v5207
        %6212 = vmatprep.subr.bf16.mxu0 %v5200
        %6213 = vmatpush1.bf16.msra.mxu0 %v5199
        %6214 = vmatprep.subr.bf16.mxu0 %v5192
        %6215 = vmatpush1.bf16.msra.mxu0 %v5191
        %6216 = vmatprep.subr.bf16.mxu0 %v5312
        %6217 = vmatpush2.bf16.msra.mxu0 %v5311
        %6218 = vmatprep.subr.bf16.mxu0 %v5304
        %6219 = vmatpush2.bf16.msra.mxu0 %v5303
        %6220 = vmatprep.subr.bf16.mxu0 %v5296
        %6221 = vmatpush2.bf16.msra.mxu0 %v5295
        %6222 = vmatprep.subr.bf16.mxu0 %v5288
        %6223 = vmatpush2.bf16.msra.mxu0 %v5287
        %6224 = vmatprep.subr.bf16.mxu0 %v5280
        %6225 = vmatpush2.bf16.msra.mxu0 %v5279
        %6226 = vmatprep.subr.bf16.mxu0 %v5272
        %6227 = vmatpush2.bf16.msra.mxu0 %v5271
        %6228 = vmatprep.subr.bf16.mxu0 %v5264
        %6229 = vmatpush2.bf16.msra.mxu0 %v5263
        %6230 = vmatprep.subr.bf16.mxu0 %v5256
        %6231 = vmatpush2.bf16.msra.mxu0 %v5255
        %6232 = vmatprep.mubr.bf16.mxu0 %v2912
        %6233 = vmatmul.mubr.bf16.gmra.mxu0 %v2911
        %v6234 = vpop.f32.mrf.mxu0
        %v6235 = vadd.f32 %v6122, %v6234
        %v6236 = vpop.f32.mrf.mxu0
        %v6237 = vadd.f32 %v6124, %v6236
        %v6238 = vpop.f32.mrf.mxu0
        %v6239 = vadd.f32 %v6126, %v6238
        %v6240 = vpop.f32.mrf.mxu0
        %v6241 = vadd.f32 %v6128, %v6240
        %6242 = vmatprep.mubr.bf16.mxu0 %v2920
        %6243 = vmatmul.mubr.bf16.gmra.mxu0 %v2919
        %v6244 = vpop.f32.mrf.mxu0
        %v6245 = vadd.f32 %v6132, %v6244
        %v6246 = vpop.f32.mrf.mxu0
        %v6247 = vadd.f32 %v6134, %v6246
        %v6248 = vpop.f32.mrf.mxu0
        %v6249 = vadd.f32 %v6136, %v6248
        %v6250 = vpop.f32.mrf.mxu0
        %v6251 = vadd.f32 %v6138, %v6250
        %6252 = vmatprep.mubr.bf16.mxu0 %v2928
        %6253 = vmatmul.mubr.bf16.gmra.mxu0 %v2927
        %v6254 = vpop.f32.mrf.mxu0
        %v6255 = vadd.f32 %v6142, %v6254
        %v6256 = vpop.f32.mrf.mxu0
        %v6257 = vadd.f32 %v6144, %v6256
        %v6258 = vpop.f32.mrf.mxu0
        %v6259 = vadd.f32 %v6146, %v6258
        %v6260 = vpop.f32.mrf.mxu0
        %v6261 = vadd.f32 %v6148, %v6260
        %6262 = vmatprep.mubr.bf16.mxu0 %v2936
        %6263 = vmatmul.mubr.bf16.gmra.mxu0 %v2935
        %v6264 = vpop.f32.mrf.mxu0
        %v6265 = vadd.f32 %v6152, %v6264
        %v6266 = vpop.f32.mrf.mxu0
        %v6267 = vadd.f32 %v6154, %v6266
        %v6268 = vpop.f32.mrf.mxu0
        %v6269 = vadd.f32 %v6156, %v6268
        %v6270 = vpop.f32.mrf.mxu0
        %v6271 = vadd.f32 %v6158, %v6270
        %6272 = vmatprep.mubr.bf16.mxu0 %v2944
        %6273 = vmatmul.mubr.bf16.gmra.mxu0 %v2943
        %v6274 = vpop.f32.mrf.mxu0
        %v6275 = vadd.f32 %v6162, %v6274
        %v6276 = vpop.f32.mrf.mxu0
        %v6277 = vadd.f32 %v6164, %v6276
        %v6278 = vpop.f32.mrf.mxu0
        %v6279 = vadd.f32 %v6166, %v6278
        %v6280 = vpop.f32.mrf.mxu0
        %v6281 = vadd.f32 %v6168, %v6280
        %6282 = vmatprep.mubr.bf16.mxu0 %v2952
        %6283 = vmatmul.mubr.bf16.gmra.mxu0 %v2951
        %v6284 = vpop.f32.mrf.mxu0
        %v6285 = vadd.f32 %v6172, %v6284
        %v6286 = vpop.f32.mrf.mxu0
        %v6287 = vadd.f32 %v6174, %v6286
        %v6288 = vpop.f32.mrf.mxu0
        %v6289 = vadd.f32 %v6176, %v6288
        %v6290 = vpop.f32.mrf.mxu0
        %v6291 = vadd.f32 %v6178, %v6290
        %6292 = vmatprep.mubr.bf16.mxu0 %v2960
        %6293 = vmatmul.mubr.bf16.gmra.mxu0 %v2959
        %v6294 = vpop.f32.mrf.mxu0
        %v6295 = vadd.f32 %v6182, %v6294
        %v6296 = vpop.f32.mrf.mxu0
        %v6297 = vadd.f32 %v6184, %v6296
        %v6298 = vpop.f32.mrf.mxu0
        %v6299 = vadd.f32 %v6186, %v6298
        %v6300 = vpop.f32.mrf.mxu0
        %v6301 = vadd.f32 %v6188, %v6300
        %6302 = vmatprep.mubr.bf16.mxu0 %v2968
        %6303 = vmatmul.mubr.bf16.gmra.mxu0 %v2967
        %v6304 = vpop.f32.mrf.mxu0
        %v6305 = vadd.f32 %v6192, %v6304
        %v6306 = vpop.f32.mrf.mxu0
        %v6307 = vadd.f32 %v6194, %v6306
        %v6308 = vpop.f32.mrf.mxu0
        %v6309 = vadd.f32 %v6196, %v6308
        %v6310 = vpop.f32.mrf.mxu0
        %v6311 = vadd.f32 %v6198, %v6310
        %6312 = vdwg.mxu0
        %6313 = vmatprep.subr.bf16.mxu0 %v5376
        %6314 = vmatpush1.bf16.msra.mxu0 %v5375
        %6315 = vmatprep.subr.bf16.mxu0 %v5368
        %6316 = vmatpush1.bf16.msra.mxu0 %v5367
        %6317 = vmatprep.subr.bf16.mxu0 %v5360
        %6318 = vmatpush1.bf16.msra.mxu0 %v5359
        %6319 = vmatprep.subr.bf16.mxu0 %v5352
        %6320 = vmatpush1.bf16.msra.mxu0 %v5351
        %6321 = vmatprep.subr.bf16.mxu0 %v5344
        %6322 = vmatpush1.bf16.msra.mxu0 %v5343
        %6323 = vmatprep.subr.bf16.mxu0 %v5336
        %6324 = vmatpush1.bf16.msra.mxu0 %v5335
        %6325 = vmatprep.subr.bf16.mxu0 %v5328
        %6326 = vmatpush1.bf16.msra.mxu0 %v5327
        %6327 = vmatprep.subr.bf16.mxu0 %v5320
        %6328 = vmatpush1.bf16.msra.mxu0 %v5319
        %6329 = vmatprep.subr.bf16.mxu0 %v5440
        %6330 = vmatpush2.bf16.msra.mxu0 %v5439
        %6331 = vmatprep.subr.bf16.mxu0 %v5432
        %6332 = vmatpush2.bf16.msra.mxu0 %v5431
        %6333 = vmatprep.subr.bf16.mxu0 %v5424
        %6334 = vmatpush2.bf16.msra.mxu0 %v5423
        %6335 = vmatprep.subr.bf16.mxu0 %v5416
        %6336 = vmatpush2.bf16.msra.mxu0 %v5415
        %6337 = vmatprep.subr.bf16.mxu0 %v5408
        %6338 = vmatpush2.bf16.msra.mxu0 %v5407
        %6339 = vmatprep.subr.bf16.mxu0 %v5400
        %6340 = vmatpush2.bf16.msra.mxu0 %v5399
        %6341 = vmatprep.subr.bf16.mxu0 %v5392
        %6342 = vmatpush2.bf16.msra.mxu0 %v5391
        %6343 = vmatprep.subr.bf16.mxu0 %v5384
        %6344 = vmatpush2.bf16.msra.mxu0 %v5383
        %6345 = vmatprep.mubr.bf16.mxu0 %v2914
        %6346 = vmatmul.mubr.bf16.gmra.mxu0 %v2913
        %v6347 = vpop.f32.mrf.mxu0
        %v6348 = vadd.f32 %v6235, %v6347
        %v6349 = vpop.f32.mrf.mxu0
        %v6350 = vadd.f32 %v6237, %v6349
        %v6351 = vpop.f32.mrf.mxu0
        %v6352 = vadd.f32 %v6239, %v6351
        %v6353 = vpop.f32.mrf.mxu0
        %v6354 = vadd.f32 %v6241, %v6353
        %6355 = vmatprep.mubr.bf16.mxu0 %v2922
        %6356 = vmatmul.mubr.bf16.gmra.mxu0 %v2921
        %v6357 = vpop.f32.mrf.mxu0
        %v6358 = vadd.f32 %v6245, %v6357
        %v6359 = vpop.f32.mrf.mxu0
        %v6360 = vadd.f32 %v6247, %v6359
        %v6361 = vpop.f32.mrf.mxu0
        %v6362 = vadd.f32 %v6249, %v6361
        %v6363 = vpop.f32.mrf.mxu0
        %v6364 = vadd.f32 %v6251, %v6363
        %6365 = vmatprep.mubr.bf16.mxu0 %v2930
        %6366 = vmatmul.mubr.bf16.gmra.mxu0 %v2929
        %v6367 = vpop.f32.mrf.mxu0
        %v6368 = vadd.f32 %v6255, %v6367
        %v6369 = vpop.f32.mrf.mxu0
        %v6370 = vadd.f32 %v6257, %v6369
        %v6371 = vpop.f32.mrf.mxu0
        %v6372 = vadd.f32 %v6259, %v6371
        %v6373 = vpop.f32.mrf.mxu0
        %v6374 = vadd.f32 %v6261, %v6373
        %6375 = vmatprep.mubr.bf16.mxu0 %v2938
        %6376 = vmatmul.mubr.bf16.gmra.mxu0 %v2937
        %v6377 = vpop.f32.mrf.mxu0
        %v6378 = vadd.f32 %v6265, %v6377
        %v6379 = vpop.f32.mrf.mxu0
        %v6380 = vadd.f32 %v6267, %v6379
        %v6381 = vpop.f32.mrf.mxu0
        %v6382 = vadd.f32 %v6269, %v6381
        %v6383 = vpop.f32.mrf.mxu0
        %v6384 = vadd.f32 %v6271, %v6383
        %6385 = vmatprep.mubr.bf16.mxu0 %v2946
        %6386 = vmatmul.mubr.bf16.gmra.mxu0 %v2945
        %v6387 = vpop.f32.mrf.mxu0
        %v6388 = vadd.f32 %v6275, %v6387
        %v6389 = vpop.f32.mrf.mxu0
        %v6390 = vadd.f32 %v6277, %v6389
        %v6391 = vpop.f32.mrf.mxu0
        %v6392 = vadd.f32 %v6279, %v6391
        %v6393 = vpop.f32.mrf.mxu0
        %v6394 = vadd.f32 %v6281, %v6393
        %6395 = vmatprep.mubr.bf16.mxu0 %v2954
        %6396 = vmatmul.mubr.bf16.gmra.mxu0 %v2953
        %v6397 = vpop.f32.mrf.mxu0
        %v6398 = vadd.f32 %v6285, %v6397
        %v6399 = vpop.f32.mrf.mxu0
        %v6400 = vadd.f32 %v6287, %v6399
        %v6401 = vpop.f32.mrf.mxu0
        %v6402 = vadd.f32 %v6289, %v6401
        %v6403 = vpop.f32.mrf.mxu0
        %v6404 = vadd.f32 %v6291, %v6403
        %6405 = vmatprep.mubr.bf16.mxu0 %v2962
        %6406 = vmatmul.mubr.bf16.gmra.mxu0 %v2961
        %v6407 = vpop.f32.mrf.mxu0
        %v6408 = vadd.f32 %v6295, %v6407
        %v6409 = vpop.f32.mrf.mxu0
        %v6410 = vadd.f32 %v6297, %v6409
        %v6411 = vpop.f32.mrf.mxu0
        %v6412 = vadd.f32 %v6299, %v6411
        %v6413 = vpop.f32.mrf.mxu0
        %v6414 = vadd.f32 %v6301, %v6413
        %6415 = vmatprep.mubr.bf16.mxu0 %v2970
        %6416 = vmatmul.mubr.bf16.gmra.mxu0 %v2969
        %v6417 = vpop.f32.mrf.mxu0
        %v6418 = vadd.f32 %v6305, %v6417
        %v6419 = vpop.f32.mrf.mxu0
        %v6420 = vadd.f32 %v6307, %v6419
        %v6421 = vpop.f32.mrf.mxu0
        %v6422 = vadd.f32 %v6309, %v6421
        %v6423 = vpop.f32.mrf.mxu0
        %v6424 = vadd.f32 %v6311, %v6423
        %6425 = vdwg.mxu0
        %6426 = vmatprep.subr.bf16.mxu0 %v5504
        %6427 = vmatpush1.bf16.msra.mxu0 %v5503
        %6428 = vmatprep.subr.bf16.mxu0 %v5496
        %6429 = vmatpush1.bf16.msra.mxu0 %v5495
        %6430 = vmatprep.subr.bf16.mxu0 %v5488
        %6431 = vmatpush1.bf16.msra.mxu0 %v5487
        %6432 = vmatprep.subr.bf16.mxu0 %v5480
        %6433 = vmatpush1.bf16.msra.mxu0 %v5479
        %6434 = vmatprep.subr.bf16.mxu0 %v5472
        %6435 = vmatpush1.bf16.msra.mxu0 %v5471
        %6436 = vmatprep.subr.bf16.mxu0 %v5464
        %6437 = vmatpush1.bf16.msra.mxu0 %v5463
        %6438 = vmatprep.subr.bf16.mxu0 %v5456
        %6439 = vmatpush1.bf16.msra.mxu0 %v5455
        %6440 = vmatprep.subr.bf16.mxu0 %v5448
        %6441 = vmatpush1.bf16.msra.mxu0 %v5447
        %6442 = vmatprep.subr.bf16.mxu0 %v5568
        %6443 = vmatpush2.bf16.msra.mxu0 %v5567
        %6444 = vmatprep.subr.bf16.mxu0 %v5560
        %6445 = vmatpush2.bf16.msra.mxu0 %v5559
        %6446 = vmatprep.subr.bf16.mxu0 %v5552
        %6447 = vmatpush2.bf16.msra.mxu0 %v5551
        %6448 = vmatprep.subr.bf16.mxu0 %v5544
        %6449 = vmatpush2.bf16.msra.mxu0 %v5543
        %6450 = vmatprep.subr.bf16.mxu0 %v5536
        %6451 = vmatpush2.bf16.msra.mxu0 %v5535
        %6452 = vmatprep.subr.bf16.mxu0 %v5528
        %6453 = vmatpush2.bf16.msra.mxu0 %v5527
        %6454 = vmatprep.subr.bf16.mxu0 %v5520
        %6455 = vmatpush2.bf16.msra.mxu0 %v5519
        %6456 = vmatprep.subr.bf16.mxu0 %v5512
        %6457 = vmatpush2.bf16.msra.mxu0 %v5511
        %6458 = vmatprep.mubr.bf16.mxu0 %v2916
        %6459 = vmatmul.mubr.bf16.gmra.mxu0 %v2915
        %v6460 = vpop.f32.mrf.mxu0
        %v6461 = vadd.f32 %v6348, %v6460
        %v6462 = vpop.f32.mrf.mxu0
        %v6463 = vadd.f32 %v6350, %v6462
        %v6464 = vpop.f32.mrf.mxu0
        %v6465 = vadd.f32 %v6352, %v6464
        %v6466 = vpop.f32.mrf.mxu0
        %v6467 = vadd.f32 %v6354, %v6466
        %6468 = vmatprep.mubr.bf16.mxu0 %v2924
        %6469 = vmatmul.mubr.bf16.gmra.mxu0 %v2923
        %v6470 = vpop.f32.mrf.mxu0
        %v6471 = vadd.f32 %v6358, %v6470
        %v6472 = vpop.f32.mrf.mxu0
        %v6473 = vadd.f32 %v6360, %v6472
        %v6474 = vpop.f32.mrf.mxu0
        %v6475 = vadd.f32 %v6362, %v6474
        %v6476 = vpop.f32.mrf.mxu0
        %v6477 = vadd.f32 %v6364, %v6476
        %6478 = vmatprep.mubr.bf16.mxu0 %v2932
        %6479 = vmatmul.mubr.bf16.gmra.mxu0 %v2931
        %v6480 = vpop.f32.mrf.mxu0
        %v6481 = vadd.f32 %v6368, %v6480
        %v6482 = vpop.f32.mrf.mxu0
        %v6483 = vadd.f32 %v6370, %v6482
        %v6484 = vpop.f32.mrf.mxu0
        %v6485 = vadd.f32 %v6372, %v6484
        %v6486 = vpop.f32.mrf.mxu0
        %v6487 = vadd.f32 %v6374, %v6486
        %6488 = vmatprep.mubr.bf16.mxu0 %v2940
        %6489 = vmatmul.mubr.bf16.gmra.mxu0 %v2939
        %v6490 = vpop.f32.mrf.mxu0
        %v6491 = vadd.f32 %v6378, %v6490
        %v6492 = vpop.f32.mrf.mxu0
        %v6493 = vadd.f32 %v6380, %v6492
        %v6494 = vpop.f32.mrf.mxu0
        %v6495 = vadd.f32 %v6382, %v6494
        %v6496 = vpop.f32.mrf.mxu0
        %v6497 = vadd.f32 %v6384, %v6496
        %6498 = vmatprep.mubr.bf16.mxu0 %v2948
        %6499 = vmatmul.mubr.bf16.gmra.mxu0 %v2947
        %v6500 = vpop.f32.mrf.mxu0
        %v6501 = vadd.f32 %v6388, %v6500
        %v6502 = vpop.f32.mrf.mxu0
        %v6503 = vadd.f32 %v6390, %v6502
        %v6504 = vpop.f32.mrf.mxu0
        %v6505 = vadd.f32 %v6392, %v6504
        %v6506 = vpop.f32.mrf.mxu0
        %v6507 = vadd.f32 %v6394, %v6506
        %6508 = vmatprep.mubr.bf16.mxu0 %v2956
        %6509 = vmatmul.mubr.bf16.gmra.mxu0 %v2955
        %v6510 = vpop.f32.mrf.mxu0
        %v6511 = vadd.f32 %v6398, %v6510
        %v6512 = vpop.f32.mrf.mxu0
        %v6513 = vadd.f32 %v6400, %v6512
        %v6514 = vpop.f32.mrf.mxu0
        %v6515 = vadd.f32 %v6402, %v6514
        %v6516 = vpop.f32.mrf.mxu0
        %v6517 = vadd.f32 %v6404, %v6516
        %6518 = vmatprep.mubr.bf16.mxu0 %v2964
        %6519 = vmatmul.mubr.bf16.gmra.mxu0 %v2963
        %v6520 = vpop.f32.mrf.mxu0
        %v6521 = vadd.f32 %v6408, %v6520
        %v6522 = vpop.f32.mrf.mxu0
        %v6523 = vadd.f32 %v6410, %v6522
        %v6524 = vpop.f32.mrf.mxu0
        %v6525 = vadd.f32 %v6412, %v6524
        %v6526 = vpop.f32.mrf.mxu0
        %v6527 = vadd.f32 %v6414, %v6526
        %6528 = vmatprep.mubr.bf16.mxu0 %v2972
        %6529 = vmatmul.mubr.bf16.gmra.mxu0 %v2971
        %v6530 = vpop.f32.mrf.mxu0
        %v6531 = vadd.f32 %v6418, %v6530
        %v6532 = vpop.f32.mrf.mxu0
        %v6533 = vadd.f32 %v6420, %v6532
        %v6534 = vpop.f32.mrf.mxu0
        %v6535 = vadd.f32 %v6422, %v6534
        %v6536 = vpop.f32.mrf.mxu0
        %v6537 = vadd.f32 %v6424, %v6536
        %6538 = vdwg.mxu0
        %6539 = vmatprep.subr.bf16.mxu0 %v5122
        %6540 = vmatpush1.bf16.msra.mxu0 %v5121
        %6541 = vmatprep.subr.bf16.mxu0 %v5114
        %6542 = vmatpush1.bf16.msra.mxu0 %v5113
        %6543 = vmatprep.subr.bf16.mxu0 %v5106
        %6544 = vmatpush1.bf16.msra.mxu0 %v5105
        %6545 = vmatprep.subr.bf16.mxu0 %v5098
        %6546 = vmatpush1.bf16.msra.mxu0 %v5097
        %6547 = vmatprep.subr.bf16.mxu0 %v5090
        %6548 = vmatpush1.bf16.msra.mxu0 %v5089
        %6549 = vmatprep.subr.bf16.mxu0 %v5082
        %6550 = vmatpush1.bf16.msra.mxu0 %v5081
        %6551 = vmatprep.subr.bf16.mxu0 %v5074
        %6552 = vmatpush1.bf16.msra.mxu0 %v5073
        %6553 = vmatprep.subr.bf16.mxu0 %v5066
        %6554 = vmatpush1.bf16.msra.mxu0 %v5065
        %6555 = vmatprep.subr.bf16.mxu0 %v5186
        %6556 = vmatpush2.bf16.msra.mxu0 %v5185
        %6557 = vmatprep.subr.bf16.mxu0 %v5178
        %6558 = vmatpush2.bf16.msra.mxu0 %v5177
        %6559 = vmatprep.subr.bf16.mxu0 %v5170
        %6560 = vmatpush2.bf16.msra.mxu0 %v5169
        %6561 = vmatprep.subr.bf16.mxu0 %v5162
        %6562 = vmatpush2.bf16.msra.mxu0 %v5161
        %6563 = vmatprep.subr.bf16.mxu0 %v5154
        %6564 = vmatpush2.bf16.msra.mxu0 %v5153
        %6565 = vmatprep.subr.bf16.mxu0 %v5146
        %6566 = vmatpush2.bf16.msra.mxu0 %v5145
        %6567 = vmatprep.subr.bf16.mxu0 %v5138
        %6568 = vmatpush2.bf16.msra.mxu0 %v5137
        %6569 = vmatprep.subr.bf16.mxu0 %v5130
        %6570 = vmatpush2.bf16.msra.mxu0 %v5129
        %6571 = vmatprep.mubr.bf16.mxu0 %v2910
        %6572 = vmatmul.mubr.bf16.gmra.mxu0 %v2909
        %v6573 = vpop.f32.mrf.mxu0
        %v6574 = vadd.f32 %v3498, %v6573
        %v6575 = vpop.f32.mrf.mxu0
        %v6576 = vadd.f32 %v3502, %v6575
        %v6577 = vpop.f32.mrf.mxu0
        %v6578 = vadd.f32 %v3498, %v6577
        %v6579 = vpop.f32.mrf.mxu0
        %v6580 = vadd.f32 %v3502, %v6579
        %6581 = vmatprep.mubr.bf16.mxu0 %v2918
        %6582 = vmatmul.mubr.bf16.gmra.mxu0 %v2917
        %v6583 = vpop.f32.mrf.mxu0
        %v6584 = vadd.f32 %v3498, %v6583
        %v6585 = vpop.f32.mrf.mxu0
        %v6586 = vadd.f32 %v3502, %v6585
        %v6587 = vpop.f32.mrf.mxu0
        %v6588 = vadd.f32 %v3498, %v6587
        %v6589 = vpop.f32.mrf.mxu0
        %v6590 = vadd.f32 %v3502, %v6589
        %6591 = vmatprep.mubr.bf16.mxu0 %v2926
        %6592 = vmatmul.mubr.bf16.gmra.mxu0 %v2925
        %v6593 = vpop.f32.mrf.mxu0
        %v6594 = vadd.f32 %v3498, %v6593
        %v6595 = vpop.f32.mrf.mxu0
        %v6596 = vadd.f32 %v3502, %v6595
        %v6597 = vpop.f32.mrf.mxu0
        %v6598 = vadd.f32 %v3498, %v6597
        %v6599 = vpop.f32.mrf.mxu0
        %v6600 = vadd.f32 %v3502, %v6599
        %6601 = vmatprep.mubr.bf16.mxu0 %v2934
        %6602 = vmatmul.mubr.bf16.gmra.mxu0 %v2933
        %v6603 = vpop.f32.mrf.mxu0
        %v6604 = vadd.f32 %v3498, %v6603
        %v6605 = vpop.f32.mrf.mxu0
        %v6606 = vadd.f32 %v3502, %v6605
        %v6607 = vpop.f32.mrf.mxu0
        %v6608 = vadd.f32 %v3498, %v6607
        %v6609 = vpop.f32.mrf.mxu0
        %v6610 = vadd.f32 %v3502, %v6609
        %6611 = vmatprep.mubr.bf16.mxu0 %v2942
        %6612 = vmatmul.mubr.bf16.gmra.mxu0 %v2941
        %v6613 = vpop.f32.mrf.mxu0
        %v6614 = vadd.f32 %v3498, %v6613
        %v6615 = vpop.f32.mrf.mxu0
        %v6616 = vadd.f32 %v3502, %v6615
        %v6617 = vpop.f32.mrf.mxu0
        %v6618 = vadd.f32 %v3498, %v6617
        %v6619 = vpop.f32.mrf.mxu0
        %v6620 = vadd.f32 %v3502, %v6619
        %6621 = vmatprep.mubr.bf16.mxu0 %v2950
        %6622 = vmatmul.mubr.bf16.gmra.mxu0 %v2949
        %v6623 = vpop.f32.mrf.mxu0
        %v6624 = vadd.f32 %v3498, %v6623
        %v6625 = vpop.f32.mrf.mxu0
        %v6626 = vadd.f32 %v3502, %v6625
        %v6627 = vpop.f32.mrf.mxu0
        %v6628 = vadd.f32 %v3498, %v6627
        %v6629 = vpop.f32.mrf.mxu0
        %v6630 = vadd.f32 %v3502, %v6629
        %6631 = vmatprep.mubr.bf16.mxu0 %v2958
        %6632 = vmatmul.mubr.bf16.gmra.mxu0 %v2957
        %v6633 = vpop.f32.mrf.mxu0
        %v6634 = vadd.f32 %v3498, %v6633
        %v6635 = vpop.f32.mrf.mxu0
        %v6636 = vadd.f32 %v3502, %v6635
        %v6637 = vpop.f32.mrf.mxu0
        %v6638 = vadd.f32 %v3498, %v6637
        %v6639 = vpop.f32.mrf.mxu0
        %v6640 = vadd.f32 %v3502, %v6639
        %6641 = vmatprep.mubr.bf16.mxu0 %v2966
        %6642 = vmatmul.mubr.bf16.gmra.mxu0 %v2965
        %v6643 = vpop.f32.mrf.mxu0
        %v6644 = vadd.f32 %v3498, %v6643
        %v6645 = vpop.f32.mrf.mxu0
        %v6646 = vadd.f32 %v3502, %v6645
        %v6647 = vpop.f32.mrf.mxu0
        %v6648 = vadd.f32 %v3498, %v6647
        %v6649 = vpop.f32.mrf.mxu0
        %v6650 = vadd.f32 %v3502, %v6649
        %6651 = vdwg.mxu0
        %6652 = vmatprep.subr.bf16.mxu0 %v5250
        %6653 = vmatpush1.bf16.msra.mxu0 %v5249
        %6654 = vmatprep.subr.bf16.mxu0 %v5242
        %6655 = vmatpush1.bf16.msra.mxu0 %v5241
        %6656 = vmatprep.subr.bf16.mxu0 %v5234
        %6657 = vmatpush1.bf16.msra.mxu0 %v5233
        %6658 = vmatprep.subr.bf16.mxu0 %v5226
        %6659 = vmatpush1.bf16.msra.mxu0 %v5225
        %6660 = vmatprep.subr.bf16.mxu0 %v5218
        %6661 = vmatpush1.bf16.msra.mxu0 %v5217
        %6662 = vmatprep.subr.bf16.mxu0 %v5210
        %6663 = vmatpush1.bf16.msra.mxu0 %v5209
        %6664 = vmatprep.subr.bf16.mxu0 %v5202
        %6665 = vmatpush1.bf16.msra.mxu0 %v5201
        %6666 = vmatprep.subr.bf16.mxu0 %v5194
        %6667 = vmatpush1.bf16.msra.mxu0 %v5193
        %6668 = vmatprep.subr.bf16.mxu0 %v5314
        %6669 = vmatpush2.bf16.msra.mxu0 %v5313
        %6670 = vmatprep.subr.bf16.mxu0 %v5306
        %6671 = vmatpush2.bf16.msra.mxu0 %v5305
        %6672 = vmatprep.subr.bf16.mxu0 %v5298
        %6673 = vmatpush2.bf16.msra.mxu0 %v5297
        %6674 = vmatprep.subr.bf16.mxu0 %v5290
        %6675 = vmatpush2.bf16.msra.mxu0 %v5289
        %6676 = vmatprep.subr.bf16.mxu0 %v5282
        %6677 = vmatpush2.bf16.msra.mxu0 %v5281
        %6678 = vmatprep.subr.bf16.mxu0 %v5274
        %6679 = vmatpush2.bf16.msra.mxu0 %v5273
        %6680 = vmatprep.subr.bf16.mxu0 %v5266
        %6681 = vmatpush2.bf16.msra.mxu0 %v5265
        %6682 = vmatprep.subr.bf16.mxu0 %v5258
        %6683 = vmatpush2.bf16.msra.mxu0 %v5257
        %6684 = vmatprep.mubr.bf16.mxu0 %v2912
        %6685 = vmatmul.mubr.bf16.gmra.mxu0 %v2911
        %v6686 = vpop.f32.mrf.mxu0
        %v6687 = vadd.f32 %v6574, %v6686
        %v6688 = vpop.f32.mrf.mxu0
        %v6689 = vadd.f32 %v6576, %v6688
        %v6690 = vpop.f32.mrf.mxu0
        %v6691 = vadd.f32 %v6578, %v6690
        %v6692 = vpop.f32.mrf.mxu0
        %v6693 = vadd.f32 %v6580, %v6692
        %6694 = vmatprep.mubr.bf16.mxu0 %v2920
        %6695 = vmatmul.mubr.bf16.gmra.mxu0 %v2919
        %v6696 = vpop.f32.mrf.mxu0
        %v6697 = vadd.f32 %v6584, %v6696
        %v6698 = vpop.f32.mrf.mxu0
        %v6699 = vadd.f32 %v6586, %v6698
        %v6700 = vpop.f32.mrf.mxu0
        %v6701 = vadd.f32 %v6588, %v6700
        %v6702 = vpop.f32.mrf.mxu0
        %v6703 = vadd.f32 %v6590, %v6702
        %6704 = vmatprep.mubr.bf16.mxu0 %v2928
        %6705 = vmatmul.mubr.bf16.gmra.mxu0 %v2927
        %v6706 = vpop.f32.mrf.mxu0
        %v6707 = vadd.f32 %v6594, %v6706
        %v6708 = vpop.f32.mrf.mxu0
        %v6709 = vadd.f32 %v6596, %v6708
        %v6710 = vpop.f32.mrf.mxu0
        %v6711 = vadd.f32 %v6598, %v6710
        %v6712 = vpop.f32.mrf.mxu0
        %v6713 = vadd.f32 %v6600, %v6712
        %6714 = vmatprep.mubr.bf16.mxu0 %v2936
        %6715 = vmatmul.mubr.bf16.gmra.mxu0 %v2935
        %v6716 = vpop.f32.mrf.mxu0
        %v6717 = vadd.f32 %v6604, %v6716
        %v6718 = vpop.f32.mrf.mxu0
        %v6719 = vadd.f32 %v6606, %v6718
        %v6720 = vpop.f32.mrf.mxu0
        %v6721 = vadd.f32 %v6608, %v6720
        %v6722 = vpop.f32.mrf.mxu0
        %v6723 = vadd.f32 %v6610, %v6722
        %6724 = vmatprep.mubr.bf16.mxu0 %v2944
        %6725 = vmatmul.mubr.bf16.gmra.mxu0 %v2943
        %v6726 = vpop.f32.mrf.mxu0
        %v6727 = vadd.f32 %v6614, %v6726
        %v6728 = vpop.f32.mrf.mxu0
        %v6729 = vadd.f32 %v6616, %v6728
        %v6730 = vpop.f32.mrf.mxu0
        %v6731 = vadd.f32 %v6618, %v6730
        %v6732 = vpop.f32.mrf.mxu0
        %v6733 = vadd.f32 %v6620, %v6732
        %6734 = vmatprep.mubr.bf16.mxu0 %v2952
        %6735 = vmatmul.mubr.bf16.gmra.mxu0 %v2951
        %v6736 = vpop.f32.mrf.mxu0
        %v6737 = vadd.f32 %v6624, %v6736
        %v6738 = vpop.f32.mrf.mxu0
        %v6739 = vadd.f32 %v6626, %v6738
        %v6740 = vpop.f32.mrf.mxu0
        %v6741 = vadd.f32 %v6628, %v6740
        %v6742 = vpop.f32.mrf.mxu0
        %v6743 = vadd.f32 %v6630, %v6742
        %6744 = vmatprep.mubr.bf16.mxu0 %v2960
        %6745 = vmatmul.mubr.bf16.gmra.mxu0 %v2959
        %v6746 = vpop.f32.mrf.mxu0
        %v6747 = vadd.f32 %v6634, %v6746
        %v6748 = vpop.f32.mrf.mxu0
        %v6749 = vadd.f32 %v6636, %v6748
        %v6750 = vpop.f32.mrf.mxu0
        %v6751 = vadd.f32 %v6638, %v6750
        %v6752 = vpop.f32.mrf.mxu0
        %v6753 = vadd.f32 %v6640, %v6752
        %6754 = vmatprep.mubr.bf16.mxu0 %v2968
        %6755 = vmatmul.mubr.bf16.gmra.mxu0 %v2967
        %v6756 = vpop.f32.mrf.mxu0
        %v6757 = vadd.f32 %v6644, %v6756
        %v6758 = vpop.f32.mrf.mxu0
        %v6759 = vadd.f32 %v6646, %v6758
        %v6760 = vpop.f32.mrf.mxu0
        %v6761 = vadd.f32 %v6648, %v6760
        %v6762 = vpop.f32.mrf.mxu0
        %v6763 = vadd.f32 %v6650, %v6762
        %6764 = vdwg.mxu0
        %6765 = vmatprep.subr.bf16.mxu0 %v5378
        %6766 = vmatpush1.bf16.msra.mxu0 %v5377
        %6767 = vmatprep.subr.bf16.mxu0 %v5370
        %6768 = vmatpush1.bf16.msra.mxu0 %v5369
        %6769 = vmatprep.subr.bf16.mxu0 %v5362
        %6770 = vmatpush1.bf16.msra.mxu0 %v5361
        %6771 = vmatprep.subr.bf16.mxu0 %v5354
        %6772 = vmatpush1.bf16.msra.mxu0 %v5353
        %6773 = vmatprep.subr.bf16.mxu0 %v5346
        %6774 = vmatpush1.bf16.msra.mxu0 %v5345
        %6775 = vmatprep.subr.bf16.mxu0 %v5338
        %6776 = vmatpush1.bf16.msra.mxu0 %v5337
        %6777 = vmatprep.subr.bf16.mxu0 %v5330
        %6778 = vmatpush1.bf16.msra.mxu0 %v5329
        %6779 = vmatprep.subr.bf16.mxu0 %v5322
        %6780 = vmatpush1.bf16.msra.mxu0 %v5321
        %6781 = vmatprep.subr.bf16.mxu0 %v5442
        %6782 = vmatpush2.bf16.msra.mxu0 %v5441
        %6783 = vmatprep.subr.bf16.mxu0 %v5434
        %6784 = vmatpush2.bf16.msra.mxu0 %v5433
        %6785 = vmatprep.subr.bf16.mxu0 %v5426
        %6786 = vmatpush2.bf16.msra.mxu0 %v5425
        %6787 = vmatprep.subr.bf16.mxu0 %v5418
        %6788 = vmatpush2.bf16.msra.mxu0 %v5417
        %6789 = vmatprep.subr.bf16.mxu0 %v5410
        %6790 = vmatpush2.bf16.msra.mxu0 %v5409
        %6791 = vmatprep.subr.bf16.mxu0 %v5402
        %6792 = vmatpush2.bf16.msra.mxu0 %v5401
        %6793 = vmatprep.subr.bf16.mxu0 %v5394
        %6794 = vmatpush2.bf16.msra.mxu0 %v5393
        %6795 = vmatprep.subr.bf16.mxu0 %v5386
        %6796 = vmatpush2.bf16.msra.mxu0 %v5385
        %6797 = vmatprep.mubr.bf16.mxu0 %v2914
        %6798 = vmatmul.mubr.bf16.gmra.mxu0 %v2913
        %v6799 = vpop.f32.mrf.mxu0
        %v6800 = vadd.f32 %v6687, %v6799
        %v6801 = vpop.f32.mrf.mxu0
        %v6802 = vadd.f32 %v6689, %v6801
        %v6803 = vpop.f32.mrf.mxu0
        %v6804 = vadd.f32 %v6691, %v6803
        %v6805 = vpop.f32.mrf.mxu0
        %v6806 = vadd.f32 %v6693, %v6805
        %6807 = vmatprep.mubr.bf16.mxu0 %v2922
        %6808 = vmatmul.mubr.bf16.gmra.mxu0 %v2921
        %v6809 = vpop.f32.mrf.mxu0
        %v6810 = vadd.f32 %v6697, %v6809
        %v6811 = vpop.f32.mrf.mxu0
        %v6812 = vadd.f32 %v6699, %v6811
        %v6813 = vpop.f32.mrf.mxu0
        %v6814 = vadd.f32 %v6701, %v6813
        %v6815 = vpop.f32.mrf.mxu0
        %v6816 = vadd.f32 %v6703, %v6815
        %6817 = vmatprep.mubr.bf16.mxu0 %v2930
        %6818 = vmatmul.mubr.bf16.gmra.mxu0 %v2929
        %v6819 = vpop.f32.mrf.mxu0
        %v6820 = vadd.f32 %v6707, %v6819
        %v6821 = vpop.f32.mrf.mxu0
        %v6822 = vadd.f32 %v6709, %v6821
        %v6823 = vpop.f32.mrf.mxu0
        %v6824 = vadd.f32 %v6711, %v6823
        %v6825 = vpop.f32.mrf.mxu0
        %v6826 = vadd.f32 %v6713, %v6825
        %6827 = vmatprep.mubr.bf16.mxu0 %v2938
        %6828 = vmatmul.mubr.bf16.gmra.mxu0 %v2937
        %v6829 = vpop.f32.mrf.mxu0
        %v6830 = vadd.f32 %v6717, %v6829
        %v6831 = vpop.f32.mrf.mxu0
        %v6832 = vadd.f32 %v6719, %v6831
        %v6833 = vpop.f32.mrf.mxu0
        %v6834 = vadd.f32 %v6721, %v6833
        %v6835 = vpop.f32.mrf.mxu0
        %v6836 = vadd.f32 %v6723, %v6835
        %6837 = vmatprep.mubr.bf16.mxu0 %v2946
        %6838 = vmatmul.mubr.bf16.gmra.mxu0 %v2945
        %v6839 = vpop.f32.mrf.mxu0
        %v6840 = vadd.f32 %v6727, %v6839
        %v6841 = vpop.f32.mrf.mxu0
        %v6842 = vadd.f32 %v6729, %v6841
        %v6843 = vpop.f32.mrf.mxu0
        %v6844 = vadd.f32 %v6731, %v6843
        %v6845 = vpop.f32.mrf.mxu0
        %v6846 = vadd.f32 %v6733, %v6845
        %6847 = vmatprep.mubr.bf16.mxu0 %v2954
        %6848 = vmatmul.mubr.bf16.gmra.mxu0 %v2953
        %v6849 = vpop.f32.mrf.mxu0
        %v6850 = vadd.f32 %v6737, %v6849
        %v6851 = vpop.f32.mrf.mxu0
        %v6852 = vadd.f32 %v6739, %v6851
        %v6853 = vpop.f32.mrf.mxu0
        %v6854 = vadd.f32 %v6741, %v6853
        %v6855 = vpop.f32.mrf.mxu0
        %v6856 = vadd.f32 %v6743, %v6855
        %6857 = vmatprep.mubr.bf16.mxu0 %v2962
        %6858 = vmatmul.mubr.bf16.gmra.mxu0 %v2961
        %v6859 = vpop.f32.mrf.mxu0
        %v6860 = vadd.f32 %v6747, %v6859
        %v6861 = vpop.f32.mrf.mxu0
        %v6862 = vadd.f32 %v6749, %v6861
        %v6863 = vpop.f32.mrf.mxu0
        %v6864 = vadd.f32 %v6751, %v6863
        %v6865 = vpop.f32.mrf.mxu0
        %v6866 = vadd.f32 %v6753, %v6865
        %6867 = vmatprep.mubr.bf16.mxu0 %v2970
        %6868 = vmatmul.mubr.bf16.gmra.mxu0 %v2969
        %v6869 = vpop.f32.mrf.mxu0
        %v6870 = vadd.f32 %v6757, %v6869
        %v6871 = vpop.f32.mrf.mxu0
        %v6872 = vadd.f32 %v6759, %v6871
        %v6873 = vpop.f32.mrf.mxu0
        %v6874 = vadd.f32 %v6761, %v6873
        %v6875 = vpop.f32.mrf.mxu0
        %v6876 = vadd.f32 %v6763, %v6875
        %6877 = vdwg.mxu0
        %6878 = vmatprep.subr.bf16.mxu0 %v5506
        %6879 = vmatpush1.bf16.msra.mxu0 %v5505
        %6880 = vmatprep.subr.bf16.mxu0 %v5498
        %6881 = vmatpush1.bf16.msra.mxu0 %v5497
        %6882 = vmatprep.subr.bf16.mxu0 %v5490
        %6883 = vmatpush1.bf16.msra.mxu0 %v5489
        %6884 = vmatprep.subr.bf16.mxu0 %v5482
        %6885 = vmatpush1.bf16.msra.mxu0 %v5481
        %6886 = vmatprep.subr.bf16.mxu0 %v5474
        %6887 = vmatpush1.bf16.msra.mxu0 %v5473
        %6888 = vmatprep.subr.bf16.mxu0 %v5466
        %6889 = vmatpush1.bf16.msra.mxu0 %v5465
        %6890 = vmatprep.subr.bf16.mxu0 %v5458
        %6891 = vmatpush1.bf16.msra.mxu0 %v5457
        %6892 = vmatprep.subr.bf16.mxu0 %v5450
        %6893 = vmatpush1.bf16.msra.mxu0 %v5449
        %6894 = vmatprep.subr.bf16.mxu0 %v5570
        %6895 = vmatpush2.bf16.msra.mxu0 %v5569
        %6896 = vmatprep.subr.bf16.mxu0 %v5562
        %6897 = vmatpush2.bf16.msra.mxu0 %v5561
        %6898 = vmatprep.subr.bf16.mxu0 %v5554
        %6899 = vmatpush2.bf16.msra.mxu0 %v5553
        %6900 = vmatprep.subr.bf16.mxu0 %v5546
        %6901 = vmatpush2.bf16.msra.mxu0 %v5545
        %6902 = vmatprep.subr.bf16.mxu0 %v5538
        %6903 = vmatpush2.bf16.msra.mxu0 %v5537
        %6904 = vmatprep.subr.bf16.mxu0 %v5530
        %6905 = vmatpush2.bf16.msra.mxu0 %v5529
        %6906 = vmatprep.subr.bf16.mxu0 %v5522
        %6907 = vmatpush2.bf16.msra.mxu0 %v5521
        %6908 = vmatprep.subr.bf16.mxu0 %v5514
        %6909 = vmatpush2.bf16.msra.mxu0 %v5513
        %6910 = vmatprep.mubr.bf16.mxu0 %v2916
        %6911 = vmatmul.mubr.bf16.gmra.mxu0 %v2915
        %v6912 = vpop.f32.mrf.mxu0
        %v6913 = vadd.f32 %v6800, %v6912
        %v6914 = vpop.f32.mrf.mxu0
        %v6915 = vadd.f32 %v6802, %v6914
        %v6916 = vpop.f32.mrf.mxu0
        %v6917 = vadd.f32 %v6804, %v6916
        %v6918 = vpop.f32.mrf.mxu0
        %v6919 = vadd.f32 %v6806, %v6918
        %6920 = vmatprep.mubr.bf16.mxu0 %v2924
        %6921 = vmatmul.mubr.bf16.gmra.mxu0 %v2923
        %v6922 = vpop.f32.mrf.mxu0
        %v6923 = vadd.f32 %v6810, %v6922
        %v6924 = vpop.f32.mrf.mxu0
        %v6925 = vadd.f32 %v6812, %v6924
        %v6926 = vpop.f32.mrf.mxu0
        %v6927 = vadd.f32 %v6814, %v6926
        %v6928 = vpop.f32.mrf.mxu0
        %v6929 = vadd.f32 %v6816, %v6928
        %6930 = vmatprep.mubr.bf16.mxu0 %v2932
        %6931 = vmatmul.mubr.bf16.gmra.mxu0 %v2931
        %v6932 = vpop.f32.mrf.mxu0
        %v6933 = vadd.f32 %v6820, %v6932
        %v6934 = vpop.f32.mrf.mxu0
        %v6935 = vadd.f32 %v6822, %v6934
        %v6936 = vpop.f32.mrf.mxu0
        %v6937 = vadd.f32 %v6824, %v6936
        %v6938 = vpop.f32.mrf.mxu0
        %v6939 = vadd.f32 %v6826, %v6938
        %6940 = vmatprep.mubr.bf16.mxu0 %v2940
        %6941 = vmatmul.mubr.bf16.gmra.mxu0 %v2939
        %v6942 = vpop.f32.mrf.mxu0
        %v6943 = vadd.f32 %v6830, %v6942
        %v6944 = vpop.f32.mrf.mxu0
        %v6945 = vadd.f32 %v6832, %v6944
        %v6946 = vpop.f32.mrf.mxu0
        %v6947 = vadd.f32 %v6834, %v6946
        %v6948 = vpop.f32.mrf.mxu0
        %v6949 = vadd.f32 %v6836, %v6948
        %6950 = vmatprep.mubr.bf16.mxu0 %v2948
        %6951 = vmatmul.mubr.bf16.gmra.mxu0 %v2947
        %v6952 = vpop.f32.mrf.mxu0
        %v6953 = vadd.f32 %v6840, %v6952
        %v6954 = vpop.f32.mrf.mxu0
        %v6955 = vadd.f32 %v6842, %v6954
        %v6956 = vpop.f32.mrf.mxu0
        %v6957 = vadd.f32 %v6844, %v6956
        %v6958 = vpop.f32.mrf.mxu0
        %v6959 = vadd.f32 %v6846, %v6958
        %6960 = vmatprep.mubr.bf16.mxu0 %v2956
        %6961 = vmatmul.mubr.bf16.gmra.mxu0 %v2955
        %v6962 = vpop.f32.mrf.mxu0
        %v6963 = vadd.f32 %v6850, %v6962
        %v6964 = vpop.f32.mrf.mxu0
        %v6965 = vadd.f32 %v6852, %v6964
        %v6966 = vpop.f32.mrf.mxu0
        %v6967 = vadd.f32 %v6854, %v6966
        %v6968 = vpop.f32.mrf.mxu0
        %v6969 = vadd.f32 %v6856, %v6968
        %6970 = vmatprep.mubr.bf16.mxu0 %v2964
        %6971 = vmatmul.mubr.bf16.gmra.mxu0 %v2963
        %v6972 = vpop.f32.mrf.mxu0
        %v6973 = vadd.f32 %v6860, %v6972
        %v6974 = vpop.f32.mrf.mxu0
        %v6975 = vadd.f32 %v6862, %v6974
        %v6976 = vpop.f32.mrf.mxu0
        %v6977 = vadd.f32 %v6864, %v6976
        %v6978 = vpop.f32.mrf.mxu0
        %v6979 = vadd.f32 %v6866, %v6978
        %6980 = vmatprep.mubr.bf16.mxu0 %v2972
        %6981 = vmatmul.mubr.bf16.gmra.mxu0 %v2971
        %v6982 = vpop.f32.mrf.mxu0
        %v6983 = vadd.f32 %v6870, %v6982
        %v6984 = vpop.f32.mrf.mxu0
        %v6985 = vadd.f32 %v6872, %v6984
        %v6986 = vpop.f32.mrf.mxu0
        %v6987 = vadd.f32 %v6874, %v6986
        %v6988 = vpop.f32.mrf.mxu0
        %v6989 = vadd.f32 %v6876, %v6988
        %6990 = vdwg.mxu0
        %6991 = vmatprep.subr.bf16.mxu0 %v5124
        %6992 = vmatpush1.bf16.msra.mxu0 %v5123
        %6993 = vmatprep.subr.bf16.mxu0 %v5116
        %6994 = vmatpush1.bf16.msra.mxu0 %v5115
        %6995 = vmatprep.subr.bf16.mxu0 %v5108
        %6996 = vmatpush1.bf16.msra.mxu0 %v5107
        %6997 = vmatprep.subr.bf16.mxu0 %v5100
        %6998 = vmatpush1.bf16.msra.mxu0 %v5099
        %6999 = vmatprep.subr.bf16.mxu0 %v5092
        %7000 = vmatpush1.bf16.msra.mxu0 %v5091
        %7001 = vmatprep.subr.bf16.mxu0 %v5084
        %7002 = vmatpush1.bf16.msra.mxu0 %v5083
        %7003 = vmatprep.subr.bf16.mxu0 %v5076
        %7004 = vmatpush1.bf16.msra.mxu0 %v5075
        %7005 = vmatprep.subr.bf16.mxu0 %v5068
        %7006 = vmatpush1.bf16.msra.mxu0 %v5067
        %7007 = vmatprep.subr.bf16.mxu0 %v5188
        %7008 = vmatpush2.bf16.msra.mxu0 %v5187
        %7009 = vmatprep.subr.bf16.mxu0 %v5180
        %7010 = vmatpush2.bf16.msra.mxu0 %v5179
        %7011 = vmatprep.subr.bf16.mxu0 %v5172
        %7012 = vmatpush2.bf16.msra.mxu0 %v5171
        %7013 = vmatprep.subr.bf16.mxu0 %v5164
        %7014 = vmatpush2.bf16.msra.mxu0 %v5163
        %7015 = vmatprep.subr.bf16.mxu0 %v5156
        %7016 = vmatpush2.bf16.msra.mxu0 %v5155
        %7017 = vmatprep.subr.bf16.mxu0 %v5148
        %7018 = vmatpush2.bf16.msra.mxu0 %v5147
        %7019 = vmatprep.subr.bf16.mxu0 %v5140
        %7020 = vmatpush2.bf16.msra.mxu0 %v5139
        %7021 = vmatprep.subr.bf16.mxu0 %v5132
        %7022 = vmatpush2.bf16.msra.mxu0 %v5131
        %7023 = vmatprep.mubr.bf16.mxu0 %v2910
        %7024 = vmatmul.mubr.bf16.gmra.mxu0 %v2909
        %v7025 = vpop.f32.mrf.mxu0
        %v7026 = vadd.f32 %v3506, %v7025
        %v7027 = vpop.f32.mrf.mxu0
        %v7028 = vadd.f32 %v3510, %v7027
        %v7029 = vpop.f32.mrf.mxu0
        %v7030 = vadd.f32 %v3506, %v7029
        %v7031 = vpop.f32.mrf.mxu0
        %v7032 = vadd.f32 %v3510, %v7031
        %7033 = vmatprep.mubr.bf16.mxu0 %v2918
        %7034 = vmatmul.mubr.bf16.gmra.mxu0 %v2917
        %v7035 = vpop.f32.mrf.mxu0
        %v7036 = vadd.f32 %v3506, %v7035
        %v7037 = vpop.f32.mrf.mxu0
        %v7038 = vadd.f32 %v3510, %v7037
        %v7039 = vpop.f32.mrf.mxu0
        %v7040 = vadd.f32 %v3506, %v7039
        %v7041 = vpop.f32.mrf.mxu0
        %v7042 = vadd.f32 %v3510, %v7041
        %7043 = vmatprep.mubr.bf16.mxu0 %v2926
        %7044 = vmatmul.mubr.bf16.gmra.mxu0 %v2925
        %v7045 = vpop.f32.mrf.mxu0
        %v7046 = vadd.f32 %v3506, %v7045
        %v7047 = vpop.f32.mrf.mxu0
        %v7048 = vadd.f32 %v3510, %v7047
        %v7049 = vpop.f32.mrf.mxu0
        %v7050 = vadd.f32 %v3506, %v7049
        %v7051 = vpop.f32.mrf.mxu0
        %v7052 = vadd.f32 %v3510, %v7051
        %7053 = vmatprep.mubr.bf16.mxu0 %v2934
        %7054 = vmatmul.mubr.bf16.gmra.mxu0 %v2933
        %v7055 = vpop.f32.mrf.mxu0
        %v7056 = vadd.f32 %v3506, %v7055
        %v7057 = vpop.f32.mrf.mxu0
        %v7058 = vadd.f32 %v3510, %v7057
        %v7059 = vpop.f32.mrf.mxu0
        %v7060 = vadd.f32 %v3506, %v7059
        %v7061 = vpop.f32.mrf.mxu0
        %v7062 = vadd.f32 %v3510, %v7061
        %7063 = vmatprep.mubr.bf16.mxu0 %v2942
        %7064 = vmatmul.mubr.bf16.gmra.mxu0 %v2941
        %v7065 = vpop.f32.mrf.mxu0
        %v7066 = vadd.f32 %v3506, %v7065
        %v7067 = vpop.f32.mrf.mxu0
        %v7068 = vadd.f32 %v3510, %v7067
        %v7069 = vpop.f32.mrf.mxu0
        %v7070 = vadd.f32 %v3506, %v7069
        %v7071 = vpop.f32.mrf.mxu0
        %v7072 = vadd.f32 %v3510, %v7071
        %7073 = vmatprep.mubr.bf16.mxu0 %v2950
        %7074 = vmatmul.mubr.bf16.gmra.mxu0 %v2949
        %v7075 = vpop.f32.mrf.mxu0
        %v7076 = vadd.f32 %v3506, %v7075
        %v7077 = vpop.f32.mrf.mxu0
        %v7078 = vadd.f32 %v3510, %v7077
        %v7079 = vpop.f32.mrf.mxu0
        %v7080 = vadd.f32 %v3506, %v7079
        %v7081 = vpop.f32.mrf.mxu0
        %v7082 = vadd.f32 %v3510, %v7081
        %7083 = vmatprep.mubr.bf16.mxu0 %v2958
        %7084 = vmatmul.mubr.bf16.gmra.mxu0 %v2957
        %v7085 = vpop.f32.mrf.mxu0
        %v7086 = vadd.f32 %v3506, %v7085
        %v7087 = vpop.f32.mrf.mxu0
        %v7088 = vadd.f32 %v3510, %v7087
        %v7089 = vpop.f32.mrf.mxu0
        %v7090 = vadd.f32 %v3506, %v7089
        %v7091 = vpop.f32.mrf.mxu0
        %v7092 = vadd.f32 %v3510, %v7091
        %7093 = vmatprep.mubr.bf16.mxu0 %v2966
        %7094 = vmatmul.mubr.bf16.gmra.mxu0 %v2965
        %v7095 = vpop.f32.mrf.mxu0
        %v7096 = vadd.f32 %v3506, %v7095
        %v7097 = vpop.f32.mrf.mxu0
        %v7098 = vadd.f32 %v3510, %v7097
        %v7099 = vpop.f32.mrf.mxu0
        %v7100 = vadd.f32 %v3506, %v7099
        %v7101 = vpop.f32.mrf.mxu0
        %v7102 = vadd.f32 %v3510, %v7101
        %7103 = vdwg.mxu0
        %7104 = vmatprep.subr.bf16.mxu0 %v5252
        %7105 = vmatpush1.bf16.msra.mxu0 %v5251
        %7106 = vmatprep.subr.bf16.mxu0 %v5244
        %7107 = vmatpush1.bf16.msra.mxu0 %v5243
        %7108 = vmatprep.subr.bf16.mxu0 %v5236
        %7109 = vmatpush1.bf16.msra.mxu0 %v5235
        %7110 = vmatprep.subr.bf16.mxu0 %v5228
        %7111 = vmatpush1.bf16.msra.mxu0 %v5227
        %7112 = vmatprep.subr.bf16.mxu0 %v5220
        %7113 = vmatpush1.bf16.msra.mxu0 %v5219
        %7114 = vmatprep.subr.bf16.mxu0 %v5212
        %7115 = vmatpush1.bf16.msra.mxu0 %v5211
        %7116 = vmatprep.subr.bf16.mxu0 %v5204
        %7117 = vmatpush1.bf16.msra.mxu0 %v5203
        %7118 = vmatprep.subr.bf16.mxu0 %v5196
        %7119 = vmatpush1.bf16.msra.mxu0 %v5195
        %7120 = vmatprep.subr.bf16.mxu0 %v5316
        %7121 = vmatpush2.bf16.msra.mxu0 %v5315
        %7122 = vmatprep.subr.bf16.mxu0 %v5308
        %7123 = vmatpush2.bf16.msra.mxu0 %v5307
        %7124 = vmatprep.subr.bf16.mxu0 %v5300
        %7125 = vmatpush2.bf16.msra.mxu0 %v5299
        %7126 = vmatprep.subr.bf16.mxu0 %v5292
        %7127 = vmatpush2.bf16.msra.mxu0 %v5291
        %7128 = vmatprep.subr.bf16.mxu0 %v5284
        %7129 = vmatpush2.bf16.msra.mxu0 %v5283
        %7130 = vmatprep.subr.bf16.mxu0 %v5276
        %7131 = vmatpush2.bf16.msra.mxu0 %v5275
        %7132 = vmatprep.subr.bf16.mxu0 %v5268
        %7133 = vmatpush2.bf16.msra.mxu0 %v5267
        %7134 = vmatprep.subr.bf16.mxu0 %v5260
        %7135 = vmatpush2.bf16.msra.mxu0 %v5259
        %7136 = vmatprep.mubr.bf16.mxu0 %v2912
        %7137 = vmatmul.mubr.bf16.gmra.mxu0 %v2911
        %v7138 = vpop.f32.mrf.mxu0
        %v7139 = vadd.f32 %v7026, %v7138
        %v7140 = vpop.f32.mrf.mxu0
        %v7141 = vadd.f32 %v7028, %v7140
        %v7142 = vpop.f32.mrf.mxu0
        %v7143 = vadd.f32 %v7030, %v7142
        %v7144 = vpop.f32.mrf.mxu0
        %v7145 = vadd.f32 %v7032, %v7144
        %7146 = vmatprep.mubr.bf16.mxu0 %v2920
        %7147 = vmatmul.mubr.bf16.gmra.mxu0 %v2919
        %v7148 = vpop.f32.mrf.mxu0
        %v7149 = vadd.f32 %v7036, %v7148
        %v7150 = vpop.f32.mrf.mxu0
        %v7151 = vadd.f32 %v7038, %v7150
        %v7152 = vpop.f32.mrf.mxu0
        %v7153 = vadd.f32 %v7040, %v7152
        %v7154 = vpop.f32.mrf.mxu0
        %v7155 = vadd.f32 %v7042, %v7154
        %7156 = vmatprep.mubr.bf16.mxu0 %v2928
        %7157 = vmatmul.mubr.bf16.gmra.mxu0 %v2927
        %v7158 = vpop.f32.mrf.mxu0
        %v7159 = vadd.f32 %v7046, %v7158
        %v7160 = vpop.f32.mrf.mxu0
        %v7161 = vadd.f32 %v7048, %v7160
        %v7162 = vpop.f32.mrf.mxu0
        %v7163 = vadd.f32 %v7050, %v7162
        %v7164 = vpop.f32.mrf.mxu0
        %v7165 = vadd.f32 %v7052, %v7164
        %7166 = vmatprep.mubr.bf16.mxu0 %v2936
        %7167 = vmatmul.mubr.bf16.gmra.mxu0 %v2935
        %v7168 = vpop.f32.mrf.mxu0
        %v7169 = vadd.f32 %v7056, %v7168
        %v7170 = vpop.f32.mrf.mxu0
        %v7171 = vadd.f32 %v7058, %v7170
        %v7172 = vpop.f32.mrf.mxu0
        %v7173 = vadd.f32 %v7060, %v7172
        %v7174 = vpop.f32.mrf.mxu0
        %v7175 = vadd.f32 %v7062, %v7174
        %7176 = vmatprep.mubr.bf16.mxu0 %v2944
        %7177 = vmatmul.mubr.bf16.gmra.mxu0 %v2943
        %v7178 = vpop.f32.mrf.mxu0
        %v7179 = vadd.f32 %v7066, %v7178
        %v7180 = vpop.f32.mrf.mxu0
        %v7181 = vadd.f32 %v7068, %v7180
        %v7182 = vpop.f32.mrf.mxu0
        %v7183 = vadd.f32 %v7070, %v7182
        %v7184 = vpop.f32.mrf.mxu0
        %v7185 = vadd.f32 %v7072, %v7184
        %7186 = vmatprep.mubr.bf16.mxu0 %v2952
        %7187 = vmatmul.mubr.bf16.gmra.mxu0 %v2951
        %v7188 = vpop.f32.mrf.mxu0
        %v7189 = vadd.f32 %v7076, %v7188
        %v7190 = vpop.f32.mrf.mxu0
        %v7191 = vadd.f32 %v7078, %v7190
        %v7192 = vpop.f32.mrf.mxu0
        %v7193 = vadd.f32 %v7080, %v7192
        %v7194 = vpop.f32.mrf.mxu0
        %v7195 = vadd.f32 %v7082, %v7194
        %7196 = vmatprep.mubr.bf16.mxu0 %v2960
        %7197 = vmatmul.mubr.bf16.gmra.mxu0 %v2959
        %v7198 = vpop.f32.mrf.mxu0
        %v7199 = vadd.f32 %v7086, %v7198
        %v7200 = vpop.f32.mrf.mxu0
        %v7201 = vadd.f32 %v7088, %v7200
        %v7202 = vpop.f32.mrf.mxu0
        %v7203 = vadd.f32 %v7090, %v7202
        %v7204 = vpop.f32.mrf.mxu0
        %v7205 = vadd.f32 %v7092, %v7204
        %7206 = vmatprep.mubr.bf16.mxu0 %v2968
        %7207 = vmatmul.mubr.bf16.gmra.mxu0 %v2967
        %v7208 = vpop.f32.mrf.mxu0
        %v7209 = vadd.f32 %v7096, %v7208
        %v7210 = vpop.f32.mrf.mxu0
        %v7211 = vadd.f32 %v7098, %v7210
        %v7212 = vpop.f32.mrf.mxu0
        %v7213 = vadd.f32 %v7100, %v7212
        %v7214 = vpop.f32.mrf.mxu0
        %v7215 = vadd.f32 %v7102, %v7214
        %7216 = vdwg.mxu0
        %7217 = vmatprep.subr.bf16.mxu0 %v5380
        %7218 = vmatpush1.bf16.msra.mxu0 %v5379
        %7219 = vmatprep.subr.bf16.mxu0 %v5372
        %7220 = vmatpush1.bf16.msra.mxu0 %v5371
        %7221 = vmatprep.subr.bf16.mxu0 %v5364
        %7222 = vmatpush1.bf16.msra.mxu0 %v5363
        %7223 = vmatprep.subr.bf16.mxu0 %v5356
        %7224 = vmatpush1.bf16.msra.mxu0 %v5355
        %7225 = vmatprep.subr.bf16.mxu0 %v5348
        %7226 = vmatpush1.bf16.msra.mxu0 %v5347
        %7227 = vmatprep.subr.bf16.mxu0 %v5340
        %7228 = vmatpush1.bf16.msra.mxu0 %v5339
        %7229 = vmatprep.subr.bf16.mxu0 %v5332
        %7230 = vmatpush1.bf16.msra.mxu0 %v5331
        %7231 = vmatprep.subr.bf16.mxu0 %v5324
        %7232 = vmatpush1.bf16.msra.mxu0 %v5323
        %7233 = vmatprep.subr.bf16.mxu0 %v5444
        %7234 = vmatpush2.bf16.msra.mxu0 %v5443
        %7235 = vmatprep.subr.bf16.mxu0 %v5436
        %7236 = vmatpush2.bf16.msra.mxu0 %v5435
        %7237 = vmatprep.subr.bf16.mxu0 %v5428
        %7238 = vmatpush2.bf16.msra.mxu0 %v5427
        %7239 = vmatprep.subr.bf16.mxu0 %v5420
        %7240 = vmatpush2.bf16.msra.mxu0 %v5419
        %7241 = vmatprep.subr.bf16.mxu0 %v5412
        %7242 = vmatpush2.bf16.msra.mxu0 %v5411
        %7243 = vmatprep.subr.bf16.mxu0 %v5404
        %7244 = vmatpush2.bf16.msra.mxu0 %v5403
        %7245 = vmatprep.subr.bf16.mxu0 %v5396
        %7246 = vmatpush2.bf16.msra.mxu0 %v5395
        %7247 = vmatprep.subr.bf16.mxu0 %v5388
        %7248 = vmatpush2.bf16.msra.mxu0 %v5387
        %7249 = vmatprep.mubr.bf16.mxu0 %v2914
        %7250 = vmatmul.mubr.bf16.gmra.mxu0 %v2913
        %v7251 = vpop.f32.mrf.mxu0
        %v7252 = vadd.f32 %v7139, %v7251
        %v7253 = vpop.f32.mrf.mxu0
        %v7254 = vadd.f32 %v7141, %v7253
        %v7255 = vpop.f32.mrf.mxu0
        %v7256 = vadd.f32 %v7143, %v7255
        %v7257 = vpop.f32.mrf.mxu0
        %v7258 = vadd.f32 %v7145, %v7257
        %7259 = vmatprep.mubr.bf16.mxu0 %v2922
        %7260 = vmatmul.mubr.bf16.gmra.mxu0 %v2921
        %v7261 = vpop.f32.mrf.mxu0
        %v7262 = vadd.f32 %v7149, %v7261
        %v7263 = vpop.f32.mrf.mxu0
        %v7264 = vadd.f32 %v7151, %v7263
        %v7265 = vpop.f32.mrf.mxu0
        %v7266 = vadd.f32 %v7153, %v7265
        %v7267 = vpop.f32.mrf.mxu0
        %v7268 = vadd.f32 %v7155, %v7267
        %7269 = vmatprep.mubr.bf16.mxu0 %v2930
        %7270 = vmatmul.mubr.bf16.gmra.mxu0 %v2929
        %v7271 = vpop.f32.mrf.mxu0
        %v7272 = vadd.f32 %v7159, %v7271
        %v7273 = vpop.f32.mrf.mxu0
        %v7274 = vadd.f32 %v7161, %v7273
        %v7275 = vpop.f32.mrf.mxu0
        %v7276 = vadd.f32 %v7163, %v7275
        %v7277 = vpop.f32.mrf.mxu0
        %v7278 = vadd.f32 %v7165, %v7277
        %7279 = vmatprep.mubr.bf16.mxu0 %v2938
        %7280 = vmatmul.mubr.bf16.gmra.mxu0 %v2937
        %v7281 = vpop.f32.mrf.mxu0
        %v7282 = vadd.f32 %v7169, %v7281
        %v7283 = vpop.f32.mrf.mxu0
        %v7284 = vadd.f32 %v7171, %v7283
        %v7285 = vpop.f32.mrf.mxu0
        %v7286 = vadd.f32 %v7173, %v7285
        %v7287 = vpop.f32.mrf.mxu0
        %v7288 = vadd.f32 %v7175, %v7287
        %7289 = vmatprep.mubr.bf16.mxu0 %v2946
        %7290 = vmatmul.mubr.bf16.gmra.mxu0 %v2945
        %v7291 = vpop.f32.mrf.mxu0
        %v7292 = vadd.f32 %v7179, %v7291
        %v7293 = vpop.f32.mrf.mxu0
        %v7294 = vadd.f32 %v7181, %v7293
        %v7295 = vpop.f32.mrf.mxu0
        %v7296 = vadd.f32 %v7183, %v7295
        %v7297 = vpop.f32.mrf.mxu0
        %v7298 = vadd.f32 %v7185, %v7297
        %7299 = vmatprep.mubr.bf16.mxu0 %v2954
        %7300 = vmatmul.mubr.bf16.gmra.mxu0 %v2953
        %v7301 = vpop.f32.mrf.mxu0
        %v7302 = vadd.f32 %v7189, %v7301
        %v7303 = vpop.f32.mrf.mxu0
        %v7304 = vadd.f32 %v7191, %v7303
        %v7305 = vpop.f32.mrf.mxu0
        %v7306 = vadd.f32 %v7193, %v7305
        %v7307 = vpop.f32.mrf.mxu0
        %v7308 = vadd.f32 %v7195, %v7307
        %7309 = vmatprep.mubr.bf16.mxu0 %v2962
        %7310 = vmatmul.mubr.bf16.gmra.mxu0 %v2961
        %v7311 = vpop.f32.mrf.mxu0
        %v7312 = vadd.f32 %v7199, %v7311
        %v7313 = vpop.f32.mrf.mxu0
        %v7314 = vadd.f32 %v7201, %v7313
        %v7315 = vpop.f32.mrf.mxu0
        %v7316 = vadd.f32 %v7203, %v7315
        %v7317 = vpop.f32.mrf.mxu0
        %v7318 = vadd.f32 %v7205, %v7317
        %7319 = vmatprep.mubr.bf16.mxu0 %v2970
        %7320 = vmatmul.mubr.bf16.gmra.mxu0 %v2969
        %v7321 = vpop.f32.mrf.mxu0
        %v7322 = vadd.f32 %v7209, %v7321
        %v7323 = vpop.f32.mrf.mxu0
        %v7324 = vadd.f32 %v7211, %v7323
        %v7325 = vpop.f32.mrf.mxu0
        %v7326 = vadd.f32 %v7213, %v7325
        %v7327 = vpop.f32.mrf.mxu0
        %v7328 = vadd.f32 %v7215, %v7327
        %7329 = vdwg.mxu0
        %7330 = vmatprep.subr.bf16.mxu0 %v5508
        %7331 = vmatpush1.bf16.msra.mxu0 %v5507
        %7332 = vmatprep.subr.bf16.mxu0 %v5500
        %7333 = vmatpush1.bf16.msra.mxu0 %v5499
        %7334 = vmatprep.subr.bf16.mxu0 %v5492
        %7335 = vmatpush1.bf16.msra.mxu0 %v5491
        %7336 = vmatprep.subr.bf16.mxu0 %v5484
        %7337 = vmatpush1.bf16.msra.mxu0 %v5483
        %7338 = vmatprep.subr.bf16.mxu0 %v5476
        %7339 = vmatpush1.bf16.msra.mxu0 %v5475
        %7340 = vmatprep.subr.bf16.mxu0 %v5468
        %7341 = vmatpush1.bf16.msra.mxu0 %v5467
        %7342 = vmatprep.subr.bf16.mxu0 %v5460
        %7343 = vmatpush1.bf16.msra.mxu0 %v5459
        %7344 = vmatprep.subr.bf16.mxu0 %v5452
        %7345 = vmatpush1.bf16.msra.mxu0 %v5451
        %7346 = vmatprep.subr.bf16.mxu0 %v5572
        %7347 = vmatpush2.bf16.msra.mxu0 %v5571
        %7348 = vmatprep.subr.bf16.mxu0 %v5564
        %7349 = vmatpush2.bf16.msra.mxu0 %v5563
        %7350 = vmatprep.subr.bf16.mxu0 %v5556
        %7351 = vmatpush2.bf16.msra.mxu0 %v5555
        %7352 = vmatprep.subr.bf16.mxu0 %v5548
        %7353 = vmatpush2.bf16.msra.mxu0 %v5547
        %7354 = vmatprep.subr.bf16.mxu0 %v5540
        %7355 = vmatpush2.bf16.msra.mxu0 %v5539
        %7356 = vmatprep.subr.bf16.mxu0 %v5532
        %7357 = vmatpush2.bf16.msra.mxu0 %v5531
        %7358 = vmatprep.subr.bf16.mxu0 %v5524
        %7359 = vmatpush2.bf16.msra.mxu0 %v5523
        %7360 = vmatprep.subr.bf16.mxu0 %v5516
        %7361 = vmatpush2.bf16.msra.mxu0 %v5515
        %7362 = vmatprep.mubr.bf16.mxu0 %v2916
        %7363 = vmatmul.mubr.bf16.gmra.mxu0 %v2915
        %v7364 = vpop.f32.mrf.mxu0
        %v7365 = vadd.f32 %v7252, %v7364
        %v7366 = vpop.f32.mrf.mxu0
        %v7367 = vadd.f32 %v7254, %v7366
        %v7368 = vpop.f32.mrf.mxu0
        %v7369 = vadd.f32 %v7256, %v7368
        %v7370 = vpop.f32.mrf.mxu0
        %v7371 = vadd.f32 %v7258, %v7370
        %7372 = vmatprep.mubr.bf16.mxu0 %v2924
        %7373 = vmatmul.mubr.bf16.gmra.mxu0 %v2923
        %v7374 = vpop.f32.mrf.mxu0
        %v7375 = vadd.f32 %v7262, %v7374
        %v7376 = vpop.f32.mrf.mxu0
        %v7377 = vadd.f32 %v7264, %v7376
        %v7378 = vpop.f32.mrf.mxu0
        %v7379 = vadd.f32 %v7266, %v7378
        %v7380 = vpop.f32.mrf.mxu0
        %v7381 = vadd.f32 %v7268, %v7380
        %7382 = vmatprep.mubr.bf16.mxu0 %v2932
        %7383 = vmatmul.mubr.bf16.gmra.mxu0 %v2931
        %v7384 = vpop.f32.mrf.mxu0
        %v7385 = vadd.f32 %v7272, %v7384
        %v7386 = vpop.f32.mrf.mxu0
        %v7387 = vadd.f32 %v7274, %v7386
        %v7388 = vpop.f32.mrf.mxu0
        %v7389 = vadd.f32 %v7276, %v7388
        %v7390 = vpop.f32.mrf.mxu0
        %v7391 = vadd.f32 %v7278, %v7390
        %7392 = vmatprep.mubr.bf16.mxu0 %v2940
        %7393 = vmatmul.mubr.bf16.gmra.mxu0 %v2939
        %v7394 = vpop.f32.mrf.mxu0
        %v7395 = vadd.f32 %v7282, %v7394
        %v7396 = vpop.f32.mrf.mxu0
        %v7397 = vadd.f32 %v7284, %v7396
        %v7398 = vpop.f32.mrf.mxu0
        %v7399 = vadd.f32 %v7286, %v7398
        %v7400 = vpop.f32.mrf.mxu0
        %v7401 = vadd.f32 %v7288, %v7400
        %7402 = vmatprep.mubr.bf16.mxu0 %v2948
        %7403 = vmatmul.mubr.bf16.gmra.mxu0 %v2947
        %v7404 = vpop.f32.mrf.mxu0
        %v7405 = vadd.f32 %v7292, %v7404
        %v7406 = vpop.f32.mrf.mxu0
        %v7407 = vadd.f32 %v7294, %v7406
        %v7408 = vpop.f32.mrf.mxu0
        %v7409 = vadd.f32 %v7296, %v7408
        %v7410 = vpop.f32.mrf.mxu0
        %v7411 = vadd.f32 %v7298, %v7410
        %7412 = vmatprep.mubr.bf16.mxu0 %v2956
        %7413 = vmatmul.mubr.bf16.gmra.mxu0 %v2955
        %v7414 = vpop.f32.mrf.mxu0
        %v7415 = vadd.f32 %v7302, %v7414
        %v7416 = vpop.f32.mrf.mxu0
        %v7417 = vadd.f32 %v7304, %v7416
        %v7418 = vpop.f32.mrf.mxu0
        %v7419 = vadd.f32 %v7306, %v7418
        %v7420 = vpop.f32.mrf.mxu0
        %v7421 = vadd.f32 %v7308, %v7420
        %7422 = vmatprep.mubr.bf16.mxu0 %v2964
        %7423 = vmatmul.mubr.bf16.gmra.mxu0 %v2963
        %v7424 = vpop.f32.mrf.mxu0
        %v7425 = vadd.f32 %v7312, %v7424
        %v7426 = vpop.f32.mrf.mxu0
        %v7427 = vadd.f32 %v7314, %v7426
        %v7428 = vpop.f32.mrf.mxu0
        %v7429 = vadd.f32 %v7316, %v7428
        %v7430 = vpop.f32.mrf.mxu0
        %v7431 = vadd.f32 %v7318, %v7430
        %7432 = vmatprep.mubr.bf16.mxu0 %v2972
        %7433 = vmatmul.mubr.bf16.gmra.mxu0 %v2971
        %v7434 = vpop.f32.mrf.mxu0
        %v7435 = vadd.f32 %v7322, %v7434
        %v7436 = vpop.f32.mrf.mxu0
        %v7437 = vadd.f32 %v7324, %v7436
        %v7438 = vpop.f32.mrf.mxu0
        %v7439 = vadd.f32 %v7326, %v7438
        %v7440 = vpop.f32.mrf.mxu0
        %v7441 = vadd.f32 %v7328, %v7440
        %7442 = vdwg.mxu0
        %7443 = vmatprep.subr.bf16.mxu0 %v5126
        %7444 = vmatpush1.bf16.msra.mxu0 %v5125
        %7445 = vmatprep.subr.bf16.mxu0 %v5118
        %7446 = vmatpush1.bf16.msra.mxu0 %v5117
        %7447 = vmatprep.subr.bf16.mxu0 %v5110
        %7448 = vmatpush1.bf16.msra.mxu0 %v5109
        %7449 = vmatprep.subr.bf16.mxu0 %v5102
        %7450 = vmatpush1.bf16.msra.mxu0 %v5101
        %7451 = vmatprep.subr.bf16.mxu0 %v5094
        %7452 = vmatpush1.bf16.msra.mxu0 %v5093
        %7453 = vmatprep.subr.bf16.mxu0 %v5086
        %7454 = vmatpush1.bf16.msra.mxu0 %v5085
        %7455 = vmatprep.subr.bf16.mxu0 %v5078
        %7456 = vmatpush1.bf16.msra.mxu0 %v5077
        %7457 = vmatprep.subr.bf16.mxu0 %v5070
        %7458 = vmatpush1.bf16.msra.mxu0 %v5069
        %7459 = vmatprep.subr.bf16.mxu0 %v5190
        %7460 = vmatpush2.bf16.msra.mxu0 %v5189
        %7461 = vmatprep.subr.bf16.mxu0 %v5182
        %7462 = vmatpush2.bf16.msra.mxu0 %v5181
        %7463 = vmatprep.subr.bf16.mxu0 %v5174
        %7464 = vmatpush2.bf16.msra.mxu0 %v5173
        %7465 = vmatprep.subr.bf16.mxu0 %v5166
        %7466 = vmatpush2.bf16.msra.mxu0 %v5165
        %7467 = vmatprep.subr.bf16.mxu0 %v5158
        %7468 = vmatpush2.bf16.msra.mxu0 %v5157
        %7469 = vmatprep.subr.bf16.mxu0 %v5150
        %7470 = vmatpush2.bf16.msra.mxu0 %v5149
        %7471 = vmatprep.subr.bf16.mxu0 %v5142
        %7472 = vmatpush2.bf16.msra.mxu0 %v5141
        %7473 = vmatprep.subr.bf16.mxu0 %v5134
        %7474 = vmatpush2.bf16.msra.mxu0 %v5133
        %7475 = vmatprep.mubr.bf16.mxu0 %v2910
        %7476 = vmatmul.mubr.bf16.gmra.mxu0 %v2909
        %v7477 = vpop.f32.mrf.mxu0
        %v7478 = vadd.f32 %v3514, %v7477
        %v7479 = vpop.f32.mrf.mxu0
        %v7480 = vadd.f32 %v3518, %v7479
        %v7481 = vpop.f32.mrf.mxu0
        %v7482 = vadd.f32 %v3514, %v7481
        %v7483 = vpop.f32.mrf.mxu0
        %v7484 = vadd.f32 %v3518, %v7483
        %7485 = vmatprep.mubr.bf16.mxu0 %v2918
        %7486 = vmatmul.mubr.bf16.gmra.mxu0 %v2917
        %v7487 = vpop.f32.mrf.mxu0
        %v7488 = vadd.f32 %v3514, %v7487
        %v7489 = vpop.f32.mrf.mxu0
        %v7490 = vadd.f32 %v3518, %v7489
        %v7491 = vpop.f32.mrf.mxu0
        %v7492 = vadd.f32 %v3514, %v7491
        %v7493 = vpop.f32.mrf.mxu0
        %v7494 = vadd.f32 %v3518, %v7493
        %7495 = vmatprep.mubr.bf16.mxu0 %v2926
        %7496 = vmatmul.mubr.bf16.gmra.mxu0 %v2925
        %v7497 = vpop.f32.mrf.mxu0
        %v7498 = vadd.f32 %v3514, %v7497
        %v7499 = vpop.f32.mrf.mxu0
        %v7500 = vadd.f32 %v3518, %v7499
        %v7501 = vpop.f32.mrf.mxu0
        %v7502 = vadd.f32 %v3514, %v7501
        %v7503 = vpop.f32.mrf.mxu0
        %v7504 = vadd.f32 %v3518, %v7503
        %7505 = vmatprep.mubr.bf16.mxu0 %v2934
        %7506 = vmatmul.mubr.bf16.gmra.mxu0 %v2933
        %v7507 = vpop.f32.mrf.mxu0
        %v7508 = vadd.f32 %v3514, %v7507
        %v7509 = vpop.f32.mrf.mxu0
        %v7510 = vadd.f32 %v3518, %v7509
        %v7511 = vpop.f32.mrf.mxu0
        %v7512 = vadd.f32 %v3514, %v7511
        %v7513 = vpop.f32.mrf.mxu0
        %v7514 = vadd.f32 %v3518, %v7513
        %7515 = vmatprep.mubr.bf16.mxu0 %v2942
        %7516 = vmatmul.mubr.bf16.gmra.mxu0 %v2941
        %v7517 = vpop.f32.mrf.mxu0
        %v7518 = vadd.f32 %v3514, %v7517
        %v7519 = vpop.f32.mrf.mxu0
        %v7520 = vadd.f32 %v3518, %v7519
        %v7521 = vpop.f32.mrf.mxu0
        %v7522 = vadd.f32 %v3514, %v7521
        %v7523 = vpop.f32.mrf.mxu0
        %v7524 = vadd.f32 %v3518, %v7523
        %7525 = vmatprep.mubr.bf16.mxu0 %v2950
        %7526 = vmatmul.mubr.bf16.gmra.mxu0 %v2949
        %v7527 = vpop.f32.mrf.mxu0
        %v7528 = vadd.f32 %v3514, %v7527
        %v7529 = vpop.f32.mrf.mxu0
        %v7530 = vadd.f32 %v3518, %v7529
        %v7531 = vpop.f32.mrf.mxu0
        %v7532 = vadd.f32 %v3514, %v7531
        %v7533 = vpop.f32.mrf.mxu0
        %v7534 = vadd.f32 %v3518, %v7533
        %7535 = vmatprep.mubr.bf16.mxu0 %v2958
        %7536 = vmatmul.mubr.bf16.gmra.mxu0 %v2957
        %v7537 = vpop.f32.mrf.mxu0
        %v7538 = vadd.f32 %v3514, %v7537
        %v7539 = vpop.f32.mrf.mxu0
        %v7540 = vadd.f32 %v3518, %v7539
        %v7541 = vpop.f32.mrf.mxu0
        %v7542 = vadd.f32 %v3514, %v7541
        %v7543 = vpop.f32.mrf.mxu0
        %v7544 = vadd.f32 %v3518, %v7543
        %7545 = vmatprep.mubr.bf16.mxu0 %v2966
        %7546 = vmatmul.mubr.bf16.gmra.mxu0 %v2965
        %v7547 = vpop.f32.mrf.mxu0
        %v7548 = vadd.f32 %v3514, %v7547
        %v7549 = vpop.f32.mrf.mxu0
        %v7550 = vadd.f32 %v3518, %v7549
        %v7551 = vpop.f32.mrf.mxu0
        %v7552 = vadd.f32 %v3514, %v7551
        %v7553 = vpop.f32.mrf.mxu0
        %v7554 = vadd.f32 %v3518, %v7553
        %7555 = vdwg.mxu0
        %7556 = vmatprep.subr.bf16.mxu0 %v5254
        %7557 = vmatpush1.bf16.msra.mxu0 %v5253
        %7558 = vmatprep.subr.bf16.mxu0 %v5246
        %7559 = vmatpush1.bf16.msra.mxu0 %v5245
        %7560 = vmatprep.subr.bf16.mxu0 %v5238
        %7561 = vmatpush1.bf16.msra.mxu0 %v5237
        %7562 = vmatprep.subr.bf16.mxu0 %v5230
        %7563 = vmatpush1.bf16.msra.mxu0 %v5229
        %7564 = vmatprep.subr.bf16.mxu0 %v5222
        %7565 = vmatpush1.bf16.msra.mxu0 %v5221
        %7566 = vmatprep.subr.bf16.mxu0 %v5214
        %7567 = vmatpush1.bf16.msra.mxu0 %v5213
        %7568 = vmatprep.subr.bf16.mxu0 %v5206
        %7569 = vmatpush1.bf16.msra.mxu0 %v5205
        %7570 = vmatprep.subr.bf16.mxu0 %v5198
        %7571 = vmatpush1.bf16.msra.mxu0 %v5197
        %7572 = vmatprep.subr.bf16.mxu0 %v5318
        %7573 = vmatpush2.bf16.msra.mxu0 %v5317
        %7574 = vmatprep.subr.bf16.mxu0 %v5310
        %7575 = vmatpush2.bf16.msra.mxu0 %v5309
        %7576 = vmatprep.subr.bf16.mxu0 %v5302
        %7577 = vmatpush2.bf16.msra.mxu0 %v5301
        %7578 = vmatprep.subr.bf16.mxu0 %v5294
        %7579 = vmatpush2.bf16.msra.mxu0 %v5293
        %7580 = vmatprep.subr.bf16.mxu0 %v5286
        %7581 = vmatpush2.bf16.msra.mxu0 %v5285
        %7582 = vmatprep.subr.bf16.mxu0 %v5278
        %7583 = vmatpush2.bf16.msra.mxu0 %v5277
        %7584 = vmatprep.subr.bf16.mxu0 %v5270
        %7585 = vmatpush2.bf16.msra.mxu0 %v5269
        %7586 = vmatprep.subr.bf16.mxu0 %v5262
        %7587 = vmatpush2.bf16.msra.mxu0 %v5261
        %7588 = vmatprep.mubr.bf16.mxu0 %v2912
        %7589 = vmatmul.mubr.bf16.gmra.mxu0 %v2911
        %v7590 = vpop.f32.mrf.mxu0
        %v7591 = vadd.f32 %v7478, %v7590
        %v7592 = vpop.f32.mrf.mxu0
        %v7593 = vadd.f32 %v7480, %v7592
        %v7594 = vpop.f32.mrf.mxu0
        %v7595 = vadd.f32 %v7482, %v7594
        %v7596 = vpop.f32.mrf.mxu0
        %v7597 = vadd.f32 %v7484, %v7596
        %7598 = vmatprep.mubr.bf16.mxu0 %v2920
        %7599 = vmatmul.mubr.bf16.gmra.mxu0 %v2919
        %v7600 = vpop.f32.mrf.mxu0
        %v7601 = vadd.f32 %v7488, %v7600
        %v7602 = vpop.f32.mrf.mxu0
        %v7603 = vadd.f32 %v7490, %v7602
        %v7604 = vpop.f32.mrf.mxu0
        %v7605 = vadd.f32 %v7492, %v7604
        %v7606 = vpop.f32.mrf.mxu0
        %v7607 = vadd.f32 %v7494, %v7606
        %7608 = vmatprep.mubr.bf16.mxu0 %v2928
        %7609 = vmatmul.mubr.bf16.gmra.mxu0 %v2927
        %v7610 = vpop.f32.mrf.mxu0
        %v7611 = vadd.f32 %v7498, %v7610
        %v7612 = vpop.f32.mrf.mxu0
        %v7613 = vadd.f32 %v7500, %v7612
        %v7614 = vpop.f32.mrf.mxu0
        %v7615 = vadd.f32 %v7502, %v7614
        %v7616 = vpop.f32.mrf.mxu0
        %v7617 = vadd.f32 %v7504, %v7616
        %7618 = vmatprep.mubr.bf16.mxu0 %v2936
        %7619 = vmatmul.mubr.bf16.gmra.mxu0 %v2935
        %v7620 = vpop.f32.mrf.mxu0
        %v7621 = vadd.f32 %v7508, %v7620
        %v7622 = vpop.f32.mrf.mxu0
        %v7623 = vadd.f32 %v7510, %v7622
        %v7624 = vpop.f32.mrf.mxu0
        %v7625 = vadd.f32 %v7512, %v7624
        %v7626 = vpop.f32.mrf.mxu0
        %v7627 = vadd.f32 %v7514, %v7626
        %7628 = vmatprep.mubr.bf16.mxu0 %v2944
        %7629 = vmatmul.mubr.bf16.gmra.mxu0 %v2943
        %v7630 = vpop.f32.mrf.mxu0
        %v7631 = vadd.f32 %v7518, %v7630
        %v7632 = vpop.f32.mrf.mxu0
        %v7633 = vadd.f32 %v7520, %v7632
        %v7634 = vpop.f32.mrf.mxu0
        %v7635 = vadd.f32 %v7522, %v7634
        %v7636 = vpop.f32.mrf.mxu0
        %v7637 = vadd.f32 %v7524, %v7636
        %7638 = vmatprep.mubr.bf16.mxu0 %v2952
        %7639 = vmatmul.mubr.bf16.gmra.mxu0 %v2951
        %v7640 = vpop.f32.mrf.mxu0
        %v7641 = vadd.f32 %v7528, %v7640
        %v7642 = vpop.f32.mrf.mxu0
        %v7643 = vadd.f32 %v7530, %v7642
        %v7644 = vpop.f32.mrf.mxu0
        %v7645 = vadd.f32 %v7532, %v7644
        %v7646 = vpop.f32.mrf.mxu0
        %v7647 = vadd.f32 %v7534, %v7646
        %7648 = vmatprep.mubr.bf16.mxu0 %v2960
        %7649 = vmatmul.mubr.bf16.gmra.mxu0 %v2959
        %v7650 = vpop.f32.mrf.mxu0
        %v7651 = vadd.f32 %v7538, %v7650
        %v7652 = vpop.f32.mrf.mxu0
        %v7653 = vadd.f32 %v7540, %v7652
        %v7654 = vpop.f32.mrf.mxu0
        %v7655 = vadd.f32 %v7542, %v7654
        %v7656 = vpop.f32.mrf.mxu0
        %v7657 = vadd.f32 %v7544, %v7656
        %7658 = vmatprep.mubr.bf16.mxu0 %v2968
        %7659 = vmatmul.mubr.bf16.gmra.mxu0 %v2967
        %v7660 = vpop.f32.mrf.mxu0
        %v7661 = vadd.f32 %v7548, %v7660
        %v7662 = vpop.f32.mrf.mxu0
        %v7663 = vadd.f32 %v7550, %v7662
        %v7664 = vpop.f32.mrf.mxu0
        %v7665 = vadd.f32 %v7552, %v7664
        %v7666 = vpop.f32.mrf.mxu0
        %v7667 = vadd.f32 %v7554, %v7666
        %7668 = vdwg.mxu0
        %7669 = vmatprep.subr.bf16.mxu0 %v5382
        %7670 = vmatpush1.bf16.msra.mxu0 %v5381
        %7671 = vmatprep.subr.bf16.mxu0 %v5374
        %7672 = vmatpush1.bf16.msra.mxu0 %v5373
        %7673 = vmatprep.subr.bf16.mxu0 %v5366
        %7674 = vmatpush1.bf16.msra.mxu0 %v5365
        %7675 = vmatprep.subr.bf16.mxu0 %v5358
        %7676 = vmatpush1.bf16.msra.mxu0 %v5357
        %7677 = vmatprep.subr.bf16.mxu0 %v5350
        %7678 = vmatpush1.bf16.msra.mxu0 %v5349
        %7679 = vmatprep.subr.bf16.mxu0 %v5342
        %7680 = vmatpush1.bf16.msra.mxu0 %v5341
        %7681 = vmatprep.subr.bf16.mxu0 %v5334
        %7682 = vmatpush1.bf16.msra.mxu0 %v5333
        %7683 = vmatprep.subr.bf16.mxu0 %v5326
        %7684 = vmatpush1.bf16.msra.mxu0 %v5325
        %7685 = vmatprep.subr.bf16.mxu0 %v5446
        %7686 = vmatpush2.bf16.msra.mxu0 %v5445
        %7687 = vmatprep.subr.bf16.mxu0 %v5438
        %7688 = vmatpush2.bf16.msra.mxu0 %v5437
        %7689 = vmatprep.subr.bf16.mxu0 %v5430
        %7690 = vmatpush2.bf16.msra.mxu0 %v5429
        %7691 = vmatprep.subr.bf16.mxu0 %v5422
        %7692 = vmatpush2.bf16.msra.mxu0 %v5421
        %7693 = vmatprep.subr.bf16.mxu0 %v5414
        %7694 = vmatpush2.bf16.msra.mxu0 %v5413
        %7695 = vmatprep.subr.bf16.mxu0 %v5406
        %7696 = vmatpush2.bf16.msra.mxu0 %v5405
        %7697 = vmatprep.subr.bf16.mxu0 %v5398
        %7698 = vmatpush2.bf16.msra.mxu0 %v5397
        %7699 = vmatprep.subr.bf16.mxu0 %v5390
        %7700 = vmatpush2.bf16.msra.mxu0 %v5389
        %7701 = vmatprep.mubr.bf16.mxu0 %v2914
        %7702 = vmatmul.mubr.bf16.gmra.mxu0 %v2913
        %v7703 = vpop.f32.mrf.mxu0
        %v7704 = vadd.f32 %v7591, %v7703
        %v7705 = vpop.f32.mrf.mxu0
        %v7706 = vadd.f32 %v7593, %v7705
        %v7707 = vpop.f32.mrf.mxu0
        %v7708 = vadd.f32 %v7595, %v7707
        %v7709 = vpop.f32.mrf.mxu0
        %v7710 = vadd.f32 %v7597, %v7709
        %7711 = vmatprep.mubr.bf16.mxu0 %v2922
        %7712 = vmatmul.mubr.bf16.gmra.mxu0 %v2921
        %v7713 = vpop.f32.mrf.mxu0
        %v7714 = vadd.f32 %v7601, %v7713
        %v7715 = vpop.f32.mrf.mxu0
        %v7716 = vadd.f32 %v7603, %v7715
        %v7717 = vpop.f32.mrf.mxu0
        %v7718 = vadd.f32 %v7605, %v7717
        %v7719 = vpop.f32.mrf.mxu0
        %v7720 = vadd.f32 %v7607, %v7719
        %7721 = vmatprep.mubr.bf16.mxu0 %v2930
        %7722 = vmatmul.mubr.bf16.gmra.mxu0 %v2929
        %v7723 = vpop.f32.mrf.mxu0
        %v7724 = vadd.f32 %v7611, %v7723
        %v7725 = vpop.f32.mrf.mxu0
        %v7726 = vadd.f32 %v7613, %v7725
        %v7727 = vpop.f32.mrf.mxu0
        %v7728 = vadd.f32 %v7615, %v7727
        %v7729 = vpop.f32.mrf.mxu0
        %v7730 = vadd.f32 %v7617, %v7729
        %7731 = vmatprep.mubr.bf16.mxu0 %v2938
        %7732 = vmatmul.mubr.bf16.gmra.mxu0 %v2937
        %v7733 = vpop.f32.mrf.mxu0
        %v7734 = vadd.f32 %v7621, %v7733
        %v7735 = vpop.f32.mrf.mxu0
        %v7736 = vadd.f32 %v7623, %v7735
        %v7737 = vpop.f32.mrf.mxu0
        %v7738 = vadd.f32 %v7625, %v7737
        %v7739 = vpop.f32.mrf.mxu0
        %v7740 = vadd.f32 %v7627, %v7739
        %7741 = vmatprep.mubr.bf16.mxu0 %v2946
        %7742 = vmatmul.mubr.bf16.gmra.mxu0 %v2945
        %v7743 = vpop.f32.mrf.mxu0
        %v7744 = vadd.f32 %v7631, %v7743
        %v7745 = vpop.f32.mrf.mxu0
        %v7746 = vadd.f32 %v7633, %v7745
        %v7747 = vpop.f32.mrf.mxu0
        %v7748 = vadd.f32 %v7635, %v7747
        %v7749 = vpop.f32.mrf.mxu0
        %v7750 = vadd.f32 %v7637, %v7749
        %7751 = vmatprep.mubr.bf16.mxu0 %v2954
        %7752 = vmatmul.mubr.bf16.gmra.mxu0 %v2953
        %v7753 = vpop.f32.mrf.mxu0
        %v7754 = vadd.f32 %v7641, %v7753
        %v7755 = vpop.f32.mrf.mxu0
        %v7756 = vadd.f32 %v7643, %v7755
        %v7757 = vpop.f32.mrf.mxu0
        %v7758 = vadd.f32 %v7645, %v7757
        %v7759 = vpop.f32.mrf.mxu0
        %v7760 = vadd.f32 %v7647, %v7759
        %7761 = vmatprep.mubr.bf16.mxu0 %v2962
        %7762 = vmatmul.mubr.bf16.gmra.mxu0 %v2961
        %v7763 = vpop.f32.mrf.mxu0
        %v7764 = vadd.f32 %v7651, %v7763
        %v7765 = vpop.f32.mrf.mxu0
        %v7766 = vadd.f32 %v7653, %v7765
        %v7767 = vpop.f32.mrf.mxu0
        %v7768 = vadd.f32 %v7655, %v7767
        %v7769 = vpop.f32.mrf.mxu0
        %v7770 = vadd.f32 %v7657, %v7769
        %7771 = vmatprep.mubr.bf16.mxu0 %v2970
        %7772 = vmatmul.mubr.bf16.gmra.mxu0 %v2969
        %v7773 = vpop.f32.mrf.mxu0
        %v7774 = vadd.f32 %v7661, %v7773
        %v7775 = vpop.f32.mrf.mxu0
        %v7776 = vadd.f32 %v7663, %v7775
        %v7777 = vpop.f32.mrf.mxu0
        %v7778 = vadd.f32 %v7665, %v7777
        %v7779 = vpop.f32.mrf.mxu0
        %v7780 = vadd.f32 %v7667, %v7779
        %7781 = vdwg.mxu0
        %7782 = vmatprep.subr.bf16.mxu0 %v5510
        %7783 = vmatpush1.bf16.msra.mxu0 %v5509
        %7784 = vmatprep.subr.bf16.mxu0 %v5502
        %7785 = vmatpush1.bf16.msra.mxu0 %v5501
        %7786 = vmatprep.subr.bf16.mxu0 %v5494
        %7787 = vmatpush1.bf16.msra.mxu0 %v5493
        %7788 = vmatprep.subr.bf16.mxu0 %v5486
        %7789 = vmatpush1.bf16.msra.mxu0 %v5485
        %7790 = vmatprep.subr.bf16.mxu0 %v5478
        %7791 = vmatpush1.bf16.msra.mxu0 %v5477
        %7792 = vmatprep.subr.bf16.mxu0 %v5470
        %7793 = vmatpush1.bf16.msra.mxu0 %v5469
        %7794 = vmatprep.subr.bf16.mxu0 %v5462
        %7795 = vmatpush1.bf16.msra.mxu0 %v5461
        %7796 = vmatprep.subr.bf16.mxu0 %v5454
        %7797 = vmatpush1.bf16.msra.mxu0 %v5453
        %7798 = vmatprep.subr.bf16.mxu0 %v5574
        %7799 = vmatpush2.bf16.msra.mxu0 %v5573
        %7800 = vmatprep.subr.bf16.mxu0 %v5566
        %7801 = vmatpush2.bf16.msra.mxu0 %v5565
        %7802 = vmatprep.subr.bf16.mxu0 %v5558
        %7803 = vmatpush2.bf16.msra.mxu0 %v5557
        %7804 = vmatprep.subr.bf16.mxu0 %v5550
        %7805 = vmatpush2.bf16.msra.mxu0 %v5549
        %7806 = vmatprep.subr.bf16.mxu0 %v5542
        %7807 = vmatpush2.bf16.msra.mxu0 %v5541
        %7808 = vmatprep.subr.bf16.mxu0 %v5534
        %7809 = vmatpush2.bf16.msra.mxu0 %v5533
        %7810 = vmatprep.subr.bf16.mxu0 %v5526
        %7811 = vmatpush2.bf16.msra.mxu0 %v5525
        %7812 = vmatprep.subr.bf16.mxu0 %v5518
        %7813 = vmatpush2.bf16.msra.mxu0 %v5517
        %7814 = vmatprep.mubr.bf16.mxu0 %v2916
        %7815 = vmatmul.mubr.bf16.gmra.mxu0 %v2915
        %v7816 = vpop.f32.mrf.mxu0
        %v7817 = vadd.f32 %v7704, %v7816
        %v7818 = vpop.f32.mrf.mxu0
        %v7819 = vadd.f32 %v7706, %v7818
        %v7820 = vpop.f32.mrf.mxu0
        %v7821 = vadd.f32 %v7708, %v7820
        %v7822 = vpop.f32.mrf.mxu0
        %v7823 = vadd.f32 %v7710, %v7822
        %7824 = vmatprep.mubr.bf16.mxu0 %v2924
        %7825 = vmatmul.mubr.bf16.gmra.mxu0 %v2923
        %v7826 = vpop.f32.mrf.mxu0
        %v7827 = vadd.f32 %v7714, %v7826
        %v7828 = vpop.f32.mrf.mxu0
        %v7829 = vadd.f32 %v7716, %v7828
        %v7830 = vpop.f32.mrf.mxu0
        %v7831 = vadd.f32 %v7718, %v7830
        %v7832 = vpop.f32.mrf.mxu0
        %v7833 = vadd.f32 %v7720, %v7832
        %7834 = vmatprep.mubr.bf16.mxu0 %v2932
        %7835 = vmatmul.mubr.bf16.gmra.mxu0 %v2931
        %v7836 = vpop.f32.mrf.mxu0
        %v7837 = vadd.f32 %v7724, %v7836
        %v7838 = vpop.f32.mrf.mxu0
        %v7839 = vadd.f32 %v7726, %v7838
        %v7840 = vpop.f32.mrf.mxu0
        %v7841 = vadd.f32 %v7728, %v7840
        %v7842 = vpop.f32.mrf.mxu0
        %v7843 = vadd.f32 %v7730, %v7842
        %7844 = vmatprep.mubr.bf16.mxu0 %v2940
        %7845 = vmatmul.mubr.bf16.gmra.mxu0 %v2939
        %v7846 = vpop.f32.mrf.mxu0
        %v7847 = vadd.f32 %v7734, %v7846
        %v7848 = vpop.f32.mrf.mxu0
        %v7849 = vadd.f32 %v7736, %v7848
        %v7850 = vpop.f32.mrf.mxu0
        %v7851 = vadd.f32 %v7738, %v7850
        %v7852 = vpop.f32.mrf.mxu0
        %v7853 = vadd.f32 %v7740, %v7852
        %7854 = vmatprep.mubr.bf16.mxu0 %v2948
        %7855 = vmatmul.mubr.bf16.gmra.mxu0 %v2947
        %v7856 = vpop.f32.mrf.mxu0
        %v7857 = vadd.f32 %v7744, %v7856
        %v7858 = vpop.f32.mrf.mxu0
        %v7859 = vadd.f32 %v7746, %v7858
        %v7860 = vpop.f32.mrf.mxu0
        %v7861 = vadd.f32 %v7748, %v7860
        %v7862 = vpop.f32.mrf.mxu0
        %v7863 = vadd.f32 %v7750, %v7862
        %7864 = vmatprep.mubr.bf16.mxu0 %v2956
        %7865 = vmatmul.mubr.bf16.gmra.mxu0 %v2955
        %v7866 = vpop.f32.mrf.mxu0
        %v7867 = vadd.f32 %v7754, %v7866
        %v7868 = vpop.f32.mrf.mxu0
        %v7869 = vadd.f32 %v7756, %v7868
        %v7870 = vpop.f32.mrf.mxu0
        %v7871 = vadd.f32 %v7758, %v7870
        %v7872 = vpop.f32.mrf.mxu0
        %v7873 = vadd.f32 %v7760, %v7872
        %7874 = vmatprep.mubr.bf16.mxu0 %v2964
        %7875 = vmatmul.mubr.bf16.gmra.mxu0 %v2963
        %v7876 = vpop.f32.mrf.mxu0
        %v7877 = vadd.f32 %v7764, %v7876
        %v7878 = vpop.f32.mrf.mxu0
        %v7879 = vadd.f32 %v7766, %v7878
        %v7880 = vpop.f32.mrf.mxu0
        %v7881 = vadd.f32 %v7768, %v7880
        %v7882 = vpop.f32.mrf.mxu0
        %v7883 = vadd.f32 %v7770, %v7882
        %7884 = vmatprep.mubr.bf16.mxu0 %v2972
        %7885 = vmatmul.mubr.bf16.gmra.mxu0 %v2971
        %v7886 = vpop.f32.mrf.mxu0
        %v7887 = vadd.f32 %v7774, %v7886
        %v7888 = vpop.f32.mrf.mxu0
        %v7889 = vadd.f32 %v7776, %v7888
        %v7890 = vpop.f32.mrf.mxu0
        %v7891 = vadd.f32 %v7778, %v7890
        %v7892 = vpop.f32.mrf.mxu0
        %v7893 = vadd.f32 %v7780, %v7892
        %7894 = vdwg.mxu0
        %v7895 = vmax.f32 %v6461, 0.0
        %v7896 = vmax.f32 %v6463, 0.0
        %v7897 = vmax.f32 %v6913, 0.0
        %v7898 = vmax.f32 %v6915, 0.0
        %v7899 = vmax.f32 %v7365, 0.0
        %v7900 = vmax.f32 %v7367, 0.0
        %v7901 = vmax.f32 %v7817, 0.0
        %v7902 = vmax.f32 %v7819, 0.0
        %v7903 = vmax.f32 %v6465, 0.0
        %v7904 = vmax.f32 %v6467, 0.0
        %v7905 = vmax.f32 %v6917, 0.0
        %v7906 = vmax.f32 %v6919, 0.0
        %v7907 = vmax.f32 %v7369, 0.0
        %v7908 = vmax.f32 %v7371, 0.0
        %v7909 = vmax.f32 %v7821, 0.0
        %v7910 = vmax.f32 %v7823, 0.0
        %v7911 = vmax.f32 %v6471, 0.0
        %v7912 = vmax.f32 %v6473, 0.0
        %v7913 = vmax.f32 %v6923, 0.0
        %v7914 = vmax.f32 %v6925, 0.0
        %v7915 = vmax.f32 %v7375, 0.0
        %v7916 = vmax.f32 %v7377, 0.0
        %v7917 = vmax.f32 %v7827, 0.0
        %v7918 = vmax.f32 %v7829, 0.0
        %v7919 = vmax.f32 %v6475, 0.0
        %v7920 = vmax.f32 %v6477, 0.0
        %v7921 = vmax.f32 %v6927, 0.0
        %v7922 = vmax.f32 %v6929, 0.0
        %v7923 = vmax.f32 %v7379, 0.0
        %v7924 = vmax.f32 %v7381, 0.0
        %v7925 = vmax.f32 %v7831, 0.0
        %v7926 = vmax.f32 %v7833, 0.0
        %v7927 = vmax.f32 %v6481, 0.0
        %v7928 = vmax.f32 %v6483, 0.0
        %v7929 = vmax.f32 %v6933, 0.0
        %v7930 = vmax.f32 %v6935, 0.0
        %v7931 = vmax.f32 %v7385, 0.0
        %v7932 = vmax.f32 %v7387, 0.0
        %v7933 = vmax.f32 %v7837, 0.0
        %v7934 = vmax.f32 %v7839, 0.0
        %v7935 = vmax.f32 %v6485, 0.0
        %v7936 = vmax.f32 %v6487, 0.0
        %v7937 = vmax.f32 %v6937, 0.0
        %v7938 = vmax.f32 %v6939, 0.0
        %v7939 = vmax.f32 %v7389, 0.0
        %v7940 = vmax.f32 %v7391, 0.0
        %v7941 = vmax.f32 %v7841, 0.0
        %v7942 = vmax.f32 %v7843, 0.0
        %v7943 = vmax.f32 %v6491, 0.0
        %v7944 = vmax.f32 %v6493, 0.0
        %v7945 = vmax.f32 %v6943, 0.0
        %v7946 = vmax.f32 %v6945, 0.0
        %v7947 = vmax.f32 %v7395, 0.0
        %v7948 = vmax.f32 %v7397, 0.0
        %v7949 = vmax.f32 %v7847, 0.0
        %v7950 = vmax.f32 %v7849, 0.0
        %v7951 = vmax.f32 %v6495, 0.0
        %v7952 = vmax.f32 %v6497, 0.0
        %v7953 = vmax.f32 %v6947, 0.0
        %v7954 = vmax.f32 %v6949, 0.0
        %v7955 = vmax.f32 %v7399, 0.0
        %v7956 = vmax.f32 %v7401, 0.0
        %v7957 = vmax.f32 %v7851, 0.0
        %v7958 = vmax.f32 %v7853, 0.0
        %v7959 = vmax.f32 %v6501, 0.0
        %v7960 = vmax.f32 %v6503, 0.0
        %v7961 = vmax.f32 %v6953, 0.0
        %v7962 = vmax.f32 %v6955, 0.0
        %v7963 = vmax.f32 %v7405, 0.0
        %v7964 = vmax.f32 %v7407, 0.0
        %v7965 = vmax.f32 %v7857, 0.0
        %v7966 = vmax.f32 %v7859, 0.0
        %v7967 = vmax.f32 %v6505, 0.0
        %v7968 = vmax.f32 %v6507, 0.0
        %v7969 = vmax.f32 %v6957, 0.0
        %v7970 = vmax.f32 %v6959, 0.0
        %v7971 = vmax.f32 %v7409, 0.0
        %v7972 = vmax.f32 %v7411, 0.0
        %v7973 = vmax.f32 %v7861, 0.0
        %v7974 = vmax.f32 %v7863, 0.0
        %v7975 = vmax.f32 %v6511, 0.0
        %v7976 = vmax.f32 %v6513, 0.0
        %v7977 = vmax.f32 %v6963, 0.0
        %v7978 = vmax.f32 %v6965, 0.0
        %v7979 = vmax.f32 %v7415, 0.0
        %v7980 = vmax.f32 %v7417, 0.0
        %v7981 = vmax.f32 %v7867, 0.0
        %v7982 = vmax.f32 %v7869, 0.0
        %v7983 = vmax.f32 %v6515, 0.0
        %v7984 = vmax.f32 %v6517, 0.0
        %v7985 = vmax.f32 %v6967, 0.0
        %v7986 = vmax.f32 %v6969, 0.0
        %v7987 = vmax.f32 %v7419, 0.0
        %v7988 = vmax.f32 %v7421, 0.0
        %v7989 = vmax.f32 %v7871, 0.0
        %v7990 = vmax.f32 %v7873, 0.0
        %v7991 = vmax.f32 %v6521, 0.0
        %v7992 = vmax.f32 %v6523, 0.0
        %v7993 = vmax.f32 %v6973, 0.0
        %v7994 = vmax.f32 %v6975, 0.0
        %v7995 = vmax.f32 %v7425, 0.0
        %v7996 = vmax.f32 %v7427, 0.0
        %v7997 = vmax.f32 %v7877, 0.0
        %v7998 = vmax.f32 %v7879, 0.0
        %v7999 = vmax.f32 %v6525, 0.0
        %v8000 = vmax.f32 %v6527, 0.0
        %v8001 = vmax.f32 %v6977, 0.0
        %v8002 = vmax.f32 %v6979, 0.0
        %v8003 = vmax.f32 %v7429, 0.0
        %v8004 = vmax.f32 %v7431, 0.0
        %v8005 = vmax.f32 %v7881, 0.0
        %v8006 = vmax.f32 %v7883, 0.0
        %v8007 = vmax.f32 %v6531, 0.0
        %v8008 = vmax.f32 %v6533, 0.0
        %v8009 = vmax.f32 %v6983, 0.0
        %v8010 = vmax.f32 %v6985, 0.0
        %v8011 = vmax.f32 %v7435, 0.0
        %v8012 = vmax.f32 %v7437, 0.0
        %v8013 = vmax.f32 %v7887, 0.0
        %v8014 = vmax.f32 %v7889, 0.0
        %v8015 = vmax.f32 %v6535, 0.0
        %v8016 = vmax.f32 %v6537, 0.0
        %v8017 = vmax.f32 %v6987, 0.0
        %v8018 = vmax.f32 %v6989, 0.0
        %v8019 = vmax.f32 %v7439, 0.0
        %v8020 = vmax.f32 %v7441, 0.0
        %v8021 = vmax.f32 %v7891, 0.0
        %v8022 = vmax.f32 %v7893, 0.0
        %v8023 = vpack.c.bf16 %v7903, %v7895
        %v8024 = vpack.c.bf16 %v7904, %v7896
        %v8025 = vpack.c.bf16 %v7905, %v7897
        %v8026 = vpack.c.bf16 %v7906, %v7898
        %v8027 = vpack.c.bf16 %v7907, %v7899
        %v8028 = vpack.c.bf16 %v7908, %v7900
        %v8029 = vpack.c.bf16 %v7909, %v7901
        %v8030 = vpack.c.bf16 %v7910, %v7902
        %v8031 = vpack.c.bf16 %v7919, %v7911
        %v8032 = vpack.c.bf16 %v7920, %v7912
        %v8033 = vpack.c.bf16 %v7921, %v7913
        %v8034 = vpack.c.bf16 %v7922, %v7914
        %v8035 = vpack.c.bf16 %v7923, %v7915
        %v8036 = vpack.c.bf16 %v7924, %v7916
        %v8037 = vpack.c.bf16 %v7925, %v7917
        %v8038 = vpack.c.bf16 %v7926, %v7918
        %v8039 = vpack.c.bf16 %v7935, %v7927
        %v8040 = vpack.c.bf16 %v7936, %v7928
        %v8041 = vpack.c.bf16 %v7937, %v7929
        %v8042 = vpack.c.bf16 %v7938, %v7930
        %v8043 = vpack.c.bf16 %v7939, %v7931
        %v8044 = vpack.c.bf16 %v7940, %v7932
        %v8045 = vpack.c.bf16 %v7941, %v7933
        %v8046 = vpack.c.bf16 %v7942, %v7934
        %v8047 = vpack.c.bf16 %v7951, %v7943
        %v8048 = vpack.c.bf16 %v7952, %v7944
        %v8049 = vpack.c.bf16 %v7953, %v7945
        %v8050 = vpack.c.bf16 %v7954, %v7946
        %v8051 = vpack.c.bf16 %v7955, %v7947
        %v8052 = vpack.c.bf16 %v7956, %v7948
        %v8053 = vpack.c.bf16 %v7957, %v7949
        %v8054 = vpack.c.bf16 %v7958, %v7950
        %v8055 = vpack.c.bf16 %v7967, %v7959
        %v8056 = vpack.c.bf16 %v7968, %v7960
        %v8057 = vpack.c.bf16 %v7969, %v7961
        %v8058 = vpack.c.bf16 %v7970, %v7962
        %v8059 = vpack.c.bf16 %v7971, %v7963
        %v8060 = vpack.c.bf16 %v7972, %v7964
        %v8061 = vpack.c.bf16 %v7973, %v7965
        %v8062 = vpack.c.bf16 %v7974, %v7966
        %v8063 = vpack.c.bf16 %v7983, %v7975
        %v8064 = vpack.c.bf16 %v7984, %v7976
        %v8065 = vpack.c.bf16 %v7985, %v7977
        %v8066 = vpack.c.bf16 %v7986, %v7978
        %v8067 = vpack.c.bf16 %v7987, %v7979
        %v8068 = vpack.c.bf16 %v7988, %v7980
        %v8069 = vpack.c.bf16 %v7989, %v7981
        %v8070 = vpack.c.bf16 %v7990, %v7982
        %v8071 = vpack.c.bf16 %v7999, %v7991
        %v8072 = vpack.c.bf16 %v8000, %v7992
        %v8073 = vpack.c.bf16 %v8001, %v7993
        %v8074 = vpack.c.bf16 %v8002, %v7994
        %v8075 = vpack.c.bf16 %v8003, %v7995
        %v8076 = vpack.c.bf16 %v8004, %v7996
        %v8077 = vpack.c.bf16 %v8005, %v7997
        %v8078 = vpack.c.bf16 %v8006, %v7998
        %v8079 = vpack.c.bf16 %v8015, %v8007
        %v8080 = vpack.c.bf16 %v8016, %v8008
        %v8081 = vpack.c.bf16 %v8017, %v8009
        %v8082 = vpack.c.bf16 %v8018, %v8010
        %v8083 = vpack.c.bf16 %v8019, %v8011
        %v8084 = vpack.c.bf16 %v8020, %v8012
        %v8085 = vpack.c.bf16 %v8021, %v8013
        %v8086 = vpack.c.bf16 %v8022, %v8014
        %v8087 = vld [vmem:[#allocation13] sm:$0xff]
        %v8088 = vld [vmem:[#allocation13 + $0x8] sm:$0xff]
        %v8089 = vld [vmem:[#allocation13 + $0x10] sm:$0xff]
        %v8090 = vld [vmem:[#allocation13 + $0x18] sm:$0xff]
        %v8091 = vld [vmem:[#allocation13 + $0x20] sm:$0xff]
        %v8092 = vld [vmem:[#allocation13 + $0x28] sm:$0xff]
        %v8093 = vld [vmem:[#allocation13 + $0x30] sm:$0xff]
        %v8094 = vld [vmem:[#allocation13 + $0x38] sm:$0xff]
        %v8095 = vld [vmem:[#allocation13 + $0x40] sm:$0xff]
        %v8096 = vld [vmem:[#allocation13 + $0x48] sm:$0xff]
        %v8097 = vld [vmem:[#allocation13 + $0x50] sm:$0xff]
        %v8098 = vld [vmem:[#allocation13 + $0x58] sm:$0xff]
        %v8099 = vld [vmem:[#allocation13 + $0x60] sm:$0xff]
        %v8100 = vld [vmem:[#allocation13 + $0x68] sm:$0xff]
        %v8101 = vld [vmem:[#allocation13 + $0x70] sm:$0xff]
        %v8102 = vld [vmem:[#allocation13 + $0x78] sm:$0xff]
        %v8103 = vld [vmem:[#allocation13 + $0x80] sm:$0xff]
        %v8104 = vld [vmem:[#allocation13 + $0x88] sm:$0xff]
        %v8105 = vld [vmem:[#allocation13 + $0x90] sm:$0xff]
        %v8106 = vld [vmem:[#allocation13 + $0x98] sm:$0xff]
        %v8107 = vld [vmem:[#allocation13 + $0xa0] sm:$0xff]
        %v8108 = vld [vmem:[#allocation13 + $0xa8] sm:$0xff]
        %v8109 = vld [vmem:[#allocation13 + $0xb0] sm:$0xff]
        %v8110 = vld [vmem:[#allocation13 + $0xb8] sm:$0xff]
        %v8111 = vld [vmem:[#allocation13 + $0xc0] sm:$0xff]
        %v8112 = vld [vmem:[#allocation13 + $0xc8] sm:$0xff]
        %v8113 = vld [vmem:[#allocation13 + $0xd0] sm:$0xff]
        %v8114 = vld [vmem:[#allocation13 + $0xd8] sm:$0xff]
        %v8115 = vld [vmem:[#allocation13 + $0xe0] sm:$0xff]
        %v8116 = vld [vmem:[#allocation13 + $0xe8] sm:$0xff]
        %v8117 = vld [vmem:[#allocation13 + $0xf0] sm:$0xff]
        %v8118 = vld [vmem:[#allocation13 + $0xf8] sm:$0xff]
        %v8119 = vld [vmem:[#allocation13 + $0x100] sm:$0xff]
        %v8120 = vld [vmem:[#allocation13 + $0x108] sm:$0xff]
        %v8121 = vld [vmem:[#allocation13 + $0x110] sm:$0xff]
        %v8122 = vld [vmem:[#allocation13 + $0x118] sm:$0xff]
        %v8123 = vld [vmem:[#allocation13 + $0x120] sm:$0xff]
        %v8124 = vld [vmem:[#allocation13 + $0x128] sm:$0xff]
        %v8125 = vld [vmem:[#allocation13 + $0x130] sm:$0xff]
        %v8126 = vld [vmem:[#allocation13 + $0x138] sm:$0xff]
        %v8127 = vld [vmem:[#allocation13 + $0x140] sm:$0xff]
        %v8128 = vld [vmem:[#allocation13 + $0x148] sm:$0xff]
        %v8129 = vld [vmem:[#allocation13 + $0x150] sm:$0xff]
        %v8130 = vld [vmem:[#allocation13 + $0x158] sm:$0xff]
        %v8131 = vld [vmem:[#allocation13 + $0x160] sm:$0xff]
        %v8132 = vld [vmem:[#allocation13 + $0x168] sm:$0xff]
        %v8133 = vld [vmem:[#allocation13 + $0x170] sm:$0xff]
        %v8134 = vld [vmem:[#allocation13 + $0x178] sm:$0xff]
        %v8135 = vld [vmem:[#allocation13 + $0x180] sm:$0xff]
        %v8136 = vld [vmem:[#allocation13 + $0x188] sm:$0xff]
        %v8137 = vld [vmem:[#allocation13 + $0x190] sm:$0xff]
        %v8138 = vld [vmem:[#allocation13 + $0x198] sm:$0xff]
        %v8139 = vld [vmem:[#allocation13 + $0x1a0] sm:$0xff]
        %v8140 = vld [vmem:[#allocation13 + $0x1a8] sm:$0xff]
        %v8141 = vld [vmem:[#allocation13 + $0x1b0] sm:$0xff]
        %v8142 = vld [vmem:[#allocation13 + $0x1b8] sm:$0xff]
        %v8143 = vld [vmem:[#allocation13 + $0x1c0] sm:$0xff]
        %v8144 = vld [vmem:[#allocation13 + $0x1c8] sm:$0xff]
        %v8145 = vld [vmem:[#allocation13 + $0x1d0] sm:$0xff]
        %v8146 = vld [vmem:[#allocation13 + $0x1d8] sm:$0xff]
        %v8147 = vld [vmem:[#allocation13 + $0x1e0] sm:$0xff]
        %v8148 = vld [vmem:[#allocation13 + $0x1e8] sm:$0xff]
        %v8149 = vld [vmem:[#allocation13 + $0x1f0] sm:$0xff]
        %v8150 = vld [vmem:[#allocation13 + $0x1f8] sm:$0xff]
        %v8151 = vld [vmem:[#allocation13 + $0x200] sm:$0xff]
        %v8152 = vld [vmem:[#allocation13 + $0x208] sm:$0xff]
        %v8153 = vld [vmem:[#allocation13 + $0x210] sm:$0xff]
        %v8154 = vld [vmem:[#allocation13 + $0x218] sm:$0xff]
        %v8155 = vld [vmem:[#allocation13 + $0x220] sm:$0xff]
        %v8156 = vld [vmem:[#allocation13 + $0x228] sm:$0xff]
        %v8157 = vld [vmem:[#allocation13 + $0x230] sm:$0xff]
        %v8158 = vld [vmem:[#allocation13 + $0x238] sm:$0xff]
        %v8159 = vld [vmem:[#allocation13 + $0x240] sm:$0xff]
        %v8160 = vld [vmem:[#allocation13 + $0x248] sm:$0xff]
        %v8161 = vld [vmem:[#allocation13 + $0x250] sm:$0xff]
        %v8162 = vld [vmem:[#allocation13 + $0x258] sm:$0xff]
        %v8163 = vld [vmem:[#allocation13 + $0x260] sm:$0xff]
        %v8164 = vld [vmem:[#allocation13 + $0x268] sm:$0xff]
        %v8165 = vld [vmem:[#allocation13 + $0x270] sm:$0xff]
        %v8166 = vld [vmem:[#allocation13 + $0x278] sm:$0xff]
        %v8167 = vld [vmem:[#allocation13 + $0x280] sm:$0xff]
        %v8168 = vld [vmem:[#allocation13 + $0x288] sm:$0xff]
        %v8169 = vld [vmem:[#allocation13 + $0x290] sm:$0xff]
        %v8170 = vld [vmem:[#allocation13 + $0x298] sm:$0xff]
        %v8171 = vld [vmem:[#allocation13 + $0x2a0] sm:$0xff]
        %v8172 = vld [vmem:[#allocation13 + $0x2a8] sm:$0xff]
        %v8173 = vld [vmem:[#allocation13 + $0x2b0] sm:$0xff]
        %v8174 = vld [vmem:[#allocation13 + $0x2b8] sm:$0xff]
        %v8175 = vld [vmem:[#allocation13 + $0x2c0] sm:$0xff]
        %v8176 = vld [vmem:[#allocation13 + $0x2c8] sm:$0xff]
        %v8177 = vld [vmem:[#allocation13 + $0x2d0] sm:$0xff]
        %v8178 = vld [vmem:[#allocation13 + $0x2d8] sm:$0xff]
        %v8179 = vld [vmem:[#allocation13 + $0x2e0] sm:$0xff]
        %v8180 = vld [vmem:[#allocation13 + $0x2e8] sm:$0xff]
        %v8181 = vld [vmem:[#allocation13 + $0x2f0] sm:$0xff]
        %v8182 = vld [vmem:[#allocation13 + $0x2f8] sm:$0xff]
        %v8183 = vld [vmem:[#allocation13 + $0x300] sm:$0xff]
        %v8184 = vld [vmem:[#allocation13 + $0x308] sm:$0xff]
        %v8185 = vld [vmem:[#allocation13 + $0x310] sm:$0xff]
        %v8186 = vld [vmem:[#allocation13 + $0x318] sm:$0xff]
        %v8187 = vld [vmem:[#allocation13 + $0x320] sm:$0xff]
        %v8188 = vld [vmem:[#allocation13 + $0x328] sm:$0xff]
        %v8189 = vld [vmem:[#allocation13 + $0x330] sm:$0xff]
        %v8190 = vld [vmem:[#allocation13 + $0x338] sm:$0xff]
        %v8191 = vld [vmem:[#allocation13 + $0x340] sm:$0xff]
        %v8192 = vld [vmem:[#allocation13 + $0x348] sm:$0xff]
        %v8193 = vld [vmem:[#allocation13 + $0x350] sm:$0xff]
        %v8194 = vld [vmem:[#allocation13 + $0x358] sm:$0xff]
        %v8195 = vld [vmem:[#allocation13 + $0x360] sm:$0xff]
        %v8196 = vld [vmem:[#allocation13 + $0x368] sm:$0xff]
        %v8197 = vld [vmem:[#allocation13 + $0x370] sm:$0xff]
        %v8198 = vld [vmem:[#allocation13 + $0x378] sm:$0xff]
        %v8199 = vld [vmem:[#allocation13 + $0x380] sm:$0xff]
        %v8200 = vld [vmem:[#allocation13 + $0x388] sm:$0xff]
        %v8201 = vld [vmem:[#allocation13 + $0x390] sm:$0xff]
        %v8202 = vld [vmem:[#allocation13 + $0x398] sm:$0xff]
        %v8203 = vld [vmem:[#allocation13 + $0x3a0] sm:$0xff]
        %v8204 = vld [vmem:[#allocation13 + $0x3a8] sm:$0xff]
        %v8205 = vld [vmem:[#allocation13 + $0x3b0] sm:$0xff]
        %v8206 = vld [vmem:[#allocation13 + $0x3b8] sm:$0xff]
        %v8207 = vld [vmem:[#allocation13 + $0x3c0] sm:$0xff]
        %v8208 = vld [vmem:[#allocation13 + $0x3c8] sm:$0xff]
        %v8209 = vld [vmem:[#allocation13 + $0x3d0] sm:$0xff]
        %v8210 = vld [vmem:[#allocation13 + $0x3d8] sm:$0xff]
        %v8211 = vld [vmem:[#allocation13 + $0x3e0] sm:$0xff]
        %v8212 = vld [vmem:[#allocation13 + $0x3e8] sm:$0xff]
        %v8213 = vld [vmem:[#allocation13 + $0x3f0] sm:$0xff]
        %v8214 = vld [vmem:[#allocation13 + $0x3f8] sm:$0xff]
        %v8215 = vld [vmem:[#allocation14] sm:$0x3]
        %v8217 = vlaneseq
        %v8218 = vshrl.u32 %v8217, 7
        %v8219 = vsub.s32 0, %v8218
        %v8220 = vrot.slane %v8215, %v8219
        %v8221 = vlaneseq
        %v8222 = vshrl.u32 %v8221, 7
        %v8223 = vsub.s32 1, %v8222
        %v8224 = vrot.slane %v8215, %v8223
        %v8355 = vunpack.c.l.b16 %v8087
        %v8356 = vunpack.c.h.b16 %v8087
        %v8357 = vunpack.c.l.b16 %v8088
        %v8358 = vunpack.c.h.b16 %v8088
        %v8359 = vunpack.c.l.b16 %v8089
        %v8360 = vunpack.c.h.b16 %v8089
        %v8361 = vunpack.c.l.b16 %v8090
        %v8362 = vunpack.c.h.b16 %v8090
        %v8363 = vunpack.c.l.b16 %v8091
        %v8364 = vunpack.c.h.b16 %v8091
        %v8365 = vunpack.c.l.b16 %v8092
        %v8366 = vunpack.c.h.b16 %v8092
        %v8367 = vunpack.c.l.b16 %v8093
        %v8368 = vunpack.c.h.b16 %v8093
        %v8369 = vunpack.c.l.b16 %v8094
        %v8370 = vunpack.c.h.b16 %v8094
        %v8371 = vunpack.c.l.b16 %v8095
        %v8372 = vunpack.c.h.b16 %v8095
        %v8373 = vunpack.c.l.b16 %v8096
        %v8374 = vunpack.c.h.b16 %v8096
        %v8375 = vunpack.c.l.b16 %v8097
        %v8376 = vunpack.c.h.b16 %v8097
        %v8377 = vunpack.c.l.b16 %v8098
        %v8378 = vunpack.c.h.b16 %v8098
        %v8379 = vunpack.c.l.b16 %v8099
        %v8380 = vunpack.c.h.b16 %v8099
        %v8381 = vunpack.c.l.b16 %v8100
        %v8382 = vunpack.c.h.b16 %v8100
        %v8383 = vunpack.c.l.b16 %v8101
        %v8384 = vunpack.c.h.b16 %v8101
        %v8385 = vunpack.c.l.b16 %v8102
        %v8386 = vunpack.c.h.b16 %v8102
        %v8387 = vunpack.c.l.b16 %v8103
        %v8388 = vunpack.c.h.b16 %v8103
        %v8389 = vunpack.c.l.b16 %v8104
        %v8390 = vunpack.c.h.b16 %v8104
        %v8391 = vunpack.c.l.b16 %v8105
        %v8392 = vunpack.c.h.b16 %v8105
        %v8393 = vunpack.c.l.b16 %v8106
        %v8394 = vunpack.c.h.b16 %v8106
        %v8395 = vunpack.c.l.b16 %v8107
        %v8396 = vunpack.c.h.b16 %v8107
        %v8397 = vunpack.c.l.b16 %v8108
        %v8398 = vunpack.c.h.b16 %v8108
        %v8399 = vunpack.c.l.b16 %v8109
        %v8400 = vunpack.c.h.b16 %v8109
        %v8401 = vunpack.c.l.b16 %v8110
        %v8402 = vunpack.c.h.b16 %v8110
        %v8403 = vunpack.c.l.b16 %v8111
        %v8404 = vunpack.c.h.b16 %v8111
        %v8405 = vunpack.c.l.b16 %v8112
        %v8406 = vunpack.c.h.b16 %v8112
        %v8407 = vunpack.c.l.b16 %v8113
        %v8408 = vunpack.c.h.b16 %v8113
        %v8409 = vunpack.c.l.b16 %v8114
        %v8410 = vunpack.c.h.b16 %v8114
        %v8411 = vunpack.c.l.b16 %v8115
        %v8412 = vunpack.c.h.b16 %v8115
        %v8413 = vunpack.c.l.b16 %v8116
        %v8414 = vunpack.c.h.b16 %v8116
        %v8415 = vunpack.c.l.b16 %v8117
        %v8416 = vunpack.c.h.b16 %v8117
        %v8417 = vunpack.c.l.b16 %v8118
        %v8418 = vunpack.c.h.b16 %v8118
        %v8419 = vunpack.c.l.b16 %v8119
        %v8420 = vunpack.c.h.b16 %v8119
        %v8421 = vunpack.c.l.b16 %v8120
        %v8422 = vunpack.c.h.b16 %v8120
        %v8423 = vunpack.c.l.b16 %v8121
        %v8424 = vunpack.c.h.b16 %v8121
        %v8425 = vunpack.c.l.b16 %v8122
        %v8426 = vunpack.c.h.b16 %v8122
        %v8427 = vunpack.c.l.b16 %v8123
        %v8428 = vunpack.c.h.b16 %v8123
        %v8429 = vunpack.c.l.b16 %v8124
        %v8430 = vunpack.c.h.b16 %v8124
        %v8431 = vunpack.c.l.b16 %v8125
        %v8432 = vunpack.c.h.b16 %v8125
        %v8433 = vunpack.c.l.b16 %v8126
        %v8434 = vunpack.c.h.b16 %v8126
        %v8435 = vunpack.c.l.b16 %v8127
        %v8436 = vunpack.c.h.b16 %v8127
        %v8437 = vunpack.c.l.b16 %v8128
        %v8438 = vunpack.c.h.b16 %v8128
        %v8439 = vunpack.c.l.b16 %v8129
        %v8440 = vunpack.c.h.b16 %v8129
        %v8441 = vunpack.c.l.b16 %v8130
        %v8442 = vunpack.c.h.b16 %v8130
        %v8443 = vunpack.c.l.b16 %v8131
        %v8444 = vunpack.c.h.b16 %v8131
        %v8445 = vunpack.c.l.b16 %v8132
        %v8446 = vunpack.c.h.b16 %v8132
        %v8447 = vunpack.c.l.b16 %v8133
        %v8448 = vunpack.c.h.b16 %v8133
        %v8449 = vunpack.c.l.b16 %v8134
        %v8450 = vunpack.c.h.b16 %v8134
        %v8451 = vunpack.c.l.b16 %v8135
        %v8452 = vunpack.c.h.b16 %v8135
        %v8453 = vunpack.c.l.b16 %v8136
        %v8454 = vunpack.c.h.b16 %v8136
        %v8455 = vunpack.c.l.b16 %v8137
        %v8456 = vunpack.c.h.b16 %v8137
        %v8457 = vunpack.c.l.b16 %v8138
        %v8458 = vunpack.c.h.b16 %v8138
        %v8459 = vunpack.c.l.b16 %v8139
        %v8460 = vunpack.c.h.b16 %v8139
        %v8461 = vunpack.c.l.b16 %v8140
        %v8462 = vunpack.c.h.b16 %v8140
        %v8463 = vunpack.c.l.b16 %v8141
        %v8464 = vunpack.c.h.b16 %v8141
        %v8465 = vunpack.c.l.b16 %v8142
        %v8466 = vunpack.c.h.b16 %v8142
        %v8467 = vunpack.c.l.b16 %v8143
        %v8468 = vunpack.c.h.b16 %v8143
        %v8469 = vunpack.c.l.b16 %v8144
        %v8470 = vunpack.c.h.b16 %v8144
        %v8471 = vunpack.c.l.b16 %v8145
        %v8472 = vunpack.c.h.b16 %v8145
        %v8473 = vunpack.c.l.b16 %v8146
        %v8474 = vunpack.c.h.b16 %v8146
        %v8475 = vunpack.c.l.b16 %v8147
        %v8476 = vunpack.c.h.b16 %v8147
        %v8477 = vunpack.c.l.b16 %v8148
        %v8478 = vunpack.c.h.b16 %v8148
        %v8479 = vunpack.c.l.b16 %v8149
        %v8480 = vunpack.c.h.b16 %v8149
        %v8481 = vunpack.c.l.b16 %v8150
        %v8482 = vunpack.c.h.b16 %v8150
        %v8483 = vunpack.c.l.b16 %v8151
        %v8484 = vunpack.c.h.b16 %v8151
        %v8485 = vunpack.c.l.b16 %v8152
        %v8486 = vunpack.c.h.b16 %v8152
        %v8487 = vunpack.c.l.b16 %v8153
        %v8488 = vunpack.c.h.b16 %v8153
        %v8489 = vunpack.c.l.b16 %v8154
        %v8490 = vunpack.c.h.b16 %v8154
        %v8491 = vunpack.c.l.b16 %v8155
        %v8492 = vunpack.c.h.b16 %v8155
        %v8493 = vunpack.c.l.b16 %v8156
        %v8494 = vunpack.c.h.b16 %v8156
        %v8495 = vunpack.c.l.b16 %v8157
        %v8496 = vunpack.c.h.b16 %v8157
        %v8497 = vunpack.c.l.b16 %v8158
        %v8498 = vunpack.c.h.b16 %v8158
        %v8499 = vunpack.c.l.b16 %v8159
        %v8500 = vunpack.c.h.b16 %v8159
        %v8501 = vunpack.c.l.b16 %v8160
        %v8502 = vunpack.c.h.b16 %v8160
        %v8503 = vunpack.c.l.b16 %v8161
        %v8504 = vunpack.c.h.b16 %v8161
        %v8505 = vunpack.c.l.b16 %v8162
        %v8506 = vunpack.c.h.b16 %v8162
        %v8507 = vunpack.c.l.b16 %v8163
        %v8508 = vunpack.c.h.b16 %v8163
        %v8509 = vunpack.c.l.b16 %v8164
        %v8510 = vunpack.c.h.b16 %v8164
        %v8511 = vunpack.c.l.b16 %v8165
        %v8512 = vunpack.c.h.b16 %v8165
        %v8513 = vunpack.c.l.b16 %v8166
        %v8514 = vunpack.c.h.b16 %v8166
        %v8515 = vunpack.c.l.b16 %v8167
        %v8516 = vunpack.c.h.b16 %v8167
        %v8517 = vunpack.c.l.b16 %v8168
        %v8518 = vunpack.c.h.b16 %v8168
        %v8519 = vunpack.c.l.b16 %v8169
        %v8520 = vunpack.c.h.b16 %v8169
        %v8521 = vunpack.c.l.b16 %v8170
        %v8522 = vunpack.c.h.b16 %v8170
        %v8523 = vunpack.c.l.b16 %v8171
        %v8524 = vunpack.c.h.b16 %v8171
        %v8525 = vunpack.c.l.b16 %v8172
        %v8526 = vunpack.c.h.b16 %v8172
        %v8527 = vunpack.c.l.b16 %v8173
        %v8528 = vunpack.c.h.b16 %v8173
        %v8529 = vunpack.c.l.b16 %v8174
        %v8530 = vunpack.c.h.b16 %v8174
        %v8531 = vunpack.c.l.b16 %v8175
        %v8532 = vunpack.c.h.b16 %v8175
        %v8533 = vunpack.c.l.b16 %v8176
        %v8534 = vunpack.c.h.b16 %v8176
        %v8535 = vunpack.c.l.b16 %v8177
        %v8536 = vunpack.c.h.b16 %v8177
        %v8537 = vunpack.c.l.b16 %v8178
        %v8538 = vunpack.c.h.b16 %v8178
        %v8539 = vunpack.c.l.b16 %v8179
        %v8540 = vunpack.c.h.b16 %v8179
        %v8541 = vunpack.c.l.b16 %v8180
        %v8542 = vunpack.c.h.b16 %v8180
        %v8543 = vunpack.c.l.b16 %v8181
        %v8544 = vunpack.c.h.b16 %v8181
        %v8545 = vunpack.c.l.b16 %v8182
        %v8546 = vunpack.c.h.b16 %v8182
        %v8547 = vunpack.c.l.b16 %v8183
        %v8548 = vunpack.c.h.b16 %v8183
        %v8549 = vunpack.c.l.b16 %v8184
        %v8550 = vunpack.c.h.b16 %v8184
        %v8551 = vunpack.c.l.b16 %v8185
        %v8552 = vunpack.c.h.b16 %v8185
        %v8553 = vunpack.c.l.b16 %v8186
        %v8554 = vunpack.c.h.b16 %v8186
        %v8555 = vunpack.c.l.b16 %v8187
        %v8556 = vunpack.c.h.b16 %v8187
        %v8557 = vunpack.c.l.b16 %v8188
        %v8558 = vunpack.c.h.b16 %v8188
        %v8559 = vunpack.c.l.b16 %v8189
        %v8560 = vunpack.c.h.b16 %v8189
        %v8561 = vunpack.c.l.b16 %v8190
        %v8562 = vunpack.c.h.b16 %v8190
        %v8563 = vunpack.c.l.b16 %v8191
        %v8564 = vunpack.c.h.b16 %v8191
        %v8565 = vunpack.c.l.b16 %v8192
        %v8566 = vunpack.c.h.b16 %v8192
        %v8567 = vunpack.c.l.b16 %v8193
        %v8568 = vunpack.c.h.b16 %v8193
        %v8569 = vunpack.c.l.b16 %v8194
        %v8570 = vunpack.c.h.b16 %v8194
        %v8571 = vunpack.c.l.b16 %v8195
        %v8572 = vunpack.c.h.b16 %v8195
        %v8573 = vunpack.c.l.b16 %v8196
        %v8574 = vunpack.c.h.b16 %v8196
        %v8575 = vunpack.c.l.b16 %v8197
        %v8576 = vunpack.c.h.b16 %v8197
        %v8577 = vunpack.c.l.b16 %v8198
        %v8578 = vunpack.c.h.b16 %v8198
        %v8579 = vunpack.c.l.b16 %v8199
        %v8580 = vunpack.c.h.b16 %v8199
        %v8581 = vunpack.c.l.b16 %v8200
        %v8582 = vunpack.c.h.b16 %v8200
        %v8583 = vunpack.c.l.b16 %v8201
        %v8584 = vunpack.c.h.b16 %v8201
        %v8585 = vunpack.c.l.b16 %v8202
        %v8586 = vunpack.c.h.b16 %v8202
        %v8587 = vunpack.c.l.b16 %v8203
        %v8588 = vunpack.c.h.b16 %v8203
        %v8589 = vunpack.c.l.b16 %v8204
        %v8590 = vunpack.c.h.b16 %v8204
        %v8591 = vunpack.c.l.b16 %v8205
        %v8592 = vunpack.c.h.b16 %v8205
        %v8593 = vunpack.c.l.b16 %v8206
        %v8594 = vunpack.c.h.b16 %v8206
        %v8595 = vunpack.c.l.b16 %v8207
        %v8596 = vunpack.c.h.b16 %v8207
        %v8597 = vunpack.c.l.b16 %v8208
        %v8598 = vunpack.c.h.b16 %v8208
        %v8599 = vunpack.c.l.b16 %v8209
        %v8600 = vunpack.c.h.b16 %v8209
        %v8601 = vunpack.c.l.b16 %v8210
        %v8602 = vunpack.c.h.b16 %v8210
        %v8603 = vunpack.c.l.b16 %v8211
        %v8604 = vunpack.c.h.b16 %v8211
        %v8605 = vunpack.c.l.b16 %v8212
        %v8606 = vunpack.c.h.b16 %v8212
        %v8607 = vunpack.c.l.b16 %v8213
        %v8608 = vunpack.c.h.b16 %v8213
        %v8609 = vunpack.c.l.b16 %v8214
        %v8610 = vunpack.c.h.b16 %v8214
        %v8611 = vpack.c.b16 %v8357, %v8355
        %v8612 = vpack.c.b16 %v8358, %v8356
        %v8613 = vpack.c.b16 %v8361, %v8359
        %v8614 = vpack.c.b16 %v8362, %v8360
        %v8615 = vpack.c.b16 %v8365, %v8363
        %v8616 = vpack.c.b16 %v8366, %v8364
        %v8617 = vpack.c.b16 %v8369, %v8367
        %v8618 = vpack.c.b16 %v8370, %v8368
        %v8619 = vpack.c.b16 %v8373, %v8371
        %v8620 = vpack.c.b16 %v8374, %v8372
        %v8621 = vpack.c.b16 %v8377, %v8375
        %v8622 = vpack.c.b16 %v8378, %v8376
        %v8623 = vpack.c.b16 %v8381, %v8379
        %v8624 = vpack.c.b16 %v8382, %v8380
        %v8625 = vpack.c.b16 %v8385, %v8383
        %v8626 = vpack.c.b16 %v8386, %v8384
        %v8627 = vpack.c.b16 %v8389, %v8387
        %v8628 = vpack.c.b16 %v8390, %v8388
        %v8629 = vpack.c.b16 %v8393, %v8391
        %v8630 = vpack.c.b16 %v8394, %v8392
        %v8631 = vpack.c.b16 %v8397, %v8395
        %v8632 = vpack.c.b16 %v8398, %v8396
        %v8633 = vpack.c.b16 %v8401, %v8399
        %v8634 = vpack.c.b16 %v8402, %v8400
        %v8635 = vpack.c.b16 %v8405, %v8403
        %v8636 = vpack.c.b16 %v8406, %v8404
        %v8637 = vpack.c.b16 %v8409, %v8407
        %v8638 = vpack.c.b16 %v8410, %v8408
        %v8639 = vpack.c.b16 %v8413, %v8411
        %v8640 = vpack.c.b16 %v8414, %v8412
        %v8641 = vpack.c.b16 %v8417, %v8415
        %v8642 = vpack.c.b16 %v8418, %v8416
        %v8643 = vpack.c.b16 %v8421, %v8419
        %v8644 = vpack.c.b16 %v8422, %v8420
        %v8645 = vpack.c.b16 %v8425, %v8423
        %v8646 = vpack.c.b16 %v8426, %v8424
        %v8647 = vpack.c.b16 %v8429, %v8427
        %v8648 = vpack.c.b16 %v8430, %v8428
        %v8649 = vpack.c.b16 %v8433, %v8431
        %v8650 = vpack.c.b16 %v8434, %v8432
        %v8651 = vpack.c.b16 %v8437, %v8435
        %v8652 = vpack.c.b16 %v8438, %v8436
        %v8653 = vpack.c.b16 %v8441, %v8439
        %v8654 = vpack.c.b16 %v8442, %v8440
        %v8655 = vpack.c.b16 %v8445, %v8443
        %v8656 = vpack.c.b16 %v8446, %v8444
        %v8657 = vpack.c.b16 %v8449, %v8447
        %v8658 = vpack.c.b16 %v8450, %v8448
        %v8659 = vpack.c.b16 %v8453, %v8451
        %v8660 = vpack.c.b16 %v8454, %v8452
        %v8661 = vpack.c.b16 %v8457, %v8455
        %v8662 = vpack.c.b16 %v8458, %v8456
        %v8663 = vpack.c.b16 %v8461, %v8459
        %v8664 = vpack.c.b16 %v8462, %v8460
        %v8665 = vpack.c.b16 %v8465, %v8463
        %v8666 = vpack.c.b16 %v8466, %v8464
        %v8667 = vpack.c.b16 %v8469, %v8467
        %v8668 = vpack.c.b16 %v8470, %v8468
        %v8669 = vpack.c.b16 %v8473, %v8471
        %v8670 = vpack.c.b16 %v8474, %v8472
        %v8671 = vpack.c.b16 %v8477, %v8475
        %v8672 = vpack.c.b16 %v8478, %v8476
        %v8673 = vpack.c.b16 %v8481, %v8479
        %v8674 = vpack.c.b16 %v8482, %v8480
        %v8675 = vpack.c.b16 %v8485, %v8483
        %v8676 = vpack.c.b16 %v8486, %v8484
        %v8677 = vpack.c.b16 %v8489, %v8487
        %v8678 = vpack.c.b16 %v8490, %v8488
        %v8679 = vpack.c.b16 %v8493, %v8491
        %v8680 = vpack.c.b16 %v8494, %v8492
        %v8681 = vpack.c.b16 %v8497, %v8495
        %v8682 = vpack.c.b16 %v8498, %v8496
        %v8683 = vpack.c.b16 %v8501, %v8499
        %v8684 = vpack.c.b16 %v8502, %v8500
        %v8685 = vpack.c.b16 %v8505, %v8503
        %v8686 = vpack.c.b16 %v8506, %v8504
        %v8687 = vpack.c.b16 %v8509, %v8507
        %v8688 = vpack.c.b16 %v8510, %v8508
        %v8689 = vpack.c.b16 %v8513, %v8511
        %v8690 = vpack.c.b16 %v8514, %v8512
        %v8691 = vpack.c.b16 %v8517, %v8515
        %v8692 = vpack.c.b16 %v8518, %v8516
        %v8693 = vpack.c.b16 %v8521, %v8519
        %v8694 = vpack.c.b16 %v8522, %v8520
        %v8695 = vpack.c.b16 %v8525, %v8523
        %v8696 = vpack.c.b16 %v8526, %v8524
        %v8697 = vpack.c.b16 %v8529, %v8527
        %v8698 = vpack.c.b16 %v8530, %v8528
        %v8699 = vpack.c.b16 %v8533, %v8531
        %v8700 = vpack.c.b16 %v8534, %v8532
        %v8701 = vpack.c.b16 %v8537, %v8535
        %v8702 = vpack.c.b16 %v8538, %v8536
        %v8703 = vpack.c.b16 %v8541, %v8539
        %v8704 = vpack.c.b16 %v8542, %v8540
        %v8705 = vpack.c.b16 %v8545, %v8543
        %v8706 = vpack.c.b16 %v8546, %v8544
        %v8707 = vpack.c.b16 %v8549, %v8547
        %v8708 = vpack.c.b16 %v8550, %v8548
        %v8709 = vpack.c.b16 %v8553, %v8551
        %v8710 = vpack.c.b16 %v8554, %v8552
        %v8711 = vpack.c.b16 %v8557, %v8555
        %v8712 = vpack.c.b16 %v8558, %v8556
        %v8713 = vpack.c.b16 %v8561, %v8559
        %v8714 = vpack.c.b16 %v8562, %v8560
        %v8715 = vpack.c.b16 %v8565, %v8563
        %v8716 = vpack.c.b16 %v8566, %v8564
        %v8717 = vpack.c.b16 %v8569, %v8567
        %v8718 = vpack.c.b16 %v8570, %v8568
        %v8719 = vpack.c.b16 %v8573, %v8571
        %v8720 = vpack.c.b16 %v8574, %v8572
        %v8721 = vpack.c.b16 %v8577, %v8575
        %v8722 = vpack.c.b16 %v8578, %v8576
        %v8723 = vpack.c.b16 %v8581, %v8579
        %v8724 = vpack.c.b16 %v8582, %v8580
        %v8725 = vpack.c.b16 %v8585, %v8583
        %v8726 = vpack.c.b16 %v8586, %v8584
        %v8727 = vpack.c.b16 %v8589, %v8587
        %v8728 = vpack.c.b16 %v8590, %v8588
        %v8729 = vpack.c.b16 %v8593, %v8591
        %v8730 = vpack.c.b16 %v8594, %v8592
        %v8731 = vpack.c.b16 %v8597, %v8595
        %v8732 = vpack.c.b16 %v8598, %v8596
        %v8733 = vpack.c.b16 %v8601, %v8599
        %v8734 = vpack.c.b16 %v8602, %v8600
        %v8735 = vpack.c.b16 %v8605, %v8603
        %v8736 = vpack.c.b16 %v8606, %v8604
        %v8737 = vpack.c.b16 %v8609, %v8607
        %v8738 = vpack.c.b16 %v8610, %v8608
        %8867 = vmatprep.subr.bf16.mxu0 %v8626
        %8868 = vmatpush1.bf16.msra.mxu0 %v8625
        %8869 = vmatprep.subr.bf16.mxu0 %v8624
        %8870 = vmatpush1.bf16.msra.mxu0 %v8623
        %8871 = vmatprep.subr.bf16.mxu0 %v8622
        %8872 = vmatpush1.bf16.msra.mxu0 %v8621
        %8873 = vmatprep.subr.bf16.mxu0 %v8620
        %8874 = vmatpush1.bf16.msra.mxu0 %v8619
        %8875 = vmatprep.subr.bf16.mxu0 %v8618
        %8876 = vmatpush1.bf16.msra.mxu0 %v8617
        %8877 = vmatprep.subr.bf16.mxu0 %v8616
        %8878 = vmatpush1.bf16.msra.mxu0 %v8615
        %8879 = vmatprep.subr.bf16.mxu0 %v8614
        %8880 = vmatpush1.bf16.msra.mxu0 %v8613
        %8881 = vmatprep.subr.bf16.mxu0 %v8612
        %8882 = vmatpush1.bf16.msra.mxu0 %v8611
        %8883 = vmatprep.subr.bf16.mxu0 %v8642
        %8884 = vmatpush2.bf16.msra.mxu0 %v8641
        %8885 = vmatprep.subr.bf16.mxu0 %v8640
        %8886 = vmatpush2.bf16.msra.mxu0 %v8639
        %8887 = vmatprep.subr.bf16.mxu0 %v8638
        %8888 = vmatpush2.bf16.msra.mxu0 %v8637
        %8889 = vmatprep.subr.bf16.mxu0 %v8636
        %8890 = vmatpush2.bf16.msra.mxu0 %v8635
        %8891 = vmatprep.subr.bf16.mxu0 %v8634
        %8892 = vmatpush2.bf16.msra.mxu0 %v8633
        %8893 = vmatprep.subr.bf16.mxu0 %v8632
        %8894 = vmatpush2.bf16.msra.mxu0 %v8631
        %8895 = vmatprep.subr.bf16.mxu0 %v8630
        %8896 = vmatpush2.bf16.msra.mxu0 %v8629
        %8897 = vmatprep.subr.bf16.mxu0 %v8628
        %8898 = vmatpush2.bf16.msra.mxu0 %v8627
        %8899 = vmatprep.mubr.bf16.mxu0 %v8024
        %8900 = vmatmul.mubr.bf16.gmra.mxu0 %v8023
        %v8901 = vpop.f32.mrf.mxu0
        %v8902 = vadd.f32 %v8220, %v8901
        %v8903 = vpop.f32.mrf.mxu0
        %v8904 = vadd.f32 %v8224, %v8903
        %v8905 = vpop.f32.mrf.mxu0
        %v8906 = vadd.f32 %v8220, %v8905
        %v8907 = vpop.f32.mrf.mxu0
        %v8908 = vadd.f32 %v8224, %v8907
        %8909 = vmatprep.mubr.bf16.mxu0 %v8032
        %8910 = vmatmul.mubr.bf16.gmra.mxu0 %v8031
        %v8911 = vpop.f32.mrf.mxu0
        %v8912 = vadd.f32 %v8220, %v8911
        %v8913 = vpop.f32.mrf.mxu0
        %v8914 = vadd.f32 %v8224, %v8913
        %v8915 = vpop.f32.mrf.mxu0
        %v8916 = vadd.f32 %v8220, %v8915
        %v8917 = vpop.f32.mrf.mxu0
        %v8918 = vadd.f32 %v8224, %v8917
        %8919 = vmatprep.mubr.bf16.mxu0 %v8040
        %8920 = vmatmul.mubr.bf16.gmra.mxu0 %v8039
        %v8921 = vpop.f32.mrf.mxu0
        %v8922 = vadd.f32 %v8220, %v8921
        %v8923 = vpop.f32.mrf.mxu0
        %v8924 = vadd.f32 %v8224, %v8923
        %v8925 = vpop.f32.mrf.mxu0
        %v8926 = vadd.f32 %v8220, %v8925
        %v8927 = vpop.f32.mrf.mxu0
        %v8928 = vadd.f32 %v8224, %v8927
        %8929 = vmatprep.mubr.bf16.mxu0 %v8048
        %8930 = vmatmul.mubr.bf16.gmra.mxu0 %v8047
        %v8931 = vpop.f32.mrf.mxu0
        %v8932 = vadd.f32 %v8220, %v8931
        %v8933 = vpop.f32.mrf.mxu0
        %v8934 = vadd.f32 %v8224, %v8933
        %v8935 = vpop.f32.mrf.mxu0
        %v8936 = vadd.f32 %v8220, %v8935
        %v8937 = vpop.f32.mrf.mxu0
        %v8938 = vadd.f32 %v8224, %v8937
        %8939 = vmatprep.mubr.bf16.mxu0 %v8056
        %8940 = vmatmul.mubr.bf16.gmra.mxu0 %v8055
        %v8941 = vpop.f32.mrf.mxu0
        %v8942 = vadd.f32 %v8220, %v8941
        %v8943 = vpop.f32.mrf.mxu0
        %v8944 = vadd.f32 %v8224, %v8943
        %v8945 = vpop.f32.mrf.mxu0
        %v8946 = vadd.f32 %v8220, %v8945
        %v8947 = vpop.f32.mrf.mxu0
        %v8948 = vadd.f32 %v8224, %v8947
        %8949 = vmatprep.mubr.bf16.mxu0 %v8064
        %8950 = vmatmul.mubr.bf16.gmra.mxu0 %v8063
        %v8951 = vpop.f32.mrf.mxu0
        %v8952 = vadd.f32 %v8220, %v8951
        %v8953 = vpop.f32.mrf.mxu0
        %v8954 = vadd.f32 %v8224, %v8953
        %v8955 = vpop.f32.mrf.mxu0
        %v8956 = vadd.f32 %v8220, %v8955
        %v8957 = vpop.f32.mrf.mxu0
        %v8958 = vadd.f32 %v8224, %v8957
        %8959 = vmatprep.mubr.bf16.mxu0 %v8072
        %8960 = vmatmul.mubr.bf16.gmra.mxu0 %v8071
        %v8961 = vpop.f32.mrf.mxu0
        %v8962 = vadd.f32 %v8220, %v8961
        %v8963 = vpop.f32.mrf.mxu0
        %v8964 = vadd.f32 %v8224, %v8963
        %v8965 = vpop.f32.mrf.mxu0
        %v8966 = vadd.f32 %v8220, %v8965
        %v8967 = vpop.f32.mrf.mxu0
        %v8968 = vadd.f32 %v8224, %v8967
        %8969 = vmatprep.mubr.bf16.mxu0 %v8080
        %8970 = vmatmul.mubr.bf16.gmra.mxu0 %v8079
        %v8971 = vpop.f32.mrf.mxu0
        %v8972 = vadd.f32 %v8220, %v8971
        %v8973 = vpop.f32.mrf.mxu0
        %v8974 = vadd.f32 %v8224, %v8973
        %v8975 = vpop.f32.mrf.mxu0
        %v8976 = vadd.f32 %v8220, %v8975
        %v8977 = vpop.f32.mrf.mxu0
        %v8978 = vadd.f32 %v8224, %v8977
        %8979 = vdwg.mxu0
        %8980 = vmatprep.subr.bf16.mxu0 %v8658
        %8981 = vmatpush1.bf16.msra.mxu0 %v8657
        %8982 = vmatprep.subr.bf16.mxu0 %v8656
        %8983 = vmatpush1.bf16.msra.mxu0 %v8655
        %8984 = vmatprep.subr.bf16.mxu0 %v8654
        %8985 = vmatpush1.bf16.msra.mxu0 %v8653
        %8986 = vmatprep.subr.bf16.mxu0 %v8652
        %8987 = vmatpush1.bf16.msra.mxu0 %v8651
        %8988 = vmatprep.subr.bf16.mxu0 %v8650
        %8989 = vmatpush1.bf16.msra.mxu0 %v8649
        %8990 = vmatprep.subr.bf16.mxu0 %v8648
        %8991 = vmatpush1.bf16.msra.mxu0 %v8647
        %8992 = vmatprep.subr.bf16.mxu0 %v8646
        %8993 = vmatpush1.bf16.msra.mxu0 %v8645
        %8994 = vmatprep.subr.bf16.mxu0 %v8644
        %8995 = vmatpush1.bf16.msra.mxu0 %v8643
        %8996 = vmatprep.subr.bf16.mxu0 %v8674
        %8997 = vmatpush2.bf16.msra.mxu0 %v8673
        %8998 = vmatprep.subr.bf16.mxu0 %v8672
        %8999 = vmatpush2.bf16.msra.mxu0 %v8671
        %9000 = vmatprep.subr.bf16.mxu0 %v8670
        %9001 = vmatpush2.bf16.msra.mxu0 %v8669
        %9002 = vmatprep.subr.bf16.mxu0 %v8668
        %9003 = vmatpush2.bf16.msra.mxu0 %v8667
        %9004 = vmatprep.subr.bf16.mxu0 %v8666
        %9005 = vmatpush2.bf16.msra.mxu0 %v8665
        %9006 = vmatprep.subr.bf16.mxu0 %v8664
        %9007 = vmatpush2.bf16.msra.mxu0 %v8663
        %9008 = vmatprep.subr.bf16.mxu0 %v8662
        %9009 = vmatpush2.bf16.msra.mxu0 %v8661
        %9010 = vmatprep.subr.bf16.mxu0 %v8660
        %9011 = vmatpush2.bf16.msra.mxu0 %v8659
        %9012 = vmatprep.mubr.bf16.mxu0 %v8026
        %9013 = vmatmul.mubr.bf16.gmra.mxu0 %v8025
        %v9014 = vpop.f32.mrf.mxu0
        %v9015 = vadd.f32 %v8902, %v9014
        %v9016 = vpop.f32.mrf.mxu0
        %v9017 = vadd.f32 %v8904, %v9016
        %v9018 = vpop.f32.mrf.mxu0
        %v9019 = vadd.f32 %v8906, %v9018
        %v9020 = vpop.f32.mrf.mxu0
        %v9021 = vadd.f32 %v8908, %v9020
        %9022 = vmatprep.mubr.bf16.mxu0 %v8034
        %9023 = vmatmul.mubr.bf16.gmra.mxu0 %v8033
        %v9024 = vpop.f32.mrf.mxu0
        %v9025 = vadd.f32 %v8912, %v9024
        %v9026 = vpop.f32.mrf.mxu0
        %v9027 = vadd.f32 %v8914, %v9026
        %v9028 = vpop.f32.mrf.mxu0
        %v9029 = vadd.f32 %v8916, %v9028
        %v9030 = vpop.f32.mrf.mxu0
        %v9031 = vadd.f32 %v8918, %v9030
        %9032 = vmatprep.mubr.bf16.mxu0 %v8042
        %9033 = vmatmul.mubr.bf16.gmra.mxu0 %v8041
        %v9034 = vpop.f32.mrf.mxu0
        %v9035 = vadd.f32 %v8922, %v9034
        %v9036 = vpop.f32.mrf.mxu0
        %v9037 = vadd.f32 %v8924, %v9036
        %v9038 = vpop.f32.mrf.mxu0
        %v9039 = vadd.f32 %v8926, %v9038
        %v9040 = vpop.f32.mrf.mxu0
        %v9041 = vadd.f32 %v8928, %v9040
        %9042 = vmatprep.mubr.bf16.mxu0 %v8050
        %9043 = vmatmul.mubr.bf16.gmra.mxu0 %v8049
        %v9044 = vpop.f32.mrf.mxu0
        %v9045 = vadd.f32 %v8932, %v9044
        %v9046 = vpop.f32.mrf.mxu0
        %v9047 = vadd.f32 %v8934, %v9046
        %v9048 = vpop.f32.mrf.mxu0
        %v9049 = vadd.f32 %v8936, %v9048
        %v9050 = vpop.f32.mrf.mxu0
        %v9051 = vadd.f32 %v8938, %v9050
        %9052 = vmatprep.mubr.bf16.mxu0 %v8058
        %9053 = vmatmul.mubr.bf16.gmra.mxu0 %v8057
        %v9054 = vpop.f32.mrf.mxu0
        %v9055 = vadd.f32 %v8942, %v9054
        %v9056 = vpop.f32.mrf.mxu0
        %v9057 = vadd.f32 %v8944, %v9056
        %v9058 = vpop.f32.mrf.mxu0
        %v9059 = vadd.f32 %v8946, %v9058
        %v9060 = vpop.f32.mrf.mxu0
        %v9061 = vadd.f32 %v8948, %v9060
        %9062 = vmatprep.mubr.bf16.mxu0 %v8066
        %9063 = vmatmul.mubr.bf16.gmra.mxu0 %v8065
        %v9064 = vpop.f32.mrf.mxu0
        %v9065 = vadd.f32 %v8952, %v9064
        %v9066 = vpop.f32.mrf.mxu0
        %v9067 = vadd.f32 %v8954, %v9066
        %v9068 = vpop.f32.mrf.mxu0
        %v9069 = vadd.f32 %v8956, %v9068
        %v9070 = vpop.f32.mrf.mxu0
        %v9071 = vadd.f32 %v8958, %v9070
        %9072 = vmatprep.mubr.bf16.mxu0 %v8074
        %9073 = vmatmul.mubr.bf16.gmra.mxu0 %v8073
        %v9074 = vpop.f32.mrf.mxu0
        %v9075 = vadd.f32 %v8962, %v9074
        %v9076 = vpop.f32.mrf.mxu0
        %v9077 = vadd.f32 %v8964, %v9076
        %v9078 = vpop.f32.mrf.mxu0
        %v9079 = vadd.f32 %v8966, %v9078
        %v9080 = vpop.f32.mrf.mxu0
        %v9081 = vadd.f32 %v8968, %v9080
        %9082 = vmatprep.mubr.bf16.mxu0 %v8082
        %9083 = vmatmul.mubr.bf16.gmra.mxu0 %v8081
        %v9084 = vpop.f32.mrf.mxu0
        %v9085 = vadd.f32 %v8972, %v9084
        %v9086 = vpop.f32.mrf.mxu0
        %v9087 = vadd.f32 %v8974, %v9086
        %v9088 = vpop.f32.mrf.mxu0
        %v9089 = vadd.f32 %v8976, %v9088
        %v9090 = vpop.f32.mrf.mxu0
        %v9091 = vadd.f32 %v8978, %v9090
        %9092 = vdwg.mxu0
        %9093 = vmatprep.subr.bf16.mxu0 %v8690
        %9094 = vmatpush1.bf16.msra.mxu0 %v8689
        %9095 = vmatprep.subr.bf16.mxu0 %v8688
        %9096 = vmatpush1.bf16.msra.mxu0 %v8687
        %9097 = vmatprep.subr.bf16.mxu0 %v8686
        %9098 = vmatpush1.bf16.msra.mxu0 %v8685
        %9099 = vmatprep.subr.bf16.mxu0 %v8684
        %9100 = vmatpush1.bf16.msra.mxu0 %v8683
        %9101 = vmatprep.subr.bf16.mxu0 %v8682
        %9102 = vmatpush1.bf16.msra.mxu0 %v8681
        %9103 = vmatprep.subr.bf16.mxu0 %v8680
        %9104 = vmatpush1.bf16.msra.mxu0 %v8679
        %9105 = vmatprep.subr.bf16.mxu0 %v8678
        %9106 = vmatpush1.bf16.msra.mxu0 %v8677
        %9107 = vmatprep.subr.bf16.mxu0 %v8676
        %9108 = vmatpush1.bf16.msra.mxu0 %v8675
        %9109 = vmatprep.subr.bf16.mxu0 %v8706
        %9110 = vmatpush2.bf16.msra.mxu0 %v8705
        %9111 = vmatprep.subr.bf16.mxu0 %v8704
        %9112 = vmatpush2.bf16.msra.mxu0 %v8703
        %9113 = vmatprep.subr.bf16.mxu0 %v8702
        %9114 = vmatpush2.bf16.msra.mxu0 %v8701
        %9115 = vmatprep.subr.bf16.mxu0 %v8700
        %9116 = vmatpush2.bf16.msra.mxu0 %v8699
        %9117 = vmatprep.subr.bf16.mxu0 %v8698
        %9118 = vmatpush2.bf16.msra.mxu0 %v8697
        %9119 = vmatprep.subr.bf16.mxu0 %v8696
        %9120 = vmatpush2.bf16.msra.mxu0 %v8695
        %9121 = vmatprep.subr.bf16.mxu0 %v8694
        %9122 = vmatpush2.bf16.msra.mxu0 %v8693
        %9123 = vmatprep.subr.bf16.mxu0 %v8692
        %9124 = vmatpush2.bf16.msra.mxu0 %v8691
        %9125 = vmatprep.mubr.bf16.mxu0 %v8028
        %9126 = vmatmul.mubr.bf16.gmra.mxu0 %v8027
        %v9127 = vpop.f32.mrf.mxu0
        %v9128 = vadd.f32 %v9015, %v9127
        %v9129 = vpop.f32.mrf.mxu0
        %v9130 = vadd.f32 %v9017, %v9129
        %v9131 = vpop.f32.mrf.mxu0
        %v9132 = vadd.f32 %v9019, %v9131
        %v9133 = vpop.f32.mrf.mxu0
        %v9134 = vadd.f32 %v9021, %v9133
        %9135 = vmatprep.mubr.bf16.mxu0 %v8036
        %9136 = vmatmul.mubr.bf16.gmra.mxu0 %v8035
        %v9137 = vpop.f32.mrf.mxu0
        %v9138 = vadd.f32 %v9025, %v9137
        %v9139 = vpop.f32.mrf.mxu0
        %v9140 = vadd.f32 %v9027, %v9139
        %v9141 = vpop.f32.mrf.mxu0
        %v9142 = vadd.f32 %v9029, %v9141
        %v9143 = vpop.f32.mrf.mxu0
        %v9144 = vadd.f32 %v9031, %v9143
        %9145 = vmatprep.mubr.bf16.mxu0 %v8044
        %9146 = vmatmul.mubr.bf16.gmra.mxu0 %v8043
        %v9147 = vpop.f32.mrf.mxu0
        %v9148 = vadd.f32 %v9035, %v9147
        %v9149 = vpop.f32.mrf.mxu0
        %v9150 = vadd.f32 %v9037, %v9149
        %v9151 = vpop.f32.mrf.mxu0
        %v9152 = vadd.f32 %v9039, %v9151
        %v9153 = vpop.f32.mrf.mxu0
        %v9154 = vadd.f32 %v9041, %v9153
        %9155 = vmatprep.mubr.bf16.mxu0 %v8052
        %9156 = vmatmul.mubr.bf16.gmra.mxu0 %v8051
        %v9157 = vpop.f32.mrf.mxu0
        %v9158 = vadd.f32 %v9045, %v9157
        %v9159 = vpop.f32.mrf.mxu0
        %v9160 = vadd.f32 %v9047, %v9159
        %v9161 = vpop.f32.mrf.mxu0
        %v9162 = vadd.f32 %v9049, %v9161
        %v9163 = vpop.f32.mrf.mxu0
        %v9164 = vadd.f32 %v9051, %v9163
        %9165 = vmatprep.mubr.bf16.mxu0 %v8060
        %9166 = vmatmul.mubr.bf16.gmra.mxu0 %v8059
        %v9167 = vpop.f32.mrf.mxu0
        %v9168 = vadd.f32 %v9055, %v9167
        %v9169 = vpop.f32.mrf.mxu0
        %v9170 = vadd.f32 %v9057, %v9169
        %v9171 = vpop.f32.mrf.mxu0
        %v9172 = vadd.f32 %v9059, %v9171
        %v9173 = vpop.f32.mrf.mxu0
        %v9174 = vadd.f32 %v9061, %v9173
        %9175 = vmatprep.mubr.bf16.mxu0 %v8068
        %9176 = vmatmul.mubr.bf16.gmra.mxu0 %v8067
        %v9177 = vpop.f32.mrf.mxu0
        %v9178 = vadd.f32 %v9065, %v9177
        %v9179 = vpop.f32.mrf.mxu0
        %v9180 = vadd.f32 %v9067, %v9179
        %v9181 = vpop.f32.mrf.mxu0
        %v9182 = vadd.f32 %v9069, %v9181
        %v9183 = vpop.f32.mrf.mxu0
        %v9184 = vadd.f32 %v9071, %v9183
        %9185 = vmatprep.mubr.bf16.mxu0 %v8076
        %9186 = vmatmul.mubr.bf16.gmra.mxu0 %v8075
        %v9187 = vpop.f32.mrf.mxu0
        %v9188 = vadd.f32 %v9075, %v9187
        %v9189 = vpop.f32.mrf.mxu0
        %v9190 = vadd.f32 %v9077, %v9189
        %v9191 = vpop.f32.mrf.mxu0
        %v9192 = vadd.f32 %v9079, %v9191
        %v9193 = vpop.f32.mrf.mxu0
        %v9194 = vadd.f32 %v9081, %v9193
        %9195 = vmatprep.mubr.bf16.mxu0 %v8084
        %9196 = vmatmul.mubr.bf16.gmra.mxu0 %v8083
        %v9197 = vpop.f32.mrf.mxu0
        %v9198 = vadd.f32 %v9085, %v9197
        %v9199 = vpop.f32.mrf.mxu0
        %v9200 = vadd.f32 %v9087, %v9199
        %v9201 = vpop.f32.mrf.mxu0
        %v9202 = vadd.f32 %v9089, %v9201
        %v9203 = vpop.f32.mrf.mxu0
        %v9204 = vadd.f32 %v9091, %v9203
        %9205 = vdwg.mxu0
        %9206 = vmatprep.subr.bf16.mxu0 %v8722
        %9207 = vmatpush1.bf16.msra.mxu0 %v8721
        %9208 = vmatprep.subr.bf16.mxu0 %v8720
        %9209 = vmatpush1.bf16.msra.mxu0 %v8719
        %9210 = vmatprep.subr.bf16.mxu0 %v8718
        %9211 = vmatpush1.bf16.msra.mxu0 %v8717
        %9212 = vmatprep.subr.bf16.mxu0 %v8716
        %9213 = vmatpush1.bf16.msra.mxu0 %v8715
        %9214 = vmatprep.subr.bf16.mxu0 %v8714
        %9215 = vmatpush1.bf16.msra.mxu0 %v8713
        %9216 = vmatprep.subr.bf16.mxu0 %v8712
        %9217 = vmatpush1.bf16.msra.mxu0 %v8711
        %9218 = vmatprep.subr.bf16.mxu0 %v8710
        %9219 = vmatpush1.bf16.msra.mxu0 %v8709
        %9220 = vmatprep.subr.bf16.mxu0 %v8708
        %9221 = vmatpush1.bf16.msra.mxu0 %v8707
        %9222 = vmatprep.subr.bf16.mxu0 %v8738
        %9223 = vmatpush2.bf16.msra.mxu0 %v8737
        %9224 = vmatprep.subr.bf16.mxu0 %v8736
        %9225 = vmatpush2.bf16.msra.mxu0 %v8735
        %9226 = vmatprep.subr.bf16.mxu0 %v8734
        %9227 = vmatpush2.bf16.msra.mxu0 %v8733
        %9228 = vmatprep.subr.bf16.mxu0 %v8732
        %9229 = vmatpush2.bf16.msra.mxu0 %v8731
        %9230 = vmatprep.subr.bf16.mxu0 %v8730
        %9231 = vmatpush2.bf16.msra.mxu0 %v8729
        %9232 = vmatprep.subr.bf16.mxu0 %v8728
        %9233 = vmatpush2.bf16.msra.mxu0 %v8727
        %9234 = vmatprep.subr.bf16.mxu0 %v8726
        %9235 = vmatpush2.bf16.msra.mxu0 %v8725
        %9236 = vmatprep.subr.bf16.mxu0 %v8724
        %9237 = vmatpush2.bf16.msra.mxu0 %v8723
        %9238 = vmatprep.mubr.bf16.mxu0 %v8030
        %9239 = vmatmul.mubr.bf16.gmra.mxu0 %v8029
        %v9240 = vpop.f32.mrf.mxu0
        %v9241 = vadd.f32 %v9128, %v9240
        %v9242 = vpop.f32.mrf.mxu0
        %v9243 = vadd.f32 %v9130, %v9242
        %v9244 = vpop.f32.mrf.mxu0
        %v9245 = vadd.f32 %v9132, %v9244
        %v9246 = vpop.f32.mrf.mxu0
        %v9247 = vadd.f32 %v9134, %v9246
        %9248 = vmatprep.mubr.bf16.mxu0 %v8038
        %9249 = vmatmul.mubr.bf16.gmra.mxu0 %v8037
        %v9250 = vpop.f32.mrf.mxu0
        %v9251 = vadd.f32 %v9138, %v9250
        %v9252 = vpop.f32.mrf.mxu0
        %v9253 = vadd.f32 %v9140, %v9252
        %v9254 = vpop.f32.mrf.mxu0
        %v9255 = vadd.f32 %v9142, %v9254
        %v9256 = vpop.f32.mrf.mxu0
        %v9257 = vadd.f32 %v9144, %v9256
        %9258 = vmatprep.mubr.bf16.mxu0 %v8046
        %9259 = vmatmul.mubr.bf16.gmra.mxu0 %v8045
        %v9260 = vpop.f32.mrf.mxu0
        %v9261 = vadd.f32 %v9148, %v9260
        %v9262 = vpop.f32.mrf.mxu0
        %v9263 = vadd.f32 %v9150, %v9262
        %v9264 = vpop.f32.mrf.mxu0
        %v9265 = vadd.f32 %v9152, %v9264
        %v9266 = vpop.f32.mrf.mxu0
        %v9267 = vadd.f32 %v9154, %v9266
        %9268 = vmatprep.mubr.bf16.mxu0 %v8054
        %9269 = vmatmul.mubr.bf16.gmra.mxu0 %v8053
        %v9270 = vpop.f32.mrf.mxu0
        %v9271 = vadd.f32 %v9158, %v9270
        %v9272 = vpop.f32.mrf.mxu0
        %v9273 = vadd.f32 %v9160, %v9272
        %v9274 = vpop.f32.mrf.mxu0
        %v9275 = vadd.f32 %v9162, %v9274
        %v9276 = vpop.f32.mrf.mxu0
        %v9277 = vadd.f32 %v9164, %v9276
        %9278 = vmatprep.mubr.bf16.mxu0 %v8062
        %9279 = vmatmul.mubr.bf16.gmra.mxu0 %v8061
        %v9280 = vpop.f32.mrf.mxu0
        %v9281 = vadd.f32 %v9168, %v9280
        %v9282 = vpop.f32.mrf.mxu0
        %v9283 = vadd.f32 %v9170, %v9282
        %v9284 = vpop.f32.mrf.mxu0
        %v9285 = vadd.f32 %v9172, %v9284
        %v9286 = vpop.f32.mrf.mxu0
        %v9287 = vadd.f32 %v9174, %v9286
        %9288 = vmatprep.mubr.bf16.mxu0 %v8070
        %9289 = vmatmul.mubr.bf16.gmra.mxu0 %v8069
        %v9290 = vpop.f32.mrf.mxu0
        %v9291 = vadd.f32 %v9178, %v9290
        %v9292 = vpop.f32.mrf.mxu0
        %v9293 = vadd.f32 %v9180, %v9292
        %v9294 = vpop.f32.mrf.mxu0
        %v9295 = vadd.f32 %v9182, %v9294
        %v9296 = vpop.f32.mrf.mxu0
        %v9297 = vadd.f32 %v9184, %v9296
        %9298 = vmatprep.mubr.bf16.mxu0 %v8078
        %9299 = vmatmul.mubr.bf16.gmra.mxu0 %v8077
        %v9300 = vpop.f32.mrf.mxu0
        %v9301 = vadd.f32 %v9188, %v9300
        %v9302 = vpop.f32.mrf.mxu0
        %v9303 = vadd.f32 %v9190, %v9302
        %v9304 = vpop.f32.mrf.mxu0
        %v9305 = vadd.f32 %v9192, %v9304
        %v9306 = vpop.f32.mrf.mxu0
        %v9307 = vadd.f32 %v9194, %v9306
        %9308 = vmatprep.mubr.bf16.mxu0 %v8086
        %9309 = vmatmul.mubr.bf16.gmra.mxu0 %v8085
        %v9310 = vpop.f32.mrf.mxu0
        %v9311 = vadd.f32 %v9198, %v9310
        %v9312 = vpop.f32.mrf.mxu0
        %v9313 = vadd.f32 %v9200, %v9312
        %v9314 = vpop.f32.mrf.mxu0
        %v9315 = vadd.f32 %v9202, %v9314
        %v9316 = vpop.f32.mrf.mxu0
        %v9317 = vadd.f32 %v9204, %v9316
        %9318 = vdwg.mxu0
        %v9319 = vmax.f32 %v9241, 0.0
        %v9320 = vmax.f32 %v9243, 0.0
        %v9321 = vmax.f32 %v9245, 0.0
        %v9322 = vmax.f32 %v9247, 0.0
        %v9323 = vmax.f32 %v9251, 0.0
        %v9324 = vmax.f32 %v9253, 0.0
        %v9325 = vmax.f32 %v9255, 0.0
        %v9326 = vmax.f32 %v9257, 0.0
        %v9327 = vmax.f32 %v9261, 0.0
        %v9328 = vmax.f32 %v9263, 0.0
        %v9329 = vmax.f32 %v9265, 0.0
        %v9330 = vmax.f32 %v9267, 0.0
        %v9331 = vmax.f32 %v9271, 0.0
        %v9332 = vmax.f32 %v9273, 0.0
        %v9333 = vmax.f32 %v9275, 0.0
        %v9334 = vmax.f32 %v9277, 0.0
        %v9335 = vmax.f32 %v9281, 0.0
        %v9336 = vmax.f32 %v9283, 0.0
        %v9337 = vmax.f32 %v9285, 0.0
        %v9338 = vmax.f32 %v9287, 0.0
        %v9339 = vmax.f32 %v9291, 0.0
        %v9340 = vmax.f32 %v9293, 0.0
        %v9341 = vmax.f32 %v9295, 0.0
        %v9342 = vmax.f32 %v9297, 0.0
        %v9343 = vmax.f32 %v9301, 0.0
        %v9344 = vmax.f32 %v9303, 0.0
        %v9345 = vmax.f32 %v9305, 0.0
        %v9346 = vmax.f32 %v9307, 0.0
        %v9347 = vmax.f32 %v9311, 0.0
        %v9348 = vmax.f32 %v9313, 0.0
        %v9349 = vmax.f32 %v9315, 0.0
        %v9350 = vmax.f32 %v9317, 0.0
        %v9351 = vpack.c.bf16 %v9321, %v9319
        %v9352 = vpack.c.bf16 %v9322, %v9320
        %v9353 = vpack.c.bf16 %v9325, %v9323
        %v9354 = vpack.c.bf16 %v9326, %v9324
        %v9355 = vpack.c.bf16 %v9329, %v9327
        %v9356 = vpack.c.bf16 %v9330, %v9328
        %v9357 = vpack.c.bf16 %v9333, %v9331
        %v9358 = vpack.c.bf16 %v9334, %v9332
        %v9359 = vpack.c.bf16 %v9337, %v9335
        %v9360 = vpack.c.bf16 %v9338, %v9336
        %v9361 = vpack.c.bf16 %v9341, %v9339
        %v9362 = vpack.c.bf16 %v9342, %v9340
        %v9363 = vpack.c.bf16 %v9345, %v9343
        %v9364 = vpack.c.bf16 %v9346, %v9344
        %v9365 = vpack.c.bf16 %v9349, %v9347
        %v9366 = vpack.c.bf16 %v9350, %v9348
        %v9367 = vld [vmem:[#allocation16] sm:$0xff]
        %v9368 = vld [vmem:[#allocation16 + $0x8] sm:$0xff]
        %v9369 = vld [vmem:[#allocation16 + $0x10] sm:$0xff]
        %v9370 = vld [vmem:[#allocation16 + $0x18] sm:$0xff]
        %v9371 = vld [vmem:[#allocation16 + $0x20] sm:$0xff]
        %v9372 = vld [vmem:[#allocation16 + $0x28] sm:$0xff]
        %v9373 = vld [vmem:[#allocation16 + $0x30] sm:$0xff]
        %v9374 = vld [vmem:[#allocation16 + $0x38] sm:$0xff]
        %v9375 = vld [vmem:[#allocation16 + $0x40] sm:$0xff]
        %v9376 = vld [vmem:[#allocation16 + $0x48] sm:$0xff]
        %v9377 = vld [vmem:[#allocation16 + $0x50] sm:$0xff]
        %v9378 = vld [vmem:[#allocation16 + $0x58] sm:$0xff]
        %v9379 = vld [vmem:[#allocation16 + $0x60] sm:$0xff]
        %v9380 = vld [vmem:[#allocation16 + $0x68] sm:$0xff]
        %v9381 = vld [vmem:[#allocation16 + $0x70] sm:$0xff]
        %v9382 = vld [vmem:[#allocation16 + $0x78] sm:$0xff]
        %v9383 = vld [vmem:[#allocation16 + $0x80] sm:$0xff]
        %v9384 = vld [vmem:[#allocation16 + $0x88] sm:$0xff]
        %v9385 = vld [vmem:[#allocation16 + $0x90] sm:$0xff]
        %v9386 = vld [vmem:[#allocation16 + $0x98] sm:$0xff]
        %v9387 = vld [vmem:[#allocation16 + $0xa0] sm:$0xff]
        %v9388 = vld [vmem:[#allocation16 + $0xa8] sm:$0xff]
        %v9389 = vld [vmem:[#allocation16 + $0xb0] sm:$0xff]
        %v9390 = vld [vmem:[#allocation16 + $0xb8] sm:$0xff]
        %v9391 = vld [vmem:[#allocation16 + $0xc0] sm:$0xff]
        %v9392 = vld [vmem:[#allocation16 + $0xc8] sm:$0xff]
        %v9393 = vld [vmem:[#allocation16 + $0xd0] sm:$0xff]
        %v9394 = vld [vmem:[#allocation16 + $0xd8] sm:$0xff]
        %v9395 = vld [vmem:[#allocation16 + $0xe0] sm:$0xff]
        %v9396 = vld [vmem:[#allocation16 + $0xe8] sm:$0xff]
        %v9397 = vld [vmem:[#allocation16 + $0xf0] sm:$0xff]
        %v9398 = vld [vmem:[#allocation16 + $0xf8] sm:$0xff]
        %v9399 = vld [vmem:[#allocation17] sm:$0x3]
        %v9401 = vlaneseq
        %v9402 = vshrl.u32 %v9401, 7
        %v9403 = vsub.s32 0, %v9402
        %v9404 = vrot.slane %v9399, %v9403
        %v9405 = vlaneseq
        %v9406 = vshrl.u32 %v9405, 7
        %v9407 = vsub.s32 1, %v9406
        %v9408 = vrot.slane %v9399, %v9407
        %v9443 = vunpack.c.l.b16 %v9367
        %v9444 = vunpack.c.h.b16 %v9367
        %v9445 = vunpack.c.l.b16 %v9368
        %v9446 = vunpack.c.h.b16 %v9368
        %v9447 = vunpack.c.l.b16 %v9369
        %v9448 = vunpack.c.h.b16 %v9369
        %v9449 = vunpack.c.l.b16 %v9370
        %v9450 = vunpack.c.h.b16 %v9370
        %v9451 = vunpack.c.l.b16 %v9371
        %v9452 = vunpack.c.h.b16 %v9371
        %v9453 = vunpack.c.l.b16 %v9372
        %v9454 = vunpack.c.h.b16 %v9372
        %v9455 = vunpack.c.l.b16 %v9373
        %v9456 = vunpack.c.h.b16 %v9373
        %v9457 = vunpack.c.l.b16 %v9374
        %v9458 = vunpack.c.h.b16 %v9374
        %v9459 = vunpack.c.l.b16 %v9375
        %v9460 = vunpack.c.h.b16 %v9375
        %v9461 = vunpack.c.l.b16 %v9376
        %v9462 = vunpack.c.h.b16 %v9376
        %v9463 = vunpack.c.l.b16 %v9377
        %v9464 = vunpack.c.h.b16 %v9377
        %v9465 = vunpack.c.l.b16 %v9378
        %v9466 = vunpack.c.h.b16 %v9378
        %v9467 = vunpack.c.l.b16 %v9379
        %v9468 = vunpack.c.h.b16 %v9379
        %v9469 = vunpack.c.l.b16 %v9380
        %v9470 = vunpack.c.h.b16 %v9380
        %v9471 = vunpack.c.l.b16 %v9381
        %v9472 = vunpack.c.h.b16 %v9381
        %v9473 = vunpack.c.l.b16 %v9382
        %v9474 = vunpack.c.h.b16 %v9382
        %v9475 = vunpack.c.l.b16 %v9383
        %v9476 = vunpack.c.h.b16 %v9383
        %v9477 = vunpack.c.l.b16 %v9384
        %v9478 = vunpack.c.h.b16 %v9384
        %v9479 = vunpack.c.l.b16 %v9385
        %v9480 = vunpack.c.h.b16 %v9385
        %v9481 = vunpack.c.l.b16 %v9386
        %v9482 = vunpack.c.h.b16 %v9386
        %v9483 = vunpack.c.l.b16 %v9387
        %v9484 = vunpack.c.h.b16 %v9387
        %v9485 = vunpack.c.l.b16 %v9388
        %v9486 = vunpack.c.h.b16 %v9388
        %v9487 = vunpack.c.l.b16 %v9389
        %v9488 = vunpack.c.h.b16 %v9389
        %v9489 = vunpack.c.l.b16 %v9390
        %v9490 = vunpack.c.h.b16 %v9390
        %v9491 = vunpack.c.l.b16 %v9391
        %v9492 = vunpack.c.h.b16 %v9391
        %v9493 = vunpack.c.l.b16 %v9392
        %v9494 = vunpack.c.h.b16 %v9392
        %v9495 = vunpack.c.l.b16 %v9393
        %v9496 = vunpack.c.h.b16 %v9393
        %v9497 = vunpack.c.l.b16 %v9394
        %v9498 = vunpack.c.h.b16 %v9394
        %v9499 = vunpack.c.l.b16 %v9395
        %v9500 = vunpack.c.h.b16 %v9395
        %v9501 = vunpack.c.l.b16 %v9396
        %v9502 = vunpack.c.h.b16 %v9396
        %v9503 = vunpack.c.l.b16 %v9397
        %v9504 = vunpack.c.h.b16 %v9397
        %v9505 = vunpack.c.l.b16 %v9398
        %v9506 = vunpack.c.h.b16 %v9398
        %v9507 = vpack.c.b16 %v9445, %v9443
        %v9508 = vpack.c.b16 %v9446, %v9444
        %v9509 = vpack.c.b16 %v9449, %v9447
        %v9510 = vpack.c.b16 %v9450, %v9448
        %v9511 = vpack.c.b16 %v9453, %v9451
        %v9512 = vpack.c.b16 %v9454, %v9452
        %v9513 = vpack.c.b16 %v9457, %v9455
        %v9514 = vpack.c.b16 %v9458, %v9456
        %v9515 = vpack.c.b16 %v9461, %v9459
        %v9516 = vpack.c.b16 %v9462, %v9460
        %v9517 = vpack.c.b16 %v9465, %v9463
        %v9518 = vpack.c.b16 %v9466, %v9464
        %v9519 = vpack.c.b16 %v9469, %v9467
        %v9520 = vpack.c.b16 %v9470, %v9468
        %v9521 = vpack.c.b16 %v9473, %v9471
        %v9522 = vpack.c.b16 %v9474, %v9472
        %v9523 = vpack.c.b16 %v9477, %v9475
        %v9524 = vpack.c.b16 %v9478, %v9476
        %v9525 = vpack.c.b16 %v9481, %v9479
        %v9526 = vpack.c.b16 %v9482, %v9480
        %v9527 = vpack.c.b16 %v9485, %v9483
        %v9528 = vpack.c.b16 %v9486, %v9484
        %v9529 = vpack.c.b16 %v9489, %v9487
        %v9530 = vpack.c.b16 %v9490, %v9488
        %v9531 = vpack.c.b16 %v9493, %v9491
        %v9532 = vpack.c.b16 %v9494, %v9492
        %v9533 = vpack.c.b16 %v9497, %v9495
        %v9534 = vpack.c.b16 %v9498, %v9496
        %v9535 = vpack.c.b16 %v9501, %v9499
        %v9536 = vpack.c.b16 %v9502, %v9500
        %v9537 = vpack.c.b16 %v9505, %v9503
        %v9538 = vpack.c.b16 %v9506, %v9504
        %9571 = vmatprep.subr.bf16.mxu0 %v9522
        %9572 = vmatpush1.bf16.msra.mxu0 %v9521
        %9573 = vmatprep.subr.bf16.mxu0 %v9520
        %9574 = vmatpush1.bf16.msra.mxu0 %v9519
        %9575 = vmatprep.subr.bf16.mxu0 %v9518
        %9576 = vmatpush1.bf16.msra.mxu0 %v9517
        %9577 = vmatprep.subr.bf16.mxu0 %v9516
        %9578 = vmatpush1.bf16.msra.mxu0 %v9515
        %9579 = vmatprep.subr.bf16.mxu0 %v9514
        %9580 = vmatpush1.bf16.msra.mxu0 %v9513
        %9581 = vmatprep.subr.bf16.mxu0 %v9512
        %9582 = vmatpush1.bf16.msra.mxu0 %v9511
        %9583 = vmatprep.subr.bf16.mxu0 %v9510
        %9584 = vmatpush1.bf16.msra.mxu0 %v9509
        %9585 = vmatprep.subr.bf16.mxu0 %v9508
        %9586 = vmatpush1.bf16.msra.mxu0 %v9507
        %9587 = vmatprep.subr.bf16.mxu0 %v9538
        %9588 = vmatpush2.bf16.msra.mxu0 %v9537
        %9589 = vmatprep.subr.bf16.mxu0 %v9536
        %9590 = vmatpush2.bf16.msra.mxu0 %v9535
        %9591 = vmatprep.subr.bf16.mxu0 %v9534
        %9592 = vmatpush2.bf16.msra.mxu0 %v9533
        %9593 = vmatprep.subr.bf16.mxu0 %v9532
        %9594 = vmatpush2.bf16.msra.mxu0 %v9531
        %9595 = vmatprep.subr.bf16.mxu0 %v9530
        %9596 = vmatpush2.bf16.msra.mxu0 %v9529
        %9597 = vmatprep.subr.bf16.mxu0 %v9528
        %9598 = vmatpush2.bf16.msra.mxu0 %v9527
        %9599 = vmatprep.subr.bf16.mxu0 %v9526
        %9600 = vmatpush2.bf16.msra.mxu0 %v9525
        %9601 = vmatprep.subr.bf16.mxu0 %v9524
        %9602 = vmatpush2.bf16.msra.mxu0 %v9523
        %9603 = vmatprep.mubr.bf16.mxu0 %v9352
        %9604 = vmatmul.mubr.bf16.gmra.mxu0 %v9351
        %v9605 = vpop.f32.mrf.mxu0
        %v9606 = vadd.f32 %v9404, %v9605
        %v9607 = vpop.f32.mrf.mxu0
        %v9608 = vadd.f32 %v9408, %v9607
        %v9609 = vpop.f32.mrf.mxu0
        %v9610 = vadd.f32 %v9404, %v9609
        %v9611 = vpop.f32.mrf.mxu0
        %v9612 = vadd.f32 %v9408, %v9611
        %9613 = vmatprep.mubr.bf16.mxu0 %v9354
        %9614 = vmatmul.mubr.bf16.gmra.mxu0 %v9353
        %v9615 = vpop.f32.mrf.mxu0
        %v9616 = vadd.f32 %v9404, %v9615
        %v9617 = vpop.f32.mrf.mxu0
        %v9618 = vadd.f32 %v9408, %v9617
        %v9619 = vpop.f32.mrf.mxu0
        %v9620 = vadd.f32 %v9404, %v9619
        %v9621 = vpop.f32.mrf.mxu0
        %v9622 = vadd.f32 %v9408, %v9621
        %9623 = vmatprep.mubr.bf16.mxu0 %v9356
        %9624 = vmatmul.mubr.bf16.gmra.mxu0 %v9355
        %v9625 = vpop.f32.mrf.mxu0
        %v9626 = vadd.f32 %v9404, %v9625
        %v9627 = vpop.f32.mrf.mxu0
        %v9628 = vadd.f32 %v9408, %v9627
        %v9629 = vpop.f32.mrf.mxu0
        %v9630 = vadd.f32 %v9404, %v9629
        %v9631 = vpop.f32.mrf.mxu0
        %v9632 = vadd.f32 %v9408, %v9631
        %9633 = vmatprep.mubr.bf16.mxu0 %v9358
        %9634 = vmatmul.mubr.bf16.gmra.mxu0 %v9357
        %v9635 = vpop.f32.mrf.mxu0
        %v9636 = vadd.f32 %v9404, %v9635
        %v9637 = vpop.f32.mrf.mxu0
        %v9638 = vadd.f32 %v9408, %v9637
        %v9639 = vpop.f32.mrf.mxu0
        %v9640 = vadd.f32 %v9404, %v9639
        %v9641 = vpop.f32.mrf.mxu0
        %v9642 = vadd.f32 %v9408, %v9641
        %9643 = vmatprep.mubr.bf16.mxu0 %v9360
        %9644 = vmatmul.mubr.bf16.gmra.mxu0 %v9359
        %v9645 = vpop.f32.mrf.mxu0
        %v9646 = vadd.f32 %v9404, %v9645
        %v9647 = vpop.f32.mrf.mxu0
        %v9648 = vadd.f32 %v9408, %v9647
        %v9649 = vpop.f32.mrf.mxu0
        %v9650 = vadd.f32 %v9404, %v9649
        %v9651 = vpop.f32.mrf.mxu0
        %v9652 = vadd.f32 %v9408, %v9651
        %9653 = vmatprep.mubr.bf16.mxu0 %v9362
        %9654 = vmatmul.mubr.bf16.gmra.mxu0 %v9361
        %v9655 = vpop.f32.mrf.mxu0
        %v9656 = vadd.f32 %v9404, %v9655
        %v9657 = vpop.f32.mrf.mxu0
        %v9658 = vadd.f32 %v9408, %v9657
        %v9659 = vpop.f32.mrf.mxu0
        %v9660 = vadd.f32 %v9404, %v9659
        %v9661 = vpop.f32.mrf.mxu0
        %v9662 = vadd.f32 %v9408, %v9661
        %9663 = vmatprep.mubr.bf16.mxu0 %v9364
        %9664 = vmatmul.mubr.bf16.gmra.mxu0 %v9363
        %v9665 = vpop.f32.mrf.mxu0
        %v9666 = vadd.f32 %v9404, %v9665
        %v9667 = vpop.f32.mrf.mxu0
        %v9668 = vadd.f32 %v9408, %v9667
        %v9669 = vpop.f32.mrf.mxu0
        %v9670 = vadd.f32 %v9404, %v9669
        %v9671 = vpop.f32.mrf.mxu0
        %v9672 = vadd.f32 %v9408, %v9671
        %9673 = vmatprep.mubr.bf16.mxu0 %v9366
        %9674 = vmatmul.mubr.bf16.gmra.mxu0 %v9365
        %v9675 = vpop.f32.mrf.mxu0
        %v9676 = vadd.f32 %v9404, %v9675
        %v9677 = vpop.f32.mrf.mxu0
        %v9678 = vadd.f32 %v9408, %v9677
        %v9679 = vpop.f32.mrf.mxu0
        %v9680 = vadd.f32 %v9404, %v9679
        %v9681 = vpop.f32.mrf.mxu0
        %v9682 = vadd.f32 %v9408, %v9681
        %9683 = vdwg.mxu0
        %9684 = vst [vmem:[%s544] sm:$0xff] %v9606
        %9685 = vst [vmem:[%s544 + $0x8] sm:$0xff] %v9608
        %9686 = vst [vmem:[%s544 + $0x10] sm:$0xff] %v9610
        %9687 = vst [vmem:[%s544 + $0x18] sm:$0xff] %v9612
        %9688 = vst [vmem:[%s544 + $0x20] sm:$0xff] %v9616
        %9689 = vst [vmem:[%s544 + $0x28] sm:$0xff] %v9618
        %9690 = vst [vmem:[%s544 + $0x30] sm:$0xff] %v9620
        %9691 = vst [vmem:[%s544 + $0x38] sm:$0xff] %v9622
        %9692 = vst [vmem:[%s544 + $0x40] sm:$0xff] %v9626
        %9693 = vst [vmem:[%s544 + $0x48] sm:$0xff] %v9628
        %9694 = vst [vmem:[%s544 + $0x50] sm:$0xff] %v9630
        %9695 = vst [vmem:[%s544 + $0x58] sm:$0xff] %v9632
        %9696 = vst [vmem:[%s544 + $0x60] sm:$0xff] %v9636
        %9697 = vst [vmem:[%s544 + $0x68] sm:$0xff] %v9638
        %9698 = vst [vmem:[%s544 + $0x70] sm:$0xff] %v9640
        %9699 = vst [vmem:[%s544 + $0x78] sm:$0xff] %v9642
        %9700 = vst [vmem:[%s544 + $0x80] sm:$0xff] %v9646
        %9701 = vst [vmem:[%s544 + $0x88] sm:$0xff] %v9648
        %9702 = vst [vmem:[%s544 + $0x90] sm:$0xff] %v9650
        %9703 = vst [vmem:[%s544 + $0x98] sm:$0xff] %v9652
        %9704 = vst [vmem:[%s544 + $0xa0] sm:$0xff] %v9656
        %9705 = vst [vmem:[%s544 + $0xa8] sm:$0xff] %v9658
        %9706 = vst [vmem:[%s544 + $0xb0] sm:$0xff] %v9660
        %9707 = vst [vmem:[%s544 + $0xb8] sm:$0xff] %v9662
        %9708 = vst [vmem:[%s544 + $0xc0] sm:$0xff] %v9666
        %9709 = vst [vmem:[%s544 + $0xc8] sm:$0xff] %v9668
        %9710 = vst [vmem:[%s544 + $0xd0] sm:$0xff] %v9670
        %9711 = vst [vmem:[%s544 + $0xd8] sm:$0xff] %v9672
        %9712 = vst [vmem:[%s544 + $0xe0] sm:$0xff] %v9676
        %9713 = vst [vmem:[%s544 + $0xe8] sm:$0xff] %v9678
        %9714 = vst [vmem:[%s544 + $0xf0] sm:$0xff] %v9680
        %9715 = vst [vmem:[%s544 + $0xf8] sm:$0xff] %v9682
        %s9716 = sand.u32 %s282, 1
        %s9717 = scalar_lea.sflag [#allocation4], %s9716
        %s9718 = sand.u32 %s282, 1
        %s9719 = smul.addr %s9718, 256
        %s9720 = scalar_lea.vmem [#allocation19], %s9719
        // Predicated region
        $region105: #{tpu_custom_call.1} parent=63 // pred_check
          %p9721 = pneg %p292
        $region106: #{tpu_custom_call.1} parent=63 // pred_check_branch
          %9723 = sbr.rel (%p9721) target = $region108
        $region107: #{tpu_custom_call.1} parent=63 // pred_region
          %s9724 = smul.u32 16, %s33
          %s9726 = ssub.s32 4096, 4096
          %9727 = vsyncadd %s9717, %s9726
          %s9728 = smul.addr %s9724, 2
          %s9729 = smul.addr %s9728, 128
          %s9730 = scalar_lea.hbm %s11, %s9729
          %s9731 = sshll.u32 %s9720, 4
          %s9732 = int_to_ptr.vmem [resolvable:$true] %s9731
          %9737 = dma.vmem_to_hbm [thread:$0]  %s9732, 4096, %s9730, %s9717, 256, 256, 16
        $region108: #{tpu_custom_call.1} parent=63 // pred_fallthru
          _
      $region64: #{tpu_custom_call.1} parent=5 // pred_fallthru
        _
      %p9738 = scmp.le.s32.totalorder 2, %s28
      // Predicated region
      $region109: #{tpu_custom_call.1} parent=5 // pred_check
        %p9739 = pneg %p9738
      $region110: #{tpu_custom_call.1} parent=5 // pred_check_branch
        %9741 = sbr.rel (%p9739) target = $region112
      $region111: #{tpu_custom_call.1} parent=5 // pred_region
        %s9742 = ssub.s32 %s28, 2
        // Predicated region
        $region113: #{tpu_custom_call.1} parent=111 // pred_check
          %p9743 = pneg %p298
        $region114: #{tpu_custom_call.1} parent=111 // pred_check_branch
          %9745 = sbr.rel (%p9743) target = $region116
        $region115: #{tpu_custom_call.1} parent=111 // pred_region
          %s9746 = sand.u32 %s283, 1
          %s9747 = scalar_lea.sflag [#allocation4], %s9746
          %s9748 = sand.u32 %s283, 1
          %s9749 = smul.addr %s9748, 256
          %s9750 = scalar_lea.vmem [#allocation19], %s9749
          %9751 = dma.done %s9747, 4096
        $region116: #{tpu_custom_call.1} parent=111 // pred_fallthru
          _
      $region112: #{tpu_custom_call.1} parent=5 // pred_fallthru
        _
    $region6: #{tpu_custom_call.1} parent=1 // loop_footer
      %s32 = sadd.s32 1, %s28
    $region7: #{tpu_custom_call.1} parent=1 // loop_footer_branch
      %27 = sbr.rel target = $region3
    $region8: #{tpu_custom_call.1} parent=1 // loop_exit
      _
    %9752 = vsyncpa [#allocation3], 1
    %s9753 = scalar_lea.sflag [#allocation3], 1
    %9754 = vsyncpa %s9753, 1
    %9755 = vsyncpa [#allocation6], 1
    %9756 = vsyncpa [#allocation9], 1
    %9757 = vsyncpa [#allocation12], 1
    %9758 = vsyncpa [#allocation15], 1
    %9759 = vsyncpa [#allocation18], 1
    %9760 = vsyncpa [#allocation4], 1
    %s9761 = scalar_lea.sflag [#allocation4], 1
    %9762 = vsyncpa %s9761, 1

</llo_original>
